<compile_context>
chip_gen: v7x
topology: tpu7x:2x2x1
jax: 0.10.0
libtpu: 0.0.40
codegen_flags: <defaults>
</compile_context>

<pallas_src>
from functools import partial

import jax
import jax.numpy as jnp
from jax.experimental import pallas as pl
from jax.experimental.pallas import tpu as pltpu


_VMEM_LIMIT_BYTES = 48 * 1024 * 1024        # raised scoped-VMEM cap (safe on v5e/v6e/v7x)
_PAIRWISE_CHUNK_BUDGET = 16 * 1024 * 1024   # byte budget for double-buffered pairwise L-chunks


# ----------------------------------------------------------------------------
# Kernel: bidirectional logsumexp message-passing scan along one spatial axis
# ----------------------------------------------------------------------------
def _bp_scan_kernel(gamma_ref, unary_ref, pairwise_ref, marg_ref, carry_ref, *, S):
    """One grid step. grid = (batch_chunk [parallel], direction {0=fwd,1=bwd}, L-chunk).

    unary_ref    : (L,  S,   R, C)  resident for the whole batch chunk
    pairwise_ref : (Lt, S*S, R, C)  streamed L-chunk (double-buffered by BlockSpec)
    marg_ref     : (L,  S,   R, C)  resident output: fwd writes, bwd accumulates in place
    carry_ref    : (S,  R,  C)      VMEM scratch carrying the message across L-chunks
    Trailing (R, C) = (batch sublane fold, D * batch lane fold); both state axes
    are leading (inter-vreg) axes so both reductions are VALU trees, never XLU.
    """
    L = unary_ref.shape[0]
    Lt = pairwise_ref.shape[0]
    R, C = unary_ref.shape[2], unary_ref.shape[3]

    d = pl.program_id(1)
    l = pl.program_id(2)
    n_l = pl.num_programs(2)

    gamma = gamma_ref[0]
    inv_gamma = 1.0 / gamma                    # hoisted scalar reciprocal
    unroll = True if Lt <= 16 else 4           # moderate unroll; avoid vreg spills

    def lse_message(p_flat, carry, reduce_axis):
        # (S*S, R, C) -> (S_from, S_to, R, C): leading-axes-only reshape (layout preserving).
        p = p_flat.reshape(S, S, R, C)
        if reduce_axis == 0:                   # forward: reduce over S_from, carry on axis 0
            x = (p + carry[:, None, :, :]) * inv_gamma
        else:                                  # backward: reduce over S_to, carry on axis 1
            x = (p + carry[None, :, :, :]) * inv_gamma
        m = jnp.max(x, axis=reduce_axis)       # inter-vreg VALU tree (no XLU)
        z = jnp.sum(jnp.exp(x - jnp.expand_dims(m, reduce_axis)), axis=reduce_axis)
        return gamma * (m + jnp.log(z))        # (S, R, C) message indexed by the kept state

    # ---------------------------- forward sweep ----------------------------
    @pl.when(d == 0)
    def _forward():
        t0 = l * Lt

        @pl.when(l == 0)
        def _init():
            c0 = unary_ref[0]
            carry_ref[...] = c0
            marg_ref[0] = c0

        def body(i, prev):
            msg = lse_message(pairwise_ref[i], prev, 0)
            nxt = unary_ref[t0 + i + 1] + msg
            marg_ref[t0 + i + 1] = nxt         # marg = left (fwd) for now
            return nxt

        carry_ref[...] = jax.lax.fori_loop(0, Lt, body, carry_ref[...], unroll=unroll)

    # ---------------------------- backward sweep ---------------------------
    @pl.when(d == 1)
    def _backward():
        t0 = (n_l - 1 - l) * Lt                # chunks arrive in reverse order

        @pl.when(l == 0)
        def _init():
            carry_ref[...] = unary_ref[L - 1]

        def body(k, prev):
            i = Lt - 1 - k                     # descending within the chunk
            msg = lse_message(pairwise_ref[i], prev, 1)
            j = t0 + i
            marg_ref[j] = marg_ref[j] + msg    # marg = left + (right - unary)
            return unary_ref[j] + msg

        carry_ref[...] = jax.lax.fori_loop(0, Lt, body, carry_ref[...], unroll=unroll)


def _bp_scan(gamma, unary, pairwise, lt):
    """unary: (Bc, L, S, R, C); pairwise: (Bc, L-1, S*S, R, C) -> marginals (Bc, L, S, R, C)."""
    Bc, L, S, R, C = unary.shape
    Ltot = L - 1
    n_l = Ltot // lt

    def pw_index(b, d, l):
        # forward: chunks ascending; backward: same chunks, reverse order
        return (b, (1 - d) * l + d * (n_l - 1 - l), 0, 0, 0)

    grid_spec = pltpu.PrefetchScalarGridSpec(
        num_scalar_prefetch=0,
        grid=(Bc, 2, n_l),
        in_specs=[
            pl.BlockSpec(memory_space=pltpu.MemorySpace.SMEM),                   # gamma
            pl.BlockSpec((None, L, S, R, C), lambda b, d, l: (b, 0, 0, 0, 0)),   # unary (resident)
            pl.BlockSpec((None, lt, S * S, R, C), pw_index),                     # pairwise (streamed)
        ],
        out_specs=pl.BlockSpec((None, L, S, R, C), lambda b, d, l: (b, 0, 0, 0, 0)),
        scratch_shapes=[pltpu.VMEM((S, R, C), jnp.float32)],                     # carry
    )
    return pl.pallas_call(
        partial(_bp_scan_kernel, S=S),
        out_shape=jax.ShapeDtypeStruct((Bc, L, S, R, C), jnp.float32),
        grid_spec=grid_spec,
        compiler_params=pltpu.CompilerParams(
            dimension_semantics=("parallel", "arbitrary", "arbitrary"),
            vmem_limit_bytes=_VMEM_LIMIT_BYTES,
        ),
    )(gamma, unary, pairwise)


# ----------------------------------------------------------------------------
# Layout helpers
# ----------------------------------------------------------------------------
def _divisors(n):
    return [i for i in range(1, n + 1) if n % i == 0]


def _round_up(x, m):
    return ((x + m - 1) // m) * m


def _choose_fold(Bt, D):
    """Split total batch Bt into (Bc grid chunks, bs sublane fold, bl lane fold).
    Keep Bc >= 2 when possible (v7x megacore + pipelining); then fill lanes toward
    128 with bl*D; remaining goes to the sublane axis (up to 8)."""
    if Bt <= 1:
        return 1, 1, 1
    Bc = min(c for c in _divisors(Bt) if c >= 2)
    rem = Bt // Bc
    divs = _divisors(rem)
    lane_ok = [c for c in divs if c * D >= 128]
    bl = min(lane_ok) if lane_ok else max(divs)
    rem2 = rem // bl
    bs = max(c for c in _divisors(rem2) if c <= 8)
    Bc = Bt // (bs * bl)          # anything left over becomes extra grid chunks
    return Bc, bs, bl


def _choose_lt(Ltot, S, R, C, budget_bytes):
    """Largest divisor of Ltot whose double-buffered pairwise chunk fits the budget
    (padding-aware: sublane -> 8, lane -> 128)."""
    per = S * S * _round_up(R, 8) * _round_up(C, 128) * 4
    max_lt = max(1, budget_bytes // (2 * per))
    lt = 1
    for cand in range(1, Ltot + 1):
        if Ltot % cand == 0 and cand <= max_lt:
            lt = cand
    return lt


def _scan_pass(unary, pairwise, gamma, *, chunk_budget=_PAIRWISE_CHUNK_BUDGET):
    """unary: (Bt, S, D, L); pairwise: (Bt, S, S, D, L-1); scan along the last axis.
    Returns marginals (Bt, S, D, L)."""
    Bt, S, D, L = unary.shape
    if L == 1:
        return unary                                  # degenerate: marginal == unary
    Bc, bs, bl = _choose_fold(Bt, D)
    R, C = bs, bl * D
    Ltot = L - 1

    # pack unary: (Bc,bs,bl,S,D,L) -> (Bc, L, S, bs, bl*D)
    u = unary.reshape(Bc, bs, bl, S, D, L)
    u = jnp.transpose(u, (0, 5, 3, 1, 2, 4)).reshape(Bc, L, S, R, C)
    # pack pairwise: (Bc,bs,bl,Sf,St,D,Ltot) -> (Bc, Ltot, Sf*St, bs, bl*D)
    p = pairwise.reshape(Bc, bs, bl, S, S, D, Ltot)
    p = jnp.transpose(p, (0, 6, 3, 4, 1, 2, 5)).reshape(Bc, Ltot, S * S, R, C)

    lt = _choose_lt(Ltot, S, R, C, chunk_budget)
    m = _bp_scan(gamma, u, p, lt)                     # (Bc, L, S, R, C)

    m = m.reshape(Bc, L, S, bs, bl, D)
    m = jnp.transpose(m, (0, 3, 4, 2, 5, 1)).reshape(Bt, S, D, L)
    return m


# ----------------------------------------------------------------------------
# Module forward (single-scale path of FixedPointIterationGapN)
# ----------------------------------------------------------------------------
def fixed_point_iteration(h_unary, v_unary, h_pairwise, v_pairwise, gamma,
                          *, chunk_budget=_PAIRWISE_CHUNK_BUDGET):
    """Returns (new_horizontal_unary, new_vertical_unary,
                horizontal_marginals, vertical_marginals), all (B, S, H, W)."""
    B, S, H, W = h_unary.shape
    # matches torch: self.gamma.data.clamp_(min=0.01)
    gamma = jnp.maximum(gamma.astype(jnp.float32), 0.01)

    if H == W:
        # merge the horizontal and vertical passes into one pallas_call (stack on batch)
        u = jnp.concatenate([h_unary, jnp.swapaxes(v_unary, 2, 3)], axis=0)         # (2B,S,D,L)
        p = jnp.concatenate([h_pairwise, jnp.swapaxes(v_pairwise, 3, 4)], axis=0)   # (2B,S,S,D,L-1)
        m = _scan_pass(u, p, gamma, chunk_budget=chunk_budget)
        h_marg = m[:B]
        v_marg = jnp.swapaxes(m[B:], 2, 3)
    else:
        h_marg = _scan_pass(h_unary, h_pairwise, gamma, chunk_budget=chunk_budget)
        v_marg = jnp.swapaxes(
            _scan_pass(jnp.swapaxes(v_unary, 2, 3), jnp.swapaxes(v_pairwise, 3, 4),
                       gamma, chunk_budget=chunk_budget), 2, 3)

    # unary update in plain jnp: XLA fuses it with the output re-layouts above.
    alpha = 1.0 / W if W > H else 1.0 / H
    avg = (h_marg + v_marg) * 0.5
    hu_new = h_unary - alpha * (h_marg - avg)
    vu_new = v_unary - alpha * (v_marg - avg)
    return hu_new, vu_new, h_marg, v_marg


# ----------------------------------------------------------------------------
# Pure-JAX reference (mirrors the PyTorch single-scale forward) for validation
# ----------------------------------------------------------------------------
def _reference(hu, vu, hp, vp, gamma):
    B, S, H, W = hu.shape
    g = jnp.maximum(gamma[0], 0.01)
    left = [hu[:, :, :, 0]]
    right = [hu[:, :, :, -1]]
    top = [vu[:, :, 0, :]]
    bottom = [vu[:, :, -1, :]]
    for i in range(W - 1):
        mm = g * jax.nn.logsumexp((hp[:, :, :, :, i] + left[-1][:, :, None, :]) / g, axis=1)
        left.append(hu[:, :, :, i + 1] + mm)
        mm = g * jax.nn.logsumexp((hp[:, :, :, :, W - i - 2] + right[-1][:, None, :, :]) / g, axis=2)
        right.append(hu[:, :, :, W - i - 2] + mm)
    left = jnp.stack(left, axis=-1)
    right = jnp.stack(right[::-1], axis=-1)
    h_marg = left + right - hu
    for i in range(H - 1):
        mm = g * jax.nn.logsumexp((vp[:, :, :, i, :] + top[-1][:, :, None, :]) / g, axis=1)
        top.append(vu[:, :, i + 1, :] + mm)
        mm = g * jax.nn.logsumexp((vp[:, :, :, H - i - 2, :] + bottom[-1][:, None, :, :]) / g, axis=2)
        bottom.append(vu[:, :, H - i - 2, :] + mm)
    top = jnp.stack(top, axis=-2)
    bottom = jnp.stack(bottom[::-1], axis=-2)
    v_marg = top + bottom - vu
    alpha = 1.0 / W if W > H else 1.0 / H
    avg = (h_marg + v_marg) / 2.0
    hu_new = hu - alpha * (h_marg - avg)
    vu_new = vu - alpha * (v_marg - avg)
    return hu_new, vu_new, h_marg, v_marg


if __name__ == "__main__":
    B, S, H, W = 2, 4, 16, 16          # state_size = 4
    key = jax.random.PRNGKey(0)
    k1, k2, k3, k4 = jax.random.split(key, 4)
    h_unary = jax.random.normal(k1, (B, S, H, W), jnp.float32)
    v_unary = jax.random.normal(k2, (B, S, H, W), jnp.float32)
    h_pairwise = jax.random.normal(k3, (B, S, S, H, W - 1), jnp.float32)
    v_pairwise = jax.random.normal(k4, (B, S, S, H - 1, W), jnp.float32)
    # Parameter init matches torch.nn.Parameter(torch.ones(1))
    gamma = jnp.ones((1,), jnp.float32)

    refs = _reference(h_unary, v_unary, h_pairwise, v_pairwise, gamma)

    # 1) default chunk budget (whole-L pairwise chunk at this size)
    outs = jax.jit(fixed_point_iteration)(h_unary, v_unary, h_pairwise, v_pairwise, gamma)
    outs = jax.block_until_ready(outs)
    for o, r in zip(outs, refs):
        assert o.shape == r.shape and o.dtype == r.dtype
        err = float(jnp.max(jnp.abs(o - r)))
        assert jnp.allclose(o, r, atol=1e-3, rtol=1e-3), err

    # 2) small budget forces the streamed multi-chunk pairwise pipeline (3 chunks of 5)
    fn_chunked = jax.jit(partial(fixed_point_iteration, chunk_budget=800_000))
    outs2 = jax.block_until_ready(fn_chunked(h_unary, v_unary, h_pairwise, v_pairwise, gamma))
    for o, r in zip(outs2, refs):
        err = float(jnp.max(jnp.abs(o - r)))
        assert jnp.allclose(o, r, atol=1e-3, rtol=1e-3), err

    print("KERNEL_OK")
</pallas_src>

<mosaic_0001>
module attributes {stable_mosaic.version = 11 : i64} {
  func.func @_bp_scan_kernel(%arg0: i32, %arg1: i32, %arg2: i32, %arg3: memref<1xf32, #tpu.memory_space<smem>>, %arg4: memref<1x16x4x1x32xf32, #tpu.memory_space<vmem>>, %arg5: memref<1x15x16x1x32xf32, #tpu.memory_space<vmem>>, %arg6: memref<1x16x4x1x32xf32, #tpu.memory_space<vmem>>, %arg7: memref<4x1x32xf32, #tpu.memory_space<vmem>>) attributes {dimension_semantics = [#tpu.dimension_semantics<parallel>, #tpu.dimension_semantics<arbitrary>, #tpu.dimension_semantics<arbitrary>], iteration_bounds = array<i64: 2, 2, 1>, scalar_prefetch = 0 : i64, scratch_operands = 1 : i64, tpu.core_type = #tpu.core_type<tc>, window_params = [{transform_indices = @transform_0, window_bounds = array<i64: 1>}, {transform_indices = @transform_1, window_bounds = array<i64: 1, 16, 4, 1, 32>}, {transform_indices = @transform_2, window_bounds = array<i64: 1, 15, 16, 1, 32>}, {transform_indices = @transform_3, window_bounds = array<i64: 1, 16, 4, 1, 32>}]} {
    %c0 = arith.constant 0 : index
    %0 = memref.load %arg3[%c0] : memref<1xf32, #tpu.memory_space<smem>>
    %cst = arith.constant 1.000000e+00 : f32
    %1 = arith.divf %cst, %0 : f32
    %c0_i32 = arith.constant 0 : i32
    %2 = arith.cmpi eq, %arg1, %c0_i32 : i32
    %3 = arith.extui %2 : i1 to i32
    %c0_i32_0 = arith.constant 0 : i32
    %4 = arith.cmpi ne, %3, %c0_i32_0 : i32
    scf.if %4 {
      %c15_i32 = arith.constant 15 : i32
      %8 = arith.muli %arg2, %c15_i32 : i32
      %c0_i32_2 = arith.constant 0 : i32
      %9 = arith.cmpi eq, %arg2, %c0_i32_2 : i32
      %10 = arith.extui %9 : i1 to i32
      %c0_i32_3 = arith.constant 0 : i32
      %11 = arith.cmpi ne, %10, %c0_i32_3 : i32
      scf.if %11 {
        %c0_253 = arith.constant 0 : index
        %c0_254 = arith.constant 0 : index
        %c0_255 = arith.constant 0 : index
        %c0_256 = arith.constant 0 : index
        %c0_257 = arith.constant 0 : index
        %479 = vector.load %arg4[%c0_253, %c0_254, %c0_255, %c0_256, %c0_257] : memref<1x16x4x1x32xf32, #tpu.memory_space<vmem>>, vector<1x1x4x1x32xf32>
        %480 = vector.shape_cast %479 : vector<1x1x4x1x32xf32> to vector<4x1x32xf32>
        %c0_258 = arith.constant 0 : index
        %c0_259 = arith.constant 0 : index
        %c0_260 = arith.constant 0 : index
        %481 = vector.load %arg7[%c0_258, %c0_259, %c0_260] : memref<4x1x32xf32, #tpu.memory_space<vmem>>, vector<4x1x32xf32>
        tpu.vector_store %arg7[%c0_258, %c0_259, %c0_260], %480 {strides = array<i32>} : memref<4x1x32xf32, #tpu.memory_space<vmem>>, vector<4x1x32xf32>,
        %c0_261 = arith.constant 0 : index
        %c0_262 = arith.constant 0 : index
        %c0_263 = arith.constant 0 : index
        %c0_264 = arith.constant 0 : index
        %c0_265 = arith.constant 0 : index
        %482 = vector.load %arg6[%c0_261, %c0_262, %c0_263, %c0_264, %c0_265] : memref<1x16x4x1x32xf32, #tpu.memory_space<vmem>>, vector<1x1x4x1x32xf32>
        %483 = vector.shape_cast %482 : vector<1x1x4x1x32xf32> to vector<4x1x32xf32>
        %484 = vector.shape_cast %480 : vector<4x1x32xf32> to vector<1x1x4x1x32xf32>
        tpu.vector_store %arg6[%c0_261, %c0_262, %c0_263, %c0_264, %c0_265], %484 {strides = array<i32>} : memref<1x16x4x1x32xf32, #tpu.memory_space<vmem>>, vector<1x1x4x1x32xf32>,
      } else {
      }
      %c0_4 = arith.constant 0 : index
      %c0_5 = arith.constant 0 : index
      %c0_6 = arith.constant 0 : index
      %12 = vector.load %arg7[%c0_4, %c0_5, %c0_6] : memref<4x1x32xf32, #tpu.memory_space<vmem>>, vector<4x1x32xf32>
      %c0_i32_7 = arith.constant 0 : i32
      %c0_8 = arith.constant 0 : index
      %13 = arith.index_cast %c0_i32_7 : i32 to index
      %c0_9 = arith.constant 0 : index
      %c0_10 = arith.constant 0 : index
      %c0_11 = arith.constant 0 : index
      %14 = vector.load %arg5[%c0_8, %13, %c0_9, %c0_10, %c0_11] : memref<1x15x16x1x32xf32, #tpu.memory_space<vmem>>, vector<1x1x16x1x32xf32>
      %15 = vector.shape_cast %14 : vector<1x1x16x1x32xf32> to vector<16x1x32xf32>
      %16 = vector.shape_cast %15 : vector<16x1x32xf32> to vector<4x4x1x32xf32>
      %17 = vector.shape_cast %12 : vector<4x1x32xf32> to vector<4x1x1x32xf32>
      %18 = vector.broadcast %17 : vector<4x1x1x32xf32> to vector<4x4x1x32xf32>
      %19 = arith.addf %16, %18 : vector<4x4x1x32xf32>
      %20 = vector.broadcast %1 : f32 to vector<4x4x1x32xf32>
      %21 = arith.mulf %19, %20 : vector<4x4x1x32xf32>
      %cst_12 = arith.constant dense<0xFF800000> : vector<4x1x32xf32>
      %22 = vector.multi_reduction <maximumf>, %21, %cst_12 [0] : vector<4x4x1x32xf32> to vector<4x1x32xf32>
      %23 = vector.shape_cast %22 : vector<4x1x32xf32> to vector<1x4x1x32xf32>
      %24 = vector.broadcast %23 : vector<1x4x1x32xf32> to vector<4x4x1x32xf32>
      %25 = arith.subf %21, %24 : vector<4x4x1x32xf32>
      %26 = math.exp %25 : vector<4x4x1x32xf32>
      %cst_13 = arith.constant dense<0.000000e+00> : vector<4x1x32xf32>
      %27 = vector.multi_reduction <add>, %26, %cst_13 [0] : vector<4x4x1x32xf32> to vector<4x1x32xf32>
      %28 = math.log %27 : vector<4x1x32xf32>
      %29 = arith.addf %22, %28 : vector<4x1x32xf32>
      %30 = vector.broadcast %0 : f32 to vector<4x1x32xf32>
      %31 = arith.mulf %30, %29 : vector<4x1x32xf32>
      %32 = arith.addi %8, %c0_i32_7 : i32
      %c1_i32_14 = arith.constant 1 : i32
      %33 = arith.addi %32, %c1_i32_14 : i32
      %c0_15 = arith.constant 0 : index
      %34 = arith.index_cast %33 : i32 to index
      %c0_16 = arith.constant 0 : index
      %c0_17 = arith.constant 0 : index
      %c0_18 = arith.constant 0 : index
      %35 = vector.load %arg4[%c0_15, %34, %c0_16, %c0_17, %c0_18] : memref<1x16x4x1x32xf32, #tpu.memory_space<vmem>>, vector<1x1x4x1x32xf32>
      %36 = vector.shape_cast %35 : vector<1x1x4x1x32xf32> to vector<4x1x32xf32>
      %37 = arith.addf %36, %31 : vector<4x1x32xf32>
      %38 = arith.addi %8, %c0_i32_7 : i32
      %c1_i32_19 = arith.constant 1 : i32
      %39 = arith.addi %38, %c1_i32_19 : i32
      %c0_20 = arith.constant 0 : index
      %40 = arith.index_cast %39 : i32 to index
      %c0_21 = arith.constant 0 : index
      %c0_22 = arith.constant 0 : index
      %c0_23 = arith.constant 0 : index
      %41 = vector.load %arg6[%c0_20, %40, %c0_21, %c0_22, %c0_23] : memref<1x16x4x1x32xf32, #tpu.memory_space<vmem>>, vector<1x1x4x1x32xf32>
      %42 = vector.shape_cast %41 : vector<1x1x4x1x32xf32> to vector<4x1x32xf32>
      %43 = vector.shape_cast %37 : vector<4x1x32xf32> to vector<1x1x4x1x32xf32>
      tpu.vector_store %arg6[%c0_20, %40, %c0_21, %c0_22, %c0_23], %43 {strides = array<i32>} : memref<1x16x4x1x32xf32, #tpu.memory_space<vmem>>, vector<1x1x4x1x32xf32>,
      %c1_i32_24 = arith.constant 1 : i32
      %c0_25 = arith.constant 0 : index
      %44 = arith.index_cast %c1_i32_24 : i32 to index
      %c0_26 = arith.constant 0 : index
      %c0_27 = arith.constant 0 : index
      %c0_28 = arith.constant 0 : index
      %45 = vector.load %arg5[%c0_25, %44, %c0_26, %c0_27, %c0_28] : memref<1x15x16x1x32xf32, #tpu.memory_space<vmem>>, vector<1x1x16x1x32xf32>
      %46 = vector.shape_cast %45 : vector<1x1x16x1x32xf32> to vector<16x1x32xf32>
      %47 = vector.shape_cast %46 : vector<16x1x32xf32> to vector<4x4x1x32xf32>
      %48 = vector.shape_cast %37 : vector<4x1x32xf32> to vector<4x1x1x32xf32>
      %49 = vector.broadcast %48 : vector<4x1x1x32xf32> to vector<4x4x1x32xf32>
      %50 = arith.addf %47, %49 : vector<4x4x1x32xf32>
      %51 = vector.broadcast %1 : f32 to vector<4x4x1x32xf32>
      %52 = arith.mulf %50, %51 : vector<4x4x1x32xf32>
      %cst_29 = arith.constant dense<0xFF800000> : vector<4x1x32xf32>
      %53 = vector.multi_reduction <maximumf>, %52, %cst_29 [0] : vector<4x4x1x32xf32> to vector<4x1x32xf32>
      %54 = vector.shape_cast %53 : vector<4x1x32xf32> to vector<1x4x1x32xf32>
      %55 = vector.broadcast %54 : vector<1x4x1x32xf32> to vector<4x4x1x32xf32>
      %56 = arith.subf %52, %55 : vector<4x4x1x32xf32>
      %57 = math.exp %56 : vector<4x4x1x32xf32>
      %cst_30 = arith.constant dense<0.000000e+00> : vector<4x1x32xf32>
      %58 = vector.multi_reduction <add>, %57, %cst_30 [0] : vector<4x4x1x32xf32> to vector<4x1x32xf32>
      %59 = math.log %58 : vector<4x1x32xf32>
      %60 = arith.addf %53, %59 : vector<4x1x32xf32>
      %61 = vector.broadcast %0 : f32 to vector<4x1x32xf32>
      %62 = arith.mulf %61, %60 : vector<4x1x32xf32>
      %63 = arith.addi %8, %c1_i32_24 : i32
      %c1_i32_31 = arith.constant 1 : i32
      %64 = arith.addi %63, %c1_i32_31 : i32
      %c0_32 = arith.constant 0 : index
      %65 = arith.index_cast %64 : i32 to index
      %c0_33 = arith.constant 0 : index
      %c0_34 = arith.constant 0 : index
      %c0_35 = arith.constant 0 : index
      %66 = vector.load %arg4[%c0_32, %65, %c0_33, %c0_34, %c0_35] : memref<1x16x4x1x32xf32, #tpu.memory_space<vmem>>, vector<1x1x4x1x32xf32>
      %67 = vector.shape_cast %66 : vector<1x1x4x1x32xf32> to vector<4x1x32xf32>
      %68 = arith.addf %67, %62 : vector<4x1x32xf32>
      %69 = arith.addi %8, %c1_i32_24 : i32
      %c1_i32_36 = arith.constant 1 : i32
      %70 = arith.addi %69, %c1_i32_36 : i32
      %c0_37 = arith.constant 0 : index
      %71 = arith.index_cast %70 : i32 to index
      %c0_38 = arith.constant 0 : index
      %c0_39 = arith.constant 0 : index
      %c0_40 = arith.constant 0 : index
      %72 = vector.load %arg6[%c0_37, %71, %c0_38, %c0_39, %c0_40] : memref<1x16x4x1x32xf32, #tpu.memory_space<vmem>>, vector<1x1x4x1x32xf32>
      %73 = vector.shape_cast %72 : vector<1x1x4x1x32xf32> to vector<4x1x32xf32>
      %74 = vector.shape_cast %68 : vector<4x1x32xf32> to vector<1x1x4x1x32xf32>
      tpu.vector_store %arg6[%c0_37, %71, %c0_38, %c0_39, %c0_40], %74 {strides = array<i32>} : memref<1x16x4x1x32xf32, #tpu.memory_space<vmem>>, vector<1x1x4x1x32xf32>,
      %c2_i32 = arith.constant 2 : i32
      %c0_41 = arith.constant 0 : index
      %75 = arith.index_cast %c2_i32 : i32 to index
      %c0_42 = arith.constant 0 : index
      %c0_43 = arith.constant 0 : index
      %c0_44 = arith.constant 0 : index
      %76 = vector.load %arg5[%c0_41, %75, %c0_42, %c0_43, %c0_44] : memref<1x15x16x1x32xf32, #tpu.memory_space<vmem>>, vector<1x1x16x1x32xf32>
      %77 = vector.shape_cast %76 : vector<1x1x16x1x32xf32> to vector<16x1x32xf32>
      %78 = vector.shape_cast %77 : vector<16x1x32xf32> to vector<4x4x1x32xf32>
      %79 = vector.shape_cast %68 : vector<4x1x32xf32> to vector<4x1x1x32xf32>
      %80 = vector.broadcast %79 : vector<4x1x1x32xf32> to vector<4x4x1x32xf32>
      %81 = arith.addf %78, %80 : vector<4x4x1x32xf32>
      %82 = vector.broadcast %1 : f32 to vector<4x4x1x32xf32>
      %83 = arith.mulf %81, %82 : vector<4x4x1x32xf32>
      %cst_45 = arith.constant dense<0xFF800000> : vector<4x1x32xf32>
      %84 = vector.multi_reduction <maximumf>, %83, %cst_45 [0] : vector<4x4x1x32xf32> to vector<4x1x32xf32>
      %85 = vector.shape_cast %84 : vector<4x1x32xf32> to vector<1x4x1x32xf32>
      %86 = vector.broadcast %85 : vector<1x4x1x32xf32> to vector<4x4x1x32xf32>
      %87 = arith.subf %83, %86 : vector<4x4x1x32xf32>
      %88 = math.exp %87 : vector<4x4x1x32xf32>
      %cst_46 = arith.constant dense<0.000000e+00> : vector<4x1x32xf32>
      %89 = vector.multi_reduction <add>, %88, %cst_46 [0] : vector<4x4x1x32xf32> to vector<4x1x32xf32>
      %90 = math.log %89 : vector<4x1x32xf32>
      %91 = arith.addf %84, %90 : vector<4x1x32xf32>
      %92 = vector.broadcast %0 : f32 to vector<4x1x32xf32>
      %93 = arith.mulf %92, %91 : vector<4x1x32xf32>
      %94 = arith.addi %8, %c2_i32 : i32
      %c1_i32_47 = arith.constant 1 : i32
      %95 = arith.addi %94, %c1_i32_47 : i32
      %c0_48 = arith.constant 0 : index
      %96 = arith.index_cast %95 : i32 to index
      %c0_49 = arith.constant 0 : index
      %c0_50 = arith.constant 0 : index
      %c0_51 = arith.constant 0 : index
      %97 = vector.load %arg4[%c0_48, %96, %c0_49, %c0_50, %c0_51] : memref<1x16x4x1x32xf32, #tpu.memory_space<vmem>>, vector<1x1x4x1x32xf32>
      %98 = vector.shape_cast %97 : vector<1x1x4x1x32xf32> to vector<4x1x32xf32>
      %99 = arith.addf %98, %93 : vector<4x1x32xf32>
      %100 = arith.addi %8, %c2_i32 : i32
      %c1_i32_52 = arith.constant 1 : i32
      %101 = arith.addi %100, %c1_i32_52 : i32
      %c0_53 = arith.constant 0 : index
      %102 = arith.index_cast %101 : i32 to index
      %c0_54 = arith.constant 0 : index
      %c0_55 = arith.constant 0 : index
      %c0_56 = arith.constant 0 : index
      %103 = vector.load %arg6[%c0_53, %102, %c0_54, %c0_55, %c0_56] : memref<1x16x4x1x32xf32, #tpu.memory_space<vmem>>, vector<1x1x4x1x32xf32>
      %104 = vector.shape_cast %103 : vector<1x1x4x1x32xf32> to vector<4x1x32xf32>
      %105 = vector.shape_cast %99 : vector<4x1x32xf32> to vector<1x1x4x1x32xf32>
      tpu.vector_store %arg6[%c0_53, %102, %c0_54, %c0_55, %c0_56], %105 {strides = array<i32>} : memref<1x16x4x1x32xf32, #tpu.memory_space<vmem>>, vector<1x1x4x1x32xf32>,
      %c3_i32 = arith.constant 3 : i32
      %c0_57 = arith.constant 0 : index
      %106 = arith.index_cast %c3_i32 : i32 to index
      %c0_58 = arith.constant 0 : index
      %c0_59 = arith.constant 0 : index
      %c0_60 = arith.constant 0 : index
      %107 = vector.load %arg5[%c0_57, %106, %c0_58, %c0_59, %c0_60] : memref<1x15x16x1x32xf32, #tpu.memory_space<vmem>>, vector<1x1x16x1x32xf32>
      %108 = vector.shape_cast %107 : vector<1x1x16x1x32xf32> to vector<16x1x32xf32>
      %109 = vector.shape_cast %108 : vector<16x1x32xf32> to vector<4x4x1x32xf32>
      %110 = vector.shape_cast %99 : vector<4x1x32xf32> to vector<4x1x1x32xf32>
      %111 = vector.broadcast %110 : vector<4x1x1x32xf32> to vector<4x4x1x32xf32>
      %112 = arith.addf %109, %111 : vector<4x4x1x32xf32>
      %113 = vector.broadcast %1 : f32 to vector<4x4x1x32xf32>
      %114 = arith.mulf %112, %113 : vector<4x4x1x32xf32>
      %cst_61 = arith.constant dense<0xFF800000> : vector<4x1x32xf32>
      %115 = vector.multi_reduction <maximumf>, %114, %cst_61 [0] : vector<4x4x1x32xf32> to vector<4x1x32xf32>
      %116 = vector.shape_cast %115 : vector<4x1x32xf32> to vector<1x4x1x32xf32>
      %117 = vector.broadcast %116 : vector<1x4x1x32xf32> to vector<4x4x1x32xf32>
      %118 = arith.subf %114, %117 : vector<4x4x1x32xf32>
      %119 = math.exp %118 : vector<4x4x1x32xf32>
      %cst_62 = arith.constant dense<0.000000e+00> : vector<4x1x32xf32>
      %120 = vector.multi_reduction <add>, %119, %cst_62 [0] : vector<4x4x1x32xf32> to vector<4x1x32xf32>
      %121 = math.log %120 : vector<4x1x32xf32>
      %122 = arith.addf %115, %121 : vector<4x1x32xf32>
      %123 = vector.broadcast %0 : f32 to vector<4x1x32xf32>
      %124 = arith.mulf %123, %122 : vector<4x1x32xf32>
      %125 = arith.addi %8, %c3_i32 : i32
      %c1_i32_63 = arith.constant 1 : i32
      %126 = arith.addi %125, %c1_i32_63 : i32
      %c0_64 = arith.constant 0 : index
      %127 = arith.index_cast %126 : i32 to index
      %c0_65 = arith.constant 0 : index
      %c0_66 = arith.constant 0 : index
      %c0_67 = arith.constant 0 : index
      %128 = vector.load %arg4[%c0_64, %127, %c0_65, %c0_66, %c0_67] : memref<1x16x4x1x32xf32, #tpu.memory_space<vmem>>, vector<1x1x4x1x32xf32>
      %129 = vector.shape_cast %128 : vector<1x1x4x1x32xf32> to vector<4x1x32xf32>
      %130 = arith.addf %129, %124 : vector<4x1x32xf32>
      %131 = arith.addi %8, %c3_i32 : i32
      %c1_i32_68 = arith.constant 1 : i32
      %132 = arith.addi %131, %c1_i32_68 : i32
      %c0_69 = arith.constant 0 : index
      %133 = arith.index_cast %132 : i32 to index
      %c0_70 = arith.constant 0 : index
      %c0_71 = arith.constant 0 : index
      %c0_72 = arith.constant 0 : index
      %134 = vector.load %arg6[%c0_69, %133, %c0_70, %c0_71, %c0_72] : memref<1x16x4x1x32xf32, #tpu.memory_space<vmem>>, vector<1x1x4x1x32xf32>
      %135 = vector.shape_cast %134 : vector<1x1x4x1x32xf32> to vector<4x1x32xf32>
      %136 = vector.shape_cast %130 : vector<4x1x32xf32> to vector<1x1x4x1x32xf32>
      tpu.vector_store %arg6[%c0_69, %133, %c0_70, %c0_71, %c0_72], %136 {strides = array<i32>} : memref<1x16x4x1x32xf32, #tpu.memory_space<vmem>>, vector<1x1x4x1x32xf32>,
      %c4_i32 = arith.constant 4 : i32
      %c0_73 = arith.constant 0 : index
      %137 = arith.index_cast %c4_i32 : i32 to index
      %c0_74 = arith.constant 0 : index
      %c0_75 = arith.constant 0 : index
      %c0_76 = arith.constant 0 : index
      %138 = vector.load %arg5[%c0_73, %137, %c0_74, %c0_75, %c0_76] : memref<1x15x16x1x32xf32, #tpu.memory_space<vmem>>, vector<1x1x16x1x32xf32>
      %139 = vector.shape_cast %138 : vector<1x1x16x1x32xf32> to vector<16x1x32xf32>
      %140 = vector.shape_cast %139 : vector<16x1x32xf32> to vector<4x4x1x32xf32>
      %141 = vector.shape_cast %130 : vector<4x1x32xf32> to vector<4x1x1x32xf32>
      %142 = vector.broadcast %141 : vector<4x1x1x32xf32> to vector<4x4x1x32xf32>
      %143 = arith.addf %140, %142 : vector<4x4x1x32xf32>
      %144 = vector.broadcast %1 : f32 to vector<4x4x1x32xf32>
      %145 = arith.mulf %143, %144 : vector<4x4x1x32xf32>
      %cst_77 = arith.constant dense<0xFF800000> : vector<4x1x32xf32>
      %146 = vector.multi_reduction <maximumf>, %145, %cst_77 [0] : vector<4x4x1x32xf32> to vector<4x1x32xf32>
      %147 = vector.shape_cast %146 : vector<4x1x32xf32> to vector<1x4x1x32xf32>
      %148 = vector.broadcast %147 : vector<1x4x1x32xf32> to vector<4x4x1x32xf32>
      %149 = arith.subf %145, %148 : vector<4x4x1x32xf32>
      %150 = math.exp %149 : vector<4x4x1x32xf32>
      %cst_78 = arith.constant dense<0.000000e+00> : vector<4x1x32xf32>
      %151 = vector.multi_reduction <add>, %150, %cst_78 [0] : vector<4x4x1x32xf32> to vector<4x1x32xf32>
      %152 = math.log %151 : vector<4x1x32xf32>
      %153 = arith.addf %146, %152 : vector<4x1x32xf32>
      %154 = vector.broadcast %0 : f32 to vector<4x1x32xf32>
      %155 = arith.mulf %154, %153 : vector<4x1x32xf32>
      %156 = arith.addi %8, %c4_i32 : i32
      %c1_i32_79 = arith.constant 1 : i32
      %157 = arith.addi %156, %c1_i32_79 : i32
      %c0_80 = arith.constant 0 : index
      %158 = arith.index_cast %157 : i32 to index
      %c0_81 = arith.constant 0 : index
      %c0_82 = arith.constant 0 : index
      %c0_83 = arith.constant 0 : index
      %159 = vector.load %arg4[%c0_80, %158, %c0_81, %c0_82, %c0_83] : memref<1x16x4x1x32xf32, #tpu.memory_space<vmem>>, vector<1x1x4x1x32xf32>
      %160 = vector.shape_cast %159 : vector<1x1x4x1x32xf32> to vector<4x1x32xf32>
      %161 = arith.addf %160, %155 : vector<4x1x32xf32>
      %162 = arith.addi %8, %c4_i32 : i32
      %c1_i32_84 = arith.constant 1 : i32
      %163 = arith.addi %162, %c1_i32_84 : i32
      %c0_85 = arith.constant 0 : index
      %164 = arith.index_cast %163 : i32 to index
      %c0_86 = arith.constant 0 : index
      %c0_87 = arith.constant 0 : index
      %c0_88 = arith.constant 0 : index
      %165 = vector.load %arg6[%c0_85, %164, %c0_86, %c0_87, %c0_88] : memref<1x16x4x1x32xf32, #tpu.memory_space<vmem>>, vector<1x1x4x1x32xf32>
      %166 = vector.shape_cast %165 : vector<1x1x4x1x32xf32> to vector<4x1x32xf32>
      %167 = vector.shape_cast %161 : vector<4x1x32xf32> to vector<1x1x4x1x32xf32>
      tpu.vector_store %arg6[%c0_85, %164, %c0_86, %c0_87, %c0_88], %167 {strides = array<i32>} : memref<1x16x4x1x32xf32, #tpu.memory_space<vmem>>, vector<1x1x4x1x32xf32>,
      %c5_i32 = arith.constant 5 : i32
      %c0_89 = arith.constant 0 : index
      %168 = arith.index_cast %c5_i32 : i32 to index
      %c0_90 = arith.constant 0 : index
      %c0_91 = arith.constant 0 : index
      %c0_92 = arith.constant 0 : index
      %169 = vector.load %arg5[%c0_89, %168, %c0_90, %c0_91, %c0_92] : memref<1x15x16x1x32xf32, #tpu.memory_space<vmem>>, vector<1x1x16x1x32xf32>
      %170 = vector.shape_cast %169 : vector<1x1x16x1x32xf32> to vector<16x1x32xf32>
      %171 = vector.shape_cast %170 : vector<16x1x32xf32> to vector<4x4x1x32xf32>
      %172 = vector.shape_cast %161 : vector<4x1x32xf32> to vector<4x1x1x32xf32>
      %173 = vector.broadcast %172 : vector<4x1x1x32xf32> to vector<4x4x1x32xf32>
      %174 = arith.addf %171, %173 : vector<4x4x1x32xf32>
      %175 = vector.broadcast %1 : f32 to vector<4x4x1x32xf32>
      %176 = arith.mulf %174, %175 : vector<4x4x1x32xf32>
      %cst_93 = arith.constant dense<0xFF800000> : vector<4x1x32xf32>
      %177 = vector.multi_reduction <maximumf>, %176, %cst_93 [0] : vector<4x4x1x32xf32> to vector<4x1x32xf32>
      %178 = vector.shape_cast %177 : vector<4x1x32xf32> to vector<1x4x1x32xf32>
      %179 = vector.broadcast %178 : vector<1x4x1x32xf32> to vector<4x4x1x32xf32>
      %180 = arith.subf %176, %179 : vector<4x4x1x32xf32>
      %181 = math.exp %180 : vector<4x4x1x32xf32>
      %cst_94 = arith.constant dense<0.000000e+00> : vector<4x1x32xf32>
      %182 = vector.multi_reduction <add>, %181, %cst_94 [0] : vector<4x4x1x32xf32> to vector<4x1x32xf32>
      %183 = math.log %182 : vector<4x1x32xf32>
      %184 = arith.addf %177, %183 : vector<4x1x32xf32>
      %185 = vector.broadcast %0 : f32 to vector<4x1x32xf32>
      %186 = arith.mulf %185, %184 : vector<4x1x32xf32>
      %187 = arith.addi %8, %c5_i32 : i32
      %c1_i32_95 = arith.constant 1 : i32
      %188 = arith.addi %187, %c1_i32_95 : i32
      %c0_96 = arith.constant 0 : index
      %189 = arith.index_cast %188 : i32 to index
      %c0_97 = arith.constant 0 : index
      %c0_98 = arith.constant 0 : index
      %c0_99 = arith.constant 0 : index
      %190 = vector.load %arg4[%c0_96, %189, %c0_97, %c0_98, %c0_99] : memref<1x16x4x1x32xf32, #tpu.memory_space<vmem>>, vector<1x1x4x1x32xf32>
      %191 = vector.shape_cast %190 : vector<1x1x4x1x32xf32> to vector<4x1x32xf32>
      %192 = arith.addf %191, %186 : vector<4x1x32xf32>
      %193 = arith.addi %8, %c5_i32 : i32
      %c1_i32_100 = arith.constant 1 : i32
      %194 = arith.addi %193, %c1_i32_100 : i32
      %c0_101 = arith.constant 0 : index
      %195 = arith.index_cast %194 : i32 to index
      %c0_102 = arith.constant 0 : index
      %c0_103 = arith.constant 0 : index
      %c0_104 = arith.constant 0 : index
      %196 = vector.load %arg6[%c0_101, %195, %c0_102, %c0_103, %c0_104] : memref<1x16x4x1x32xf32, #tpu.memory_space<vmem>>, vector<1x1x4x1x32xf32>
      %197 = vector.shape_cast %196 : vector<1x1x4x1x32xf32> to vector<4x1x32xf32>
      %198 = vector.shape_cast %192 : vector<4x1x32xf32> to vector<1x1x4x1x32xf32>
      tpu.vector_store %arg6[%c0_101, %195, %c0_102, %c0_103, %c0_104], %198 {strides = array<i32>} : memref<1x16x4x1x32xf32, #tpu.memory_space<vmem>>, vector<1x1x4x1x32xf32>,
      %c6_i32 = arith.constant 6 : i32
      %c0_105 = arith.constant 0 : index
      %199 = arith.index_cast %c6_i32 : i32 to index
      %c0_106 = arith.constant 0 : index
      %c0_107 = arith.constant 0 : index
      %c0_108 = arith.constant 0 : index
      %200 = vector.load %arg5[%c0_105, %199, %c0_106, %c0_107, %c0_108] : memref<1x15x16x1x32xf32, #tpu.memory_space<vmem>>, vector<1x1x16x1x32xf32>
      %201 = vector.shape_cast %200 : vector<1x1x16x1x32xf32> to vector<16x1x32xf32>
      %202 = vector.shape_cast %201 : vector<16x1x32xf32> to vector<4x4x1x32xf32>
      %203 = vector.shape_cast %192 : vector<4x1x32xf32> to vector<4x1x1x32xf32>
      %204 = vector.broadcast %203 : vector<4x1x1x32xf32> to vector<4x4x1x32xf32>
      %205 = arith.addf %202, %204 : vector<4x4x1x32xf32>
      %206 = vector.broadcast %1 : f32 to vector<4x4x1x32xf32>
      %207 = arith.mulf %205, %206 : vector<4x4x1x32xf32>
      %cst_109 = arith.constant dense<0xFF800000> : vector<4x1x32xf32>
      %208 = vector.multi_reduction <maximumf>, %207, %cst_109 [0] : vector<4x4x1x32xf32> to vector<4x1x32xf32>
      %209 = vector.shape_cast %208 : vector<4x1x32xf32> to vector<1x4x1x32xf32>
      %210 = vector.broadcast %209 : vector<1x4x1x32xf32> to vector<4x4x1x32xf32>
      %211 = arith.subf %207, %210 : vector<4x4x1x32xf32>
      %212 = math.exp %211 : vector<4x4x1x32xf32>
      %cst_110 = arith.constant dense<0.000000e+00> : vector<4x1x32xf32>
      %213 = vector.multi_reduction <add>, %212, %cst_110 [0] : vector<4x4x1x32xf32> to vector<4x1x32xf32>
      %214 = math.log %213 : vector<4x1x32xf32>
      %215 = arith.addf %208, %214 : vector<4x1x32xf32>
      %216 = vector.broadcast %0 : f32 to vector<4x1x32xf32>
      %217 = arith.mulf %216, %215 : vector<4x1x32xf32>
      %218 = arith.addi %8, %c6_i32 : i32
      %c1_i32_111 = arith.constant 1 : i32
      %219 = arith.addi %218, %c1_i32_111 : i32
      %c0_112 = arith.constant 0 : index
      %220 = arith.index_cast %219 : i32 to index
      %c0_113 = arith.constant 0 : index
      %c0_114 = arith.constant 0 : index
      %c0_115 = arith.constant 0 : index
      %221 = vector.load %arg4[%c0_112, %220, %c0_113, %c0_114, %c0_115] : memref<1x16x4x1x32xf32, #tpu.memory_space<vmem>>, vector<1x1x4x1x32xf32>
      %222 = vector.shape_cast %221 : vector<1x1x4x1x32xf32> to vector<4x1x32xf32>
      %223 = arith.addf %222, %217 : vector<4x1x32xf32>
      %224 = arith.addi %8, %c6_i32 : i32
      %c1_i32_116 = arith.constant 1 : i32
      %225 = arith.addi %224, %c1_i32_116 : i32
      %c0_117 = arith.constant 0 : index
      %226 = arith.index_cast %225 : i32 to index
      %c0_118 = arith.constant 0 : index
      %c0_119 = arith.constant 0 : index
      %c0_120 = arith.constant 0 : index
      %227 = vector.load %arg6[%c0_117, %226, %c0_118, %c0_119, %c0_120] : memref<1x16x4x1x32xf32, #tpu.memory_space<vmem>>, vector<1x1x4x1x32xf32>
      %228 = vector.shape_cast %227 : vector<1x1x4x1x32xf32> to vector<4x1x32xf32>
      %229 = vector.shape_cast %223 : vector<4x1x32xf32> to vector<1x1x4x1x32xf32>
      tpu.vector_store %arg6[%c0_117, %226, %c0_118, %c0_119, %c0_120], %229 {strides = array<i32>} : memref<1x16x4x1x32xf32, #tpu.memory_space<vmem>>, vector<1x1x4x1x32xf32>,
      %c7_i32 = arith.constant 7 : i32
      %c0_121 = arith.constant 0 : index
      %230 = arith.index_cast %c7_i32 : i32 to index
      %c0_122 = arith.constant 0 : index
      %c0_123 = arith.constant 0 : index
      %c0_124 = arith.constant 0 : index
      %231 = vector.load %arg5[%c0_121, %230, %c0_122, %c0_123, %c0_124] : memref<1x15x16x1x32xf32, #tpu.memory_space<vmem>>, vector<1x1x16x1x32xf32>
      %232 = vector.shape_cast %231 : vector<1x1x16x1x32xf32> to vector<16x1x32xf32>
      %233 = vector.shape_cast %232 : vector<16x1x32xf32> to vector<4x4x1x32xf32>
      %234 = vector.shape_cast %223 : vector<4x1x32xf32> to vector<4x1x1x32xf32>
      %235 = vector.broadcast %234 : vector<4x1x1x32xf32> to vector<4x4x1x32xf32>
      %236 = arith.addf %233, %235 : vector<4x4x1x32xf32>
      %237 = vector.broadcast %1 : f32 to vector<4x4x1x32xf32>
      %238 = arith.mulf %236, %237 : vector<4x4x1x32xf32>
      %cst_125 = arith.constant dense<0xFF800000> : vector<4x1x32xf32>
      %239 = vector.multi_reduction <maximumf>, %238, %cst_125 [0] : vector<4x4x1x32xf32> to vector<4x1x32xf32>
      %240 = vector.shape_cast %239 : vector<4x1x32xf32> to vector<1x4x1x32xf32>
      %241 = vector.broadcast %240 : vector<1x4x1x32xf32> to vector<4x4x1x32xf32>
      %242 = arith.subf %238, %241 : vector<4x4x1x32xf32>
      %243 = math.exp %242 : vector<4x4x1x32xf32>
      %cst_126 = arith.constant dense<0.000000e+00> : vector<4x1x32xf32>
      %244 = vector.multi_reduction <add>, %243, %cst_126 [0] : vector<4x4x1x32xf32> to vector<4x1x32xf32>
      %245 = math.log %244 : vector<4x1x32xf32>
      %246 = arith.addf %239, %245 : vector<4x1x32xf32>
      %247 = vector.broadcast %0 : f32 to vector<4x1x32xf32>
      %248 = arith.mulf %247, %246 : vector<4x1x32xf32>
      %249 = arith.addi %8, %c7_i32 : i32
      %c1_i32_127 = arith.constant 1 : i32
      %250 = arith.addi %249, %c1_i32_127 : i32
      %c0_128 = arith.constant 0 : index
      %251 = arith.index_cast %250 : i32 to index
      %c0_129 = arith.constant 0 : index
      %c0_130 = arith.constant 0 : index
      %c0_131 = arith.constant 0 : index
      %252 = vector.load %arg4[%c0_128, %251, %c0_129, %c0_130, %c0_131] : memref<1x16x4x1x32xf32, #tpu.memory_space<vmem>>, vector<1x1x4x1x32xf32>
      %253 = vector.shape_cast %252 : vector<1x1x4x1x32xf32> to vector<4x1x32xf32>
      %254 = arith.addf %253, %248 : vector<4x1x32xf32>
      %255 = arith.addi %8, %c7_i32 : i32
      %c1_i32_132 = arith.constant 1 : i32
      %256 = arith.addi %255, %c1_i32_132 : i32
      %c0_133 = arith.constant 0 : index
      %257 = arith.index_cast %256 : i32 to index
      %c0_134 = arith.constant 0 : index
      %c0_135 = arith.constant 0 : index
      %c0_136 = arith.constant 0 : index
      %258 = vector.load %arg6[%c0_133, %257, %c0_134, %c0_135, %c0_136] : memref<1x16x4x1x32xf32, #tpu.memory_space<vmem>>, vector<1x1x4x1x32xf32>
      %259 = vector.shape_cast %258 : vector<1x1x4x1x32xf32> to vector<4x1x32xf32>
      %260 = vector.shape_cast %254 : vector<4x1x32xf32> to vector<1x1x4x1x32xf32>
      tpu.vector_store %arg6[%c0_133, %257, %c0_134, %c0_135, %c0_136], %260 {strides = array<i32>} : memref<1x16x4x1x32xf32, #tpu.memory_space<vmem>>, vector<1x1x4x1x32xf32>,
      %c8_i32 = arith.constant 8 : i32
      %c0_137 = arith.constant 0 : index
      %261 = arith.index_cast %c8_i32 : i32 to index
      %c0_138 = arith.constant 0 : index
      %c0_139 = arith.constant 0 : index
      %c0_140 = arith.constant 0 : index
      %262 = vector.load %arg5[%c0_137, %261, %c0_138, %c0_139, %c0_140] : memref<1x15x16x1x32xf32, #tpu.memory_space<vmem>>, vector<1x1x16x1x32xf32>
      %263 = vector.shape_cast %262 : vector<1x1x16x1x32xf32> to vector<16x1x32xf32>
      %264 = vector.shape_cast %263 : vector<16x1x32xf32> to vector<4x4x1x32xf32>
      %265 = vector.shape_cast %254 : vector<4x1x32xf32> to vector<4x1x1x32xf32>
      %266 = vector.broadcast %265 : vector<4x1x1x32xf32> to vector<4x4x1x32xf32>
      %267 = arith.addf %264, %266 : vector<4x4x1x32xf32>
      %268 = vector.broadcast %1 : f32 to vector<4x4x1x32xf32>
      %269 = arith.mulf %267, %268 : vector<4x4x1x32xf32>
      %cst_141 = arith.constant dense<0xFF800000> : vector<4x1x32xf32>
      %270 = vector.multi_reduction <maximumf>, %269, %cst_141 [0] : vector<4x4x1x32xf32> to vector<4x1x32xf32>
      %271 = vector.shape_cast %270 : vector<4x1x32xf32> to vector<1x4x1x32xf32>
      %272 = vector.broadcast %271 : vector<1x4x1x32xf32> to vector<4x4x1x32xf32>
      %273 = arith.subf %269, %272 : vector<4x4x1x32xf32>
      %274 = math.exp %273 : vector<4x4x1x32xf32>
      %cst_142 = arith.constant dense<0.000000e+00> : vector<4x1x32xf32>
      %275 = vector.multi_reduction <add>, %274, %cst_142 [0] : vector<4x4x1x32xf32> to vector<4x1x32xf32>
      %276 = math.log %275 : vector<4x1x32xf32>
      %277 = arith.addf %270, %276 : vector<4x1x32xf32>
      %278 = vector.broadcast %0 : f32 to vector<4x1x32xf32>
      %279 = arith.mulf %278, %277 : vector<4x1x32xf32>
      %280 = arith.addi %8, %c8_i32 : i32
      %c1_i32_143 = arith.constant 1 : i32
      %281 = arith.addi %280, %c1_i32_143 : i32
      %c0_144 = arith.constant 0 : index
      %282 = arith.index_cast %281 : i32 to index
      %c0_145 = arith.constant 0 : index
      %c0_146 = arith.constant 0 : index
      %c0_147 = arith.constant 0 : index
      %283 = vector.load %arg4[%c0_144, %282, %c0_145, %c0_146, %c0_147] : memref<1x16x4x1x32xf32, #tpu.memory_space<vmem>>, vector<1x1x4x1x32xf32>
      %284 = vector.shape_cast %283 : vector<1x1x4x1x32xf32> to vector<4x1x32xf32>
      %285 = arith.addf %284, %279 : vector<4x1x32xf32>
      %286 = arith.addi %8, %c8_i32 : i32
      %c1_i32_148 = arith.constant 1 : i32
      %287 = arith.addi %286, %c1_i32_148 : i32
      %c0_149 = arith.constant 0 : index
      %288 = arith.index_cast %287 : i32 to index
      %c0_150 = arith.constant 0 : index
      %c0_151 = arith.constant 0 : index
      %c0_152 = arith.constant 0 : index
      %289 = vector.load %arg6[%c0_149, %288, %c0_150, %c0_151, %c0_152] : memref<1x16x4x1x32xf32, #tpu.memory_space<vmem>>, vector<1x1x4x1x32xf32>
      %290 = vector.shape_cast %289 : vector<1x1x4x1x32xf32> to vector<4x1x32xf32>
      %291 = vector.shape_cast %285 : vector<4x1x32xf32> to vector<1x1x4x1x32xf32>
      tpu.vector_store %arg6[%c0_149, %288, %c0_150, %c0_151, %c0_152], %291 {strides = array<i32>} : memref<1x16x4x1x32xf32, #tpu.memory_space<vmem>>, vector<1x1x4x1x32xf32>,
      %c9_i32 = arith.constant 9 : i32
      %c0_153 = arith.constant 0 : index
      %292 = arith.index_cast %c9_i32 : i32 to index
      %c0_154 = arith.constant 0 : index
      %c0_155 = arith.constant 0 : index
      %c0_156 = arith.constant 0 : index
      %293 = vector.load %arg5[%c0_153, %292, %c0_154, %c0_155, %c0_156] : memref<1x15x16x1x32xf32, #tpu.memory_space<vmem>>, vector<1x1x16x1x32xf32>
      %294 = vector.shape_cast %293 : vector<1x1x16x1x32xf32> to vector<16x1x32xf32>
      %295 = vector.shape_cast %294 : vector<16x1x32xf32> to vector<4x4x1x32xf32>
      %296 = vector.shape_cast %285 : vector<4x1x32xf32> to vector<4x1x1x32xf32>
      %297 = vector.broadcast %296 : vector<4x1x1x32xf32> to vector<4x4x1x32xf32>
      %298 = arith.addf %295, %297 : vector<4x4x1x32xf32>
      %299 = vector.broadcast %1 : f32 to vector<4x4x1x32xf32>
      %300 = arith.mulf %298, %299 : vector<4x4x1x32xf32>
      %cst_157 = arith.constant dense<0xFF800000> : vector<4x1x32xf32>
      %301 = vector.multi_reduction <maximumf>, %300, %cst_157 [0] : vector<4x4x1x32xf32> to vector<4x1x32xf32>
      %302 = vector.shape_cast %301 : vector<4x1x32xf32> to vector<1x4x1x32xf32>
      %303 = vector.broadcast %302 : vector<1x4x1x32xf32> to vector<4x4x1x32xf32>
      %304 = arith.subf %300, %303 : vector<4x4x1x32xf32>
      %305 = math.exp %304 : vector<4x4x1x32xf32>
      %cst_158 = arith.constant dense<0.000000e+00> : vector<4x1x32xf32>
      %306 = vector.multi_reduction <add>, %305, %cst_158 [0] : vector<4x4x1x32xf32> to vector<4x1x32xf32>
      %307 = math.log %306 : vector<4x1x32xf32>
      %308 = arith.addf %301, %307 : vector<4x1x32xf32>
      %309 = vector.broadcast %0 : f32 to vector<4x1x32xf32>
      %310 = arith.mulf %309, %308 : vector<4x1x32xf32>
      %311 = arith.addi %8, %c9_i32 : i32
      %c1_i32_159 = arith.constant 1 : i32
      %312 = arith.addi %311, %c1_i32_159 : i32
      %c0_160 = arith.constant 0 : index
      %313 = arith.index_cast %312 : i32 to index
      %c0_161 = arith.constant 0 : index
      %c0_162 = arith.constant 0 : index
      %c0_163 = arith.constant 0 : index
      %314 = vector.load %arg4[%c0_160, %313, %c0_161, %c0_162, %c0_163] : memref<1x16x4x1x32xf32, #tpu.memory_space<vmem>>, vector<1x1x4x1x32xf32>
      %315 = vector.shape_cast %314 : vector<1x1x4x1x32xf32> to vector<4x1x32xf32>
      %316 = arith.addf %315, %310 : vector<4x1x32xf32>
      %317 = arith.addi %8, %c9_i32 : i32
      %c1_i32_164 = arith.constant 1 : i32
      %318 = arith.addi %317, %c1_i32_164 : i32
      %c0_165 = arith.constant 0 : index
      %319 = arith.index_cast %318 : i32 to index
      %c0_166 = arith.constant 0 : index
      %c0_167 = arith.constant 0 : index
      %c0_168 = arith.constant 0 : index
      %320 = vector.load %arg6[%c0_165, %319, %c0_166, %c0_167, %c0_168] : memref<1x16x4x1x32xf32, #tpu.memory_space<vmem>>, vector<1x1x4x1x32xf32>
      %321 = vector.shape_cast %320 : vector<1x1x4x1x32xf32> to vector<4x1x32xf32>
      %322 = vector.shape_cast %316 : vector<4x1x32xf32> to vector<1x1x4x1x32xf32>
      tpu.vector_store %arg6[%c0_165, %319, %c0_166, %c0_167, %c0_168], %322 {strides = array<i32>} : memref<1x16x4x1x32xf32, #tpu.memory_space<vmem>>, vector<1x1x4x1x32xf32>,
      %c10_i32 = arith.constant 10 : i32
      %c0_169 = arith.constant 0 : index
      %323 = arith.index_cast %c10_i32 : i32 to index
      %c0_170 = arith.constant 0 : index
      %c0_171 = arith.constant 0 : index
      %c0_172 = arith.constant 0 : index
      %324 = vector.load %arg5[%c0_169, %323, %c0_170, %c0_171, %c0_172] : memref<1x15x16x1x32xf32, #tpu.memory_space<vmem>>, vector<1x1x16x1x32xf32>
      %325 = vector.shape_cast %324 : vector<1x1x16x1x32xf32> to vector<16x1x32xf32>
      %326 = vector.shape_cast %325 : vector<16x1x32xf32> to vector<4x4x1x32xf32>
      %327 = vector.shape_cast %316 : vector<4x1x32xf32> to vector<4x1x1x32xf32>
      %328 = vector.broadcast %327 : vector<4x1x1x32xf32> to vector<4x4x1x32xf32>
      %329 = arith.addf %326, %328 : vector<4x4x1x32xf32>
      %330 = vector.broadcast %1 : f32 to vector<4x4x1x32xf32>
      %331 = arith.mulf %329, %330 : vector<4x4x1x32xf32>
      %cst_173 = arith.constant dense<0xFF800000> : vector<4x1x32xf32>
      %332 = vector.multi_reduction <maximumf>, %331, %cst_173 [0] : vector<4x4x1x32xf32> to vector<4x1x32xf32>
      %333 = vector.shape_cast %332 : vector<4x1x32xf32> to vector<1x4x1x32xf32>
      %334 = vector.broadcast %333 : vector<1x4x1x32xf32> to vector<4x4x1x32xf32>
      %335 = arith.subf %331, %334 : vector<4x4x1x32xf32>
      %336 = math.exp %335 : vector<4x4x1x32xf32>
      %cst_174 = arith.constant dense<0.000000e+00> : vector<4x1x32xf32>
      %337 = vector.multi_reduction <add>, %336, %cst_174 [0] : vector<4x4x1x32xf32> to vector<4x1x32xf32>
      %338 = math.log %337 : vector<4x1x32xf32>
      %339 = arith.addf %332, %338 : vector<4x1x32xf32>
      %340 = vector.broadcast %0 : f32 to vector<4x1x32xf32>
      %341 = arith.mulf %340, %339 : vector<4x1x32xf32>
      %342 = arith.addi %8, %c10_i32 : i32
      %c1_i32_175 = arith.constant 1 : i32
      %343 = arith.addi %342, %c1_i32_175 : i32
      %c0_176 = arith.constant 0 : index
      %344 = arith.index_cast %343 : i32 to index
      %c0_177 = arith.constant 0 : index
      %c0_178 = arith.constant 0 : index
      %c0_179 = arith.constant 0 : index
      %345 = vector.load %arg4[%c0_176, %344, %c0_177, %c0_178, %c0_179] : memref<1x16x4x1x32xf32, #tpu.memory_space<vmem>>, vector<1x1x4x1x32xf32>
      %346 = vector.shape_cast %345 : vector<1x1x4x1x32xf32> to vector<4x1x32xf32>
      %347 = arith.addf %346, %341 : vector<4x1x32xf32>
      %348 = arith.addi %8, %c10_i32 : i32
      %c1_i32_180 = arith.constant 1 : i32
      %349 = arith.addi %348, %c1_i32_180 : i32
      %c0_181 = arith.constant 0 : index
      %350 = arith.index_cast %349 : i32 to index
      %c0_182 = arith.constant 0 : index
      %c0_183 = arith.constant 0 : index
      %c0_184 = arith.constant 0 : index
      %351 = vector.load %arg6[%c0_181, %350, %c0_182, %c0_183, %c0_184] : memref<1x16x4x1x32xf32, #tpu.memory_space<vmem>>, vector<1x1x4x1x32xf32>
      %352 = vector.shape_cast %351 : vector<1x1x4x1x32xf32> to vector<4x1x32xf32>
      %353 = vector.shape_cast %347 : vector<4x1x32xf32> to vector<1x1x4x1x32xf32>
      tpu.vector_store %arg6[%c0_181, %350, %c0_182, %c0_183, %c0_184], %353 {strides = array<i32>} : memref<1x16x4x1x32xf32, #tpu.memory_space<vmem>>, vector<1x1x4x1x32xf32>,
      %c11_i32 = arith.constant 11 : i32
      %c0_185 = arith.constant 0 : index
      %354 = arith.index_cast %c11_i32 : i32 to index
      %c0_186 = arith.constant 0 : index
      %c0_187 = arith.constant 0 : index
      %c0_188 = arith.constant 0 : index
      %355 = vector.load %arg5[%c0_185, %354, %c0_186, %c0_187, %c0_188] : memref<1x15x16x1x32xf32, #tpu.memory_space<vmem>>, vector<1x1x16x1x32xf32>
      %356 = vector.shape_cast %355 : vector<1x1x16x1x32xf32> to vector<16x1x32xf32>
      %357 = vector.shape_cast %356 : vector<16x1x32xf32> to vector<4x4x1x32xf32>
      %358 = vector.shape_cast %347 : vector<4x1x32xf32> to vector<4x1x1x32xf32>
      %359 = vector.broadcast %358 : vector<4x1x1x32xf32> to vector<4x4x1x32xf32>
      %360 = arith.addf %357, %359 : vector<4x4x1x32xf32>
      %361 = vector.broadcast %1 : f32 to vector<4x4x1x32xf32>
      %362 = arith.mulf %360, %361 : vector<4x4x1x32xf32>
      %cst_189 = arith.constant dense<0xFF800000> : vector<4x1x32xf32>
      %363 = vector.multi_reduction <maximumf>, %362, %cst_189 [0] : vector<4x4x1x32xf32> to vector<4x1x32xf32>
      %364 = vector.shape_cast %363 : vector<4x1x32xf32> to vector<1x4x1x32xf32>
      %365 = vector.broadcast %364 : vector<1x4x1x32xf32> to vector<4x4x1x32xf32>
      %366 = arith.subf %362, %365 : vector<4x4x1x32xf32>
      %367 = math.exp %366 : vector<4x4x1x32xf32>
      %cst_190 = arith.constant dense<0.000000e+00> : vector<4x1x32xf32>
      %368 = vector.multi_reduction <add>, %367, %cst_190 [0] : vector<4x4x1x32xf32> to vector<4x1x32xf32>
      %369 = math.log %368 : vector<4x1x32xf32>
      %370 = arith.addf %363, %369 : vector<4x1x32xf32>
      %371 = vector.broadcast %0 : f32 to vector<4x1x32xf32>
      %372 = arith.mulf %371, %370 : vector<4x1x32xf32>
      %373 = arith.addi %8, %c11_i32 : i32
      %c1_i32_191 = arith.constant 1 : i32
      %374 = arith.addi %373, %c1_i32_191 : i32
      %c0_192 = arith.constant 0 : index
      %375 = arith.index_cast %374 : i32 to index
      %c0_193 = arith.constant 0 : index
      %c0_194 = arith.constant 0 : index
      %c0_195 = arith.constant 0 : index
      %376 = vector.load %arg4[%c0_192, %375, %c0_193, %c0_194, %c0_195] : memref<1x16x4x1x32xf32, #tpu.memory_space<vmem>>, vector<1x1x4x1x32xf32>
      %377 = vector.shape_cast %376 : vector<1x1x4x1x32xf32> to vector<4x1x32xf32>
      %378 = arith.addf %377, %372 : vector<4x1x32xf32>
      %379 = arith.addi %8, %c11_i32 : i32
      %c1_i32_196 = arith.constant 1 : i32
      %380 = arith.addi %379, %c1_i32_196 : i32
      %c0_197 = arith.constant 0 : index
      %381 = arith.index_cast %380 : i32 to index
      %c0_198 = arith.constant 0 : index
      %c0_199 = arith.constant 0 : index
      %c0_200 = arith.constant 0 : index
      %382 = vector.load %arg6[%c0_197, %381, %c0_198, %c0_199, %c0_200] : memref<1x16x4x1x32xf32, #tpu.memory_space<vmem>>, vector<1x1x4x1x32xf32>
      %383 = vector.shape_cast %382 : vector<1x1x4x1x32xf32> to vector<4x1x32xf32>
      %384 = vector.shape_cast %378 : vector<4x1x32xf32> to vector<1x1x4x1x32xf32>
      tpu.vector_store %arg6[%c0_197, %381, %c0_198, %c0_199, %c0_200], %384 {strides = array<i32>} : memref<1x16x4x1x32xf32, #tpu.memory_space<vmem>>, vector<1x1x4x1x32xf32>,
      %c12_i32 = arith.constant 12 : i32
      %c0_201 = arith.constant 0 : index
      %385 = arith.index_cast %c12_i32 : i32 to index
      %c0_202 = arith.constant 0 : index
      %c0_203 = arith.constant 0 : index
      %c0_204 = arith.constant 0 : index
      %386 = vector.load %arg5[%c0_201, %385, %c0_202, %c0_203, %c0_204] : memref<1x15x16x1x32xf32, #tpu.memory_space<vmem>>, vector<1x1x16x1x32xf32>
      %387 = vector.shape_cast %386 : vector<1x1x16x1x32xf32> to vector<16x1x32xf32>
      %388 = vector.shape_cast %387 : vector<16x1x32xf32> to vector<4x4x1x32xf32>
      %389 = vector.shape_cast %378 : vector<4x1x32xf32> to vector<4x1x1x32xf32>
      %390 = vector.broadcast %389 : vector<4x1x1x32xf32> to vector<4x4x1x32xf32>
      %391 = arith.addf %388, %390 : vector<4x4x1x32xf32>
      %392 = vector.broadcast %1 : f32 to vector<4x4x1x32xf32>
      %393 = arith.mulf %391, %392 : vector<4x4x1x32xf32>
      %cst_205 = arith.constant dense<0xFF800000> : vector<4x1x32xf32>
      %394 = vector.multi_reduction <maximumf>, %393, %cst_205 [0] : vector<4x4x1x32xf32> to vector<4x1x32xf32>
      %395 = vector.shape_cast %394 : vector<4x1x32xf32> to vector<1x4x1x32xf32>
      %396 = vector.broadcast %395 : vector<1x4x1x32xf32> to vector<4x4x1x32xf32>
      %397 = arith.subf %393, %396 : vector<4x4x1x32xf32>
      %398 = math.exp %397 : vector<4x4x1x32xf32>
      %cst_206 = arith.constant dense<0.000000e+00> : vector<4x1x32xf32>
      %399 = vector.multi_reduction <add>, %398, %cst_206 [0] : vector<4x4x1x32xf32> to vector<4x1x32xf32>
      %400 = math.log %399 : vector<4x1x32xf32>
      %401 = arith.addf %394, %400 : vector<4x1x32xf32>
      %402 = vector.broadcast %0 : f32 to vector<4x1x32xf32>
      %403 = arith.mulf %402, %401 : vector<4x1x32xf32>
      %404 = arith.addi %8, %c12_i32 : i32
      %c1_i32_207 = arith.constant 1 : i32
      %405 = arith.addi %404, %c1_i32_207 : i32
      %c0_208 = arith.constant 0 : index
      %406 = arith.index_cast %405 : i32 to index
      %c0_209 = arith.constant 0 : index
      %c0_210 = arith.constant 0 : index
      %c0_211 = arith.constant 0 : index
      %407 = vector.load %arg4[%c0_208, %406, %c0_209, %c0_210, %c0_211] : memref<1x16x4x1x32xf32, #tpu.memory_space<vmem>>, vector<1x1x4x1x32xf32>
      %408 = vector.shape_cast %407 : vector<1x1x4x1x32xf32> to vector<4x1x32xf32>
      %409 = arith.addf %408, %403 : vector<4x1x32xf32>
      %410 = arith.addi %8, %c12_i32 : i32
      %c1_i32_212 = arith.constant 1 : i32
      %411 = arith.addi %410, %c1_i32_212 : i32
      %c0_213 = arith.constant 0 : index
      %412 = arith.index_cast %411 : i32 to index
      %c0_214 = arith.constant 0 : index
      %c0_215 = arith.constant 0 : index
      %c0_216 = arith.constant 0 : index
      %413 = vector.load %arg6[%c0_213, %412, %c0_214, %c0_215, %c0_216] : memref<1x16x4x1x32xf32, #tpu.memory_space<vmem>>, vector<1x1x4x1x32xf32>
      %414 = vector.shape_cast %413 : vector<1x1x4x1x32xf32> to vector<4x1x32xf32>
      %415 = vector.shape_cast %409 : vector<4x1x32xf32> to vector<1x1x4x1x32xf32>
      tpu.vector_store %arg6[%c0_213, %412, %c0_214, %c0_215, %c0_216], %415 {strides = array<i32>} : memref<1x16x4x1x32xf32, #tpu.memory_space<vmem>>, vector<1x1x4x1x32xf32>,
      %c13_i32 = arith.constant 13 : i32
      %c0_217 = arith.constant 0 : index
      %416 = arith.index_cast %c13_i32 : i32 to index
      %c0_218 = arith.constant 0 : index
      %c0_219 = arith.constant 0 : index
      %c0_220 = arith.constant 0 : index
      %417 = vector.load %arg5[%c0_217, %416, %c0_218, %c0_219, %c0_220] : memref<1x15x16x1x32xf32, #tpu.memory_space<vmem>>, vector<1x1x16x1x32xf32>
      %418 = vector.shape_cast %417 : vector<1x1x16x1x32xf32> to vector<16x1x32xf32>
      %419 = vector.shape_cast %418 : vector<16x1x32xf32> to vector<4x4x1x32xf32>
      %420 = vector.shape_cast %409 : vector<4x1x32xf32> to vector<4x1x1x32xf32>
      %421 = vector.broadcast %420 : vector<4x1x1x32xf32> to vector<4x4x1x32xf32>
      %422 = arith.addf %419, %421 : vector<4x4x1x32xf32>
      %423 = vector.broadcast %1 : f32 to vector<4x4x1x32xf32>
      %424 = arith.mulf %422, %423 : vector<4x4x1x32xf32>
      %cst_221 = arith.constant dense<0xFF800000> : vector<4x1x32xf32>
      %425 = vector.multi_reduction <maximumf>, %424, %cst_221 [0] : vector<4x4x1x32xf32> to vector<4x1x32xf32>
      %426 = vector.shape_cast %425 : vector<4x1x32xf32> to vector<1x4x1x32xf32>
      %427 = vector.broadcast %426 : vector<1x4x1x32xf32> to vector<4x4x1x32xf32>
      %428 = arith.subf %424, %427 : vector<4x4x1x32xf32>
      %429 = math.exp %428 : vector<4x4x1x32xf32>
      %cst_222 = arith.constant dense<0.000000e+00> : vector<4x1x32xf32>
      %430 = vector.multi_reduction <add>, %429, %cst_222 [0] : vector<4x4x1x32xf32> to vector<4x1x32xf32>
      %431 = math.log %430 : vector<4x1x32xf32>
      %432 = arith.addf %425, %431 : vector<4x1x32xf32>
      %433 = vector.broadcast %0 : f32 to vector<4x1x32xf32>
      %434 = arith.mulf %433, %432 : vector<4x1x32xf32>
      %435 = arith.addi %8, %c13_i32 : i32
      %c1_i32_223 = arith.constant 1 : i32
      %436 = arith.addi %435, %c1_i32_223 : i32
      %c0_224 = arith.constant 0 : index
      %437 = arith.index_cast %436 : i32 to index
      %c0_225 = arith.constant 0 : index
      %c0_226 = arith.constant 0 : index
      %c0_227 = arith.constant 0 : index
      %438 = vector.load %arg4[%c0_224, %437, %c0_225, %c0_226, %c0_227] : memref<1x16x4x1x32xf32, #tpu.memory_space<vmem>>, vector<1x1x4x1x32xf32>
      %439 = vector.shape_cast %438 : vector<1x1x4x1x32xf32> to vector<4x1x32xf32>
      %440 = arith.addf %439, %434 : vector<4x1x32xf32>
      %441 = arith.addi %8, %c13_i32 : i32
      %c1_i32_228 = arith.constant 1 : i32
      %442 = arith.addi %441, %c1_i32_228 : i32
      %c0_229 = arith.constant 0 : index
      %443 = arith.index_cast %442 : i32 to index
      %c0_230 = arith.constant 0 : index
      %c0_231 = arith.constant 0 : index
      %c0_232 = arith.constant 0 : index
      %444 = vector.load %arg6[%c0_229, %443, %c0_230, %c0_231, %c0_232] : memref<1x16x4x1x32xf32, #tpu.memory_space<vmem>>, vector<1x1x4x1x32xf32>
      %445 = vector.shape_cast %444 : vector<1x1x4x1x32xf32> to vector<4x1x32xf32>
      %446 = vector.shape_cast %440 : vector<4x1x32xf32> to vector<1x1x4x1x32xf32>
      tpu.vector_store %arg6[%c0_229, %443, %c0_230, %c0_231, %c0_232], %446 {strides = array<i32>} : memref<1x16x4x1x32xf32, #tpu.memory_space<vmem>>, vector<1x1x4x1x32xf32>,
      %c14_i32 = arith.constant 14 : i32
      %c0_233 = arith.constant 0 : index
      %447 = arith.index_cast %c14_i32 : i32 to index
      %c0_234 = arith.constant 0 : index
      %c0_235 = arith.constant 0 : index
      %c0_236 = arith.constant 0 : index
      %448 = vector.load %arg5[%c0_233, %447, %c0_234, %c0_235, %c0_236] : memref<1x15x16x1x32xf32, #tpu.memory_space<vmem>>, vector<1x1x16x1x32xf32>
      %449 = vector.shape_cast %448 : vector<1x1x16x1x32xf32> to vector<16x1x32xf32>
      %450 = vector.shape_cast %449 : vector<16x1x32xf32> to vector<4x4x1x32xf32>
      %451 = vector.shape_cast %440 : vector<4x1x32xf32> to vector<4x1x1x32xf32>
      %452 = vector.broadcast %451 : vector<4x1x1x32xf32> to vector<4x4x1x32xf32>
      %453 = arith.addf %450, %452 : vector<4x4x1x32xf32>
      %454 = vector.broadcast %1 : f32 to vector<4x4x1x32xf32>
      %455 = arith.mulf %453, %454 : vector<4x4x1x32xf32>
      %cst_237 = arith.constant dense<0xFF800000> : vector<4x1x32xf32>
      %456 = vector.multi_reduction <maximumf>, %455, %cst_237 [0] : vector<4x4x1x32xf32> to vector<4x1x32xf32>
      %457 = vector.shape_cast %456 : vector<4x1x32xf32> to vector<1x4x1x32xf32>
      %458 = vector.broadcast %457 : vector<1x4x1x32xf32> to vector<4x4x1x32xf32>
      %459 = arith.subf %455, %458 : vector<4x4x1x32xf32>
      %460 = math.exp %459 : vector<4x4x1x32xf32>
      %cst_238 = arith.constant dense<0.000000e+00> : vector<4x1x32xf32>
      %461 = vector.multi_reduction <add>, %460, %cst_238 [0] : vector<4x4x1x32xf32> to vector<4x1x32xf32>
      %462 = math.log %461 : vector<4x1x32xf32>
      %463 = arith.addf %456, %462 : vector<4x1x32xf32>
      %464 = vector.broadcast %0 : f32 to vector<4x1x32xf32>
      %465 = arith.mulf %464, %463 : vector<4x1x32xf32>
      %466 = arith.addi %8, %c14_i32 : i32
      %c1_i32_239 = arith.constant 1 : i32
      %467 = arith.addi %466, %c1_i32_239 : i32
      %c0_240 = arith.constant 0 : index
      %468 = arith.index_cast %467 : i32 to index
      %c0_241 = arith.constant 0 : index
      %c0_242 = arith.constant 0 : index
      %c0_243 = arith.constant 0 : index
      %469 = vector.load %arg4[%c0_240, %468, %c0_241, %c0_242, %c0_243] : memref<1x16x4x1x32xf32, #tpu.memory_space<vmem>>, vector<1x1x4x1x32xf32>
      %470 = vector.shape_cast %469 : vector<1x1x4x1x32xf32> to vector<4x1x32xf32>
      %471 = arith.addf %470, %465 : vector<4x1x32xf32>
      %472 = arith.addi %8, %c14_i32 : i32
      %c1_i32_244 = arith.constant 1 : i32
      %473 = arith.addi %472, %c1_i32_244 : i32
      %c0_245 = arith.constant 0 : index
      %474 = arith.index_cast %473 : i32 to index
      %c0_246 = arith.constant 0 : index
      %c0_247 = arith.constant 0 : index
      %c0_248 = arith.constant 0 : index
      %475 = vector.load %arg6[%c0_245, %474, %c0_246, %c0_247, %c0_248] : memref<1x16x4x1x32xf32, #tpu.memory_space<vmem>>, vector<1x1x4x1x32xf32>
      %476 = vector.shape_cast %475 : vector<1x1x4x1x32xf32> to vector<4x1x32xf32>
      %477 = vector.shape_cast %471 : vector<4x1x32xf32> to vector<1x1x4x1x32xf32>
      tpu.vector_store %arg6[%c0_245, %474, %c0_246, %c0_247, %c0_248], %477 {strides = array<i32>} : memref<1x16x4x1x32xf32, #tpu.memory_space<vmem>>, vector<1x1x4x1x32xf32>,
      %c15_i32_249 = arith.constant 15 : i32
      %c0_250 = arith.constant 0 : index
      %c0_251 = arith.constant 0 : index
      %c0_252 = arith.constant 0 : index
      %478 = vector.load %arg7[%c0_250, %c0_251, %c0_252] : memref<4x1x32xf32, #tpu.memory_space<vmem>>, vector<4x1x32xf32>
      tpu.vector_store %arg7[%c0_250, %c0_251, %c0_252], %471 {strides = array<i32>} : memref<4x1x32xf32, #tpu.memory_space<vmem>>, vector<4x1x32xf32>,
    } else {
    }
    %c1_i32 = arith.constant 1 : i32
    %5 = arith.cmpi eq, %arg1, %c1_i32 : i32
    %6 = arith.extui %5 : i1 to i32
    %c0_i32_1 = arith.constant 0 : i32
    %7 = arith.cmpi ne, %6, %c0_i32_1 : i32
    scf.if %7 {
      %c0_i32_2 = arith.constant 0 : i32
      %8 = arith.subi %c0_i32_2, %arg2 : i32
      %c15_i32 = arith.constant 15 : i32
      %9 = arith.muli %8, %c15_i32 : i32
      %c0_i32_3 = arith.constant 0 : i32
      %10 = arith.cmpi eq, %arg2, %c0_i32_3 : i32
      %11 = arith.extui %10 : i1 to i32
      %c0_i32_4 = arith.constant 0 : i32
      %12 = arith.cmpi ne, %11, %c0_i32_4 : i32
      scf.if %12 {
        %c0_299 = arith.constant 0 : index
        %c15 = arith.constant 15 : index
        %c0_300 = arith.constant 0 : index
        %c0_301 = arith.constant 0 : index
        %c0_302 = arith.constant 0 : index
        %510 = vector.load %arg4[%c0_299, %c15, %c0_300, %c0_301, %c0_302] : memref<1x16x4x1x32xf32, #tpu.memory_space<vmem>>, vector<1x1x4x1x32xf32>
        %511 = vector.shape_cast %510 : vector<1x1x4x1x32xf32> to vector<4x1x32xf32>
        %c0_303 = arith.constant 0 : index
        %c0_304 = arith.constant 0 : index
        %c0_305 = arith.constant 0 : index
        %512 = vector.load %arg7[%c0_303, %c0_304, %c0_305] : memref<4x1x32xf32, #tpu.memory_space<vmem>>, vector<4x1x32xf32>
        tpu.vector_store %arg7[%c0_303, %c0_304, %c0_305], %511 {strides = array<i32>} : memref<4x1x32xf32, #tpu.memory_space<vmem>>, vector<4x1x32xf32>,
      } else {
      }
      %c0_5 = arith.constant 0 : index
      %c0_6 = arith.constant 0 : index
      %c0_7 = arith.constant 0 : index
      %13 = vector.load %arg7[%c0_5, %c0_6, %c0_7] : memref<4x1x32xf32, #tpu.memory_space<vmem>>, vector<4x1x32xf32>
      %c0_i32_8 = arith.constant 0 : i32
      %c14_i32 = arith.constant 14 : i32
      %14 = arith.subi %c14_i32, %c0_i32_8 : i32
      %c0_9 = arith.constant 0 : index
      %15 = arith.index_cast %14 : i32 to index
      %c0_10 = arith.constant 0 : index
      %c0_11 = arith.constant 0 : index
      %c0_12 = arith.constant 0 : index
      %16 = vector.load %arg5[%c0_9, %15, %c0_10, %c0_11, %c0_12] : memref<1x15x16x1x32xf32, #tpu.memory_space<vmem>>, vector<1x1x16x1x32xf32>
      %17 = vector.shape_cast %16 : vector<1x1x16x1x32xf32> to vector<16x1x32xf32>
      %18 = vector.shape_cast %17 : vector<16x1x32xf32> to vector<4x4x1x32xf32>
      %19 = vector.shape_cast %13 : vector<4x1x32xf32> to vector<1x4x1x32xf32>
      %20 = vector.broadcast %19 : vector<1x4x1x32xf32> to vector<4x4x1x32xf32>
      %21 = arith.addf %18, %20 : vector<4x4x1x32xf32>
      %22 = vector.broadcast %1 : f32 to vector<4x4x1x32xf32>
      %23 = arith.mulf %21, %22 : vector<4x4x1x32xf32>
      %cst_13 = arith.constant dense<0xFF800000> : vector<4x1x32xf32>
      %24 = vector.multi_reduction <maximumf>, %23, %cst_13 [1] : vector<4x4x1x32xf32> to vector<4x1x32xf32>
      %25 = vector.shape_cast %24 : vector<4x1x32xf32> to vector<4x1x1x32xf32>
      %26 = vector.broadcast %25 : vector<4x1x1x32xf32> to vector<4x4x1x32xf32>
      %27 = arith.subf %23, %26 : vector<4x4x1x32xf32>
      %28 = math.exp %27 : vector<4x4x1x32xf32>
      %cst_14 = arith.constant dense<0.000000e+00> : vector<4x1x32xf32>
      %29 = vector.multi_reduction <add>, %28, %cst_14 [1] : vector<4x4x1x32xf32> to vector<4x1x32xf32>
      %30 = math.log %29 : vector<4x1x32xf32>
      %31 = arith.addf %24, %30 : vector<4x1x32xf32>
      %32 = vector.broadcast %0 : f32 to vector<4x1x32xf32>
      %33 = arith.mulf %32, %31 : vector<4x1x32xf32>
      %34 = arith.addi %9, %14 : i32
      %c0_15 = arith.constant 0 : index
      %35 = arith.index_cast %34 : i32 to index
      %c0_16 = arith.constant 0 : index
      %c0_17 = arith.constant 0 : index
      %c0_18 = arith.constant 0 : index
      %36 = vector.load %arg6[%c0_15, %35, %c0_16, %c0_17, %c0_18] : memref<1x16x4x1x32xf32, #tpu.memory_space<vmem>>, vector<1x1x4x1x32xf32>
      %37 = vector.shape_cast %36 : vector<1x1x4x1x32xf32> to vector<4x1x32xf32>
      %38 = arith.addf %37, %33 : vector<4x1x32xf32>
      %c0_19 = arith.constant 0 : index
      %39 = arith.index_cast %34 : i32 to index
      %c0_20 = arith.constant 0 : index
      %c0_21 = arith.constant 0 : index
      %c0_22 = arith.constant 0 : index
      %40 = vector.load %arg6[%c0_19, %39, %c0_20, %c0_21, %c0_22] : memref<1x16x4x1x32xf32, #tpu.memory_space<vmem>>, vector<1x1x4x1x32xf32>
      %41 = vector.shape_cast %40 : vector<1x1x4x1x32xf32> to vector<4x1x32xf32>
      %42 = vector.shape_cast %38 : vector<4x1x32xf32> to vector<1x1x4x1x32xf32>
      tpu.vector_store %arg6[%c0_19, %39, %c0_20, %c0_21, %c0_22], %42 {strides = array<i32>} : memref<1x16x4x1x32xf32, #tpu.memory_space<vmem>>, vector<1x1x4x1x32xf32>,
      %c0_23 = arith.constant 0 : index
      %43 = arith.index_cast %34 : i32 to index
      %c0_24 = arith.constant 0 : index
      %c0_25 = arith.constant 0 : index
      %c0_26 = arith.constant 0 : index
      %44 = vector.load %arg4[%c0_23, %43, %c0_24, %c0_25, %c0_26] : memref<1x16x4x1x32xf32, #tpu.memory_space<vmem>>, vector<1x1x4x1x32xf32>
      %45 = vector.shape_cast %44 : vector<1x1x4x1x32xf32> to vector<4x1x32xf32>
      %46 = arith.addf %45, %33 : vector<4x1x32xf32>
      %c1_i32_27 = arith.constant 1 : i32
      %c14_i32_28 = arith.constant 14 : i32
      %47 = arith.subi %c14_i32_28, %c1_i32_27 : i32
      %c0_29 = arith.constant 0 : index
      %48 = arith.index_cast %47 : i32 to index
      %c0_30 = arith.constant 0 : index
      %c0_31 = arith.constant 0 : index
      %c0_32 = arith.constant 0 : index
      %49 = vector.load %arg5[%c0_29, %48, %c0_30, %c0_31, %c0_32] : memref<1x15x16x1x32xf32, #tpu.memory_space<vmem>>, vector<1x1x16x1x32xf32>
      %50 = vector.shape_cast %49 : vector<1x1x16x1x32xf32> to vector<16x1x32xf32>
      %51 = vector.shape_cast %50 : vector<16x1x32xf32> to vector<4x4x1x32xf32>
      %52 = vector.shape_cast %46 : vector<4x1x32xf32> to vector<1x4x1x32xf32>
      %53 = vector.broadcast %52 : vector<1x4x1x32xf32> to vector<4x4x1x32xf32>
      %54 = arith.addf %51, %53 : vector<4x4x1x32xf32>
      %55 = vector.broadcast %1 : f32 to vector<4x4x1x32xf32>
      %56 = arith.mulf %54, %55 : vector<4x4x1x32xf32>
      %cst_33 = arith.constant dense<0xFF800000> : vector<4x1x32xf32>
      %57 = vector.multi_reduction <maximumf>, %56, %cst_33 [1] : vector<4x4x1x32xf32> to vector<4x1x32xf32>
      %58 = vector.shape_cast %57 : vector<4x1x32xf32> to vector<4x1x1x32xf32>
      %59 = vector.broadcast %58 : vector<4x1x1x32xf32> to vector<4x4x1x32xf32>
      %60 = arith.subf %56, %59 : vector<4x4x1x32xf32>
      %61 = math.exp %60 : vector<4x4x1x32xf32>
      %cst_34 = arith.constant dense<0.000000e+00> : vector<4x1x32xf32>
      %62 = vector.multi_reduction <add>, %61, %cst_34 [1] : vector<4x4x1x32xf32> to vector<4x1x32xf32>
      %63 = math.log %62 : vector<4x1x32xf32>
      %64 = arith.addf %57, %63 : vector<4x1x32xf32>
      %65 = vector.broadcast %0 : f32 to vector<4x1x32xf32>
      %66 = arith.mulf %65, %64 : vector<4x1x32xf32>
      %67 = arith.addi %9, %47 : i32
      %c0_35 = arith.constant 0 : index
      %68 = arith.index_cast %67 : i32 to index
      %c0_36 = arith.constant 0 : index
      %c0_37 = arith.constant 0 : index
      %c0_38 = arith.constant 0 : index
      %69 = vector.load %arg6[%c0_35, %68, %c0_36, %c0_37, %c0_38] : memref<1x16x4x1x32xf32, #tpu.memory_space<vmem>>, vector<1x1x4x1x32xf32>
      %70 = vector.shape_cast %69 : vector<1x1x4x1x32xf32> to vector<4x1x32xf32>
      %71 = arith.addf %70, %66 : vector<4x1x32xf32>
      %c0_39 = arith.constant 0 : index
      %72 = arith.index_cast %67 : i32 to index
      %c0_40 = arith.constant 0 : index
      %c0_41 = arith.constant 0 : index
      %c0_42 = arith.constant 0 : index
      %73 = vector.load %arg6[%c0_39, %72, %c0_40, %c0_41, %c0_42] : memref<1x16x4x1x32xf32, #tpu.memory_space<vmem>>, vector<1x1x4x1x32xf32>
      %74 = vector.shape_cast %73 : vector<1x1x4x1x32xf32> to vector<4x1x32xf32>
      %75 = vector.shape_cast %71 : vector<4x1x32xf32> to vector<1x1x4x1x32xf32>
      tpu.vector_store %arg6[%c0_39, %72, %c0_40, %c0_41, %c0_42], %75 {strides = array<i32>} : memref<1x16x4x1x32xf32, #tpu.memory_space<vmem>>, vector<1x1x4x1x32xf32>,
      %c0_43 = arith.constant 0 : index
      %76 = arith.index_cast %67 : i32 to index
      %c0_44 = arith.constant 0 : index
      %c0_45 = arith.constant 0 : index
      %c0_46 = arith.constant 0 : index
      %77 = vector.load %arg4[%c0_43, %76, %c0_44, %c0_45, %c0_46] : memref<1x16x4x1x32xf32, #tpu.memory_space<vmem>>, vector<1x1x4x1x32xf32>
      %78 = vector.shape_cast %77 : vector<1x1x4x1x32xf32> to vector<4x1x32xf32>
      %79 = arith.addf %78, %66 : vector<4x1x32xf32>
      %c2_i32 = arith.constant 2 : i32
      %c14_i32_47 = arith.constant 14 : i32
      %80 = arith.subi %c14_i32_47, %c2_i32 : i32
      %c0_48 = arith.constant 0 : index
      %81 = arith.index_cast %80 : i32 to index
      %c0_49 = arith.constant 0 : index
      %c0_50 = arith.constant 0 : index
      %c0_51 = arith.constant 0 : index
      %82 = vector.load %arg5[%c0_48, %81, %c0_49, %c0_50, %c0_51] : memref<1x15x16x1x32xf32, #tpu.memory_space<vmem>>, vector<1x1x16x1x32xf32>
      %83 = vector.shape_cast %82 : vector<1x1x16x1x32xf32> to vector<16x1x32xf32>
      %84 = vector.shape_cast %83 : vector<16x1x32xf32> to vector<4x4x1x32xf32>
      %85 = vector.shape_cast %79 : vector<4x1x32xf32> to vector<1x4x1x32xf32>
      %86 = vector.broadcast %85 : vector<1x4x1x32xf32> to vector<4x4x1x32xf32>
      %87 = arith.addf %84, %86 : vector<4x4x1x32xf32>
      %88 = vector.broadcast %1 : f32 to vector<4x4x1x32xf32>
      %89 = arith.mulf %87, %88 : vector<4x4x1x32xf32>
      %cst_52 = arith.constant dense<0xFF800000> : vector<4x1x32xf32>
      %90 = vector.multi_reduction <maximumf>, %89, %cst_52 [1] : vector<4x4x1x32xf32> to vector<4x1x32xf32>
      %91 = vector.shape_cast %90 : vector<4x1x32xf32> to vector<4x1x1x32xf32>
      %92 = vector.broadcast %91 : vector<4x1x1x32xf32> to vector<4x4x1x32xf32>
      %93 = arith.subf %89, %92 : vector<4x4x1x32xf32>
      %94 = math.exp %93 : vector<4x4x1x32xf32>
      %cst_53 = arith.constant dense<0.000000e+00> : vector<4x1x32xf32>
      %95 = vector.multi_reduction <add>, %94, %cst_53 [1] : vector<4x4x1x32xf32> to vector<4x1x32xf32>
      %96 = math.log %95 : vector<4x1x32xf32>
      %97 = arith.addf %90, %96 : vector<4x1x32xf32>
      %98 = vector.broadcast %0 : f32 to vector<4x1x32xf32>
      %99 = arith.mulf %98, %97 : vector<4x1x32xf32>
      %100 = arith.addi %9, %80 : i32
      %c0_54 = arith.constant 0 : index
      %101 = arith.index_cast %100 : i32 to index
      %c0_55 = arith.constant 0 : index
      %c0_56 = arith.constant 0 : index
      %c0_57 = arith.constant 0 : index
      %102 = vector.load %arg6[%c0_54, %101, %c0_55, %c0_56, %c0_57] : memref<1x16x4x1x32xf32, #tpu.memory_space<vmem>>, vector<1x1x4x1x32xf32>
      %103 = vector.shape_cast %102 : vector<1x1x4x1x32xf32> to vector<4x1x32xf32>
      %104 = arith.addf %103, %99 : vector<4x1x32xf32>
      %c0_58 = arith.constant 0 : index
      %105 = arith.index_cast %100 : i32 to index
      %c0_59 = arith.constant 0 : index
      %c0_60 = arith.constant 0 : index
      %c0_61 = arith.constant 0 : index
      %106 = vector.load %arg6[%c0_58, %105, %c0_59, %c0_60, %c0_61] : memref<1x16x4x1x32xf32, #tpu.memory_space<vmem>>, vector<1x1x4x1x32xf32>
      %107 = vector.shape_cast %106 : vector<1x1x4x1x32xf32> to vector<4x1x32xf32>
      %108 = vector.shape_cast %104 : vector<4x1x32xf32> to vector<1x1x4x1x32xf32>
      tpu.vector_store %arg6[%c0_58, %105, %c0_59, %c0_60, %c0_61], %108 {strides = array<i32>} : memref<1x16x4x1x32xf32, #tpu.memory_space<vmem>>, vector<1x1x4x1x32xf32>,
      %c0_62 = arith.constant 0 : index
      %109 = arith.index_cast %100 : i32 to index
      %c0_63 = arith.constant 0 : index
      %c0_64 = arith.constant 0 : index
      %c0_65 = arith.constant 0 : index
      %110 = vector.load %arg4[%c0_62, %109, %c0_63, %c0_64, %c0_65] : memref<1x16x4x1x32xf32, #tpu.memory_space<vmem>>, vector<1x1x4x1x32xf32>
      %111 = vector.shape_cast %110 : vector<1x1x4x1x32xf32> to vector<4x1x32xf32>
      %112 = arith.addf %111, %99 : vector<4x1x32xf32>
      %c3_i32 = arith.constant 3 : i32
      %c14_i32_66 = arith.constant 14 : i32
      %113 = arith.subi %c14_i32_66, %c3_i32 : i32
      %c0_67 = arith.constant 0 : index
      %114 = arith.index_cast %113 : i32 to index
      %c0_68 = arith.constant 0 : index
      %c0_69 = arith.constant 0 : index
      %c0_70 = arith.constant 0 : index
      %115 = vector.load %arg5[%c0_67, %114, %c0_68, %c0_69, %c0_70] : memref<1x15x16x1x32xf32, #tpu.memory_space<vmem>>, vector<1x1x16x1x32xf32>
      %116 = vector.shape_cast %115 : vector<1x1x16x1x32xf32> to vector<16x1x32xf32>
      %117 = vector.shape_cast %116 : vector<16x1x32xf32> to vector<4x4x1x32xf32>
      %118 = vector.shape_cast %112 : vector<4x1x32xf32> to vector<1x4x1x32xf32>
      %119 = vector.broadcast %118 : vector<1x4x1x32xf32> to vector<4x4x1x32xf32>
      %120 = arith.addf %117, %119 : vector<4x4x1x32xf32>
      %121 = vector.broadcast %1 : f32 to vector<4x4x1x32xf32>
      %122 = arith.mulf %120, %121 : vector<4x4x1x32xf32>
      %cst_71 = arith.constant dense<0xFF800000> : vector<4x1x32xf32>
      %123 = vector.multi_reduction <maximumf>, %122, %cst_71 [1] : vector<4x4x1x32xf32> to vector<4x1x32xf32>
      %124 = vector.shape_cast %123 : vector<4x1x32xf32> to vector<4x1x1x32xf32>
      %125 = vector.broadcast %124 : vector<4x1x1x32xf32> to vector<4x4x1x32xf32>
      %126 = arith.subf %122, %125 : vector<4x4x1x32xf32>
      %127 = math.exp %126 : vector<4x4x1x32xf32>
      %cst_72 = arith.constant dense<0.000000e+00> : vector<4x1x32xf32>
      %128 = vector.multi_reduction <add>, %127, %cst_72 [1] : vector<4x4x1x32xf32> to vector<4x1x32xf32>
      %129 = math.log %128 : vector<4x1x32xf32>
      %130 = arith.addf %123, %129 : vector<4x1x32xf32>
      %131 = vector.broadcast %0 : f32 to vector<4x1x32xf32>
      %132 = arith.mulf %131, %130 : vector<4x1x32xf32>
      %133 = arith.addi %9, %113 : i32
      %c0_73 = arith.constant 0 : index
      %134 = arith.index_cast %133 : i32 to index
      %c0_74 = arith.constant 0 : index
      %c0_75 = arith.constant 0 : index
      %c0_76 = arith.constant 0 : index
      %135 = vector.load %arg6[%c0_73, %134, %c0_74, %c0_75, %c0_76] : memref<1x16x4x1x32xf32, #tpu.memory_space<vmem>>, vector<1x1x4x1x32xf32>
      %136 = vector.shape_cast %135 : vector<1x1x4x1x32xf32> to vector<4x1x32xf32>
      %137 = arith.addf %136, %132 : vector<4x1x32xf32>
      %c0_77 = arith.constant 0 : index
      %138 = arith.index_cast %133 : i32 to index
      %c0_78 = arith.constant 0 : index
      %c0_79 = arith.constant 0 : index
      %c0_80 = arith.constant 0 : index
      %139 = vector.load %arg6[%c0_77, %138, %c0_78, %c0_79, %c0_80] : memref<1x16x4x1x32xf32, #tpu.memory_space<vmem>>, vector<1x1x4x1x32xf32>
      %140 = vector.shape_cast %139 : vector<1x1x4x1x32xf32> to vector<4x1x32xf32>
      %141 = vector.shape_cast %137 : vector<4x1x32xf32> to vector<1x1x4x1x32xf32>
      tpu.vector_store %arg6[%c0_77, %138, %c0_78, %c0_79, %c0_80], %141 {strides = array<i32>} : memref<1x16x4x1x32xf32, #tpu.memory_space<vmem>>, vector<1x1x4x1x32xf32>,
      %c0_81 = arith.constant 0 : index
      %142 = arith.index_cast %133 : i32 to index
      %c0_82 = arith.constant 0 : index
      %c0_83 = arith.constant 0 : index
      %c0_84 = arith.constant 0 : index
      %143 = vector.load %arg4[%c0_81, %142, %c0_82, %c0_83, %c0_84] : memref<1x16x4x1x32xf32, #tpu.memory_space<vmem>>, vector<1x1x4x1x32xf32>
      %144 = vector.shape_cast %143 : vector<1x1x4x1x32xf32> to vector<4x1x32xf32>
      %145 = arith.addf %144, %132 : vector<4x1x32xf32>
      %c4_i32 = arith.constant 4 : i32
      %c14_i32_85 = arith.constant 14 : i32
      %146 = arith.subi %c14_i32_85, %c4_i32 : i32
      %c0_86 = arith.constant 0 : index
      %147 = arith.index_cast %146 : i32 to index
      %c0_87 = arith.constant 0 : index
      %c0_88 = arith.constant 0 : index
      %c0_89 = arith.constant 0 : index
      %148 = vector.load %arg5[%c0_86, %147, %c0_87, %c0_88, %c0_89] : memref<1x15x16x1x32xf32, #tpu.memory_space<vmem>>, vector<1x1x16x1x32xf32>
      %149 = vector.shape_cast %148 : vector<1x1x16x1x32xf32> to vector<16x1x32xf32>
      %150 = vector.shape_cast %149 : vector<16x1x32xf32> to vector<4x4x1x32xf32>
      %151 = vector.shape_cast %145 : vector<4x1x32xf32> to vector<1x4x1x32xf32>
      %152 = vector.broadcast %151 : vector<1x4x1x32xf32> to vector<4x4x1x32xf32>
      %153 = arith.addf %150, %152 : vector<4x4x1x32xf32>
      %154 = vector.broadcast %1 : f32 to vector<4x4x1x32xf32>
      %155 = arith.mulf %153, %154 : vector<4x4x1x32xf32>
      %cst_90 = arith.constant dense<0xFF800000> : vector<4x1x32xf32>
      %156 = vector.multi_reduction <maximumf>, %155, %cst_90 [1] : vector<4x4x1x32xf32> to vector<4x1x32xf32>
      %157 = vector.shape_cast %156 : vector<4x1x32xf32> to vector<4x1x1x32xf32>
      %158 = vector.broadcast %157 : vector<4x1x1x32xf32> to vector<4x4x1x32xf32>
      %159 = arith.subf %155, %158 : vector<4x4x1x32xf32>
      %160 = math.exp %159 : vector<4x4x1x32xf32>
      %cst_91 = arith.constant dense<0.000000e+00> : vector<4x1x32xf32>
      %161 = vector.multi_reduction <add>, %160, %cst_91 [1] : vector<4x4x1x32xf32> to vector<4x1x32xf32>
      %162 = math.log %161 : vector<4x1x32xf32>
      %163 = arith.addf %156, %162 : vector<4x1x32xf32>
      %164 = vector.broadcast %0 : f32 to vector<4x1x32xf32>
      %165 = arith.mulf %164, %163 : vector<4x1x32xf32>
      %166 = arith.addi %9, %146 : i32
      %c0_92 = arith.constant 0 : index
      %167 = arith.index_cast %166 : i32 to index
      %c0_93 = arith.constant 0 : index
      %c0_94 = arith.constant 0 : index
      %c0_95 = arith.constant 0 : index
      %168 = vector.load %arg6[%c0_92, %167, %c0_93, %c0_94, %c0_95] : memref<1x16x4x1x32xf32, #tpu.memory_space<vmem>>, vector<1x1x4x1x32xf32>
      %169 = vector.shape_cast %168 : vector<1x1x4x1x32xf32> to vector<4x1x32xf32>
      %170 = arith.addf %169, %165 : vector<4x1x32xf32>
      %c0_96 = arith.constant 0 : index
      %171 = arith.index_cast %166 : i32 to index
      %c0_97 = arith.constant 0 : index
      %c0_98 = arith.constant 0 : index
      %c0_99 = arith.constant 0 : index
      %172 = vector.load %arg6[%c0_96, %171, %c0_97, %c0_98, %c0_99] : memref<1x16x4x1x32xf32, #tpu.memory_space<vmem>>, vector<1x1x4x1x32xf32>
      %173 = vector.shape_cast %172 : vector<1x1x4x1x32xf32> to vector<4x1x32xf32>
      %174 = vector.shape_cast %170 : vector<4x1x32xf32> to vector<1x1x4x1x32xf32>
      tpu.vector_store %arg6[%c0_96, %171, %c0_97, %c0_98, %c0_99], %174 {strides = array<i32>} : memref<1x16x4x1x32xf32, #tpu.memory_space<vmem>>, vector<1x1x4x1x32xf32>,
      %c0_100 = arith.constant 0 : index
      %175 = arith.index_cast %166 : i32 to index
      %c0_101 = arith.constant 0 : index
      %c0_102 = arith.constant 0 : index
      %c0_103 = arith.constant 0 : index
      %176 = vector.load %arg4[%c0_100, %175, %c0_101, %c0_102, %c0_103] : memref<1x16x4x1x32xf32, #tpu.memory_space<vmem>>, vector<1x1x4x1x32xf32>
      %177 = vector.shape_cast %176 : vector<1x1x4x1x32xf32> to vector<4x1x32xf32>
      %178 = arith.addf %177, %165 : vector<4x1x32xf32>
      %c5_i32 = arith.constant 5 : i32
      %c14_i32_104 = arith.constant 14 : i32
      %179 = arith.subi %c14_i32_104, %c5_i32 : i32
      %c0_105 = arith.constant 0 : index
      %180 = arith.index_cast %179 : i32 to index
      %c0_106 = arith.constant 0 : index
      %c0_107 = arith.constant 0 : index
      %c0_108 = arith.constant 0 : index
      %181 = vector.load %arg5[%c0_105, %180, %c0_106, %c0_107, %c0_108] : memref<1x15x16x1x32xf32, #tpu.memory_space<vmem>>, vector<1x1x16x1x32xf32>
      %182 = vector.shape_cast %181 : vector<1x1x16x1x32xf32> to vector<16x1x32xf32>
      %183 = vector.shape_cast %182 : vector<16x1x32xf32> to vector<4x4x1x32xf32>
      %184 = vector.shape_cast %178 : vector<4x1x32xf32> to vector<1x4x1x32xf32>
      %185 = vector.broadcast %184 : vector<1x4x1x32xf32> to vector<4x4x1x32xf32>
      %186 = arith.addf %183, %185 : vector<4x4x1x32xf32>
      %187 = vector.broadcast %1 : f32 to vector<4x4x1x32xf32>
      %188 = arith.mulf %186, %187 : vector<4x4x1x32xf32>
      %cst_109 = arith.constant dense<0xFF800000> : vector<4x1x32xf32>
      %189 = vector.multi_reduction <maximumf>, %188, %cst_109 [1] : vector<4x4x1x32xf32> to vector<4x1x32xf32>
      %190 = vector.shape_cast %189 : vector<4x1x32xf32> to vector<4x1x1x32xf32>
      %191 = vector.broadcast %190 : vector<4x1x1x32xf32> to vector<4x4x1x32xf32>
      %192 = arith.subf %188, %191 : vector<4x4x1x32xf32>
      %193 = math.exp %192 : vector<4x4x1x32xf32>
      %cst_110 = arith.constant dense<0.000000e+00> : vector<4x1x32xf32>
      %194 = vector.multi_reduction <add>, %193, %cst_110 [1] : vector<4x4x1x32xf32> to vector<4x1x32xf32>
      %195 = math.log %194 : vector<4x1x32xf32>
      %196 = arith.addf %189, %195 : vector<4x1x32xf32>
      %197 = vector.broadcast %0 : f32 to vector<4x1x32xf32>
      %198 = arith.mulf %197, %196 : vector<4x1x32xf32>
      %199 = arith.addi %9, %179 : i32
      %c0_111 = arith.constant 0 : index
      %200 = arith.index_cast %199 : i32 to index
      %c0_112 = arith.constant 0 : index
      %c0_113 = arith.constant 0 : index
      %c0_114 = arith.constant 0 : index
      %201 = vector.load %arg6[%c0_111, %200, %c0_112, %c0_113, %c0_114] : memref<1x16x4x1x32xf32, #tpu.memory_space<vmem>>, vector<1x1x4x1x32xf32>
      %202 = vector.shape_cast %201 : vector<1x1x4x1x32xf32> to vector<4x1x32xf32>
      %203 = arith.addf %202, %198 : vector<4x1x32xf32>
      %c0_115 = arith.constant 0 : index
      %204 = arith.index_cast %199 : i32 to index
      %c0_116 = arith.constant 0 : index
      %c0_117 = arith.constant 0 : index
      %c0_118 = arith.constant 0 : index
      %205 = vector.load %arg6[%c0_115, %204, %c0_116, %c0_117, %c0_118] : memref<1x16x4x1x32xf32, #tpu.memory_space<vmem>>, vector<1x1x4x1x32xf32>
      %206 = vector.shape_cast %205 : vector<1x1x4x1x32xf32> to vector<4x1x32xf32>
      %207 = vector.shape_cast %203 : vector<4x1x32xf32> to vector<1x1x4x1x32xf32>
      tpu.vector_store %arg6[%c0_115, %204, %c0_116, %c0_117, %c0_118], %207 {strides = array<i32>} : memref<1x16x4x1x32xf32, #tpu.memory_space<vmem>>, vector<1x1x4x1x32xf32>,
      %c0_119 = arith.constant 0 : index
      %208 = arith.index_cast %199 : i32 to index
      %c0_120 = arith.constant 0 : index
      %c0_121 = arith.constant 0 : index
      %c0_122 = arith.constant 0 : index
      %209 = vector.load %arg4[%c0_119, %208, %c0_120, %c0_121, %c0_122] : memref<1x16x4x1x32xf32, #tpu.memory_space<vmem>>, vector<1x1x4x1x32xf32>
      %210 = vector.shape_cast %209 : vector<1x1x4x1x32xf32> to vector<4x1x32xf32>
      %211 = arith.addf %210, %198 : vector<4x1x32xf32>
      %c6_i32 = arith.constant 6 : i32
      %c14_i32_123 = arith.constant 14 : i32
      %212 = arith.subi %c14_i32_123, %c6_i32 : i32
      %c0_124 = arith.constant 0 : index
      %213 = arith.index_cast %212 : i32 to index
      %c0_125 = arith.constant 0 : index
      %c0_126 = arith.constant 0 : index
      %c0_127 = arith.constant 0 : index
      %214 = vector.load %arg5[%c0_124, %213, %c0_125, %c0_126, %c0_127] : memref<1x15x16x1x32xf32, #tpu.memory_space<vmem>>, vector<1x1x16x1x32xf32>
      %215 = vector.shape_cast %214 : vector<1x1x16x1x32xf32> to vector<16x1x32xf32>
      %216 = vector.shape_cast %215 : vector<16x1x32xf32> to vector<4x4x1x32xf32>
      %217 = vector.shape_cast %211 : vector<4x1x32xf32> to vector<1x4x1x32xf32>
      %218 = vector.broadcast %217 : vector<1x4x1x32xf32> to vector<4x4x1x32xf32>
      %219 = arith.addf %216, %218 : vector<4x4x1x32xf32>
      %220 = vector.broadcast %1 : f32 to vector<4x4x1x32xf32>
      %221 = arith.mulf %219, %220 : vector<4x4x1x32xf32>
      %cst_128 = arith.constant dense<0xFF800000> : vector<4x1x32xf32>
      %222 = vector.multi_reduction <maximumf>, %221, %cst_128 [1] : vector<4x4x1x32xf32> to vector<4x1x32xf32>
      %223 = vector.shape_cast %222 : vector<4x1x32xf32> to vector<4x1x1x32xf32>
      %224 = vector.broadcast %223 : vector<4x1x1x32xf32> to vector<4x4x1x32xf32>
      %225 = arith.subf %221, %224 : vector<4x4x1x32xf32>
      %226 = math.exp %225 : vector<4x4x1x32xf32>
      %cst_129 = arith.constant dense<0.000000e+00> : vector<4x1x32xf32>
      %227 = vector.multi_reduction <add>, %226, %cst_129 [1] : vector<4x4x1x32xf32> to vector<4x1x32xf32>
      %228 = math.log %227 : vector<4x1x32xf32>
      %229 = arith.addf %222, %228 : vector<4x1x32xf32>
      %230 = vector.broadcast %0 : f32 to vector<4x1x32xf32>
      %231 = arith.mulf %230, %229 : vector<4x1x32xf32>
      %232 = arith.addi %9, %212 : i32
      %c0_130 = arith.constant 0 : index
      %233 = arith.index_cast %232 : i32 to index
      %c0_131 = arith.constant 0 : index
      %c0_132 = arith.constant 0 : index
      %c0_133 = arith.constant 0 : index
      %234 = vector.load %arg6[%c0_130, %233, %c0_131, %c0_132, %c0_133] : memref<1x16x4x1x32xf32, #tpu.memory_space<vmem>>, vector<1x1x4x1x32xf32>
      %235 = vector.shape_cast %234 : vector<1x1x4x1x32xf32> to vector<4x1x32xf32>
      %236 = arith.addf %235, %231 : vector<4x1x32xf32>
      %c0_134 = arith.constant 0 : index
      %237 = arith.index_cast %232 : i32 to index
      %c0_135 = arith.constant 0 : index
      %c0_136 = arith.constant 0 : index
      %c0_137 = arith.constant 0 : index
      %238 = vector.load %arg6[%c0_134, %237, %c0_135, %c0_136, %c0_137] : memref<1x16x4x1x32xf32, #tpu.memory_space<vmem>>, vector<1x1x4x1x32xf32>
      %239 = vector.shape_cast %238 : vector<1x1x4x1x32xf32> to vector<4x1x32xf32>
      %240 = vector.shape_cast %236 : vector<4x1x32xf32> to vector<1x1x4x1x32xf32>
      tpu.vector_store %arg6[%c0_134, %237, %c0_135, %c0_136, %c0_137], %240 {strides = array<i32>} : memref<1x16x4x1x32xf32, #tpu.memory_space<vmem>>, vector<1x1x4x1x32xf32>,
      %c0_138 = arith.constant 0 : index
      %241 = arith.index_cast %232 : i32 to index
      %c0_139 = arith.constant 0 : index
      %c0_140 = arith.constant 0 : index
      %c0_141 = arith.constant 0 : index
      %242 = vector.load %arg4[%c0_138, %241, %c0_139, %c0_140, %c0_141] : memref<1x16x4x1x32xf32, #tpu.memory_space<vmem>>, vector<1x1x4x1x32xf32>
      %243 = vector.shape_cast %242 : vector<1x1x4x1x32xf32> to vector<4x1x32xf32>
      %244 = arith.addf %243, %231 : vector<4x1x32xf32>
      %c7_i32 = arith.constant 7 : i32
      %c14_i32_142 = arith.constant 14 : i32
      %245 = arith.subi %c14_i32_142, %c7_i32 : i32
      %c0_143 = arith.constant 0 : index
      %246 = arith.index_cast %245 : i32 to index
      %c0_144 = arith.constant 0 : index
      %c0_145 = arith.constant 0 : index
      %c0_146 = arith.constant 0 : index
      %247 = vector.load %arg5[%c0_143, %246, %c0_144, %c0_145, %c0_146] : memref<1x15x16x1x32xf32, #tpu.memory_space<vmem>>, vector<1x1x16x1x32xf32>
      %248 = vector.shape_cast %247 : vector<1x1x16x1x32xf32> to vector<16x1x32xf32>
      %249 = vector.shape_cast %248 : vector<16x1x32xf32> to vector<4x4x1x32xf32>
      %250 = vector.shape_cast %244 : vector<4x1x32xf32> to vector<1x4x1x32xf32>
      %251 = vector.broadcast %250 : vector<1x4x1x32xf32> to vector<4x4x1x32xf32>
      %252 = arith.addf %249, %251 : vector<4x4x1x32xf32>
      %253 = vector.broadcast %1 : f32 to vector<4x4x1x32xf32>
      %254 = arith.mulf %252, %253 : vector<4x4x1x32xf32>
      %cst_147 = arith.constant dense<0xFF800000> : vector<4x1x32xf32>
      %255 = vector.multi_reduction <maximumf>, %254, %cst_147 [1] : vector<4x4x1x32xf32> to vector<4x1x32xf32>
      %256 = vector.shape_cast %255 : vector<4x1x32xf32> to vector<4x1x1x32xf32>
      %257 = vector.broadcast %256 : vector<4x1x1x32xf32> to vector<4x4x1x32xf32>
      %258 = arith.subf %254, %257 : vector<4x4x1x32xf32>
      %259 = math.exp %258 : vector<4x4x1x32xf32>
      %cst_148 = arith.constant dense<0.000000e+00> : vector<4x1x32xf32>
      %260 = vector.multi_reduction <add>, %259, %cst_148 [1] : vector<4x4x1x32xf32> to vector<4x1x32xf32>
      %261 = math.log %260 : vector<4x1x32xf32>
      %262 = arith.addf %255, %261 : vector<4x1x32xf32>
      %263 = vector.broadcast %0 : f32 to vector<4x1x32xf32>
      %264 = arith.mulf %263, %262 : vector<4x1x32xf32>
      %265 = arith.addi %9, %245 : i32
      %c0_149 = arith.constant 0 : index
      %266 = arith.index_cast %265 : i32 to index
      %c0_150 = arith.constant 0 : index
      %c0_151 = arith.constant 0 : index
      %c0_152 = arith.constant 0 : index
      %267 = vector.load %arg6[%c0_149, %266, %c0_150, %c0_151, %c0_152] : memref<1x16x4x1x32xf32, #tpu.memory_space<vmem>>, vector<1x1x4x1x32xf32>
      %268 = vector.shape_cast %267 : vector<1x1x4x1x32xf32> to vector<4x1x32xf32>
      %269 = arith.addf %268, %264 : vector<4x1x32xf32>
      %c0_153 = arith.constant 0 : index
      %270 = arith.index_cast %265 : i32 to index
      %c0_154 = arith.constant 0 : index
      %c0_155 = arith.constant 0 : index
      %c0_156 = arith.constant 0 : index
      %271 = vector.load %arg6[%c0_153, %270, %c0_154, %c0_155, %c0_156] : memref<1x16x4x1x32xf32, #tpu.memory_space<vmem>>, vector<1x1x4x1x32xf32>
      %272 = vector.shape_cast %271 : vector<1x1x4x1x32xf32> to vector<4x1x32xf32>
      %273 = vector.shape_cast %269 : vector<4x1x32xf32> to vector<1x1x4x1x32xf32>
      tpu.vector_store %arg6[%c0_153, %270, %c0_154, %c0_155, %c0_156], %273 {strides = array<i32>} : memref<1x16x4x1x32xf32, #tpu.memory_space<vmem>>, vector<1x1x4x1x32xf32>,
      %c0_157 = arith.constant 0 : index
      %274 = arith.index_cast %265 : i32 to index
      %c0_158 = arith.constant 0 : index
      %c0_159 = arith.constant 0 : index
      %c0_160 = arith.constant 0 : index
      %275 = vector.load %arg4[%c0_157, %274, %c0_158, %c0_159, %c0_160] : memref<1x16x4x1x32xf32, #tpu.memory_space<vmem>>, vector<1x1x4x1x32xf32>
      %276 = vector.shape_cast %275 : vector<1x1x4x1x32xf32> to vector<4x1x32xf32>
      %277 = arith.addf %276, %264 : vector<4x1x32xf32>
      %c8_i32 = arith.constant 8 : i32
      %c14_i32_161 = arith.constant 14 : i32
      %278 = arith.subi %c14_i32_161, %c8_i32 : i32
      %c0_162 = arith.constant 0 : index
      %279 = arith.index_cast %278 : i32 to index
      %c0_163 = arith.constant 0 : index
      %c0_164 = arith.constant 0 : index
      %c0_165 = arith.constant 0 : index
      %280 = vector.load %arg5[%c0_162, %279, %c0_163, %c0_164, %c0_165] : memref<1x15x16x1x32xf32, #tpu.memory_space<vmem>>, vector<1x1x16x1x32xf32>
      %281 = vector.shape_cast %280 : vector<1x1x16x1x32xf32> to vector<16x1x32xf32>
      %282 = vector.shape_cast %281 : vector<16x1x32xf32> to vector<4x4x1x32xf32>
      %283 = vector.shape_cast %277 : vector<4x1x32xf32> to vector<1x4x1x32xf32>
      %284 = vector.broadcast %283 : vector<1x4x1x32xf32> to vector<4x4x1x32xf32>
      %285 = arith.addf %282, %284 : vector<4x4x1x32xf32>
      %286 = vector.broadcast %1 : f32 to vector<4x4x1x32xf32>
      %287 = arith.mulf %285, %286 : vector<4x4x1x32xf32>
      %cst_166 = arith.constant dense<0xFF800000> : vector<4x1x32xf32>
      %288 = vector.multi_reduction <maximumf>, %287, %cst_166 [1] : vector<4x4x1x32xf32> to vector<4x1x32xf32>
      %289 = vector.shape_cast %288 : vector<4x1x32xf32> to vector<4x1x1x32xf32>
      %290 = vector.broadcast %289 : vector<4x1x1x32xf32> to vector<4x4x1x32xf32>
      %291 = arith.subf %287, %290 : vector<4x4x1x32xf32>
      %292 = math.exp %291 : vector<4x4x1x32xf32>
      %cst_167 = arith.constant dense<0.000000e+00> : vector<4x1x32xf32>
      %293 = vector.multi_reduction <add>, %292, %cst_167 [1] : vector<4x4x1x32xf32> to vector<4x1x32xf32>
      %294 = math.log %293 : vector<4x1x32xf32>
      %295 = arith.addf %288, %294 : vector<4x1x32xf32>
      %296 = vector.broadcast %0 : f32 to vector<4x1x32xf32>
      %297 = arith.mulf %296, %295 : vector<4x1x32xf32>
      %298 = arith.addi %9, %278 : i32
      %c0_168 = arith.constant 0 : index
      %299 = arith.index_cast %298 : i32 to index
      %c0_169 = arith.constant 0 : index
      %c0_170 = arith.constant 0 : index
      %c0_171 = arith.constant 0 : index
      %300 = vector.load %arg6[%c0_168, %299, %c0_169, %c0_170, %c0_171] : memref<1x16x4x1x32xf32, #tpu.memory_space<vmem>>, vector<1x1x4x1x32xf32>
      %301 = vector.shape_cast %300 : vector<1x1x4x1x32xf32> to vector<4x1x32xf32>
      %302 = arith.addf %301, %297 : vector<4x1x32xf32>
      %c0_172 = arith.constant 0 : index
      %303 = arith.index_cast %298 : i32 to index
      %c0_173 = arith.constant 0 : index
      %c0_174 = arith.constant 0 : index
      %c0_175 = arith.constant 0 : index
      %304 = vector.load %arg6[%c0_172, %303, %c0_173, %c0_174, %c0_175] : memref<1x16x4x1x32xf32, #tpu.memory_space<vmem>>, vector<1x1x4x1x32xf32>
      %305 = vector.shape_cast %304 : vector<1x1x4x1x32xf32> to vector<4x1x32xf32>
      %306 = vector.shape_cast %302 : vector<4x1x32xf32> to vector<1x1x4x1x32xf32>
      tpu.vector_store %arg6[%c0_172, %303, %c0_173, %c0_174, %c0_175], %306 {strides = array<i32>} : memref<1x16x4x1x32xf32, #tpu.memory_space<vmem>>, vector<1x1x4x1x32xf32>,
      %c0_176 = arith.constant 0 : index
      %307 = arith.index_cast %298 : i32 to index
      %c0_177 = arith.constant 0 : index
      %c0_178 = arith.constant 0 : index
      %c0_179 = arith.constant 0 : index
      %308 = vector.load %arg4[%c0_176, %307, %c0_177, %c0_178, %c0_179] : memref<1x16x4x1x32xf32, #tpu.memory_space<vmem>>, vector<1x1x4x1x32xf32>
      %309 = vector.shape_cast %308 : vector<1x1x4x1x32xf32> to vector<4x1x32xf32>
      %310 = arith.addf %309, %297 : vector<4x1x32xf32>
      %c9_i32 = arith.constant 9 : i32
      %c14_i32_180 = arith.constant 14 : i32
      %311 = arith.subi %c14_i32_180, %c9_i32 : i32
      %c0_181 = arith.constant 0 : index
      %312 = arith.index_cast %311 : i32 to index
      %c0_182 = arith.constant 0 : index
      %c0_183 = arith.constant 0 : index
      %c0_184 = arith.constant 0 : index
      %313 = vector.load %arg5[%c0_181, %312, %c0_182, %c0_183, %c0_184] : memref<1x15x16x1x32xf32, #tpu.memory_space<vmem>>, vector<1x1x16x1x32xf32>
      %314 = vector.shape_cast %313 : vector<1x1x16x1x32xf32> to vector<16x1x32xf32>
      %315 = vector.shape_cast %314 : vector<16x1x32xf32> to vector<4x4x1x32xf32>
      %316 = vector.shape_cast %310 : vector<4x1x32xf32> to vector<1x4x1x32xf32>
      %317 = vector.broadcast %316 : vector<1x4x1x32xf32> to vector<4x4x1x32xf32>
      %318 = arith.addf %315, %317 : vector<4x4x1x32xf32>
      %319 = vector.broadcast %1 : f32 to vector<4x4x1x32xf32>
      %320 = arith.mulf %318, %319 : vector<4x4x1x32xf32>
      %cst_185 = arith.constant dense<0xFF800000> : vector<4x1x32xf32>
      %321 = vector.multi_reduction <maximumf>, %320, %cst_185 [1] : vector<4x4x1x32xf32> to vector<4x1x32xf32>
      %322 = vector.shape_cast %321 : vector<4x1x32xf32> to vector<4x1x1x32xf32>
      %323 = vector.broadcast %322 : vector<4x1x1x32xf32> to vector<4x4x1x32xf32>
      %324 = arith.subf %320, %323 : vector<4x4x1x32xf32>
      %325 = math.exp %324 : vector<4x4x1x32xf32>
      %cst_186 = arith.constant dense<0.000000e+00> : vector<4x1x32xf32>
      %326 = vector.multi_reduction <add>, %325, %cst_186 [1] : vector<4x4x1x32xf32> to vector<4x1x32xf32>
      %327 = math.log %326 : vector<4x1x32xf32>
      %328 = arith.addf %321, %327 : vector<4x1x32xf32>
      %329 = vector.broadcast %0 : f32 to vector<4x1x32xf32>
      %330 = arith.mulf %329, %328 : vector<4x1x32xf32>
      %331 = arith.addi %9, %311 : i32
      %c0_187 = arith.constant 0 : index
      %332 = arith.index_cast %331 : i32 to index
      %c0_188 = arith.constant 0 : index
      %c0_189 = arith.constant 0 : index
      %c0_190 = arith.constant 0 : index
      %333 = vector.load %arg6[%c0_187, %332, %c0_188, %c0_189, %c0_190] : memref<1x16x4x1x32xf32, #tpu.memory_space<vmem>>, vector<1x1x4x1x32xf32>
      %334 = vector.shape_cast %333 : vector<1x1x4x1x32xf32> to vector<4x1x32xf32>
      %335 = arith.addf %334, %330 : vector<4x1x32xf32>
      %c0_191 = arith.constant 0 : index
      %336 = arith.index_cast %331 : i32 to index
      %c0_192 = arith.constant 0 : index
      %c0_193 = arith.constant 0 : index
      %c0_194 = arith.constant 0 : index
      %337 = vector.load %arg6[%c0_191, %336, %c0_192, %c0_193, %c0_194] : memref<1x16x4x1x32xf32, #tpu.memory_space<vmem>>, vector<1x1x4x1x32xf32>
      %338 = vector.shape_cast %337 : vector<1x1x4x1x32xf32> to vector<4x1x32xf32>
      %339 = vector.shape_cast %335 : vector<4x1x32xf32> to vector<1x1x4x1x32xf32>
      tpu.vector_store %arg6[%c0_191, %336, %c0_192, %c0_193, %c0_194], %339 {strides = array<i32>} : memref<1x16x4x1x32xf32, #tpu.memory_space<vmem>>, vector<1x1x4x1x32xf32>,
      %c0_195 = arith.constant 0 : index
      %340 = arith.index_cast %331 : i32 to index
      %c0_196 = arith.constant 0 : index
      %c0_197 = arith.constant 0 : index
      %c0_198 = arith.constant 0 : index
      %341 = vector.load %arg4[%c0_195, %340, %c0_196, %c0_197, %c0_198] : memref<1x16x4x1x32xf32, #tpu.memory_space<vmem>>, vector<1x1x4x1x32xf32>
      %342 = vector.shape_cast %341 : vector<1x1x4x1x32xf32> to vector<4x1x32xf32>
      %343 = arith.addf %342, %330 : vector<4x1x32xf32>
      %c10_i32 = arith.constant 10 : i32
      %c14_i32_199 = arith.constant 14 : i32
      %344 = arith.subi %c14_i32_199, %c10_i32 : i32
      %c0_200 = arith.constant 0 : index
      %345 = arith.index_cast %344 : i32 to index
      %c0_201 = arith.constant 0 : index
      %c0_202 = arith.constant 0 : index
      %c0_203 = arith.constant 0 : index
      %346 = vector.load %arg5[%c0_200, %345, %c0_201, %c0_202, %c0_203] : memref<1x15x16x1x32xf32, #tpu.memory_space<vmem>>, vector<1x1x16x1x32xf32>
      %347 = vector.shape_cast %346 : vector<1x1x16x1x32xf32> to vector<16x1x32xf32>
      %348 = vector.shape_cast %347 : vector<16x1x32xf32> to vector<4x4x1x32xf32>
      %349 = vector.shape_cast %343 : vector<4x1x32xf32> to vector<1x4x1x32xf32>
      %350 = vector.broadcast %349 : vector<1x4x1x32xf32> to vector<4x4x1x32xf32>
      %351 = arith.addf %348, %350 : vector<4x4x1x32xf32>
      %352 = vector.broadcast %1 : f32 to vector<4x4x1x32xf32>
      %353 = arith.mulf %351, %352 : vector<4x4x1x32xf32>
      %cst_204 = arith.constant dense<0xFF800000> : vector<4x1x32xf32>
      %354 = vector.multi_reduction <maximumf>, %353, %cst_204 [1] : vector<4x4x1x32xf32> to vector<4x1x32xf32>
      %355 = vector.shape_cast %354 : vector<4x1x32xf32> to vector<4x1x1x32xf32>
      %356 = vector.broadcast %355 : vector<4x1x1x32xf32> to vector<4x4x1x32xf32>
      %357 = arith.subf %353, %356 : vector<4x4x1x32xf32>
      %358 = math.exp %357 : vector<4x4x1x32xf32>
      %cst_205 = arith.constant dense<0.000000e+00> : vector<4x1x32xf32>
      %359 = vector.multi_reduction <add>, %358, %cst_205 [1] : vector<4x4x1x32xf32> to vector<4x1x32xf32>
      %360 = math.log %359 : vector<4x1x32xf32>
      %361 = arith.addf %354, %360 : vector<4x1x32xf32>
      %362 = vector.broadcast %0 : f32 to vector<4x1x32xf32>
      %363 = arith.mulf %362, %361 : vector<4x1x32xf32>
      %364 = arith.addi %9, %344 : i32
      %c0_206 = arith.constant 0 : index
      %365 = arith.index_cast %364 : i32 to index
      %c0_207 = arith.constant 0 : index
      %c0_208 = arith.constant 0 : index
      %c0_209 = arith.constant 0 : index
      %366 = vector.load %arg6[%c0_206, %365, %c0_207, %c0_208, %c0_209] : memref<1x16x4x1x32xf32, #tpu.memory_space<vmem>>, vector<1x1x4x1x32xf32>
      %367 = vector.shape_cast %366 : vector<1x1x4x1x32xf32> to vector<4x1x32xf32>
      %368 = arith.addf %367, %363 : vector<4x1x32xf32>
      %c0_210 = arith.constant 0 : index
      %369 = arith.index_cast %364 : i32 to index
      %c0_211 = arith.constant 0 : index
      %c0_212 = arith.constant 0 : index
      %c0_213 = arith.constant 0 : index
      %370 = vector.load %arg6[%c0_210, %369, %c0_211, %c0_212, %c0_213] : memref<1x16x4x1x32xf32, #tpu.memory_space<vmem>>, vector<1x1x4x1x32xf32>
      %371 = vector.shape_cast %370 : vector<1x1x4x1x32xf32> to vector<4x1x32xf32>
      %372 = vector.shape_cast %368 : vector<4x1x32xf32> to vector<1x1x4x1x32xf32>
      tpu.vector_store %arg6[%c0_210, %369, %c0_211, %c0_212, %c0_213], %372 {strides = array<i32>} : memref<1x16x4x1x32xf32, #tpu.memory_space<vmem>>, vector<1x1x4x1x32xf32>,
      %c0_214 = arith.constant 0 : index
      %373 = arith.index_cast %364 : i32 to index
      %c0_215 = arith.constant 0 : index
      %c0_216 = arith.constant 0 : index
      %c0_217 = arith.constant 0 : index
      %374 = vector.load %arg4[%c0_214, %373, %c0_215, %c0_216, %c0_217] : memref<1x16x4x1x32xf32, #tpu.memory_space<vmem>>, vector<1x1x4x1x32xf32>
      %375 = vector.shape_cast %374 : vector<1x1x4x1x32xf32> to vector<4x1x32xf32>
      %376 = arith.addf %375, %363 : vector<4x1x32xf32>
      %c11_i32 = arith.constant 11 : i32
      %c14_i32_218 = arith.constant 14 : i32
      %377 = arith.subi %c14_i32_218, %c11_i32 : i32
      %c0_219 = arith.constant 0 : index
      %378 = arith.index_cast %377 : i32 to index
      %c0_220 = arith.constant 0 : index
      %c0_221 = arith.constant 0 : index
      %c0_222 = arith.constant 0 : index
      %379 = vector.load %arg5[%c0_219, %378, %c0_220, %c0_221, %c0_222] : memref<1x15x16x1x32xf32, #tpu.memory_space<vmem>>, vector<1x1x16x1x32xf32>
      %380 = vector.shape_cast %379 : vector<1x1x16x1x32xf32> to vector<16x1x32xf32>
      %381 = vector.shape_cast %380 : vector<16x1x32xf32> to vector<4x4x1x32xf32>
      %382 = vector.shape_cast %376 : vector<4x1x32xf32> to vector<1x4x1x32xf32>
      %383 = vector.broadcast %382 : vector<1x4x1x32xf32> to vector<4x4x1x32xf32>
      %384 = arith.addf %381, %383 : vector<4x4x1x32xf32>
      %385 = vector.broadcast %1 : f32 to vector<4x4x1x32xf32>
      %386 = arith.mulf %384, %385 : vector<4x4x1x32xf32>
      %cst_223 = arith.constant dense<0xFF800000> : vector<4x1x32xf32>
      %387 = vector.multi_reduction <maximumf>, %386, %cst_223 [1] : vector<4x4x1x32xf32> to vector<4x1x32xf32>
      %388 = vector.shape_cast %387 : vector<4x1x32xf32> to vector<4x1x1x32xf32>
      %389 = vector.broadcast %388 : vector<4x1x1x32xf32> to vector<4x4x1x32xf32>
      %390 = arith.subf %386, %389 : vector<4x4x1x32xf32>
      %391 = math.exp %390 : vector<4x4x1x32xf32>
      %cst_224 = arith.constant dense<0.000000e+00> : vector<4x1x32xf32>
      %392 = vector.multi_reduction <add>, %391, %cst_224 [1] : vector<4x4x1x32xf32> to vector<4x1x32xf32>
      %393 = math.log %392 : vector<4x1x32xf32>
      %394 = arith.addf %387, %393 : vector<4x1x32xf32>
      %395 = vector.broadcast %0 : f32 to vector<4x1x32xf32>
      %396 = arith.mulf %395, %394 : vector<4x1x32xf32>
      %397 = arith.addi %9, %377 : i32
      %c0_225 = arith.constant 0 : index
      %398 = arith.index_cast %397 : i32 to index
      %c0_226 = arith.constant 0 : index
      %c0_227 = arith.constant 0 : index
      %c0_228 = arith.constant 0 : index
      %399 = vector.load %arg6[%c0_225, %398, %c0_226, %c0_227, %c0_228] : memref<1x16x4x1x32xf32, #tpu.memory_space<vmem>>, vector<1x1x4x1x32xf32>
      %400 = vector.shape_cast %399 : vector<1x1x4x1x32xf32> to vector<4x1x32xf32>
      %401 = arith.addf %400, %396 : vector<4x1x32xf32>
      %c0_229 = arith.constant 0 : index
      %402 = arith.index_cast %397 : i32 to index
      %c0_230 = arith.constant 0 : index
      %c0_231 = arith.constant 0 : index
      %c0_232 = arith.constant 0 : index
      %403 = vector.load %arg6[%c0_229, %402, %c0_230, %c0_231, %c0_232] : memref<1x16x4x1x32xf32, #tpu.memory_space<vmem>>, vector<1x1x4x1x32xf32>
      %404 = vector.shape_cast %403 : vector<1x1x4x1x32xf32> to vector<4x1x32xf32>
      %405 = vector.shape_cast %401 : vector<4x1x32xf32> to vector<1x1x4x1x32xf32>
      tpu.vector_store %arg6[%c0_229, %402, %c0_230, %c0_231, %c0_232], %405 {strides = array<i32>} : memref<1x16x4x1x32xf32, #tpu.memory_space<vmem>>, vector<1x1x4x1x32xf32>,
      %c0_233 = arith.constant 0 : index
      %406 = arith.index_cast %397 : i32 to index
      %c0_234 = arith.constant 0 : index
      %c0_235 = arith.constant 0 : index
      %c0_236 = arith.constant 0 : index
      %407 = vector.load %arg4[%c0_233, %406, %c0_234, %c0_235, %c0_236] : memref<1x16x4x1x32xf32, #tpu.memory_space<vmem>>, vector<1x1x4x1x32xf32>
      %408 = vector.shape_cast %407 : vector<1x1x4x1x32xf32> to vector<4x1x32xf32>
      %409 = arith.addf %408, %396 : vector<4x1x32xf32>
      %c12_i32 = arith.constant 12 : i32
      %c14_i32_237 = arith.constant 14 : i32
      %410 = arith.subi %c14_i32_237, %c12_i32 : i32
      %c0_238 = arith.constant 0 : index
      %411 = arith.index_cast %410 : i32 to index
      %c0_239 = arith.constant 0 : index
      %c0_240 = arith.constant 0 : index
      %c0_241 = arith.constant 0 : index
      %412 = vector.load %arg5[%c0_238, %411, %c0_239, %c0_240, %c0_241] : memref<1x15x16x1x32xf32, #tpu.memory_space<vmem>>, vector<1x1x16x1x32xf32>
      %413 = vector.shape_cast %412 : vector<1x1x16x1x32xf32> to vector<16x1x32xf32>
      %414 = vector.shape_cast %413 : vector<16x1x32xf32> to vector<4x4x1x32xf32>
      %415 = vector.shape_cast %409 : vector<4x1x32xf32> to vector<1x4x1x32xf32>
      %416 = vector.broadcast %415 : vector<1x4x1x32xf32> to vector<4x4x1x32xf32>
      %417 = arith.addf %414, %416 : vector<4x4x1x32xf32>
      %418 = vector.broadcast %1 : f32 to vector<4x4x1x32xf32>
      %419 = arith.mulf %417, %418 : vector<4x4x1x32xf32>
      %cst_242 = arith.constant dense<0xFF800000> : vector<4x1x32xf32>
      %420 = vector.multi_reduction <maximumf>, %419, %cst_242 [1] : vector<4x4x1x32xf32> to vector<4x1x32xf32>
      %421 = vector.shape_cast %420 : vector<4x1x32xf32> to vector<4x1x1x32xf32>
      %422 = vector.broadcast %421 : vector<4x1x1x32xf32> to vector<4x4x1x32xf32>
      %423 = arith.subf %419, %422 : vector<4x4x1x32xf32>
      %424 = math.exp %423 : vector<4x4x1x32xf32>
      %cst_243 = arith.constant dense<0.000000e+00> : vector<4x1x32xf32>
      %425 = vector.multi_reduction <add>, %424, %cst_243 [1] : vector<4x4x1x32xf32> to vector<4x1x32xf32>
      %426 = math.log %425 : vector<4x1x32xf32>
      %427 = arith.addf %420, %426 : vector<4x1x32xf32>
      %428 = vector.broadcast %0 : f32 to vector<4x1x32xf32>
      %429 = arith.mulf %428, %427 : vector<4x1x32xf32>
      %430 = arith.addi %9, %410 : i32
      %c0_244 = arith.constant 0 : index
      %431 = arith.index_cast %430 : i32 to index
      %c0_245 = arith.constant 0 : index
      %c0_246 = arith.constant 0 : index
      %c0_247 = arith.constant 0 : index
      %432 = vector.load %arg6[%c0_244, %431, %c0_245, %c0_246, %c0_247] : memref<1x16x4x1x32xf32, #tpu.memory_space<vmem>>, vector<1x1x4x1x32xf32>
      %433 = vector.shape_cast %432 : vector<1x1x4x1x32xf32> to vector<4x1x32xf32>
      %434 = arith.addf %433, %429 : vector<4x1x32xf32>
      %c0_248 = arith.constant 0 : index
      %435 = arith.index_cast %430 : i32 to index
      %c0_249 = arith.constant 0 : index
      %c0_250 = arith.constant 0 : index
      %c0_251 = arith.constant 0 : index
      %436 = vector.load %arg6[%c0_248, %435, %c0_249, %c0_250, %c0_251] : memref<1x16x4x1x32xf32, #tpu.memory_space<vmem>>, vector<1x1x4x1x32xf32>
      %437 = vector.shape_cast %436 : vector<1x1x4x1x32xf32> to vector<4x1x32xf32>
      %438 = vector.shape_cast %434 : vector<4x1x32xf32> to vector<1x1x4x1x32xf32>
      tpu.vector_store %arg6[%c0_248, %435, %c0_249, %c0_250, %c0_251], %438 {strides = array<i32>} : memref<1x16x4x1x32xf32, #tpu.memory_space<vmem>>, vector<1x1x4x1x32xf32>,
      %c0_252 = arith.constant 0 : index
      %439 = arith.index_cast %430 : i32 to index
      %c0_253 = arith.constant 0 : index
      %c0_254 = arith.constant 0 : index
      %c0_255 = arith.constant 0 : index
      %440 = vector.load %arg4[%c0_252, %439, %c0_253, %c0_254, %c0_255] : memref<1x16x4x1x32xf32, #tpu.memory_space<vmem>>, vector<1x1x4x1x32xf32>
      %441 = vector.shape_cast %440 : vector<1x1x4x1x32xf32> to vector<4x1x32xf32>
      %442 = arith.addf %441, %429 : vector<4x1x32xf32>
      %c13_i32 = arith.constant 13 : i32
      %c14_i32_256 = arith.constant 14 : i32
      %443 = arith.subi %c14_i32_256, %c13_i32 : i32
      %c0_257 = arith.constant 0 : index
      %444 = arith.index_cast %443 : i32 to index
      %c0_258 = arith.constant 0 : index
      %c0_259 = arith.constant 0 : index
      %c0_260 = arith.constant 0 : index
      %445 = vector.load %arg5[%c0_257, %444, %c0_258, %c0_259, %c0_260] : memref<1x15x16x1x32xf32, #tpu.memory_space<vmem>>, vector<1x1x16x1x32xf32>
      %446 = vector.shape_cast %445 : vector<1x1x16x1x32xf32> to vector<16x1x32xf32>
      %447 = vector.shape_cast %446 : vector<16x1x32xf32> to vector<4x4x1x32xf32>
      %448 = vector.shape_cast %442 : vector<4x1x32xf32> to vector<1x4x1x32xf32>
      %449 = vector.broadcast %448 : vector<1x4x1x32xf32> to vector<4x4x1x32xf32>
      %450 = arith.addf %447, %449 : vector<4x4x1x32xf32>
      %451 = vector.broadcast %1 : f32 to vector<4x4x1x32xf32>
      %452 = arith.mulf %450, %451 : vector<4x4x1x32xf32>
      %cst_261 = arith.constant dense<0xFF800000> : vector<4x1x32xf32>
      %453 = vector.multi_reduction <maximumf>, %452, %cst_261 [1] : vector<4x4x1x32xf32> to vector<4x1x32xf32>
      %454 = vector.shape_cast %453 : vector<4x1x32xf32> to vector<4x1x1x32xf32>
      %455 = vector.broadcast %454 : vector<4x1x1x32xf32> to vector<4x4x1x32xf32>
      %456 = arith.subf %452, %455 : vector<4x4x1x32xf32>
      %457 = math.exp %456 : vector<4x4x1x32xf32>
      %cst_262 = arith.constant dense<0.000000e+00> : vector<4x1x32xf32>
      %458 = vector.multi_reduction <add>, %457, %cst_262 [1] : vector<4x4x1x32xf32> to vector<4x1x32xf32>
      %459 = math.log %458 : vector<4x1x32xf32>
      %460 = arith.addf %453, %459 : vector<4x1x32xf32>
      %461 = vector.broadcast %0 : f32 to vector<4x1x32xf32>
      %462 = arith.mulf %461, %460 : vector<4x1x32xf32>
      %463 = arith.addi %9, %443 : i32
      %c0_263 = arith.constant 0 : index
      %464 = arith.index_cast %463 : i32 to index
      %c0_264 = arith.constant 0 : index
      %c0_265 = arith.constant 0 : index
      %c0_266 = arith.constant 0 : index
      %465 = vector.load %arg6[%c0_263, %464, %c0_264, %c0_265, %c0_266] : memref<1x16x4x1x32xf32, #tpu.memory_space<vmem>>, vector<1x1x4x1x32xf32>
      %466 = vector.shape_cast %465 : vector<1x1x4x1x32xf32> to vector<4x1x32xf32>
      %467 = arith.addf %466, %462 : vector<4x1x32xf32>
      %c0_267 = arith.constant 0 : index
      %468 = arith.index_cast %463 : i32 to index
      %c0_268 = arith.constant 0 : index
      %c0_269 = arith.constant 0 : index
      %c0_270 = arith.constant 0 : index
      %469 = vector.load %arg6[%c0_267, %468, %c0_268, %c0_269, %c0_270] : memref<1x16x4x1x32xf32, #tpu.memory_space<vmem>>, vector<1x1x4x1x32xf32>
      %470 = vector.shape_cast %469 : vector<1x1x4x1x32xf32> to vector<4x1x32xf32>
      %471 = vector.shape_cast %467 : vector<4x1x32xf32> to vector<1x1x4x1x32xf32>
      tpu.vector_store %arg6[%c0_267, %468, %c0_268, %c0_269, %c0_270], %471 {strides = array<i32>} : memref<1x16x4x1x32xf32, #tpu.memory_space<vmem>>, vector<1x1x4x1x32xf32>,
      %c0_271 = arith.constant 0 : index
      %472 = arith.index_cast %463 : i32 to index
      %c0_272 = arith.constant 0 : index
      %c0_273 = arith.constant 0 : index
      %c0_274 = arith.constant 0 : index
      %473 = vector.load %arg4[%c0_271, %472, %c0_272, %c0_273, %c0_274] : memref<1x16x4x1x32xf32, #tpu.memory_space<vmem>>, vector<1x1x4x1x32xf32>
      %474 = vector.shape_cast %473 : vector<1x1x4x1x32xf32> to vector<4x1x32xf32>
      %475 = arith.addf %474, %462 : vector<4x1x32xf32>
      %c14_i32_275 = arith.constant 14 : i32
      %c14_i32_276 = arith.constant 14 : i32
      %476 = arith.subi %c14_i32_276, %c14_i32_275 : i32
      %c0_277 = arith.constant 0 : index
      %477 = arith.index_cast %476 : i32 to index
      %c0_278 = arith.constant 0 : index
      %c0_279 = arith.constant 0 : index
      %c0_280 = arith.constant 0 : index
      %478 = vector.load %arg5[%c0_277, %477, %c0_278, %c0_279, %c0_280] : memref<1x15x16x1x32xf32, #tpu.memory_space<vmem>>, vector<1x1x16x1x32xf32>
      %479 = vector.shape_cast %478 : vector<1x1x16x1x32xf32> to vector<16x1x32xf32>
      %480 = vector.shape_cast %479 : vector<16x1x32xf32> to vector<4x4x1x32xf32>
      %481 = vector.shape_cast %475 : vector<4x1x32xf32> to vector<1x4x1x32xf32>
      %482 = vector.broadcast %481 : vector<1x4x1x32xf32> to vector<4x4x1x32xf32>
      %483 = arith.addf %480, %482 : vector<4x4x1x32xf32>
      %484 = vector.broadcast %1 : f32 to vector<4x4x1x32xf32>
      %485 = arith.mulf %483, %484 : vector<4x4x1x32xf32>
      %cst_281 = arith.constant dense<0xFF800000> : vector<4x1x32xf32>
      %486 = vector.multi_reduction <maximumf>, %485, %cst_281 [1] : vector<4x4x1x32xf32> to vector<4x1x32xf32>
      %487 = vector.shape_cast %486 : vector<4x1x32xf32> to vector<4x1x1x32xf32>
      %488 = vector.broadcast %487 : vector<4x1x1x32xf32> to vector<4x4x1x32xf32>
      %489 = arith.subf %485, %488 : vector<4x4x1x32xf32>
      %490 = math.exp %489 : vector<4x4x1x32xf32>
      %cst_282 = arith.constant dense<0.000000e+00> : vector<4x1x32xf32>
      %491 = vector.multi_reduction <add>, %490, %cst_282 [1] : vector<4x4x1x32xf32> to vector<4x1x32xf32>
      %492 = math.log %491 : vector<4x1x32xf32>
      %493 = arith.addf %486, %492 : vector<4x1x32xf32>
      %494 = vector.broadcast %0 : f32 to vector<4x1x32xf32>
      %495 = arith.mulf %494, %493 : vector<4x1x32xf32>
      %496 = arith.addi %9, %476 : i32
      %c0_283 = arith.constant 0 : index
      %497 = arith.index_cast %496 : i32 to index
      %c0_284 = arith.constant 0 : index
      %c0_285 = arith.constant 0 : index
      %c0_286 = arith.constant 0 : index
      %498 = vector.load %arg6[%c0_283, %497, %c0_284, %c0_285, %c0_286] : memref<1x16x4x1x32xf32, #tpu.memory_space<vmem>>, vector<1x1x4x1x32xf32>
      %499 = vector.shape_cast %498 : vector<1x1x4x1x32xf32> to vector<4x1x32xf32>
      %500 = arith.addf %499, %495 : vector<4x1x32xf32>
      %c0_287 = arith.constant 0 : index
      %501 = arith.index_cast %496 : i32 to index
      %c0_288 = arith.constant 0 : index
      %c0_289 = arith.constant 0 : index
      %c0_290 = arith.constant 0 : index
      %502 = vector.load %arg6[%c0_287, %501, %c0_288, %c0_289, %c0_290] : memref<1x16x4x1x32xf32, #tpu.memory_space<vmem>>, vector<1x1x4x1x32xf32>
      %503 = vector.shape_cast %502 : vector<1x1x4x1x32xf32> to vector<4x1x32xf32>
      %504 = vector.shape_cast %500 : vector<4x1x32xf32> to vector<1x1x4x1x32xf32>
      tpu.vector_store %arg6[%c0_287, %501, %c0_288, %c0_289, %c0_290], %504 {strides = array<i32>} : memref<1x16x4x1x32xf32, #tpu.memory_space<vmem>>, vector<1x1x4x1x32xf32>,
      %c0_291 = arith.constant 0 : index
      %505 = arith.index_cast %496 : i32 to index
      %c0_292 = arith.constant 0 : index
      %c0_293 = arith.constant 0 : index
      %c0_294 = arith.constant 0 : index
      %506 = vector.load %arg4[%c0_291, %505, %c0_292, %c0_293, %c0_294] : memref<1x16x4x1x32xf32, #tpu.memory_space<vmem>>, vector<1x1x4x1x32xf32>
      %507 = vector.shape_cast %506 : vector<1x1x4x1x32xf32> to vector<4x1x32xf32>
      %508 = arith.addf %507, %495 : vector<4x1x32xf32>
      %c15_i32_295 = arith.constant 15 : i32
      %c0_296 = arith.constant 0 : index
      %c0_297 = arith.constant 0 : index
      %c0_298 = arith.constant 0 : index
      %509 = vector.load %arg7[%c0_296, %c0_297, %c0_298] : memref<4x1x32xf32, #tpu.memory_space<vmem>>, vector<4x1x32xf32>
      tpu.vector_store %arg7[%c0_296, %c0_297, %c0_298], %508 {strides = array<i32>} : memref<4x1x32xf32, #tpu.memory_space<vmem>>, vector<4x1x32xf32>,
    } else {
    }
    return
  }
  func.func @transform_0(%arg0: i32, %arg1: i32, %arg2: i32) -> i32 {
    %c0_i32 = arith.constant 0 : i32
    %c0_i32_0 = arith.constant 0 : i32
    return %c0_i32 : i32
  }
  func.func @transform_1(%arg0: i32, %arg1: i32, %arg2: i32) -> (i32, i32, i32, i32, i32) {
    %c0_i32 = arith.constant 0 : i32
    %c0_i32_0 = arith.constant 0 : i32
    %c0_i32_1 = arith.constant 0 : i32
    %c0_i32_2 = arith.constant 0 : i32
    %c0_i32_3 = arith.constant 0 : i32
    return %arg0, %c0_i32, %c0_i32_0, %c0_i32_1, %c0_i32_2 : i32, i32, i32, i32, i32
  }
  func.func @transform_2(%arg0: i32, %arg1: i32, %arg2: i32) -> (i32, i32, i32, i32, i32) {
    %c1_i32 = arith.constant 1 : i32
    %0 = arith.subi %c1_i32, %arg1 : i32
    %1 = arith.muli %0, %arg2 : i32
    %c0_i32 = arith.constant 0 : i32
    %2 = arith.subi %c0_i32, %arg2 : i32
    %3 = arith.muli %arg1, %2 : i32
    %4 = arith.addi %1, %3 : i32
    %c0_i32_0 = arith.constant 0 : i32
    %c0_i32_1 = arith.constant 0 : i32
    %c0_i32_2 = arith.constant 0 : i32
    %c0_i32_3 = arith.constant 0 : i32
    return %arg0, %4, %c0_i32_0, %c0_i32_1, %c0_i32_2 : i32, i32, i32, i32, i32
  }
  func.func @transform_3(%arg0: i32, %arg1: i32, %arg2: i32) -> (i32, i32, i32, i32, i32) {
    %c0_i32 = arith.constant 0 : i32
    %c0_i32_0 = arith.constant 0 : i32
    %c0_i32_1 = arith.constant 0 : i32
    %c0_i32_2 = arith.constant 0 : i32
    %c0_i32_3 = arith.constant 0 : i32
    return %arg0, %c0_i32, %c0_i32_0, %c0_i32_1, %c0_i32_2 : i32, i32, i32, i32, i32
  }
}

</mosaic_0001>

<llo_original>
// kernel: fixed_point_iteration.1
$region0: #{fixed_point_iteration.1}
  #allocation0 [shape = 'u32[]', space=smem, size = 0x4, offset = 0x4, fixed_abs, tag = 'smem constant byte address 0x4 - core index']
  #allocation1 [shape = 'u32[144,128]{1,0:T(1,128)}', space=vmem, size = 0x12000, scoped, tag = 'internal scratch']
  #allocation2 [shape = 'f32[4,1,32]{2,1,0:T(1,128)}', space=vmem, size = 0x800, scoped, tag = 'scratch operand']
  #allocation3 [shape = 'f32[1]{0:T(128)S(6)}', space=smem, size = 0x200, scoped, tag = 'scoped memory for fixed_point_iteration.1']
  %s0 = inlined_call_operand.<no memory space> [shape: f32[1], index: 0, kind: input, shape index: {}]
  %s1 = inlined_call_operand.vmem [shape: f32[2,16,4,1,32], index: 1, kind: input, shape index: {}]
  %s2 = inlined_call_operand.vmem [shape: f32[2,15,16,1,32], index: 2, kind: input, shape index: {}]
  %s3 = inlined_call_operand.vmem [shape: f32[2,16,4,1,32], index: 3, kind: output, shape index: {}]
  %s4 = sld [smem:[#allocation0]]
  $region61: #{fixed_point_iteration.1} parent=0
    _
  %s6 = ssub.s32 1, %s4
  %s7 = scalar_select 0, %s6, %s4
  %8 = sst [smem:[#allocation3]] %s0
  loop: start=0, step=1, limit=6
  $region2: #{fixed_point_iteration.1} parent=0 // loop_pre_header
    _
  $region3: #{fixed_point_iteration.1} parent=0 // loop_header
    %s10 = sphi 0, %s14
    %p11 = scmp.ge.s32.totalorder %s10, 6
    %s17 = sphi 0, %s36
    %s18 = sphi 0, %s32
    %s19 = sphi 0, %s28
    %s20 = sphi 0, %s17
    %s21 = sphi 0, %s18
    %s22 = sphi 0, %s19
    %s23 = sphi 0, %s20
    %s24 = sphi 0, %s21
    %s25 = sphi 0, %s22
    %s37 = sphi 0, %s37
    %s39 = sphi 0, %s37
    %s40 = sphi 0, %s39
    %s54 = sphi 0, %s40
    %s60 = sphi 0, %s62
    %s63 = sphi 0, %s60
    %s64 = sphi 0, %s63
    %s80 = sphi 0, %s64
    %s98 = sphi 0, %s100
    %s101 = sphi 0, %s98
    %s102 = sphi 0, %s101
    %s118 = sphi 0, %s102
    %s124 = sphi 0, %s126
    %s127 = sphi 0, %s124
    %s128 = sphi 0, %s127
    %s144 = sphi 0, %s128
  $region4: #{fixed_point_iteration.1} parent=0 // loop_header_branch
    %13 = sbr.rel (%p11) target = $region8
  $region5: #{fixed_point_iteration.1} parent=0 // loop_body
    %s15 = ssub.s32 %s10, 1
    %s16 = ssub.s32 %s10, 2
    %s26 = sadd.s32 1, %s19
    %p27 = scmp.ge.s32.totalorder %s26, 1
    %s28 = scalar_select %p27, 0, %s26
    %s29 = sadd.s32 1, %s18
    %s30 = scalar_select %p27, %s29, %s18
    %p31 = scmp.ge.s32.totalorder %s30, 2
    %s32 = scalar_select %p31, 0, %s30
    %s33 = sadd.s32 1, %s17
    %s34 = scalar_select %p31, %s33, %s17
    %p35 = scmp.ge.s32.totalorder %s34, 2
    %s36 = scalar_select %p35, 0, %s34
    %s38 = sadd.s32 %s37, 1
    %p41 = scmp.eq.s32.totalorder %s10, 3
    %p42 = scmp.ne.s32.totalorder %s37, %s39
    %p43 = scmp.eq.s32.totalorder %s10, 0
    %p44 = por %p42, %p43
    %p45 = scmp.ne.s32.totalorder %s37, %s39
    %p46 = scmp.eq.s32.totalorder %s15, 3
    %p47 = por %p45, %p46
    %p48 = scmp.ne.s32.totalorder %s39, %s40
    %p49 = scmp.eq.s32.totalorder %s15, 0
    %p50 = por %p48, %p49
    %p51 = scmp.ne.s32.totalorder %s39, %s40
    %p52 = scmp.eq.s32.totalorder %s16, 3
    %p53 = por %p51, %p52
    %p55 = scmp.ne.s32.totalorder %s40, %s54
    %p56 = scmp.eq.s32.totalorder %s16, 0
    %p57 = por %p55, %p56
    %s58 = ssub.s32 %s17, %s36
    %p59 = scmp.eq.s32.totalorder %s58, 0
    %s61 = sadd.s32 %s60, 1
    %s62 = scalar_select %p59, %s60, %s61
    %p65 = pneg %p59
    %p66 = scmp.eq.s32.totalorder %s10, 3
    %p67 = por %p65, %p66
    %p68 = scmp.ne.s32.totalorder %s60, %s63
    %p69 = scmp.eq.s32.totalorder %s10, 0
    %p70 = por %p68, %p69
    %p71 = scmp.ne.s32.totalorder %s60, %s63
    %p72 = scmp.eq.s32.totalorder %s15, 3
    %p73 = por %p71, %p72
    %p74 = scmp.ne.s32.totalorder %s63, %s64
    %p75 = scmp.eq.s32.totalorder %s15, 0
    %p76 = por %p74, %p75
    %p77 = scmp.ne.s32.totalorder %s63, %s64
    %p78 = scmp.eq.s32.totalorder %s16, 3
    %p79 = por %p77, %p78
    %p81 = scmp.ne.s32.totalorder %s64, %s80
    %p82 = scmp.eq.s32.totalorder %s16, 0
    %p83 = por %p81, %p82
    %s84 = ssub.s32 1, %s18
    %s85 = smul.u32 %s84, %s19
    %s86 = ssub.s32 0, %s19
    %s87 = smul.u32 %s18, %s86
    %s88 = sadd.s32 %s85, %s87
    %s89 = ssub.s32 1, %s32
    %s90 = smul.u32 %s89, %s28
    %s91 = ssub.s32 0, %s28
    %s92 = smul.u32 %s32, %s91
    %s93 = sadd.s32 %s90, %s92
    %s94 = ssub.s32 %s17, %s36
    %s95 = ssub.s32 %s88, %s93
    %s96 = sor.u32 %s94, %s95
    %p97 = scmp.eq.s32.totalorder %s96, 0
    %s99 = sadd.s32 %s98, 1
    %s100 = scalar_select %p97, %s98, %s99
    %p103 = pneg %p97
    %p104 = scmp.eq.s32.totalorder %s10, 3
    %p105 = por %p103, %p104
    %p106 = scmp.ne.s32.totalorder %s98, %s101
    %p107 = scmp.eq.s32.totalorder %s10, 0
    %p108 = por %p106, %p107
    %p109 = scmp.ne.s32.totalorder %s98, %s101
    %p110 = scmp.eq.s32.totalorder %s15, 3
    %p111 = por %p109, %p110
    %p112 = scmp.ne.s32.totalorder %s101, %s102
    %p113 = scmp.eq.s32.totalorder %s15, 0
    %p114 = por %p112, %p113
    %p115 = scmp.ne.s32.totalorder %s101, %s102
    %p116 = scmp.eq.s32.totalorder %s16, 3
    %p117 = por %p115, %p116
    %p119 = scmp.ne.s32.totalorder %s102, %s118
    %p120 = scmp.eq.s32.totalorder %s16, 0
    %p121 = por %p119, %p120
    %s122 = ssub.s32 %s17, %s36
    %p123 = scmp.eq.s32.totalorder %s122, 0
    %s125 = sadd.s32 %s124, 1
    %s126 = scalar_select %p123, %s124, %s125
    %p129 = pneg %p123
    %p130 = scmp.eq.s32.totalorder %s10, 3
    %p131 = por %p129, %p130
    %p132 = scmp.ne.s32.totalorder %s124, %s127
    %p133 = scmp.eq.s32.totalorder %s10, 0
    %p134 = por %p132, %p133
    %p135 = scmp.ne.s32.totalorder %s124, %s127
    %p136 = scmp.eq.s32.totalorder %s15, 3
    %p137 = por %p135, %p136
    %p138 = scmp.ne.s32.totalorder %s127, %s128
    %p139 = scmp.eq.s32.totalorder %s15, 0
    %p140 = por %p138, %p139
    %p141 = scmp.ne.s32.totalorder %s127, %s128
    %p142 = scmp.eq.s32.totalorder %s16, 3
    %p143 = por %p141, %p142
    %p145 = scmp.ne.s32.totalorder %s128, %s144
    %p146 = scmp.eq.s32.totalorder %s16, 0
    %p147 = por %p145, %p146
    %p148 = scmp.le.s32.totalorder 1, %s10
    %p149 = scmp.lt.s32.totalorder %s10, 5
    %p150 = pnand %p148, %p149
    %p151 = pneg %p150
    // Predicated region
    $region9: #{fixed_point_iteration.1} parent=5 // pred_check
      _
    $region10: #{fixed_point_iteration.1} parent=5 // pred_check_branch
      %153 = sbr.rel (%p150) target = $region12
    $region11: #{fixed_point_iteration.1} parent=5 // pred_region
      %s154 = ssub.s32 %s10, 1
      // Predicated region
      $region13: #{fixed_point_iteration.1} parent=11 // pred_check
        %p155 = pneg %p50
      $region14: #{fixed_point_iteration.1} parent=11 // pred_check_branch
        %157 = sbr.rel (%p155) target = $region16
      $region15: #{fixed_point_iteration.1} parent=11 // pred_region
        _
      $region16: #{fixed_point_iteration.1} parent=11 // pred_fallthru
        _
    $region12: #{fixed_point_iteration.1} parent=5 // pred_fallthru
      _
    %p158 = scmp.lt.s32.totalorder %s10, 4
    // Predicated region
    $region17: #{fixed_point_iteration.1} parent=5 // pred_check
      %p159 = pneg %p158
    $region18: #{fixed_point_iteration.1} parent=5 // pred_check_branch
      %161 = sbr.rel (%p159) target = $region20
    $region19: #{fixed_point_iteration.1} parent=5 // pred_region
      // Predicated region
      $region21: #{fixed_point_iteration.1} parent=19 // pred_check
        %p162 = pneg %p70
      $region22: #{fixed_point_iteration.1} parent=19 // pred_check_branch
        %164 = sbr.rel (%p162) target = $region24
      $region23: #{fixed_point_iteration.1} parent=19 // pred_region
        %p165 = scmp.lt.s32.totalorder %s17, 1
        %s166 = scalar_select %p165, %s17, 1
        %s167 = smul.addr %s166, 64
        %s168 = scalar_lea.vmem %s1, %s167
      $region24: #{fixed_point_iteration.1} parent=19 // pred_fallthru
        _
      // Predicated region
      $region25: #{fixed_point_iteration.1} parent=19 // pred_check
        %p169 = pneg %p108
      $region26: #{fixed_point_iteration.1} parent=19 // pred_check_branch
        %171 = sbr.rel (%p169) target = $region28
      $region27: #{fixed_point_iteration.1} parent=19 // pred_region
        %s172 = ssub.s32 1, %s18
        %s173 = smul.u32 %s172, %s19
        %s174 = ssub.s32 0, %s19
        %s175 = smul.u32 %s18, %s174
        %s176 = sadd.s32 %s173, %s175
        %s177 = smul.u32 15, %s176
        %p178 = scmp.lt.s32.totalorder %s17, 1
        %s179 = scalar_select %p178, %s17, 1
        %p180 = scmp.lt.s32.totalorder %s177, 14
        %s181 = scalar_select %p180, %s177, 14
        %s182 = smul.addr %s181, 16
        %s183 = smul.addr %s179, 240
        %s184 = sadd.s32 %s182, %s183
        %s185 = scalar_lea.vmem %s2, %s184
        %s186 = ssub.s32 1, %s18
        %s187 = smul.u32 %s186, %s19
        %s188 = ssub.s32 0, %s19
        %s189 = smul.u32 %s18, %s188
        %s190 = sadd.s32 %s187, %s189
        %s191 = smul.u32 15, %s190
      $region28: #{fixed_point_iteration.1} parent=19 // pred_fallthru
        _
    $region20: #{fixed_point_iteration.1} parent=5 // pred_fallthru
      _
    %p192 = scmp.le.s32.totalorder 1, %s10
    %p193 = scmp.lt.s32.totalorder %s10, 5
    %p194 = pnand %p192, %p193
    %p195 = pneg %p194
    // Predicated region
    $region29: #{fixed_point_iteration.1} parent=5 // pred_check
      _
    $region30: #{fixed_point_iteration.1} parent=5 // pred_check_branch
      %197 = sbr.rel (%p194) target = $region32
    $region31: #{fixed_point_iteration.1} parent=5 // pred_region
      %s198 = ssub.s32 %s10, 1
      %p199 = pneg %p50
      %p200 = pneg %p47
      %p201 = scmp.lt.s32.totalorder %s20, 1
      %s202 = scalar_select %p201, %s20, 1
      %s203 = smul.addr %s202, 64
      %s204 = scalar_lea.vmem %s1, %s203
      %p205 = pneg %p76
      %p206 = pneg %p73
      %s207 = ssub.s32 1, %s21
      %s208 = smul.u32 %s207, %s22
      %s209 = ssub.s32 0, %s22
      %s210 = smul.u32 %s21, %s209
      %s211 = sadd.s32 %s208, %s210
      %s212 = smul.u32 15, %s211
      %p213 = scmp.lt.s32.totalorder %s20, 1
      %s214 = scalar_select %p213, %s20, 1
      %p215 = scmp.lt.s32.totalorder %s212, 14
      %s216 = scalar_select %p215, %s212, 14
      %s217 = smul.addr %s216, 16
      %s218 = smul.addr %s214, 240
      %s219 = sadd.s32 %s217, %s218
      %s220 = scalar_lea.vmem %s2, %s219
      %p221 = pneg %p114
      %p222 = pneg %p111
      %p223 = pneg %p140
      %p224 = pneg %p137
      %p225 = scmp.lt.s32.totalorder %s20, 1
      %s226 = scalar_select %p225, %s20, 1
      %s227 = smul.addr %s226, 64
      %s228 = scalar_lea.vmem %s3, %s227
      %p229 = scmp.lt.s32.totalorder %s20, 1
      %s230 = scalar_select %p229, %s20, 1
      %s231 = smul.addr %s230, 64
      %s232 = scalar_lea.vmem %s1, %s231
      %s233 = ssub.s32 1, %s21
      %s234 = smul.u32 %s233, %s22
      %s235 = ssub.s32 0, %s22
      %s236 = smul.u32 %s21, %s235
      %s237 = sadd.s32 %s234, %s236
      %s238 = smul.u32 15, %s237
      %p239 = scmp.lt.s32.totalorder %s20, 1
      %s240 = scalar_select %p239, %s20, 1
      %p241 = scmp.lt.s32.totalorder %s238, 14
      %s242 = scalar_select %p241, %s238, 14
      %s243 = smul.addr %s242, 16
      %s244 = smul.addr %s240, 240
      %s245 = sadd.s32 %s243, %s244
      %s246 = scalar_lea.vmem %s2, %s245
      %s247 = ssub.s32 1, %s21
      %s248 = smul.u32 %s247, %s22
      %s249 = ssub.s32 0, %s22
      %s250 = smul.u32 %s21, %s249
      %s251 = sadd.s32 %s248, %s250
      %s252 = smul.u32 15, %s251
      %p253 = scmp.lt.s32.totalorder %s20, 1
      %s254 = scalar_select %p253, %s20, 1
      %s255 = smul.addr %s254, 64
      %s256 = scalar_lea.vmem %s3, %s255
      %s257 = sld [smem:[#allocation3]]
      %v258 = vstv %s257
      %v259 = vrcp.pop %v258
      %s260 = vtos %v259
      %p261 = scmp.eq.s32.totalorder %s21, 0
      // Predicated region
      $region33: #{fixed_point_iteration.1} parent=31 // pred_check
        %p262 = pneg %p261
      $region34: #{fixed_point_iteration.1} parent=31 // pred_check_branch
        %264 = sbr.rel (%p262) target = $region36
      $region35: #{fixed_point_iteration.1} parent=31 // pred_region
        %s265 = smul.u32 %s22, 15
        %p266 = scmp.eq.s32.totalorder %s22, 0
        // Predicated region
        $region37: #{fixed_point_iteration.1} parent=35 // pred_check
          %p267 = pneg %p266
        $region38: #{fixed_point_iteration.1} parent=35 // pred_check_branch
          %269 = sbr.rel (%p267) target = $region40
        $region39: #{fixed_point_iteration.1} parent=35 // pred_region
          %v270 = vld [vmem:[%s232] sm:$0x1]
          %v271 = vld [vmem:[%s232 + $0x1] sm:$0x1]
          %v272 = vld [vmem:[%s232 + $0x2] sm:$0x1]
          %v273 = vld [vmem:[%s232 + $0x3] sm:$0x1]
          %vm274 = vcmask 253952
          %275 = vst.msk [vmem:[#allocation2] sm:$0x1] %vm274, %v270
          %276 = vst.msk [vmem:[#allocation2 + $0x1] sm:$0x1] %vm274, %v271
          %277 = vst.msk [vmem:[#allocation2 + $0x2] sm:$0x1] %vm274, %v272
          %278 = vst.msk [vmem:[#allocation2 + $0x3] sm:$0x1] %vm274, %v273
          %279 = vst.msk [vmem:[%s256] sm:$0x1] %vm274, %v270
          %280 = vst.msk [vmem:[%s256 + $0x1] sm:$0x1] %vm274, %v271
          %281 = vst.msk [vmem:[%s256 + $0x2] sm:$0x1] %vm274, %v272
          %282 = vst.msk [vmem:[%s256 + $0x3] sm:$0x1] %vm274, %v273
        $region40: #{fixed_point_iteration.1} parent=35 // pred_fallthru
          _
        %v283 = vld [vmem:[#allocation2] sm:$0x1]
        %v284 = vld [vmem:[#allocation2 + $0x1] sm:$0x1]
        %v285 = vld [vmem:[#allocation2 + $0x2] sm:$0x1]
        %v286 = vld [vmem:[#allocation2 + $0x3] sm:$0x1]
        %v287 = vld [vmem:[%s246] sm:$0x1]
        %v288 = vld [vmem:[%s246 + $0x1] sm:$0x1]
        %v289 = vld [vmem:[%s246 + $0x2] sm:$0x1]
        %v290 = vld [vmem:[%s246 + $0x3] sm:$0x1]
        %v291 = vld [vmem:[%s246 + $0x4] sm:$0x1]
        %v292 = vld [vmem:[%s246 + $0x5] sm:$0x1]
        %v293 = vld [vmem:[%s246 + $0x6] sm:$0x1]
        %v294 = vld [vmem:[%s246 + $0x7] sm:$0x1]
        %v295 = vld [vmem:[%s246 + $0x8] sm:$0x1]
        %v296 = vld [vmem:[%s246 + $0x9] sm:$0x1]
        %v297 = vld [vmem:[%s246 + $0xa] sm:$0x1]
        %v298 = vld [vmem:[%s246 + $0xb] sm:$0x1]
        %v299 = vld [vmem:[%s246 + $0xc] sm:$0x1]
        %v300 = vld [vmem:[%s246 + $0xd] sm:$0x1]
        %v301 = vld [vmem:[%s246 + $0xe] sm:$0x1]
        %v302 = vld [vmem:[%s246 + $0xf] sm:$0x1]
        %v303 = vadd.f32 %v287, %v283
        %v304 = vadd.f32 %v288, %v283
        %v305 = vadd.f32 %v289, %v283
        %v306 = vadd.f32 %v290, %v283
        %v307 = vadd.f32 %v291, %v284
        %v308 = vadd.f32 %v292, %v284
        %v309 = vadd.f32 %v293, %v284
        %v310 = vadd.f32 %v294, %v284
        %v311 = vadd.f32 %v295, %v285
        %v312 = vadd.f32 %v296, %v285
        %v313 = vadd.f32 %v297, %v285
        %v314 = vadd.f32 %v298, %v285
        %v315 = vadd.f32 %v299, %v286
        %v316 = vadd.f32 %v300, %v286
        %v317 = vadd.f32 %v301, %v286
        %v318 = vadd.f32 %v302, %v286
        %v319 = vstv %s260
        %v320 = vmul.f32 %v303, %v319
        %v321 = vmul.f32 %v304, %v319
        %v322 = vmul.f32 %v305, %v319
        %v323 = vmul.f32 %v306, %v319
        %v324 = vmul.f32 %v307, %v319
        %v325 = vmul.f32 %v308, %v319
        %v326 = vmul.f32 %v309, %v319
        %v327 = vmul.f32 %v310, %v319
        %v328 = vmul.f32 %v311, %v319
        %v329 = vmul.f32 %v312, %v319
        %v330 = vmul.f32 %v313, %v319
        %v331 = vmul.f32 %v314, %v319
        %v332 = vmul.f32 %v315, %v319
        %v333 = vmul.f32 %v316, %v319
        %v334 = vmul.f32 %v317, %v319
        %v335 = vmul.f32 %v318, %v319
        %v336 = vlaneseq
        %vm337 = vcmp.ge.s32.totalorder %v336, 0
        %vm338 = vcmp.lt.s32.totalorder %v336, 32
        %vm339 = vmand %vm337, %vm338
        %v340 = vsel %vm339, %v320, -inf
        %v341 = vsel %vm339, %v324, -inf
        %v342 = vmax.f32 %v340, %v341
        %v343 = vsel %vm339, %v328, -inf
        %v344 = vmax.f32 %v342, %v343
        %v345 = vsel %vm339, %v332, -inf
        %v346 = vmax.f32 %v344, %v345
        %v347 = vsel %vm339, %v321, -inf
        %v348 = vsel %vm339, %v325, -inf
        %v349 = vmax.f32 %v347, %v348
        %v350 = vsel %vm339, %v329, -inf
        %v351 = vmax.f32 %v349, %v350
        %v352 = vsel %vm339, %v333, -inf
        %v353 = vmax.f32 %v351, %v352
        %v354 = vsel %vm339, %v322, -inf
        %v355 = vsel %vm339, %v326, -inf
        %v356 = vmax.f32 %v354, %v355
        %v357 = vsel %vm339, %v330, -inf
        %v358 = vmax.f32 %v356, %v357
        %v359 = vsel %vm339, %v334, -inf
        %v360 = vmax.f32 %v358, %v359
        %v361 = vsel %vm339, %v323, -inf
        %v362 = vsel %vm339, %v327, -inf
        %v363 = vmax.f32 %v361, %v362
        %v364 = vsel %vm339, %v331, -inf
        %v365 = vmax.f32 %v363, %v364
        %v366 = vsel %vm339, %v335, -inf
        %v367 = vmax.f32 %v365, %v366
        %v368 = vsub.f32 %v320, %v346
        %v369 = vsub.f32 %v321, %v353
        %v370 = vsub.f32 %v322, %v360
        %v371 = vsub.f32 %v323, %v367
        %v372 = vsub.f32 %v324, %v346
        %v373 = vsub.f32 %v325, %v353
        %v374 = vsub.f32 %v326, %v360
        %v375 = vsub.f32 %v327, %v367
        %v376 = vsub.f32 %v328, %v346
        %v377 = vsub.f32 %v329, %v353
        %v378 = vsub.f32 %v330, %v360
        %v379 = vsub.f32 %v331, %v367
        %v380 = vsub.f32 %v332, %v346
        %v381 = vsub.f32 %v333, %v353
        %v382 = vsub.f32 %v334, %v360
        %v383 = vsub.f32 %v335, %v367
        %v384 = vmul.f32 %v368, 1.442695
        %v385 = vpow.pop %v384
        %v386 = vmul.f32 %v369, 1.442695
        %v387 = vpow.pop %v386
        %v388 = vmul.f32 %v370, 1.442695
        %v389 = vpow.pop %v388
        %v390 = vmul.f32 %v371, 1.442695
        %v391 = vpow.pop %v390
        %v392 = vmul.f32 %v372, 1.442695
        %v393 = vpow.pop %v392
        %v394 = vmul.f32 %v373, 1.442695
        %v395 = vpow.pop %v394
        %v396 = vmul.f32 %v374, 1.442695
        %v397 = vpow.pop %v396
        %v398 = vmul.f32 %v375, 1.442695
        %v399 = vpow.pop %v398
        %v400 = vmul.f32 %v376, 1.442695
        %v401 = vpow.pop %v400
        %v402 = vmul.f32 %v377, 1.442695
        %v403 = vpow.pop %v402
        %v404 = vmul.f32 %v378, 1.442695
        %v405 = vpow.pop %v404
        %v406 = vmul.f32 %v379, 1.442695
        %v407 = vpow.pop %v406
        %v408 = vmul.f32 %v380, 1.442695
        %v409 = vpow.pop %v408
        %v410 = vmul.f32 %v381, 1.442695
        %v411 = vpow.pop %v410
        %v412 = vmul.f32 %v382, 1.442695
        %v413 = vpow.pop %v412
        %v414 = vmul.f32 %v383, 1.442695
        %v415 = vpow.pop %v414
        %vm416 = vcmask 253952
        %v417 = vsel %vm416, %v385, 0.0
        %v418 = vsel %vm416, %v393, 0.0
        %v419 = vadd.f32 %v417, %v418
        %v420 = vsel %vm416, %v401, 0.0
        %v421 = vadd.f32 %v419, %v420
        %v422 = vsel %vm416, %v409, 0.0
        %v423 = vadd.f32 %v421, %v422
        %v424 = vsel %vm416, %v387, 0.0
        %v425 = vsel %vm416, %v395, 0.0
        %v426 = vadd.f32 %v424, %v425
        %v427 = vsel %vm416, %v403, 0.0
        %v428 = vadd.f32 %v426, %v427
        %v429 = vsel %vm416, %v411, 0.0
        %v430 = vadd.f32 %v428, %v429
        %v431 = vsel %vm416, %v389, 0.0
        %v432 = vsel %vm416, %v397, 0.0
        %v433 = vadd.f32 %v431, %v432
        %v434 = vsel %vm416, %v405, 0.0
        %v435 = vadd.f32 %v433, %v434
        %v436 = vsel %vm416, %v413, 0.0
        %v437 = vadd.f32 %v435, %v436
        %v438 = vsel %vm416, %v391, 0.0
        %v439 = vsel %vm416, %v399, 0.0
        %v440 = vadd.f32 %v438, %v439
        %v441 = vsel %vm416, %v407, 0.0
        %v442 = vadd.f32 %v440, %v441
        %v443 = vsel %vm416, %v415, 0.0
        %v444 = vadd.f32 %v442, %v443
        %v445 = vlog2.pop %v423
        %v446 = vmul.f32 %v445, 0.6931472
        %v447 = vlog2.pop %v430
        %v448 = vmul.f32 %v447, 0.6931472
        %v449 = vlog2.pop %v437
        %v450 = vmul.f32 %v449, 0.6931472
        %v451 = vlog2.pop %v444
        %v452 = vmul.f32 %v451, 0.6931472
        %v453 = vadd.f32 %v346, %v446
        %v454 = vadd.f32 %v353, %v448
        %v455 = vadd.f32 %v360, %v450
        %v456 = vadd.f32 %v367, %v452
        %v457 = vstv %s257
        %v458 = vmul.f32 %v457, %v453
        %v459 = vmul.f32 %v457, %v454
        %v460 = vmul.f32 %v457, %v455
        %v461 = vmul.f32 %v457, %v456
        %s462 = sadd.s32 %s265, 1
        %s463 = smul.u32 %s462, 4
        %s464 = scalar_lea.vmem %s232, %s463
        %v465 = vld [vmem:[%s464] sm:$0x1]
        %v466 = vld [vmem:[%s464 + $0x1] sm:$0x1]
        %v467 = vld [vmem:[%s464 + $0x2] sm:$0x1]
        %v468 = vld [vmem:[%s464 + $0x3] sm:$0x1]
        %v469 = vadd.f32 %v465, %v458
        %v470 = vadd.f32 %v466, %v459
        %v471 = vadd.f32 %v467, %v460
        %v472 = vadd.f32 %v468, %v461
        %s473 = scalar_lea.vmem %s256, %s463
        %474 = vst.msk [vmem:[%s473] sm:$0x1] %vm416, %v469
        %475 = vst.msk [vmem:[%s473 + $0x1] sm:$0x1] %vm416, %v470
        %476 = vst.msk [vmem:[%s473 + $0x2] sm:$0x1] %vm416, %v471
        %477 = vst.msk [vmem:[%s473 + $0x3] sm:$0x1] %vm416, %v472
        %s478 = scalar_lea.vmem %s246, 16
        %v479 = vld [vmem:[%s478] sm:$0x1]
        %v480 = vld [vmem:[%s478 + $0x1] sm:$0x1]
        %v481 = vld [vmem:[%s478 + $0x2] sm:$0x1]
        %v482 = vld [vmem:[%s478 + $0x3] sm:$0x1]
        %v483 = vld [vmem:[%s478 + $0x4] sm:$0x1]
        %v484 = vld [vmem:[%s478 + $0x5] sm:$0x1]
        %v485 = vld [vmem:[%s478 + $0x6] sm:$0x1]
        %v486 = vld [vmem:[%s478 + $0x7] sm:$0x1]
        %v487 = vld [vmem:[%s478 + $0x8] sm:$0x1]
        %v488 = vld [vmem:[%s478 + $0x9] sm:$0x1]
        %v489 = vld [vmem:[%s478 + $0xa] sm:$0x1]
        %v490 = vld [vmem:[%s478 + $0xb] sm:$0x1]
        %v491 = vld [vmem:[%s478 + $0xc] sm:$0x1]
        %v492 = vld [vmem:[%s478 + $0xd] sm:$0x1]
        %v493 = vld [vmem:[%s478 + $0xe] sm:$0x1]
        %v494 = vld [vmem:[%s478 + $0xf] sm:$0x1]
        %v495 = vadd.f32 %v479, %v469
        %v496 = vadd.f32 %v480, %v469
        %v497 = vadd.f32 %v481, %v469
        %v498 = vadd.f32 %v482, %v469
        %v499 = vadd.f32 %v483, %v470
        %v500 = vadd.f32 %v484, %v470
        %v501 = vadd.f32 %v485, %v470
        %v502 = vadd.f32 %v486, %v470
        %v503 = vadd.f32 %v487, %v471
        %v504 = vadd.f32 %v488, %v471
        %v505 = vadd.f32 %v489, %v471
        %v506 = vadd.f32 %v490, %v471
        %v507 = vadd.f32 %v491, %v472
        %v508 = vadd.f32 %v492, %v472
        %v509 = vadd.f32 %v493, %v472
        %v510 = vadd.f32 %v494, %v472
        %v511 = vmul.f32 %v495, %v319
        %v512 = vmul.f32 %v496, %v319
        %v513 = vmul.f32 %v497, %v319
        %v514 = vmul.f32 %v498, %v319
        %v515 = vmul.f32 %v499, %v319
        %v516 = vmul.f32 %v500, %v319
        %v517 = vmul.f32 %v501, %v319
        %v518 = vmul.f32 %v502, %v319
        %v519 = vmul.f32 %v503, %v319
        %v520 = vmul.f32 %v504, %v319
        %v521 = vmul.f32 %v505, %v319
        %v522 = vmul.f32 %v506, %v319
        %v523 = vmul.f32 %v507, %v319
        %v524 = vmul.f32 %v508, %v319
        %v525 = vmul.f32 %v509, %v319
        %v526 = vmul.f32 %v510, %v319
        %v527 = vsel %vm339, %v511, -inf
        %v528 = vsel %vm339, %v515, -inf
        %v529 = vmax.f32 %v527, %v528
        %v530 = vsel %vm339, %v519, -inf
        %v531 = vmax.f32 %v529, %v530
        %v532 = vsel %vm339, %v523, -inf
        %v533 = vmax.f32 %v531, %v532
        %v534 = vsel %vm339, %v512, -inf
        %v535 = vsel %vm339, %v516, -inf
        %v536 = vmax.f32 %v534, %v535
        %v537 = vsel %vm339, %v520, -inf
        %v538 = vmax.f32 %v536, %v537
        %v539 = vsel %vm339, %v524, -inf
        %v540 = vmax.f32 %v538, %v539
        %v541 = vsel %vm339, %v513, -inf
        %v542 = vsel %vm339, %v517, -inf
        %v543 = vmax.f32 %v541, %v542
        %v544 = vsel %vm339, %v521, -inf
        %v545 = vmax.f32 %v543, %v544
        %v546 = vsel %vm339, %v525, -inf
        %v547 = vmax.f32 %v545, %v546
        %v548 = vsel %vm339, %v514, -inf
        %v549 = vsel %vm339, %v518, -inf
        %v550 = vmax.f32 %v548, %v549
        %v551 = vsel %vm339, %v522, -inf
        %v552 = vmax.f32 %v550, %v551
        %v553 = vsel %vm339, %v526, -inf
        %v554 = vmax.f32 %v552, %v553
        %v555 = vsub.f32 %v511, %v533
        %v556 = vsub.f32 %v512, %v540
        %v557 = vsub.f32 %v513, %v547
        %v558 = vsub.f32 %v514, %v554
        %v559 = vsub.f32 %v515, %v533
        %v560 = vsub.f32 %v516, %v540
        %v561 = vsub.f32 %v517, %v547
        %v562 = vsub.f32 %v518, %v554
        %v563 = vsub.f32 %v519, %v533
        %v564 = vsub.f32 %v520, %v540
        %v565 = vsub.f32 %v521, %v547
        %v566 = vsub.f32 %v522, %v554
        %v567 = vsub.f32 %v523, %v533
        %v568 = vsub.f32 %v524, %v540
        %v569 = vsub.f32 %v525, %v547
        %v570 = vsub.f32 %v526, %v554
        %v571 = vmul.f32 %v555, 1.442695
        %v572 = vpow.pop %v571
        %v573 = vmul.f32 %v556, 1.442695
        %v574 = vpow.pop %v573
        %v575 = vmul.f32 %v557, 1.442695
        %v576 = vpow.pop %v575
        %v577 = vmul.f32 %v558, 1.442695
        %v578 = vpow.pop %v577
        %v579 = vmul.f32 %v559, 1.442695
        %v580 = vpow.pop %v579
        %v581 = vmul.f32 %v560, 1.442695
        %v582 = vpow.pop %v581
        %v583 = vmul.f32 %v561, 1.442695
        %v584 = vpow.pop %v583
        %v585 = vmul.f32 %v562, 1.442695
        %v586 = vpow.pop %v585
        %v587 = vmul.f32 %v563, 1.442695
        %v588 = vpow.pop %v587
        %v589 = vmul.f32 %v564, 1.442695
        %v590 = vpow.pop %v589
        %v591 = vmul.f32 %v565, 1.442695
        %v592 = vpow.pop %v591
        %v593 = vmul.f32 %v566, 1.442695
        %v594 = vpow.pop %v593
        %v595 = vmul.f32 %v567, 1.442695
        %v596 = vpow.pop %v595
        %v597 = vmul.f32 %v568, 1.442695
        %v598 = vpow.pop %v597
        %v599 = vmul.f32 %v569, 1.442695
        %v600 = vpow.pop %v599
        %v601 = vmul.f32 %v570, 1.442695
        %v602 = vpow.pop %v601
        %v603 = vsel %vm416, %v572, 0.0
        %v604 = vsel %vm416, %v580, 0.0
        %v605 = vadd.f32 %v603, %v604
        %v606 = vsel %vm416, %v588, 0.0
        %v607 = vadd.f32 %v605, %v606
        %v608 = vsel %vm416, %v596, 0.0
        %v609 = vadd.f32 %v607, %v608
        %v610 = vsel %vm416, %v574, 0.0
        %v611 = vsel %vm416, %v582, 0.0
        %v612 = vadd.f32 %v610, %v611
        %v613 = vsel %vm416, %v590, 0.0
        %v614 = vadd.f32 %v612, %v613
        %v615 = vsel %vm416, %v598, 0.0
        %v616 = vadd.f32 %v614, %v615
        %v617 = vsel %vm416, %v576, 0.0
        %v618 = vsel %vm416, %v584, 0.0
        %v619 = vadd.f32 %v617, %v618
        %v620 = vsel %vm416, %v592, 0.0
        %v621 = vadd.f32 %v619, %v620
        %v622 = vsel %vm416, %v600, 0.0
        %v623 = vadd.f32 %v621, %v622
        %v624 = vsel %vm416, %v578, 0.0
        %v625 = vsel %vm416, %v586, 0.0
        %v626 = vadd.f32 %v624, %v625
        %v627 = vsel %vm416, %v594, 0.0
        %v628 = vadd.f32 %v626, %v627
        %v629 = vsel %vm416, %v602, 0.0
        %v630 = vadd.f32 %v628, %v629
        %v631 = vlog2.pop %v609
        %v632 = vmul.f32 %v631, 0.6931472
        %v633 = vlog2.pop %v616
        %v634 = vmul.f32 %v633, 0.6931472
        %v635 = vlog2.pop %v623
        %v636 = vmul.f32 %v635, 0.6931472
        %v637 = vlog2.pop %v630
        %v638 = vmul.f32 %v637, 0.6931472
        %v639 = vadd.f32 %v533, %v632
        %v640 = vadd.f32 %v540, %v634
        %v641 = vadd.f32 %v547, %v636
        %v642 = vadd.f32 %v554, %v638
        %v643 = vmul.f32 %v457, %v639
        %v644 = vmul.f32 %v457, %v640
        %v645 = vmul.f32 %v457, %v641
        %v646 = vmul.f32 %v457, %v642
        %s647 = sadd.s32 %s265, 2
        %s648 = smul.u32 %s647, 4
        %s649 = scalar_lea.vmem %s232, %s648
        %v650 = vld [vmem:[%s649] sm:$0x1]
        %v651 = vld [vmem:[%s649 + $0x1] sm:$0x1]
        %v652 = vld [vmem:[%s649 + $0x2] sm:$0x1]
        %v653 = vld [vmem:[%s649 + $0x3] sm:$0x1]
        %v654 = vadd.f32 %v650, %v643
        %v655 = vadd.f32 %v651, %v644
        %v656 = vadd.f32 %v652, %v645
        %v657 = vadd.f32 %v653, %v646
        %s658 = scalar_lea.vmem %s256, %s648
        %659 = vst.msk [vmem:[%s658] sm:$0x1] %vm416, %v654
        %660 = vst.msk [vmem:[%s658 + $0x1] sm:$0x1] %vm416, %v655
        %661 = vst.msk [vmem:[%s658 + $0x2] sm:$0x1] %vm416, %v656
        %662 = vst.msk [vmem:[%s658 + $0x3] sm:$0x1] %vm416, %v657
        %s663 = scalar_lea.vmem %s246, 32
        %v664 = vld [vmem:[%s663] sm:$0x1]
        %v665 = vld [vmem:[%s663 + $0x1] sm:$0x1]
        %v666 = vld [vmem:[%s663 + $0x2] sm:$0x1]
        %v667 = vld [vmem:[%s663 + $0x3] sm:$0x1]
        %v668 = vld [vmem:[%s663 + $0x4] sm:$0x1]
        %v669 = vld [vmem:[%s663 + $0x5] sm:$0x1]
        %v670 = vld [vmem:[%s663 + $0x6] sm:$0x1]
        %v671 = vld [vmem:[%s663 + $0x7] sm:$0x1]
        %v672 = vld [vmem:[%s663 + $0x8] sm:$0x1]
        %v673 = vld [vmem:[%s663 + $0x9] sm:$0x1]
        %v674 = vld [vmem:[%s663 + $0xa] sm:$0x1]
        %v675 = vld [vmem:[%s663 + $0xb] sm:$0x1]
        %v676 = vld [vmem:[%s663 + $0xc] sm:$0x1]
        %v677 = vld [vmem:[%s663 + $0xd] sm:$0x1]
        %v678 = vld [vmem:[%s663 + $0xe] sm:$0x1]
        %v679 = vld [vmem:[%s663 + $0xf] sm:$0x1]
        %v680 = vadd.f32 %v664, %v654
        %v681 = vadd.f32 %v665, %v654
        %v682 = vadd.f32 %v666, %v654
        %v683 = vadd.f32 %v667, %v654
        %v684 = vadd.f32 %v668, %v655
        %v685 = vadd.f32 %v669, %v655
        %v686 = vadd.f32 %v670, %v655
        %v687 = vadd.f32 %v671, %v655
        %v688 = vadd.f32 %v672, %v656
        %v689 = vadd.f32 %v673, %v656
        %v690 = vadd.f32 %v674, %v656
        %v691 = vadd.f32 %v675, %v656
        %v692 = vadd.f32 %v676, %v657
        %v693 = vadd.f32 %v677, %v657
        %v694 = vadd.f32 %v678, %v657
        %v695 = vadd.f32 %v679, %v657
        %v696 = vmul.f32 %v680, %v319
        %v697 = vmul.f32 %v681, %v319
        %v698 = vmul.f32 %v682, %v319
        %v699 = vmul.f32 %v683, %v319
        %v700 = vmul.f32 %v684, %v319
        %v701 = vmul.f32 %v685, %v319
        %v702 = vmul.f32 %v686, %v319
        %v703 = vmul.f32 %v687, %v319
        %v704 = vmul.f32 %v688, %v319
        %v705 = vmul.f32 %v689, %v319
        %v706 = vmul.f32 %v690, %v319
        %v707 = vmul.f32 %v691, %v319
        %v708 = vmul.f32 %v692, %v319
        %v709 = vmul.f32 %v693, %v319
        %v710 = vmul.f32 %v694, %v319
        %v711 = vmul.f32 %v695, %v319
        %v712 = vsel %vm339, %v696, -inf
        %v713 = vsel %vm339, %v700, -inf
        %v714 = vmax.f32 %v712, %v713
        %v715 = vsel %vm339, %v704, -inf
        %v716 = vmax.f32 %v714, %v715
        %v717 = vsel %vm339, %v708, -inf
        %v718 = vmax.f32 %v716, %v717
        %v719 = vsel %vm339, %v697, -inf
        %v720 = vsel %vm339, %v701, -inf
        %v721 = vmax.f32 %v719, %v720
        %v722 = vsel %vm339, %v705, -inf
        %v723 = vmax.f32 %v721, %v722
        %v724 = vsel %vm339, %v709, -inf
        %v725 = vmax.f32 %v723, %v724
        %v726 = vsel %vm339, %v698, -inf
        %v727 = vsel %vm339, %v702, -inf
        %v728 = vmax.f32 %v726, %v727
        %v729 = vsel %vm339, %v706, -inf
        %v730 = vmax.f32 %v728, %v729
        %v731 = vsel %vm339, %v710, -inf
        %v732 = vmax.f32 %v730, %v731
        %v733 = vsel %vm339, %v699, -inf
        %v734 = vsel %vm339, %v703, -inf
        %v735 = vmax.f32 %v733, %v734
        %v736 = vsel %vm339, %v707, -inf
        %v737 = vmax.f32 %v735, %v736
        %v738 = vsel %vm339, %v711, -inf
        %v739 = vmax.f32 %v737, %v738
        %v740 = vsub.f32 %v696, %v718
        %v741 = vsub.f32 %v697, %v725
        %v742 = vsub.f32 %v698, %v732
        %v743 = vsub.f32 %v699, %v739
        %v744 = vsub.f32 %v700, %v718
        %v745 = vsub.f32 %v701, %v725
        %v746 = vsub.f32 %v702, %v732
        %v747 = vsub.f32 %v703, %v739
        %v748 = vsub.f32 %v704, %v718
        %v749 = vsub.f32 %v705, %v725
        %v750 = vsub.f32 %v706, %v732
        %v751 = vsub.f32 %v707, %v739
        %v752 = vsub.f32 %v708, %v718
        %v753 = vsub.f32 %v709, %v725
        %v754 = vsub.f32 %v710, %v732
        %v755 = vsub.f32 %v711, %v739
        %v756 = vmul.f32 %v740, 1.442695
        %v757 = vpow.pop %v756
        %v758 = vmul.f32 %v741, 1.442695
        %v759 = vpow.pop %v758
        %v760 = vmul.f32 %v742, 1.442695
        %v761 = vpow.pop %v760
        %v762 = vmul.f32 %v743, 1.442695
        %v763 = vpow.pop %v762
        %v764 = vmul.f32 %v744, 1.442695
        %v765 = vpow.pop %v764
        %v766 = vmul.f32 %v745, 1.442695
        %v767 = vpow.pop %v766
        %v768 = vmul.f32 %v746, 1.442695
        %v769 = vpow.pop %v768
        %v770 = vmul.f32 %v747, 1.442695
        %v771 = vpow.pop %v770
        %v772 = vmul.f32 %v748, 1.442695
        %v773 = vpow.pop %v772
        %v774 = vmul.f32 %v749, 1.442695
        %v775 = vpow.pop %v774
        %v776 = vmul.f32 %v750, 1.442695
        %v777 = vpow.pop %v776
        %v778 = vmul.f32 %v751, 1.442695
        %v779 = vpow.pop %v778
        %v780 = vmul.f32 %v752, 1.442695
        %v781 = vpow.pop %v780
        %v782 = vmul.f32 %v753, 1.442695
        %v783 = vpow.pop %v782
        %v784 = vmul.f32 %v754, 1.442695
        %v785 = vpow.pop %v784
        %v786 = vmul.f32 %v755, 1.442695
        %v787 = vpow.pop %v786
        %v788 = vsel %vm416, %v757, 0.0
        %v789 = vsel %vm416, %v765, 0.0
        %v790 = vadd.f32 %v788, %v789
        %v791 = vsel %vm416, %v773, 0.0
        %v792 = vadd.f32 %v790, %v791
        %v793 = vsel %vm416, %v781, 0.0
        %v794 = vadd.f32 %v792, %v793
        %v795 = vsel %vm416, %v759, 0.0
        %v796 = vsel %vm416, %v767, 0.0
        %v797 = vadd.f32 %v795, %v796
        %v798 = vsel %vm416, %v775, 0.0
        %v799 = vadd.f32 %v797, %v798
        %v800 = vsel %vm416, %v783, 0.0
        %v801 = vadd.f32 %v799, %v800
        %v802 = vsel %vm416, %v761, 0.0
        %v803 = vsel %vm416, %v769, 0.0
        %v804 = vadd.f32 %v802, %v803
        %v805 = vsel %vm416, %v777, 0.0
        %v806 = vadd.f32 %v804, %v805
        %v807 = vsel %vm416, %v785, 0.0
        %v808 = vadd.f32 %v806, %v807
        %v809 = vsel %vm416, %v763, 0.0
        %v810 = vsel %vm416, %v771, 0.0
        %v811 = vadd.f32 %v809, %v810
        %v812 = vsel %vm416, %v779, 0.0
        %v813 = vadd.f32 %v811, %v812
        %v814 = vsel %vm416, %v787, 0.0
        %v815 = vadd.f32 %v813, %v814
        %v816 = vlog2.pop %v794
        %v817 = vmul.f32 %v816, 0.6931472
        %v818 = vlog2.pop %v801
        %v819 = vmul.f32 %v818, 0.6931472
        %v820 = vlog2.pop %v808
        %v821 = vmul.f32 %v820, 0.6931472
        %v822 = vlog2.pop %v815
        %v823 = vmul.f32 %v822, 0.6931472
        %v824 = vadd.f32 %v718, %v817
        %v825 = vadd.f32 %v725, %v819
        %v826 = vadd.f32 %v732, %v821
        %v827 = vadd.f32 %v739, %v823
        %v828 = vmul.f32 %v457, %v824
        %v829 = vmul.f32 %v457, %v825
        %v830 = vmul.f32 %v457, %v826
        %v831 = vmul.f32 %v457, %v827
        %s832 = sadd.s32 %s265, 3
        %s833 = smul.u32 %s832, 4
        %s834 = scalar_lea.vmem %s232, %s833
        %v835 = vld [vmem:[%s834] sm:$0x1]
        %v836 = vld [vmem:[%s834 + $0x1] sm:$0x1]
        %v837 = vld [vmem:[%s834 + $0x2] sm:$0x1]
        %v838 = vld [vmem:[%s834 + $0x3] sm:$0x1]
        %v839 = vadd.f32 %v835, %v828
        %v840 = vadd.f32 %v836, %v829
        %v841 = vadd.f32 %v837, %v830
        %v842 = vadd.f32 %v838, %v831
        %s843 = scalar_lea.vmem %s256, %s833
        %844 = vst.msk [vmem:[%s843] sm:$0x1] %vm416, %v839
        %845 = vst.msk [vmem:[%s843 + $0x1] sm:$0x1] %vm416, %v840
        %846 = vst.msk [vmem:[%s843 + $0x2] sm:$0x1] %vm416, %v841
        %847 = vst.msk [vmem:[%s843 + $0x3] sm:$0x1] %vm416, %v842
        %s848 = scalar_lea.vmem %s246, 48
        %v849 = vld [vmem:[%s848] sm:$0x1]
        %v850 = vld [vmem:[%s848 + $0x1] sm:$0x1]
        %v851 = vld [vmem:[%s848 + $0x2] sm:$0x1]
        %v852 = vld [vmem:[%s848 + $0x3] sm:$0x1]
        %v853 = vld [vmem:[%s848 + $0x4] sm:$0x1]
        %v854 = vld [vmem:[%s848 + $0x5] sm:$0x1]
        %v855 = vld [vmem:[%s848 + $0x6] sm:$0x1]
        %v856 = vld [vmem:[%s848 + $0x7] sm:$0x1]
        %v857 = vld [vmem:[%s848 + $0x8] sm:$0x1]
        %v858 = vld [vmem:[%s848 + $0x9] sm:$0x1]
        %v859 = vld [vmem:[%s848 + $0xa] sm:$0x1]
        %v860 = vld [vmem:[%s848 + $0xb] sm:$0x1]
        %v861 = vld [vmem:[%s848 + $0xc] sm:$0x1]
        %v862 = vld [vmem:[%s848 + $0xd] sm:$0x1]
        %v863 = vld [vmem:[%s848 + $0xe] sm:$0x1]
        %v864 = vld [vmem:[%s848 + $0xf] sm:$0x1]
        %v865 = vadd.f32 %v849, %v839
        %v866 = vadd.f32 %v850, %v839
        %v867 = vadd.f32 %v851, %v839
        %v868 = vadd.f32 %v852, %v839
        %v869 = vadd.f32 %v853, %v840
        %v870 = vadd.f32 %v854, %v840
        %v871 = vadd.f32 %v855, %v840
        %v872 = vadd.f32 %v856, %v840
        %v873 = vadd.f32 %v857, %v841
        %v874 = vadd.f32 %v858, %v841
        %v875 = vadd.f32 %v859, %v841
        %v876 = vadd.f32 %v860, %v841
        %v877 = vadd.f32 %v861, %v842
        %v878 = vadd.f32 %v862, %v842
        %v879 = vadd.f32 %v863, %v842
        %v880 = vadd.f32 %v864, %v842
        %v881 = vmul.f32 %v865, %v319
        %v882 = vmul.f32 %v866, %v319
        %v883 = vmul.f32 %v867, %v319
        %v884 = vmul.f32 %v868, %v319
        %v885 = vmul.f32 %v869, %v319
        %v886 = vmul.f32 %v870, %v319
        %v887 = vmul.f32 %v871, %v319
        %v888 = vmul.f32 %v872, %v319
        %v889 = vmul.f32 %v873, %v319
        %v890 = vmul.f32 %v874, %v319
        %v891 = vmul.f32 %v875, %v319
        %v892 = vmul.f32 %v876, %v319
        %v893 = vmul.f32 %v877, %v319
        %v894 = vmul.f32 %v878, %v319
        %v895 = vmul.f32 %v879, %v319
        %v896 = vmul.f32 %v880, %v319
        %v897 = vsel %vm339, %v881, -inf
        %v898 = vsel %vm339, %v885, -inf
        %v899 = vmax.f32 %v897, %v898
        %v900 = vsel %vm339, %v889, -inf
        %v901 = vmax.f32 %v899, %v900
        %v902 = vsel %vm339, %v893, -inf
        %v903 = vmax.f32 %v901, %v902
        %v904 = vsel %vm339, %v882, -inf
        %v905 = vsel %vm339, %v886, -inf
        %v906 = vmax.f32 %v904, %v905
        %v907 = vsel %vm339, %v890, -inf
        %v908 = vmax.f32 %v906, %v907
        %v909 = vsel %vm339, %v894, -inf
        %v910 = vmax.f32 %v908, %v909
        %v911 = vsel %vm339, %v883, -inf
        %v912 = vsel %vm339, %v887, -inf
        %v913 = vmax.f32 %v911, %v912
        %v914 = vsel %vm339, %v891, -inf
        %v915 = vmax.f32 %v913, %v914
        %v916 = vsel %vm339, %v895, -inf
        %v917 = vmax.f32 %v915, %v916
        %v918 = vsel %vm339, %v884, -inf
        %v919 = vsel %vm339, %v888, -inf
        %v920 = vmax.f32 %v918, %v919
        %v921 = vsel %vm339, %v892, -inf
        %v922 = vmax.f32 %v920, %v921
        %v923 = vsel %vm339, %v896, -inf
        %v924 = vmax.f32 %v922, %v923
        %v925 = vsub.f32 %v881, %v903
        %v926 = vsub.f32 %v882, %v910
        %v927 = vsub.f32 %v883, %v917
        %v928 = vsub.f32 %v884, %v924
        %v929 = vsub.f32 %v885, %v903
        %v930 = vsub.f32 %v886, %v910
        %v931 = vsub.f32 %v887, %v917
        %v932 = vsub.f32 %v888, %v924
        %v933 = vsub.f32 %v889, %v903
        %v934 = vsub.f32 %v890, %v910
        %v935 = vsub.f32 %v891, %v917
        %v936 = vsub.f32 %v892, %v924
        %v937 = vsub.f32 %v893, %v903
        %v938 = vsub.f32 %v894, %v910
        %v939 = vsub.f32 %v895, %v917
        %v940 = vsub.f32 %v896, %v924
        %v941 = vmul.f32 %v925, 1.442695
        %v942 = vpow.pop %v941
        %v943 = vmul.f32 %v926, 1.442695
        %v944 = vpow.pop %v943
        %v945 = vmul.f32 %v927, 1.442695
        %v946 = vpow.pop %v945
        %v947 = vmul.f32 %v928, 1.442695
        %v948 = vpow.pop %v947
        %v949 = vmul.f32 %v929, 1.442695
        %v950 = vpow.pop %v949
        %v951 = vmul.f32 %v930, 1.442695
        %v952 = vpow.pop %v951
        %v953 = vmul.f32 %v931, 1.442695
        %v954 = vpow.pop %v953
        %v955 = vmul.f32 %v932, 1.442695
        %v956 = vpow.pop %v955
        %v957 = vmul.f32 %v933, 1.442695
        %v958 = vpow.pop %v957
        %v959 = vmul.f32 %v934, 1.442695
        %v960 = vpow.pop %v959
        %v961 = vmul.f32 %v935, 1.442695
        %v962 = vpow.pop %v961
        %v963 = vmul.f32 %v936, 1.442695
        %v964 = vpow.pop %v963
        %v965 = vmul.f32 %v937, 1.442695
        %v966 = vpow.pop %v965
        %v967 = vmul.f32 %v938, 1.442695
        %v968 = vpow.pop %v967
        %v969 = vmul.f32 %v939, 1.442695
        %v970 = vpow.pop %v969
        %v971 = vmul.f32 %v940, 1.442695
        %v972 = vpow.pop %v971
        %v973 = vsel %vm416, %v942, 0.0
        %v974 = vsel %vm416, %v950, 0.0
        %v975 = vadd.f32 %v973, %v974
        %v976 = vsel %vm416, %v958, 0.0
        %v977 = vadd.f32 %v975, %v976
        %v978 = vsel %vm416, %v966, 0.0
        %v979 = vadd.f32 %v977, %v978
        %v980 = vsel %vm416, %v944, 0.0
        %v981 = vsel %vm416, %v952, 0.0
        %v982 = vadd.f32 %v980, %v981
        %v983 = vsel %vm416, %v960, 0.0
        %v984 = vadd.f32 %v982, %v983
        %v985 = vsel %vm416, %v968, 0.0
        %v986 = vadd.f32 %v984, %v985
        %v987 = vsel %vm416, %v946, 0.0
        %v988 = vsel %vm416, %v954, 0.0
        %v989 = vadd.f32 %v987, %v988
        %v990 = vsel %vm416, %v962, 0.0
        %v991 = vadd.f32 %v989, %v990
        %v992 = vsel %vm416, %v970, 0.0
        %v993 = vadd.f32 %v991, %v992
        %v994 = vsel %vm416, %v948, 0.0
        %v995 = vsel %vm416, %v956, 0.0
        %v996 = vadd.f32 %v994, %v995
        %v997 = vsel %vm416, %v964, 0.0
        %v998 = vadd.f32 %v996, %v997
        %v999 = vsel %vm416, %v972, 0.0
        %v1000 = vadd.f32 %v998, %v999
        %v1001 = vlog2.pop %v979
        %v1002 = vmul.f32 %v1001, 0.6931472
        %v1003 = vlog2.pop %v986
        %v1004 = vmul.f32 %v1003, 0.6931472
        %v1005 = vlog2.pop %v993
        %v1006 = vmul.f32 %v1005, 0.6931472
        %v1007 = vlog2.pop %v1000
        %v1008 = vmul.f32 %v1007, 0.6931472
        %v1009 = vadd.f32 %v903, %v1002
        %v1010 = vadd.f32 %v910, %v1004
        %v1011 = vadd.f32 %v917, %v1006
        %v1012 = vadd.f32 %v924, %v1008
        %v1013 = vmul.f32 %v457, %v1009
        %v1014 = vmul.f32 %v457, %v1010
        %v1015 = vmul.f32 %v457, %v1011
        %v1016 = vmul.f32 %v457, %v1012
        %s1017 = sadd.s32 %s265, 4
        %s1018 = smul.u32 %s1017, 4
        %s1019 = scalar_lea.vmem %s232, %s1018
        %v1020 = vld [vmem:[%s1019] sm:$0x1]
        %v1021 = vld [vmem:[%s1019 + $0x1] sm:$0x1]
        %v1022 = vld [vmem:[%s1019 + $0x2] sm:$0x1]
        %v1023 = vld [vmem:[%s1019 + $0x3] sm:$0x1]
        %v1024 = vadd.f32 %v1020, %v1013
        %v1025 = vadd.f32 %v1021, %v1014
        %v1026 = vadd.f32 %v1022, %v1015
        %v1027 = vadd.f32 %v1023, %v1016
        %s1028 = scalar_lea.vmem %s256, %s1018
        %1029 = vst.msk [vmem:[%s1028] sm:$0x1] %vm416, %v1024
        %1030 = vst.msk [vmem:[%s1028 + $0x1] sm:$0x1] %vm416, %v1025
        %1031 = vst.msk [vmem:[%s1028 + $0x2] sm:$0x1] %vm416, %v1026
        %1032 = vst.msk [vmem:[%s1028 + $0x3] sm:$0x1] %vm416, %v1027
        %s1033 = scalar_lea.vmem %s246, 64
        %v1034 = vld [vmem:[%s1033] sm:$0x1]
        %v1035 = vld [vmem:[%s1033 + $0x1] sm:$0x1]
        %v1036 = vld [vmem:[%s1033 + $0x2] sm:$0x1]
        %v1037 = vld [vmem:[%s1033 + $0x3] sm:$0x1]
        %v1038 = vld [vmem:[%s1033 + $0x4] sm:$0x1]
        %v1039 = vld [vmem:[%s1033 + $0x5] sm:$0x1]
        %v1040 = vld [vmem:[%s1033 + $0x6] sm:$0x1]
        %v1041 = vld [vmem:[%s1033 + $0x7] sm:$0x1]
        %v1042 = vld [vmem:[%s1033 + $0x8] sm:$0x1]
        %v1043 = vld [vmem:[%s1033 + $0x9] sm:$0x1]
        %v1044 = vld [vmem:[%s1033 + $0xa] sm:$0x1]
        %v1045 = vld [vmem:[%s1033 + $0xb] sm:$0x1]
        %v1046 = vld [vmem:[%s1033 + $0xc] sm:$0x1]
        %v1047 = vld [vmem:[%s1033 + $0xd] sm:$0x1]
        %v1048 = vld [vmem:[%s1033 + $0xe] sm:$0x1]
        %v1049 = vld [vmem:[%s1033 + $0xf] sm:$0x1]
        %v1050 = vadd.f32 %v1034, %v1024
        %v1051 = vadd.f32 %v1035, %v1024
        %v1052 = vadd.f32 %v1036, %v1024
        %v1053 = vadd.f32 %v1037, %v1024
        %v1054 = vadd.f32 %v1038, %v1025
        %v1055 = vadd.f32 %v1039, %v1025
        %v1056 = vadd.f32 %v1040, %v1025
        %v1057 = vadd.f32 %v1041, %v1025
        %v1058 = vadd.f32 %v1042, %v1026
        %v1059 = vadd.f32 %v1043, %v1026
        %v1060 = vadd.f32 %v1044, %v1026
        %v1061 = vadd.f32 %v1045, %v1026
        %v1062 = vadd.f32 %v1046, %v1027
        %v1063 = vadd.f32 %v1047, %v1027
        %v1064 = vadd.f32 %v1048, %v1027
        %v1065 = vadd.f32 %v1049, %v1027
        %v1066 = vmul.f32 %v1050, %v319
        %v1067 = vmul.f32 %v1051, %v319
        %v1068 = vmul.f32 %v1052, %v319
        %v1069 = vmul.f32 %v1053, %v319
        %v1070 = vmul.f32 %v1054, %v319
        %v1071 = vmul.f32 %v1055, %v319
        %v1072 = vmul.f32 %v1056, %v319
        %v1073 = vmul.f32 %v1057, %v319
        %v1074 = vmul.f32 %v1058, %v319
        %v1075 = vmul.f32 %v1059, %v319
        %v1076 = vmul.f32 %v1060, %v319
        %v1077 = vmul.f32 %v1061, %v319
        %v1078 = vmul.f32 %v1062, %v319
        %v1079 = vmul.f32 %v1063, %v319
        %v1080 = vmul.f32 %v1064, %v319
        %v1081 = vmul.f32 %v1065, %v319
        %v1082 = vsel %vm339, %v1066, -inf
        %v1083 = vsel %vm339, %v1070, -inf
        %v1084 = vmax.f32 %v1082, %v1083
        %v1085 = vsel %vm339, %v1074, -inf
        %v1086 = vmax.f32 %v1084, %v1085
        %v1087 = vsel %vm339, %v1078, -inf
        %v1088 = vmax.f32 %v1086, %v1087
        %v1089 = vsel %vm339, %v1067, -inf
        %v1090 = vsel %vm339, %v1071, -inf
        %v1091 = vmax.f32 %v1089, %v1090
        %v1092 = vsel %vm339, %v1075, -inf
        %v1093 = vmax.f32 %v1091, %v1092
        %v1094 = vsel %vm339, %v1079, -inf
        %v1095 = vmax.f32 %v1093, %v1094
        %v1096 = vsel %vm339, %v1068, -inf
        %v1097 = vsel %vm339, %v1072, -inf
        %v1098 = vmax.f32 %v1096, %v1097
        %v1099 = vsel %vm339, %v1076, -inf
        %v1100 = vmax.f32 %v1098, %v1099
        %v1101 = vsel %vm339, %v1080, -inf
        %v1102 = vmax.f32 %v1100, %v1101
        %v1103 = vsel %vm339, %v1069, -inf
        %v1104 = vsel %vm339, %v1073, -inf
        %v1105 = vmax.f32 %v1103, %v1104
        %v1106 = vsel %vm339, %v1077, -inf
        %v1107 = vmax.f32 %v1105, %v1106
        %v1108 = vsel %vm339, %v1081, -inf
        %v1109 = vmax.f32 %v1107, %v1108
        %v1110 = vsub.f32 %v1066, %v1088
        %v1111 = vsub.f32 %v1067, %v1095
        %v1112 = vsub.f32 %v1068, %v1102
        %v1113 = vsub.f32 %v1069, %v1109
        %v1114 = vsub.f32 %v1070, %v1088
        %v1115 = vsub.f32 %v1071, %v1095
        %v1116 = vsub.f32 %v1072, %v1102
        %v1117 = vsub.f32 %v1073, %v1109
        %v1118 = vsub.f32 %v1074, %v1088
        %v1119 = vsub.f32 %v1075, %v1095
        %v1120 = vsub.f32 %v1076, %v1102
        %v1121 = vsub.f32 %v1077, %v1109
        %v1122 = vsub.f32 %v1078, %v1088
        %v1123 = vsub.f32 %v1079, %v1095
        %v1124 = vsub.f32 %v1080, %v1102
        %v1125 = vsub.f32 %v1081, %v1109
        %v1126 = vmul.f32 %v1110, 1.442695
        %v1127 = vpow.pop %v1126
        %v1128 = vmul.f32 %v1111, 1.442695
        %v1129 = vpow.pop %v1128
        %v1130 = vmul.f32 %v1112, 1.442695
        %v1131 = vpow.pop %v1130
        %v1132 = vmul.f32 %v1113, 1.442695
        %v1133 = vpow.pop %v1132
        %v1134 = vmul.f32 %v1114, 1.442695
        %v1135 = vpow.pop %v1134
        %v1136 = vmul.f32 %v1115, 1.442695
        %v1137 = vpow.pop %v1136
        %v1138 = vmul.f32 %v1116, 1.442695
        %v1139 = vpow.pop %v1138
        %v1140 = vmul.f32 %v1117, 1.442695
        %v1141 = vpow.pop %v1140
        %v1142 = vmul.f32 %v1118, 1.442695
        %v1143 = vpow.pop %v1142
        %v1144 = vmul.f32 %v1119, 1.442695
        %v1145 = vpow.pop %v1144
        %v1146 = vmul.f32 %v1120, 1.442695
        %v1147 = vpow.pop %v1146
        %v1148 = vmul.f32 %v1121, 1.442695
        %v1149 = vpow.pop %v1148
        %v1150 = vmul.f32 %v1122, 1.442695
        %v1151 = vpow.pop %v1150
        %v1152 = vmul.f32 %v1123, 1.442695
        %v1153 = vpow.pop %v1152
        %v1154 = vmul.f32 %v1124, 1.442695
        %v1155 = vpow.pop %v1154
        %v1156 = vmul.f32 %v1125, 1.442695
        %v1157 = vpow.pop %v1156
        %v1158 = vsel %vm416, %v1127, 0.0
        %v1159 = vsel %vm416, %v1135, 0.0
        %v1160 = vadd.f32 %v1158, %v1159
        %v1161 = vsel %vm416, %v1143, 0.0
        %v1162 = vadd.f32 %v1160, %v1161
        %v1163 = vsel %vm416, %v1151, 0.0
        %v1164 = vadd.f32 %v1162, %v1163
        %v1165 = vsel %vm416, %v1129, 0.0
        %v1166 = vsel %vm416, %v1137, 0.0
        %v1167 = vadd.f32 %v1165, %v1166
        %v1168 = vsel %vm416, %v1145, 0.0
        %v1169 = vadd.f32 %v1167, %v1168
        %v1170 = vsel %vm416, %v1153, 0.0
        %v1171 = vadd.f32 %v1169, %v1170
        %v1172 = vsel %vm416, %v1131, 0.0
        %v1173 = vsel %vm416, %v1139, 0.0
        %v1174 = vadd.f32 %v1172, %v1173
        %v1175 = vsel %vm416, %v1147, 0.0
        %v1176 = vadd.f32 %v1174, %v1175
        %v1177 = vsel %vm416, %v1155, 0.0
        %v1178 = vadd.f32 %v1176, %v1177
        %v1179 = vsel %vm416, %v1133, 0.0
        %v1180 = vsel %vm416, %v1141, 0.0
        %v1181 = vadd.f32 %v1179, %v1180
        %v1182 = vsel %vm416, %v1149, 0.0
        %v1183 = vadd.f32 %v1181, %v1182
        %v1184 = vsel %vm416, %v1157, 0.0
        %v1185 = vadd.f32 %v1183, %v1184
        %v1186 = vlog2.pop %v1164
        %v1187 = vmul.f32 %v1186, 0.6931472
        %v1188 = vlog2.pop %v1171
        %v1189 = vmul.f32 %v1188, 0.6931472
        %v1190 = vlog2.pop %v1178
        %v1191 = vmul.f32 %v1190, 0.6931472
        %v1192 = vlog2.pop %v1185
        %v1193 = vmul.f32 %v1192, 0.6931472
        %v1194 = vadd.f32 %v1088, %v1187
        %v1195 = vadd.f32 %v1095, %v1189
        %v1196 = vadd.f32 %v1102, %v1191
        %v1197 = vadd.f32 %v1109, %v1193
        %v1198 = vmul.f32 %v457, %v1194
        %v1199 = vmul.f32 %v457, %v1195
        %v1200 = vmul.f32 %v457, %v1196
        %v1201 = vmul.f32 %v457, %v1197
        %s1202 = sadd.s32 %s265, 5
        %s1203 = smul.u32 %s1202, 4
        %s1204 = scalar_lea.vmem %s232, %s1203
        %v1205 = vld [vmem:[%s1204] sm:$0x1]
        %v1206 = vld [vmem:[%s1204 + $0x1] sm:$0x1]
        %v1207 = vld [vmem:[%s1204 + $0x2] sm:$0x1]
        %v1208 = vld [vmem:[%s1204 + $0x3] sm:$0x1]
        %v1209 = vadd.f32 %v1205, %v1198
        %v1210 = vadd.f32 %v1206, %v1199
        %v1211 = vadd.f32 %v1207, %v1200
        %v1212 = vadd.f32 %v1208, %v1201
        %s1213 = scalar_lea.vmem %s256, %s1203
        %1214 = vst.msk [vmem:[%s1213] sm:$0x1] %vm416, %v1209
        %1215 = vst.msk [vmem:[%s1213 + $0x1] sm:$0x1] %vm416, %v1210
        %1216 = vst.msk [vmem:[%s1213 + $0x2] sm:$0x1] %vm416, %v1211
        %1217 = vst.msk [vmem:[%s1213 + $0x3] sm:$0x1] %vm416, %v1212
        %s1218 = scalar_lea.vmem %s246, 80
        %v1219 = vld [vmem:[%s1218] sm:$0x1]
        %v1220 = vld [vmem:[%s1218 + $0x1] sm:$0x1]
        %v1221 = vld [vmem:[%s1218 + $0x2] sm:$0x1]
        %v1222 = vld [vmem:[%s1218 + $0x3] sm:$0x1]
        %v1223 = vld [vmem:[%s1218 + $0x4] sm:$0x1]
        %v1224 = vld [vmem:[%s1218 + $0x5] sm:$0x1]
        %v1225 = vld [vmem:[%s1218 + $0x6] sm:$0x1]
        %v1226 = vld [vmem:[%s1218 + $0x7] sm:$0x1]
        %v1227 = vld [vmem:[%s1218 + $0x8] sm:$0x1]
        %v1228 = vld [vmem:[%s1218 + $0x9] sm:$0x1]
        %v1229 = vld [vmem:[%s1218 + $0xa] sm:$0x1]
        %v1230 = vld [vmem:[%s1218 + $0xb] sm:$0x1]
        %v1231 = vld [vmem:[%s1218 + $0xc] sm:$0x1]
        %v1232 = vld [vmem:[%s1218 + $0xd] sm:$0x1]
        %v1233 = vld [vmem:[%s1218 + $0xe] sm:$0x1]
        %v1234 = vld [vmem:[%s1218 + $0xf] sm:$0x1]
        %v1235 = vadd.f32 %v1219, %v1209
        %v1236 = vadd.f32 %v1220, %v1209
        %v1237 = vadd.f32 %v1221, %v1209
        %v1238 = vadd.f32 %v1222, %v1209
        %v1239 = vadd.f32 %v1223, %v1210
        %v1240 = vadd.f32 %v1224, %v1210
        %v1241 = vadd.f32 %v1225, %v1210
        %v1242 = vadd.f32 %v1226, %v1210
        %v1243 = vadd.f32 %v1227, %v1211
        %v1244 = vadd.f32 %v1228, %v1211
        %v1245 = vadd.f32 %v1229, %v1211
        %v1246 = vadd.f32 %v1230, %v1211
        %v1247 = vadd.f32 %v1231, %v1212
        %v1248 = vadd.f32 %v1232, %v1212
        %v1249 = vadd.f32 %v1233, %v1212
        %v1250 = vadd.f32 %v1234, %v1212
        %v1251 = vmul.f32 %v1235, %v319
        %v1252 = vmul.f32 %v1236, %v319
        %v1253 = vmul.f32 %v1237, %v319
        %v1254 = vmul.f32 %v1238, %v319
        %v1255 = vmul.f32 %v1239, %v319
        %v1256 = vmul.f32 %v1240, %v319
        %v1257 = vmul.f32 %v1241, %v319
        %v1258 = vmul.f32 %v1242, %v319
        %v1259 = vmul.f32 %v1243, %v319
        %v1260 = vmul.f32 %v1244, %v319
        %v1261 = vmul.f32 %v1245, %v319
        %v1262 = vmul.f32 %v1246, %v319
        %v1263 = vmul.f32 %v1247, %v319
        %v1264 = vmul.f32 %v1248, %v319
        %v1265 = vmul.f32 %v1249, %v319
        %v1266 = vmul.f32 %v1250, %v319
        %v1267 = vsel %vm339, %v1251, -inf
        %v1268 = vsel %vm339, %v1255, -inf
        %v1269 = vmax.f32 %v1267, %v1268
        %v1270 = vsel %vm339, %v1259, -inf
        %v1271 = vmax.f32 %v1269, %v1270
        %v1272 = vsel %vm339, %v1263, -inf
        %v1273 = vmax.f32 %v1271, %v1272
        %v1274 = vsel %vm339, %v1252, -inf
        %v1275 = vsel %vm339, %v1256, -inf
        %v1276 = vmax.f32 %v1274, %v1275
        %v1277 = vsel %vm339, %v1260, -inf
        %v1278 = vmax.f32 %v1276, %v1277
        %v1279 = vsel %vm339, %v1264, -inf
        %v1280 = vmax.f32 %v1278, %v1279
        %v1281 = vsel %vm339, %v1253, -inf
        %v1282 = vsel %vm339, %v1257, -inf
        %v1283 = vmax.f32 %v1281, %v1282
        %v1284 = vsel %vm339, %v1261, -inf
        %v1285 = vmax.f32 %v1283, %v1284
        %v1286 = vsel %vm339, %v1265, -inf
        %v1287 = vmax.f32 %v1285, %v1286
        %v1288 = vsel %vm339, %v1254, -inf
        %v1289 = vsel %vm339, %v1258, -inf
        %v1290 = vmax.f32 %v1288, %v1289
        %v1291 = vsel %vm339, %v1262, -inf
        %v1292 = vmax.f32 %v1290, %v1291
        %v1293 = vsel %vm339, %v1266, -inf
        %v1294 = vmax.f32 %v1292, %v1293
        %v1295 = vsub.f32 %v1251, %v1273
        %v1296 = vsub.f32 %v1252, %v1280
        %v1297 = vsub.f32 %v1253, %v1287
        %v1298 = vsub.f32 %v1254, %v1294
        %v1299 = vsub.f32 %v1255, %v1273
        %v1300 = vsub.f32 %v1256, %v1280
        %v1301 = vsub.f32 %v1257, %v1287
        %v1302 = vsub.f32 %v1258, %v1294
        %v1303 = vsub.f32 %v1259, %v1273
        %v1304 = vsub.f32 %v1260, %v1280
        %v1305 = vsub.f32 %v1261, %v1287
        %v1306 = vsub.f32 %v1262, %v1294
        %v1307 = vsub.f32 %v1263, %v1273
        %v1308 = vsub.f32 %v1264, %v1280
        %v1309 = vsub.f32 %v1265, %v1287
        %v1310 = vsub.f32 %v1266, %v1294
        %v1311 = vmul.f32 %v1295, 1.442695
        %v1312 = vpow.pop %v1311
        %v1313 = vmul.f32 %v1296, 1.442695
        %v1314 = vpow.pop %v1313
        %v1315 = vmul.f32 %v1297, 1.442695
        %v1316 = vpow.pop %v1315
        %v1317 = vmul.f32 %v1298, 1.442695
        %v1318 = vpow.pop %v1317
        %v1319 = vmul.f32 %v1299, 1.442695
        %v1320 = vpow.pop %v1319
        %v1321 = vmul.f32 %v1300, 1.442695
        %v1322 = vpow.pop %v1321
        %v1323 = vmul.f32 %v1301, 1.442695
        %v1324 = vpow.pop %v1323
        %v1325 = vmul.f32 %v1302, 1.442695
        %v1326 = vpow.pop %v1325
        %v1327 = vmul.f32 %v1303, 1.442695
        %v1328 = vpow.pop %v1327
        %v1329 = vmul.f32 %v1304, 1.442695
        %v1330 = vpow.pop %v1329
        %v1331 = vmul.f32 %v1305, 1.442695
        %v1332 = vpow.pop %v1331
        %v1333 = vmul.f32 %v1306, 1.442695
        %v1334 = vpow.pop %v1333
        %v1335 = vmul.f32 %v1307, 1.442695
        %v1336 = vpow.pop %v1335
        %v1337 = vmul.f32 %v1308, 1.442695
        %v1338 = vpow.pop %v1337
        %v1339 = vmul.f32 %v1309, 1.442695
        %v1340 = vpow.pop %v1339
        %v1341 = vmul.f32 %v1310, 1.442695
        %v1342 = vpow.pop %v1341
        %v1343 = vsel %vm416, %v1312, 0.0
        %v1344 = vsel %vm416, %v1320, 0.0
        %v1345 = vadd.f32 %v1343, %v1344
        %v1346 = vsel %vm416, %v1328, 0.0
        %v1347 = vadd.f32 %v1345, %v1346
        %v1348 = vsel %vm416, %v1336, 0.0
        %v1349 = vadd.f32 %v1347, %v1348
        %v1350 = vsel %vm416, %v1314, 0.0
        %v1351 = vsel %vm416, %v1322, 0.0
        %v1352 = vadd.f32 %v1350, %v1351
        %v1353 = vsel %vm416, %v1330, 0.0
        %v1354 = vadd.f32 %v1352, %v1353
        %v1355 = vsel %vm416, %v1338, 0.0
        %v1356 = vadd.f32 %v1354, %v1355
        %v1357 = vsel %vm416, %v1316, 0.0
        %v1358 = vsel %vm416, %v1324, 0.0
        %v1359 = vadd.f32 %v1357, %v1358
        %v1360 = vsel %vm416, %v1332, 0.0
        %v1361 = vadd.f32 %v1359, %v1360
        %v1362 = vsel %vm416, %v1340, 0.0
        %v1363 = vadd.f32 %v1361, %v1362
        %v1364 = vsel %vm416, %v1318, 0.0
        %v1365 = vsel %vm416, %v1326, 0.0
        %v1366 = vadd.f32 %v1364, %v1365
        %v1367 = vsel %vm416, %v1334, 0.0
        %v1368 = vadd.f32 %v1366, %v1367
        %v1369 = vsel %vm416, %v1342, 0.0
        %v1370 = vadd.f32 %v1368, %v1369
        %v1371 = vlog2.pop %v1349
        %v1372 = vmul.f32 %v1371, 0.6931472
        %v1373 = vlog2.pop %v1356
        %v1374 = vmul.f32 %v1373, 0.6931472
        %v1375 = vlog2.pop %v1363
        %v1376 = vmul.f32 %v1375, 0.6931472
        %v1377 = vlog2.pop %v1370
        %v1378 = vmul.f32 %v1377, 0.6931472
        %v1379 = vadd.f32 %v1273, %v1372
        %v1380 = vadd.f32 %v1280, %v1374
        %v1381 = vadd.f32 %v1287, %v1376
        %v1382 = vadd.f32 %v1294, %v1378
        %v1383 = vmul.f32 %v457, %v1379
        %v1384 = vmul.f32 %v457, %v1380
        %v1385 = vmul.f32 %v457, %v1381
        %v1386 = vmul.f32 %v457, %v1382
        %s1387 = sadd.s32 %s265, 6
        %s1388 = smul.u32 %s1387, 4
        %s1389 = scalar_lea.vmem %s232, %s1388
        %v1390 = vld [vmem:[%s1389] sm:$0x1]
        %v1391 = vld [vmem:[%s1389 + $0x1] sm:$0x1]
        %v1392 = vld [vmem:[%s1389 + $0x2] sm:$0x1]
        %v1393 = vld [vmem:[%s1389 + $0x3] sm:$0x1]
        %v1394 = vadd.f32 %v1390, %v1383
        %v1395 = vadd.f32 %v1391, %v1384
        %v1396 = vadd.f32 %v1392, %v1385
        %v1397 = vadd.f32 %v1393, %v1386
        %s1398 = scalar_lea.vmem %s256, %s1388
        %1399 = vst.msk [vmem:[%s1398] sm:$0x1] %vm416, %v1394
        %1400 = vst.msk [vmem:[%s1398 + $0x1] sm:$0x1] %vm416, %v1395
        %1401 = vst.msk [vmem:[%s1398 + $0x2] sm:$0x1] %vm416, %v1396
        %1402 = vst.msk [vmem:[%s1398 + $0x3] sm:$0x1] %vm416, %v1397
        %s1403 = scalar_lea.vmem %s246, 96
        %v1404 = vld [vmem:[%s1403] sm:$0x1]
        %v1405 = vld [vmem:[%s1403 + $0x1] sm:$0x1]
        %v1406 = vld [vmem:[%s1403 + $0x2] sm:$0x1]
        %v1407 = vld [vmem:[%s1403 + $0x3] sm:$0x1]
        %v1408 = vld [vmem:[%s1403 + $0x4] sm:$0x1]
        %v1409 = vld [vmem:[%s1403 + $0x5] sm:$0x1]
        %v1410 = vld [vmem:[%s1403 + $0x6] sm:$0x1]
        %v1411 = vld [vmem:[%s1403 + $0x7] sm:$0x1]
        %v1412 = vld [vmem:[%s1403 + $0x8] sm:$0x1]
        %v1413 = vld [vmem:[%s1403 + $0x9] sm:$0x1]
        %v1414 = vld [vmem:[%s1403 + $0xa] sm:$0x1]
        %v1415 = vld [vmem:[%s1403 + $0xb] sm:$0x1]
        %v1416 = vld [vmem:[%s1403 + $0xc] sm:$0x1]
        %v1417 = vld [vmem:[%s1403 + $0xd] sm:$0x1]
        %v1418 = vld [vmem:[%s1403 + $0xe] sm:$0x1]
        %v1419 = vld [vmem:[%s1403 + $0xf] sm:$0x1]
        %v1420 = vadd.f32 %v1404, %v1394
        %v1421 = vadd.f32 %v1405, %v1394
        %v1422 = vadd.f32 %v1406, %v1394
        %v1423 = vadd.f32 %v1407, %v1394
        %v1424 = vadd.f32 %v1408, %v1395
        %v1425 = vadd.f32 %v1409, %v1395
        %v1426 = vadd.f32 %v1410, %v1395
        %v1427 = vadd.f32 %v1411, %v1395
        %v1428 = vadd.f32 %v1412, %v1396
        %v1429 = vadd.f32 %v1413, %v1396
        %v1430 = vadd.f32 %v1414, %v1396
        %v1431 = vadd.f32 %v1415, %v1396
        %v1432 = vadd.f32 %v1416, %v1397
        %v1433 = vadd.f32 %v1417, %v1397
        %v1434 = vadd.f32 %v1418, %v1397
        %v1435 = vadd.f32 %v1419, %v1397
        %v1436 = vmul.f32 %v1420, %v319
        %v1437 = vmul.f32 %v1421, %v319
        %v1438 = vmul.f32 %v1422, %v319
        %v1439 = vmul.f32 %v1423, %v319
        %v1440 = vmul.f32 %v1424, %v319
        %v1441 = vmul.f32 %v1425, %v319
        %v1442 = vmul.f32 %v1426, %v319
        %v1443 = vmul.f32 %v1427, %v319
        %v1444 = vmul.f32 %v1428, %v319
        %v1445 = vmul.f32 %v1429, %v319
        %v1446 = vmul.f32 %v1430, %v319
        %v1447 = vmul.f32 %v1431, %v319
        %v1448 = vmul.f32 %v1432, %v319
        %v1449 = vmul.f32 %v1433, %v319
        %v1450 = vmul.f32 %v1434, %v319
        %v1451 = vmul.f32 %v1435, %v319
        %v1452 = vsel %vm339, %v1436, -inf
        %v1453 = vsel %vm339, %v1440, -inf
        %v1454 = vmax.f32 %v1452, %v1453
        %v1455 = vsel %vm339, %v1444, -inf
        %v1456 = vmax.f32 %v1454, %v1455
        %v1457 = vsel %vm339, %v1448, -inf
        %v1458 = vmax.f32 %v1456, %v1457
        %v1459 = vsel %vm339, %v1437, -inf
        %v1460 = vsel %vm339, %v1441, -inf
        %v1461 = vmax.f32 %v1459, %v1460
        %v1462 = vsel %vm339, %v1445, -inf
        %v1463 = vmax.f32 %v1461, %v1462
        %v1464 = vsel %vm339, %v1449, -inf
        %v1465 = vmax.f32 %v1463, %v1464
        %v1466 = vsel %vm339, %v1438, -inf
        %v1467 = vsel %vm339, %v1442, -inf
        %v1468 = vmax.f32 %v1466, %v1467
        %v1469 = vsel %vm339, %v1446, -inf
        %v1470 = vmax.f32 %v1468, %v1469
        %v1471 = vsel %vm339, %v1450, -inf
        %v1472 = vmax.f32 %v1470, %v1471
        %v1473 = vsel %vm339, %v1439, -inf
        %v1474 = vsel %vm339, %v1443, -inf
        %v1475 = vmax.f32 %v1473, %v1474
        %v1476 = vsel %vm339, %v1447, -inf
        %v1477 = vmax.f32 %v1475, %v1476
        %v1478 = vsel %vm339, %v1451, -inf
        %v1479 = vmax.f32 %v1477, %v1478
        %v1480 = vsub.f32 %v1436, %v1458
        %v1481 = vsub.f32 %v1437, %v1465
        %v1482 = vsub.f32 %v1438, %v1472
        %v1483 = vsub.f32 %v1439, %v1479
        %v1484 = vsub.f32 %v1440, %v1458
        %v1485 = vsub.f32 %v1441, %v1465
        %v1486 = vsub.f32 %v1442, %v1472
        %v1487 = vsub.f32 %v1443, %v1479
        %v1488 = vsub.f32 %v1444, %v1458
        %v1489 = vsub.f32 %v1445, %v1465
        %v1490 = vsub.f32 %v1446, %v1472
        %v1491 = vsub.f32 %v1447, %v1479
        %v1492 = vsub.f32 %v1448, %v1458
        %v1493 = vsub.f32 %v1449, %v1465
        %v1494 = vsub.f32 %v1450, %v1472
        %v1495 = vsub.f32 %v1451, %v1479
        %v1496 = vmul.f32 %v1480, 1.442695
        %v1497 = vpow.pop %v1496
        %v1498 = vmul.f32 %v1481, 1.442695
        %v1499 = vpow.pop %v1498
        %v1500 = vmul.f32 %v1482, 1.442695
        %v1501 = vpow.pop %v1500
        %v1502 = vmul.f32 %v1483, 1.442695
        %v1503 = vpow.pop %v1502
        %v1504 = vmul.f32 %v1484, 1.442695
        %v1505 = vpow.pop %v1504
        %v1506 = vmul.f32 %v1485, 1.442695
        %v1507 = vpow.pop %v1506
        %v1508 = vmul.f32 %v1486, 1.442695
        %v1509 = vpow.pop %v1508
        %v1510 = vmul.f32 %v1487, 1.442695
        %v1511 = vpow.pop %v1510
        %v1512 = vmul.f32 %v1488, 1.442695
        %v1513 = vpow.pop %v1512
        %v1514 = vmul.f32 %v1489, 1.442695
        %v1515 = vpow.pop %v1514
        %v1516 = vmul.f32 %v1490, 1.442695
        %v1517 = vpow.pop %v1516
        %v1518 = vmul.f32 %v1491, 1.442695
        %v1519 = vpow.pop %v1518
        %v1520 = vmul.f32 %v1492, 1.442695
        %v1521 = vpow.pop %v1520
        %v1522 = vmul.f32 %v1493, 1.442695
        %v1523 = vpow.pop %v1522
        %v1524 = vmul.f32 %v1494, 1.442695
        %v1525 = vpow.pop %v1524
        %v1526 = vmul.f32 %v1495, 1.442695
        %v1527 = vpow.pop %v1526
        %v1528 = vsel %vm416, %v1497, 0.0
        %v1529 = vsel %vm416, %v1505, 0.0
        %v1530 = vadd.f32 %v1528, %v1529
        %v1531 = vsel %vm416, %v1513, 0.0
        %v1532 = vadd.f32 %v1530, %v1531
        %v1533 = vsel %vm416, %v1521, 0.0
        %v1534 = vadd.f32 %v1532, %v1533
        %v1535 = vsel %vm416, %v1499, 0.0
        %v1536 = vsel %vm416, %v1507, 0.0
        %v1537 = vadd.f32 %v1535, %v1536
        %v1538 = vsel %vm416, %v1515, 0.0
        %v1539 = vadd.f32 %v1537, %v1538
        %v1540 = vsel %vm416, %v1523, 0.0
        %v1541 = vadd.f32 %v1539, %v1540
        %v1542 = vsel %vm416, %v1501, 0.0
        %v1543 = vsel %vm416, %v1509, 0.0
        %v1544 = vadd.f32 %v1542, %v1543
        %v1545 = vsel %vm416, %v1517, 0.0
        %v1546 = vadd.f32 %v1544, %v1545
        %v1547 = vsel %vm416, %v1525, 0.0
        %v1548 = vadd.f32 %v1546, %v1547
        %v1549 = vsel %vm416, %v1503, 0.0
        %v1550 = vsel %vm416, %v1511, 0.0
        %v1551 = vadd.f32 %v1549, %v1550
        %v1552 = vsel %vm416, %v1519, 0.0
        %v1553 = vadd.f32 %v1551, %v1552
        %v1554 = vsel %vm416, %v1527, 0.0
        %v1555 = vadd.f32 %v1553, %v1554
        %v1556 = vlog2.pop %v1534
        %v1557 = vmul.f32 %v1556, 0.6931472
        %v1558 = vlog2.pop %v1541
        %v1559 = vmul.f32 %v1558, 0.6931472
        %v1560 = vlog2.pop %v1548
        %v1561 = vmul.f32 %v1560, 0.6931472
        %v1562 = vlog2.pop %v1555
        %v1563 = vmul.f32 %v1562, 0.6931472
        %v1564 = vadd.f32 %v1458, %v1557
        %v1565 = vadd.f32 %v1465, %v1559
        %v1566 = vadd.f32 %v1472, %v1561
        %v1567 = vadd.f32 %v1479, %v1563
        %v1568 = vmul.f32 %v457, %v1564
        %v1569 = vmul.f32 %v457, %v1565
        %v1570 = vmul.f32 %v457, %v1566
        %v1571 = vmul.f32 %v457, %v1567
        %s1572 = sadd.s32 %s265, 7
        %s1573 = smul.u32 %s1572, 4
        %s1574 = scalar_lea.vmem %s232, %s1573
        %v1575 = vld [vmem:[%s1574] sm:$0x1]
        %v1576 = vld [vmem:[%s1574 + $0x1] sm:$0x1]
        %v1577 = vld [vmem:[%s1574 + $0x2] sm:$0x1]
        %v1578 = vld [vmem:[%s1574 + $0x3] sm:$0x1]
        %v1579 = vadd.f32 %v1575, %v1568
        %v1580 = vadd.f32 %v1576, %v1569
        %v1581 = vadd.f32 %v1577, %v1570
        %v1582 = vadd.f32 %v1578, %v1571
        %s1583 = scalar_lea.vmem %s256, %s1573
        %1584 = vst.msk [vmem:[%s1583] sm:$0x1] %vm416, %v1579
        %1585 = vst.msk [vmem:[%s1583 + $0x1] sm:$0x1] %vm416, %v1580
        %1586 = vst.msk [vmem:[%s1583 + $0x2] sm:$0x1] %vm416, %v1581
        %1587 = vst.msk [vmem:[%s1583 + $0x3] sm:$0x1] %vm416, %v1582
        %s1588 = scalar_lea.vmem %s246, 112
        %v1589 = vld [vmem:[%s1588] sm:$0x1]
        %v1590 = vld [vmem:[%s1588 + $0x1] sm:$0x1]
        %v1591 = vld [vmem:[%s1588 + $0x2] sm:$0x1]
        %v1592 = vld [vmem:[%s1588 + $0x3] sm:$0x1]
        %v1593 = vld [vmem:[%s1588 + $0x4] sm:$0x1]
        %v1594 = vld [vmem:[%s1588 + $0x5] sm:$0x1]
        %v1595 = vld [vmem:[%s1588 + $0x6] sm:$0x1]
        %v1596 = vld [vmem:[%s1588 + $0x7] sm:$0x1]
        %v1597 = vld [vmem:[%s1588 + $0x8] sm:$0x1]
        %v1598 = vld [vmem:[%s1588 + $0x9] sm:$0x1]
        %v1599 = vld [vmem:[%s1588 + $0xa] sm:$0x1]
        %v1600 = vld [vmem:[%s1588 + $0xb] sm:$0x1]
        %v1601 = vld [vmem:[%s1588 + $0xc] sm:$0x1]
        %v1602 = vld [vmem:[%s1588 + $0xd] sm:$0x1]
        %v1603 = vld [vmem:[%s1588 + $0xe] sm:$0x1]
        %v1604 = vld [vmem:[%s1588 + $0xf] sm:$0x1]
        %v1605 = vadd.f32 %v1589, %v1579
        %v1606 = vadd.f32 %v1590, %v1579
        %v1607 = vadd.f32 %v1591, %v1579
        %v1608 = vadd.f32 %v1592, %v1579
        %v1609 = vadd.f32 %v1593, %v1580
        %v1610 = vadd.f32 %v1594, %v1580
        %v1611 = vadd.f32 %v1595, %v1580
        %v1612 = vadd.f32 %v1596, %v1580
        %v1613 = vadd.f32 %v1597, %v1581
        %v1614 = vadd.f32 %v1598, %v1581
        %v1615 = vadd.f32 %v1599, %v1581
        %v1616 = vadd.f32 %v1600, %v1581
        %v1617 = vadd.f32 %v1601, %v1582
        %v1618 = vadd.f32 %v1602, %v1582
        %v1619 = vadd.f32 %v1603, %v1582
        %v1620 = vadd.f32 %v1604, %v1582
        %v1621 = vmul.f32 %v1605, %v319
        %v1622 = vmul.f32 %v1606, %v319
        %v1623 = vmul.f32 %v1607, %v319
        %v1624 = vmul.f32 %v1608, %v319
        %v1625 = vmul.f32 %v1609, %v319
        %v1626 = vmul.f32 %v1610, %v319
        %v1627 = vmul.f32 %v1611, %v319
        %v1628 = vmul.f32 %v1612, %v319
        %v1629 = vmul.f32 %v1613, %v319
        %v1630 = vmul.f32 %v1614, %v319
        %v1631 = vmul.f32 %v1615, %v319
        %v1632 = vmul.f32 %v1616, %v319
        %v1633 = vmul.f32 %v1617, %v319
        %v1634 = vmul.f32 %v1618, %v319
        %v1635 = vmul.f32 %v1619, %v319
        %v1636 = vmul.f32 %v1620, %v319
        %v1637 = vsel %vm339, %v1621, -inf
        %v1638 = vsel %vm339, %v1625, -inf
        %v1639 = vmax.f32 %v1637, %v1638
        %v1640 = vsel %vm339, %v1629, -inf
        %v1641 = vmax.f32 %v1639, %v1640
        %v1642 = vsel %vm339, %v1633, -inf
        %v1643 = vmax.f32 %v1641, %v1642
        %v1644 = vsel %vm339, %v1622, -inf
        %v1645 = vsel %vm339, %v1626, -inf
        %v1646 = vmax.f32 %v1644, %v1645
        %v1647 = vsel %vm339, %v1630, -inf
        %v1648 = vmax.f32 %v1646, %v1647
        %v1649 = vsel %vm339, %v1634, -inf
        %v1650 = vmax.f32 %v1648, %v1649
        %v1651 = vsel %vm339, %v1623, -inf
        %v1652 = vsel %vm339, %v1627, -inf
        %v1653 = vmax.f32 %v1651, %v1652
        %v1654 = vsel %vm339, %v1631, -inf
        %v1655 = vmax.f32 %v1653, %v1654
        %v1656 = vsel %vm339, %v1635, -inf
        %v1657 = vmax.f32 %v1655, %v1656
        %v1658 = vsel %vm339, %v1624, -inf
        %v1659 = vsel %vm339, %v1628, -inf
        %v1660 = vmax.f32 %v1658, %v1659
        %v1661 = vsel %vm339, %v1632, -inf
        %v1662 = vmax.f32 %v1660, %v1661
        %v1663 = vsel %vm339, %v1636, -inf
        %v1664 = vmax.f32 %v1662, %v1663
        %v1665 = vsub.f32 %v1621, %v1643
        %v1666 = vsub.f32 %v1622, %v1650
        %v1667 = vsub.f32 %v1623, %v1657
        %v1668 = vsub.f32 %v1624, %v1664
        %v1669 = vsub.f32 %v1625, %v1643
        %v1670 = vsub.f32 %v1626, %v1650
        %v1671 = vsub.f32 %v1627, %v1657
        %v1672 = vsub.f32 %v1628, %v1664
        %v1673 = vsub.f32 %v1629, %v1643
        %v1674 = vsub.f32 %v1630, %v1650
        %v1675 = vsub.f32 %v1631, %v1657
        %v1676 = vsub.f32 %v1632, %v1664
        %v1677 = vsub.f32 %v1633, %v1643
        %v1678 = vsub.f32 %v1634, %v1650
        %v1679 = vsub.f32 %v1635, %v1657
        %v1680 = vsub.f32 %v1636, %v1664
        %v1681 = vmul.f32 %v1665, 1.442695
        %v1682 = vpow.pop %v1681
        %v1683 = vmul.f32 %v1666, 1.442695
        %v1684 = vpow.pop %v1683
        %v1685 = vmul.f32 %v1667, 1.442695
        %v1686 = vpow.pop %v1685
        %v1687 = vmul.f32 %v1668, 1.442695
        %v1688 = vpow.pop %v1687
        %v1689 = vmul.f32 %v1669, 1.442695
        %v1690 = vpow.pop %v1689
        %v1691 = vmul.f32 %v1670, 1.442695
        %v1692 = vpow.pop %v1691
        %v1693 = vmul.f32 %v1671, 1.442695
        %v1694 = vpow.pop %v1693
        %v1695 = vmul.f32 %v1672, 1.442695
        %v1696 = vpow.pop %v1695
        %v1697 = vmul.f32 %v1673, 1.442695
        %v1698 = vpow.pop %v1697
        %v1699 = vmul.f32 %v1674, 1.442695
        %v1700 = vpow.pop %v1699
        %v1701 = vmul.f32 %v1675, 1.442695
        %v1702 = vpow.pop %v1701
        %v1703 = vmul.f32 %v1676, 1.442695
        %v1704 = vpow.pop %v1703
        %v1705 = vmul.f32 %v1677, 1.442695
        %v1706 = vpow.pop %v1705
        %v1707 = vmul.f32 %v1678, 1.442695
        %v1708 = vpow.pop %v1707
        %v1709 = vmul.f32 %v1679, 1.442695
        %v1710 = vpow.pop %v1709
        %v1711 = vmul.f32 %v1680, 1.442695
        %v1712 = vpow.pop %v1711
        %v1713 = vsel %vm416, %v1682, 0.0
        %v1714 = vsel %vm416, %v1690, 0.0
        %v1715 = vadd.f32 %v1713, %v1714
        %v1716 = vsel %vm416, %v1698, 0.0
        %v1717 = vadd.f32 %v1715, %v1716
        %v1718 = vsel %vm416, %v1706, 0.0
        %v1719 = vadd.f32 %v1717, %v1718
        %v1720 = vsel %vm416, %v1684, 0.0
        %v1721 = vsel %vm416, %v1692, 0.0
        %v1722 = vadd.f32 %v1720, %v1721
        %v1723 = vsel %vm416, %v1700, 0.0
        %v1724 = vadd.f32 %v1722, %v1723
        %v1725 = vsel %vm416, %v1708, 0.0
        %v1726 = vadd.f32 %v1724, %v1725
        %v1727 = vsel %vm416, %v1686, 0.0
        %v1728 = vsel %vm416, %v1694, 0.0
        %v1729 = vadd.f32 %v1727, %v1728
        %v1730 = vsel %vm416, %v1702, 0.0
        %v1731 = vadd.f32 %v1729, %v1730
        %v1732 = vsel %vm416, %v1710, 0.0
        %v1733 = vadd.f32 %v1731, %v1732
        %v1734 = vsel %vm416, %v1688, 0.0
        %v1735 = vsel %vm416, %v1696, 0.0
        %v1736 = vadd.f32 %v1734, %v1735
        %v1737 = vsel %vm416, %v1704, 0.0
        %v1738 = vadd.f32 %v1736, %v1737
        %v1739 = vsel %vm416, %v1712, 0.0
        %v1740 = vadd.f32 %v1738, %v1739
        %v1741 = vlog2.pop %v1719
        %v1742 = vmul.f32 %v1741, 0.6931472
        %v1743 = vlog2.pop %v1726
        %v1744 = vmul.f32 %v1743, 0.6931472
        %v1745 = vlog2.pop %v1733
        %v1746 = vmul.f32 %v1745, 0.6931472
        %v1747 = vlog2.pop %v1740
        %v1748 = vmul.f32 %v1747, 0.6931472
        %v1749 = vadd.f32 %v1643, %v1742
        %v1750 = vadd.f32 %v1650, %v1744
        %v1751 = vadd.f32 %v1657, %v1746
        %v1752 = vadd.f32 %v1664, %v1748
        %v1753 = vmul.f32 %v457, %v1749
        %v1754 = vmul.f32 %v457, %v1750
        %v1755 = vmul.f32 %v457, %v1751
        %v1756 = vmul.f32 %v457, %v1752
        %s1757 = sadd.s32 %s265, 8
        %s1758 = smul.u32 %s1757, 4
        %s1759 = scalar_lea.vmem %s232, %s1758
        %v1760 = vld [vmem:[%s1759] sm:$0x1]
        %v1761 = vld [vmem:[%s1759 + $0x1] sm:$0x1]
        %v1762 = vld [vmem:[%s1759 + $0x2] sm:$0x1]
        %v1763 = vld [vmem:[%s1759 + $0x3] sm:$0x1]
        %v1764 = vadd.f32 %v1760, %v1753
        %v1765 = vadd.f32 %v1761, %v1754
        %v1766 = vadd.f32 %v1762, %v1755
        %v1767 = vadd.f32 %v1763, %v1756
        %s1768 = scalar_lea.vmem %s256, %s1758
        %1769 = vst.msk [vmem:[%s1768] sm:$0x1] %vm416, %v1764
        %1770 = vst.msk [vmem:[%s1768 + $0x1] sm:$0x1] %vm416, %v1765
        %1771 = vst.msk [vmem:[%s1768 + $0x2] sm:$0x1] %vm416, %v1766
        %1772 = vst.msk [vmem:[%s1768 + $0x3] sm:$0x1] %vm416, %v1767
        %s1773 = scalar_lea.vmem %s246, 128
        %v1774 = vld [vmem:[%s1773] sm:$0x1]
        %v1775 = vld [vmem:[%s1773 + $0x1] sm:$0x1]
        %v1776 = vld [vmem:[%s1773 + $0x2] sm:$0x1]
        %v1777 = vld [vmem:[%s1773 + $0x3] sm:$0x1]
        %v1778 = vld [vmem:[%s1773 + $0x4] sm:$0x1]
        %v1779 = vld [vmem:[%s1773 + $0x5] sm:$0x1]
        %v1780 = vld [vmem:[%s1773 + $0x6] sm:$0x1]
        %v1781 = vld [vmem:[%s1773 + $0x7] sm:$0x1]
        %v1782 = vld [vmem:[%s1773 + $0x8] sm:$0x1]
        %v1783 = vld [vmem:[%s1773 + $0x9] sm:$0x1]
        %v1784 = vld [vmem:[%s1773 + $0xa] sm:$0x1]
        %v1785 = vld [vmem:[%s1773 + $0xb] sm:$0x1]
        %v1786 = vld [vmem:[%s1773 + $0xc] sm:$0x1]
        %v1787 = vld [vmem:[%s1773 + $0xd] sm:$0x1]
        %v1788 = vld [vmem:[%s1773 + $0xe] sm:$0x1]
        %v1789 = vld [vmem:[%s1773 + $0xf] sm:$0x1]
        %v1790 = vadd.f32 %v1774, %v1764
        %v1791 = vadd.f32 %v1775, %v1764
        %v1792 = vadd.f32 %v1776, %v1764
        %v1793 = vadd.f32 %v1777, %v1764
        %v1794 = vadd.f32 %v1778, %v1765
        %v1795 = vadd.f32 %v1779, %v1765
        %v1796 = vadd.f32 %v1780, %v1765
        %v1797 = vadd.f32 %v1781, %v1765
        %v1798 = vadd.f32 %v1782, %v1766
        %v1799 = vadd.f32 %v1783, %v1766
        %v1800 = vadd.f32 %v1784, %v1766
        %v1801 = vadd.f32 %v1785, %v1766
        %v1802 = vadd.f32 %v1786, %v1767
        %v1803 = vadd.f32 %v1787, %v1767
        %v1804 = vadd.f32 %v1788, %v1767
        %v1805 = vadd.f32 %v1789, %v1767
        %v1806 = vmul.f32 %v1790, %v319
        %v1807 = vmul.f32 %v1791, %v319
        %v1808 = vmul.f32 %v1792, %v319
        %v1809 = vmul.f32 %v1793, %v319
        %v1810 = vmul.f32 %v1794, %v319
        %v1811 = vmul.f32 %v1795, %v319
        %v1812 = vmul.f32 %v1796, %v319
        %v1813 = vmul.f32 %v1797, %v319
        %v1814 = vmul.f32 %v1798, %v319
        %v1815 = vmul.f32 %v1799, %v319
        %v1816 = vmul.f32 %v1800, %v319
        %v1817 = vmul.f32 %v1801, %v319
        %v1818 = vmul.f32 %v1802, %v319
        %v1819 = vmul.f32 %v1803, %v319
        %v1820 = vmul.f32 %v1804, %v319
        %v1821 = vmul.f32 %v1805, %v319
        %v1822 = vsel %vm339, %v1806, -inf
        %v1823 = vsel %vm339, %v1810, -inf
        %v1824 = vmax.f32 %v1822, %v1823
        %v1825 = vsel %vm339, %v1814, -inf
        %v1826 = vmax.f32 %v1824, %v1825
        %v1827 = vsel %vm339, %v1818, -inf
        %v1828 = vmax.f32 %v1826, %v1827
        %v1829 = vsel %vm339, %v1807, -inf
        %v1830 = vsel %vm339, %v1811, -inf
        %v1831 = vmax.f32 %v1829, %v1830
        %v1832 = vsel %vm339, %v1815, -inf
        %v1833 = vmax.f32 %v1831, %v1832
        %v1834 = vsel %vm339, %v1819, -inf
        %v1835 = vmax.f32 %v1833, %v1834
        %v1836 = vsel %vm339, %v1808, -inf
        %v1837 = vsel %vm339, %v1812, -inf
        %v1838 = vmax.f32 %v1836, %v1837
        %v1839 = vsel %vm339, %v1816, -inf
        %v1840 = vmax.f32 %v1838, %v1839
        %v1841 = vsel %vm339, %v1820, -inf
        %v1842 = vmax.f32 %v1840, %v1841
        %v1843 = vsel %vm339, %v1809, -inf
        %v1844 = vsel %vm339, %v1813, -inf
        %v1845 = vmax.f32 %v1843, %v1844
        %v1846 = vsel %vm339, %v1817, -inf
        %v1847 = vmax.f32 %v1845, %v1846
        %v1848 = vsel %vm339, %v1821, -inf
        %v1849 = vmax.f32 %v1847, %v1848
        %v1850 = vsub.f32 %v1806, %v1828
        %v1851 = vsub.f32 %v1807, %v1835
        %v1852 = vsub.f32 %v1808, %v1842
        %v1853 = vsub.f32 %v1809, %v1849
        %v1854 = vsub.f32 %v1810, %v1828
        %v1855 = vsub.f32 %v1811, %v1835
        %v1856 = vsub.f32 %v1812, %v1842
        %v1857 = vsub.f32 %v1813, %v1849
        %v1858 = vsub.f32 %v1814, %v1828
        %v1859 = vsub.f32 %v1815, %v1835
        %v1860 = vsub.f32 %v1816, %v1842
        %v1861 = vsub.f32 %v1817, %v1849
        %v1862 = vsub.f32 %v1818, %v1828
        %v1863 = vsub.f32 %v1819, %v1835
        %v1864 = vsub.f32 %v1820, %v1842
        %v1865 = vsub.f32 %v1821, %v1849
        %v1866 = vmul.f32 %v1850, 1.442695
        %v1867 = vpow.pop %v1866
        %v1868 = vmul.f32 %v1851, 1.442695
        %v1869 = vpow.pop %v1868
        %v1870 = vmul.f32 %v1852, 1.442695
        %v1871 = vpow.pop %v1870
        %v1872 = vmul.f32 %v1853, 1.442695
        %v1873 = vpow.pop %v1872
        %v1874 = vmul.f32 %v1854, 1.442695
        %v1875 = vpow.pop %v1874
        %v1876 = vmul.f32 %v1855, 1.442695
        %v1877 = vpow.pop %v1876
        %v1878 = vmul.f32 %v1856, 1.442695
        %v1879 = vpow.pop %v1878
        %v1880 = vmul.f32 %v1857, 1.442695
        %v1881 = vpow.pop %v1880
        %v1882 = vmul.f32 %v1858, 1.442695
        %v1883 = vpow.pop %v1882
        %v1884 = vmul.f32 %v1859, 1.442695
        %v1885 = vpow.pop %v1884
        %v1886 = vmul.f32 %v1860, 1.442695
        %v1887 = vpow.pop %v1886
        %v1888 = vmul.f32 %v1861, 1.442695
        %v1889 = vpow.pop %v1888
        %v1890 = vmul.f32 %v1862, 1.442695
        %v1891 = vpow.pop %v1890
        %v1892 = vmul.f32 %v1863, 1.442695
        %v1893 = vpow.pop %v1892
        %v1894 = vmul.f32 %v1864, 1.442695
        %v1895 = vpow.pop %v1894
        %v1896 = vmul.f32 %v1865, 1.442695
        %v1897 = vpow.pop %v1896
        %v1898 = vsel %vm416, %v1867, 0.0
        %v1899 = vsel %vm416, %v1875, 0.0
        %v1900 = vadd.f32 %v1898, %v1899
        %v1901 = vsel %vm416, %v1883, 0.0
        %v1902 = vadd.f32 %v1900, %v1901
        %v1903 = vsel %vm416, %v1891, 0.0
        %v1904 = vadd.f32 %v1902, %v1903
        %v1905 = vsel %vm416, %v1869, 0.0
        %v1906 = vsel %vm416, %v1877, 0.0
        %v1907 = vadd.f32 %v1905, %v1906
        %v1908 = vsel %vm416, %v1885, 0.0
        %v1909 = vadd.f32 %v1907, %v1908
        %v1910 = vsel %vm416, %v1893, 0.0
        %v1911 = vadd.f32 %v1909, %v1910
        %v1912 = vsel %vm416, %v1871, 0.0
        %v1913 = vsel %vm416, %v1879, 0.0
        %v1914 = vadd.f32 %v1912, %v1913
        %v1915 = vsel %vm416, %v1887, 0.0
        %v1916 = vadd.f32 %v1914, %v1915
        %v1917 = vsel %vm416, %v1895, 0.0
        %v1918 = vadd.f32 %v1916, %v1917
        %v1919 = vsel %vm416, %v1873, 0.0
        %v1920 = vsel %vm416, %v1881, 0.0
        %v1921 = vadd.f32 %v1919, %v1920
        %v1922 = vsel %vm416, %v1889, 0.0
        %v1923 = vadd.f32 %v1921, %v1922
        %v1924 = vsel %vm416, %v1897, 0.0
        %v1925 = vadd.f32 %v1923, %v1924
        %v1926 = vlog2.pop %v1904
        %v1927 = vmul.f32 %v1926, 0.6931472
        %v1928 = vlog2.pop %v1911
        %v1929 = vmul.f32 %v1928, 0.6931472
        %v1930 = vlog2.pop %v1918
        %v1931 = vmul.f32 %v1930, 0.6931472
        %v1932 = vlog2.pop %v1925
        %v1933 = vmul.f32 %v1932, 0.6931472
        %v1934 = vadd.f32 %v1828, %v1927
        %v1935 = vadd.f32 %v1835, %v1929
        %v1936 = vadd.f32 %v1842, %v1931
        %v1937 = vadd.f32 %v1849, %v1933
        %v1938 = vmul.f32 %v457, %v1934
        %v1939 = vmul.f32 %v457, %v1935
        %v1940 = vmul.f32 %v457, %v1936
        %v1941 = vmul.f32 %v457, %v1937
        %s1942 = sadd.s32 %s265, 9
        %s1943 = smul.u32 %s1942, 4
        %s1944 = scalar_lea.vmem %s232, %s1943
        %v1945 = vld [vmem:[%s1944] sm:$0x1]
        %v1946 = vld [vmem:[%s1944 + $0x1] sm:$0x1]
        %v1947 = vld [vmem:[%s1944 + $0x2] sm:$0x1]
        %v1948 = vld [vmem:[%s1944 + $0x3] sm:$0x1]
        %v1949 = vadd.f32 %v1945, %v1938
        %v1950 = vadd.f32 %v1946, %v1939
        %v1951 = vadd.f32 %v1947, %v1940
        %v1952 = vadd.f32 %v1948, %v1941
        %s1953 = scalar_lea.vmem %s256, %s1943
        %1954 = vst.msk [vmem:[%s1953] sm:$0x1] %vm416, %v1949
        %1955 = vst.msk [vmem:[%s1953 + $0x1] sm:$0x1] %vm416, %v1950
        %1956 = vst.msk [vmem:[%s1953 + $0x2] sm:$0x1] %vm416, %v1951
        %1957 = vst.msk [vmem:[%s1953 + $0x3] sm:$0x1] %vm416, %v1952
        %s1958 = scalar_lea.vmem %s246, 144
        %v1959 = vld [vmem:[%s1958] sm:$0x1]
        %v1960 = vld [vmem:[%s1958 + $0x1] sm:$0x1]
        %v1961 = vld [vmem:[%s1958 + $0x2] sm:$0x1]
        %v1962 = vld [vmem:[%s1958 + $0x3] sm:$0x1]
        %v1963 = vld [vmem:[%s1958 + $0x4] sm:$0x1]
        %v1964 = vld [vmem:[%s1958 + $0x5] sm:$0x1]
        %v1965 = vld [vmem:[%s1958 + $0x6] sm:$0x1]
        %v1966 = vld [vmem:[%s1958 + $0x7] sm:$0x1]
        %v1967 = vld [vmem:[%s1958 + $0x8] sm:$0x1]
        %v1968 = vld [vmem:[%s1958 + $0x9] sm:$0x1]
        %v1969 = vld [vmem:[%s1958 + $0xa] sm:$0x1]
        %v1970 = vld [vmem:[%s1958 + $0xb] sm:$0x1]
        %v1971 = vld [vmem:[%s1958 + $0xc] sm:$0x1]
        %v1972 = vld [vmem:[%s1958 + $0xd] sm:$0x1]
        %v1973 = vld [vmem:[%s1958 + $0xe] sm:$0x1]
        %v1974 = vld [vmem:[%s1958 + $0xf] sm:$0x1]
        %v1975 = vadd.f32 %v1959, %v1949
        %v1976 = vadd.f32 %v1960, %v1949
        %v1977 = vadd.f32 %v1961, %v1949
        %v1978 = vadd.f32 %v1962, %v1949
        %v1979 = vadd.f32 %v1963, %v1950
        %v1980 = vadd.f32 %v1964, %v1950
        %v1981 = vadd.f32 %v1965, %v1950
        %v1982 = vadd.f32 %v1966, %v1950
        %v1983 = vadd.f32 %v1967, %v1951
        %v1984 = vadd.f32 %v1968, %v1951
        %v1985 = vadd.f32 %v1969, %v1951
        %v1986 = vadd.f32 %v1970, %v1951
        %v1987 = vadd.f32 %v1971, %v1952
        %v1988 = vadd.f32 %v1972, %v1952
        %v1989 = vadd.f32 %v1973, %v1952
        %v1990 = vadd.f32 %v1974, %v1952
        %v1991 = vmul.f32 %v1975, %v319
        %v1992 = vmul.f32 %v1976, %v319
        %v1993 = vmul.f32 %v1977, %v319
        %v1994 = vmul.f32 %v1978, %v319
        %v1995 = vmul.f32 %v1979, %v319
        %v1996 = vmul.f32 %v1980, %v319
        %v1997 = vmul.f32 %v1981, %v319
        %v1998 = vmul.f32 %v1982, %v319
        %v1999 = vmul.f32 %v1983, %v319
        %v2000 = vmul.f32 %v1984, %v319
        %v2001 = vmul.f32 %v1985, %v319
        %v2002 = vmul.f32 %v1986, %v319
        %v2003 = vmul.f32 %v1987, %v319
        %v2004 = vmul.f32 %v1988, %v319
        %v2005 = vmul.f32 %v1989, %v319
        %v2006 = vmul.f32 %v1990, %v319
        %v2007 = vsel %vm339, %v1991, -inf
        %v2008 = vsel %vm339, %v1995, -inf
        %v2009 = vmax.f32 %v2007, %v2008
        %v2010 = vsel %vm339, %v1999, -inf
        %v2011 = vmax.f32 %v2009, %v2010
        %v2012 = vsel %vm339, %v2003, -inf
        %v2013 = vmax.f32 %v2011, %v2012
        %v2014 = vsel %vm339, %v1992, -inf
        %v2015 = vsel %vm339, %v1996, -inf
        %v2016 = vmax.f32 %v2014, %v2015
        %v2017 = vsel %vm339, %v2000, -inf
        %v2018 = vmax.f32 %v2016, %v2017
        %v2019 = vsel %vm339, %v2004, -inf
        %v2020 = vmax.f32 %v2018, %v2019
        %v2021 = vsel %vm339, %v1993, -inf
        %v2022 = vsel %vm339, %v1997, -inf
        %v2023 = vmax.f32 %v2021, %v2022
        %v2024 = vsel %vm339, %v2001, -inf
        %v2025 = vmax.f32 %v2023, %v2024
        %v2026 = vsel %vm339, %v2005, -inf
        %v2027 = vmax.f32 %v2025, %v2026
        %v2028 = vsel %vm339, %v1994, -inf
        %v2029 = vsel %vm339, %v1998, -inf
        %v2030 = vmax.f32 %v2028, %v2029
        %v2031 = vsel %vm339, %v2002, -inf
        %v2032 = vmax.f32 %v2030, %v2031
        %v2033 = vsel %vm339, %v2006, -inf
        %v2034 = vmax.f32 %v2032, %v2033
        %v2035 = vsub.f32 %v1991, %v2013
        %v2036 = vsub.f32 %v1992, %v2020
        %v2037 = vsub.f32 %v1993, %v2027
        %v2038 = vsub.f32 %v1994, %v2034
        %v2039 = vsub.f32 %v1995, %v2013
        %v2040 = vsub.f32 %v1996, %v2020
        %v2041 = vsub.f32 %v1997, %v2027
        %v2042 = vsub.f32 %v1998, %v2034
        %v2043 = vsub.f32 %v1999, %v2013
        %v2044 = vsub.f32 %v2000, %v2020
        %v2045 = vsub.f32 %v2001, %v2027
        %v2046 = vsub.f32 %v2002, %v2034
        %v2047 = vsub.f32 %v2003, %v2013
        %v2048 = vsub.f32 %v2004, %v2020
        %v2049 = vsub.f32 %v2005, %v2027
        %v2050 = vsub.f32 %v2006, %v2034
        %v2051 = vmul.f32 %v2035, 1.442695
        %v2052 = vpow.pop %v2051
        %v2053 = vmul.f32 %v2036, 1.442695
        %v2054 = vpow.pop %v2053
        %v2055 = vmul.f32 %v2037, 1.442695
        %v2056 = vpow.pop %v2055
        %v2057 = vmul.f32 %v2038, 1.442695
        %v2058 = vpow.pop %v2057
        %v2059 = vmul.f32 %v2039, 1.442695
        %v2060 = vpow.pop %v2059
        %v2061 = vmul.f32 %v2040, 1.442695
        %v2062 = vpow.pop %v2061
        %v2063 = vmul.f32 %v2041, 1.442695
        %v2064 = vpow.pop %v2063
        %v2065 = vmul.f32 %v2042, 1.442695
        %v2066 = vpow.pop %v2065
        %v2067 = vmul.f32 %v2043, 1.442695
        %v2068 = vpow.pop %v2067
        %v2069 = vmul.f32 %v2044, 1.442695
        %v2070 = vpow.pop %v2069
        %v2071 = vmul.f32 %v2045, 1.442695
        %v2072 = vpow.pop %v2071
        %v2073 = vmul.f32 %v2046, 1.442695
        %v2074 = vpow.pop %v2073
        %v2075 = vmul.f32 %v2047, 1.442695
        %v2076 = vpow.pop %v2075
        %v2077 = vmul.f32 %v2048, 1.442695
        %v2078 = vpow.pop %v2077
        %v2079 = vmul.f32 %v2049, 1.442695
        %v2080 = vpow.pop %v2079
        %v2081 = vmul.f32 %v2050, 1.442695
        %v2082 = vpow.pop %v2081
        %v2083 = vsel %vm416, %v2052, 0.0
        %v2084 = vsel %vm416, %v2060, 0.0
        %v2085 = vadd.f32 %v2083, %v2084
        %v2086 = vsel %vm416, %v2068, 0.0
        %v2087 = vadd.f32 %v2085, %v2086
        %v2088 = vsel %vm416, %v2076, 0.0
        %v2089 = vadd.f32 %v2087, %v2088
        %v2090 = vsel %vm416, %v2054, 0.0
        %v2091 = vsel %vm416, %v2062, 0.0
        %v2092 = vadd.f32 %v2090, %v2091
        %v2093 = vsel %vm416, %v2070, 0.0
        %v2094 = vadd.f32 %v2092, %v2093
        %v2095 = vsel %vm416, %v2078, 0.0
        %v2096 = vadd.f32 %v2094, %v2095
        %v2097 = vsel %vm416, %v2056, 0.0
        %v2098 = vsel %vm416, %v2064, 0.0
        %v2099 = vadd.f32 %v2097, %v2098
        %v2100 = vsel %vm416, %v2072, 0.0
        %v2101 = vadd.f32 %v2099, %v2100
        %v2102 = vsel %vm416, %v2080, 0.0
        %v2103 = vadd.f32 %v2101, %v2102
        %v2104 = vsel %vm416, %v2058, 0.0
        %v2105 = vsel %vm416, %v2066, 0.0
        %v2106 = vadd.f32 %v2104, %v2105
        %v2107 = vsel %vm416, %v2074, 0.0
        %v2108 = vadd.f32 %v2106, %v2107
        %v2109 = vsel %vm416, %v2082, 0.0
        %v2110 = vadd.f32 %v2108, %v2109
        %v2111 = vlog2.pop %v2089
        %v2112 = vmul.f32 %v2111, 0.6931472
        %v2113 = vlog2.pop %v2096
        %v2114 = vmul.f32 %v2113, 0.6931472
        %v2115 = vlog2.pop %v2103
        %v2116 = vmul.f32 %v2115, 0.6931472
        %v2117 = vlog2.pop %v2110
        %v2118 = vmul.f32 %v2117, 0.6931472
        %v2119 = vadd.f32 %v2013, %v2112
        %v2120 = vadd.f32 %v2020, %v2114
        %v2121 = vadd.f32 %v2027, %v2116
        %v2122 = vadd.f32 %v2034, %v2118
        %v2123 = vmul.f32 %v457, %v2119
        %v2124 = vmul.f32 %v457, %v2120
        %v2125 = vmul.f32 %v457, %v2121
        %v2126 = vmul.f32 %v457, %v2122
        %s2127 = sadd.s32 %s265, 10
        %s2128 = smul.u32 %s2127, 4
        %s2129 = scalar_lea.vmem %s232, %s2128
        %v2130 = vld [vmem:[%s2129] sm:$0x1]
        %v2131 = vld [vmem:[%s2129 + $0x1] sm:$0x1]
        %v2132 = vld [vmem:[%s2129 + $0x2] sm:$0x1]
        %v2133 = vld [vmem:[%s2129 + $0x3] sm:$0x1]
        %v2134 = vadd.f32 %v2130, %v2123
        %v2135 = vadd.f32 %v2131, %v2124
        %v2136 = vadd.f32 %v2132, %v2125
        %v2137 = vadd.f32 %v2133, %v2126
        %s2138 = scalar_lea.vmem %s256, %s2128
        %2139 = vst.msk [vmem:[%s2138] sm:$0x1] %vm416, %v2134
        %2140 = vst.msk [vmem:[%s2138 + $0x1] sm:$0x1] %vm416, %v2135
        %2141 = vst.msk [vmem:[%s2138 + $0x2] sm:$0x1] %vm416, %v2136
        %2142 = vst.msk [vmem:[%s2138 + $0x3] sm:$0x1] %vm416, %v2137
        %s2143 = scalar_lea.vmem %s246, 160
        %v2144 = vld [vmem:[%s2143] sm:$0x1]
        %v2145 = vld [vmem:[%s2143 + $0x1] sm:$0x1]
        %v2146 = vld [vmem:[%s2143 + $0x2] sm:$0x1]
        %v2147 = vld [vmem:[%s2143 + $0x3] sm:$0x1]
        %v2148 = vld [vmem:[%s2143 + $0x4] sm:$0x1]
        %v2149 = vld [vmem:[%s2143 + $0x5] sm:$0x1]
        %v2150 = vld [vmem:[%s2143 + $0x6] sm:$0x1]
        %v2151 = vld [vmem:[%s2143 + $0x7] sm:$0x1]
        %v2152 = vld [vmem:[%s2143 + $0x8] sm:$0x1]
        %v2153 = vld [vmem:[%s2143 + $0x9] sm:$0x1]
        %v2154 = vld [vmem:[%s2143 + $0xa] sm:$0x1]
        %v2155 = vld [vmem:[%s2143 + $0xb] sm:$0x1]
        %v2156 = vld [vmem:[%s2143 + $0xc] sm:$0x1]
        %v2157 = vld [vmem:[%s2143 + $0xd] sm:$0x1]
        %v2158 = vld [vmem:[%s2143 + $0xe] sm:$0x1]
        %v2159 = vld [vmem:[%s2143 + $0xf] sm:$0x1]
        %v2160 = vadd.f32 %v2144, %v2134
        %v2161 = vadd.f32 %v2145, %v2134
        %v2162 = vadd.f32 %v2146, %v2134
        %v2163 = vadd.f32 %v2147, %v2134
        %v2164 = vadd.f32 %v2148, %v2135
        %v2165 = vadd.f32 %v2149, %v2135
        %v2166 = vadd.f32 %v2150, %v2135
        %v2167 = vadd.f32 %v2151, %v2135
        %v2168 = vadd.f32 %v2152, %v2136
        %v2169 = vadd.f32 %v2153, %v2136
        %v2170 = vadd.f32 %v2154, %v2136
        %v2171 = vadd.f32 %v2155, %v2136
        %v2172 = vadd.f32 %v2156, %v2137
        %v2173 = vadd.f32 %v2157, %v2137
        %v2174 = vadd.f32 %v2158, %v2137
        %v2175 = vadd.f32 %v2159, %v2137
        %v2176 = vmul.f32 %v2160, %v319
        %v2177 = vmul.f32 %v2161, %v319
        %v2178 = vmul.f32 %v2162, %v319
        %v2179 = vmul.f32 %v2163, %v319
        %v2180 = vmul.f32 %v2164, %v319
        %v2181 = vmul.f32 %v2165, %v319
        %v2182 = vmul.f32 %v2166, %v319
        %v2183 = vmul.f32 %v2167, %v319
        %v2184 = vmul.f32 %v2168, %v319
        %v2185 = vmul.f32 %v2169, %v319
        %v2186 = vmul.f32 %v2170, %v319
        %v2187 = vmul.f32 %v2171, %v319
        %v2188 = vmul.f32 %v2172, %v319
        %v2189 = vmul.f32 %v2173, %v319
        %v2190 = vmul.f32 %v2174, %v319
        %v2191 = vmul.f32 %v2175, %v319
        %v2192 = vsel %vm339, %v2176, -inf
        %v2193 = vsel %vm339, %v2180, -inf
        %v2194 = vmax.f32 %v2192, %v2193
        %v2195 = vsel %vm339, %v2184, -inf
        %v2196 = vmax.f32 %v2194, %v2195
        %v2197 = vsel %vm339, %v2188, -inf
        %v2198 = vmax.f32 %v2196, %v2197
        %v2199 = vsel %vm339, %v2177, -inf
        %v2200 = vsel %vm339, %v2181, -inf
        %v2201 = vmax.f32 %v2199, %v2200
        %v2202 = vsel %vm339, %v2185, -inf
        %v2203 = vmax.f32 %v2201, %v2202
        %v2204 = vsel %vm339, %v2189, -inf
        %v2205 = vmax.f32 %v2203, %v2204
        %v2206 = vsel %vm339, %v2178, -inf
        %v2207 = vsel %vm339, %v2182, -inf
        %v2208 = vmax.f32 %v2206, %v2207
        %v2209 = vsel %vm339, %v2186, -inf
        %v2210 = vmax.f32 %v2208, %v2209
        %v2211 = vsel %vm339, %v2190, -inf
        %v2212 = vmax.f32 %v2210, %v2211
        %v2213 = vsel %vm339, %v2179, -inf
        %v2214 = vsel %vm339, %v2183, -inf
        %v2215 = vmax.f32 %v2213, %v2214
        %v2216 = vsel %vm339, %v2187, -inf
        %v2217 = vmax.f32 %v2215, %v2216
        %v2218 = vsel %vm339, %v2191, -inf
        %v2219 = vmax.f32 %v2217, %v2218
        %v2220 = vsub.f32 %v2176, %v2198
        %v2221 = vsub.f32 %v2177, %v2205
        %v2222 = vsub.f32 %v2178, %v2212
        %v2223 = vsub.f32 %v2179, %v2219
        %v2224 = vsub.f32 %v2180, %v2198
        %v2225 = vsub.f32 %v2181, %v2205
        %v2226 = vsub.f32 %v2182, %v2212
        %v2227 = vsub.f32 %v2183, %v2219
        %v2228 = vsub.f32 %v2184, %v2198
        %v2229 = vsub.f32 %v2185, %v2205
        %v2230 = vsub.f32 %v2186, %v2212
        %v2231 = vsub.f32 %v2187, %v2219
        %v2232 = vsub.f32 %v2188, %v2198
        %v2233 = vsub.f32 %v2189, %v2205
        %v2234 = vsub.f32 %v2190, %v2212
        %v2235 = vsub.f32 %v2191, %v2219
        %v2236 = vmul.f32 %v2220, 1.442695
        %v2237 = vpow.pop %v2236
        %v2238 = vmul.f32 %v2221, 1.442695
        %v2239 = vpow.pop %v2238
        %v2240 = vmul.f32 %v2222, 1.442695
        %v2241 = vpow.pop %v2240
        %v2242 = vmul.f32 %v2223, 1.442695
        %v2243 = vpow.pop %v2242
        %v2244 = vmul.f32 %v2224, 1.442695
        %v2245 = vpow.pop %v2244
        %v2246 = vmul.f32 %v2225, 1.442695
        %v2247 = vpow.pop %v2246
        %v2248 = vmul.f32 %v2226, 1.442695
        %v2249 = vpow.pop %v2248
        %v2250 = vmul.f32 %v2227, 1.442695
        %v2251 = vpow.pop %v2250
        %v2252 = vmul.f32 %v2228, 1.442695
        %v2253 = vpow.pop %v2252
        %v2254 = vmul.f32 %v2229, 1.442695
        %v2255 = vpow.pop %v2254
        %v2256 = vmul.f32 %v2230, 1.442695
        %v2257 = vpow.pop %v2256
        %v2258 = vmul.f32 %v2231, 1.442695
        %v2259 = vpow.pop %v2258
        %v2260 = vmul.f32 %v2232, 1.442695
        %v2261 = vpow.pop %v2260
        %v2262 = vmul.f32 %v2233, 1.442695
        %v2263 = vpow.pop %v2262
        %v2264 = vmul.f32 %v2234, 1.442695
        %v2265 = vpow.pop %v2264
        %v2266 = vmul.f32 %v2235, 1.442695
        %v2267 = vpow.pop %v2266
        %v2268 = vsel %vm416, %v2237, 0.0
        %v2269 = vsel %vm416, %v2245, 0.0
        %v2270 = vadd.f32 %v2268, %v2269
        %v2271 = vsel %vm416, %v2253, 0.0
        %v2272 = vadd.f32 %v2270, %v2271
        %v2273 = vsel %vm416, %v2261, 0.0
        %v2274 = vadd.f32 %v2272, %v2273
        %v2275 = vsel %vm416, %v2239, 0.0
        %v2276 = vsel %vm416, %v2247, 0.0
        %v2277 = vadd.f32 %v2275, %v2276
        %v2278 = vsel %vm416, %v2255, 0.0
        %v2279 = vadd.f32 %v2277, %v2278
        %v2280 = vsel %vm416, %v2263, 0.0
        %v2281 = vadd.f32 %v2279, %v2280
        %v2282 = vsel %vm416, %v2241, 0.0
        %v2283 = vsel %vm416, %v2249, 0.0
        %v2284 = vadd.f32 %v2282, %v2283
        %v2285 = vsel %vm416, %v2257, 0.0
        %v2286 = vadd.f32 %v2284, %v2285
        %v2287 = vsel %vm416, %v2265, 0.0
        %v2288 = vadd.f32 %v2286, %v2287
        %v2289 = vsel %vm416, %v2243, 0.0
        %v2290 = vsel %vm416, %v2251, 0.0
        %v2291 = vadd.f32 %v2289, %v2290
        %v2292 = vsel %vm416, %v2259, 0.0
        %v2293 = vadd.f32 %v2291, %v2292
        %v2294 = vsel %vm416, %v2267, 0.0
        %v2295 = vadd.f32 %v2293, %v2294
        %v2296 = vlog2.pop %v2274
        %v2297 = vmul.f32 %v2296, 0.6931472
        %v2298 = vlog2.pop %v2281
        %v2299 = vmul.f32 %v2298, 0.6931472
        %v2300 = vlog2.pop %v2288
        %v2301 = vmul.f32 %v2300, 0.6931472
        %v2302 = vlog2.pop %v2295
        %v2303 = vmul.f32 %v2302, 0.6931472
        %v2304 = vadd.f32 %v2198, %v2297
        %v2305 = vadd.f32 %v2205, %v2299
        %v2306 = vadd.f32 %v2212, %v2301
        %v2307 = vadd.f32 %v2219, %v2303
        %v2308 = vmul.f32 %v457, %v2304
        %v2309 = vmul.f32 %v457, %v2305
        %v2310 = vmul.f32 %v457, %v2306
        %v2311 = vmul.f32 %v457, %v2307
        %s2312 = sadd.s32 %s265, 11
        %s2313 = smul.u32 %s2312, 4
        %s2314 = scalar_lea.vmem %s232, %s2313
        %v2315 = vld [vmem:[%s2314] sm:$0x1]
        %v2316 = vld [vmem:[%s2314 + $0x1] sm:$0x1]
        %v2317 = vld [vmem:[%s2314 + $0x2] sm:$0x1]
        %v2318 = vld [vmem:[%s2314 + $0x3] sm:$0x1]
        %v2319 = vadd.f32 %v2315, %v2308
        %v2320 = vadd.f32 %v2316, %v2309
        %v2321 = vadd.f32 %v2317, %v2310
        %v2322 = vadd.f32 %v2318, %v2311
        %s2323 = scalar_lea.vmem %s256, %s2313
        %2324 = vst.msk [vmem:[%s2323] sm:$0x1] %vm416, %v2319
        %2325 = vst.msk [vmem:[%s2323 + $0x1] sm:$0x1] %vm416, %v2320
        %2326 = vst.msk [vmem:[%s2323 + $0x2] sm:$0x1] %vm416, %v2321
        %2327 = vst.msk [vmem:[%s2323 + $0x3] sm:$0x1] %vm416, %v2322
        %s2328 = scalar_lea.vmem %s246, 176
        %v2329 = vld [vmem:[%s2328] sm:$0x1]
        %v2330 = vld [vmem:[%s2328 + $0x1] sm:$0x1]
        %v2331 = vld [vmem:[%s2328 + $0x2] sm:$0x1]
        %v2332 = vld [vmem:[%s2328 + $0x3] sm:$0x1]
        %v2333 = vld [vmem:[%s2328 + $0x4] sm:$0x1]
        %v2334 = vld [vmem:[%s2328 + $0x5] sm:$0x1]
        %v2335 = vld [vmem:[%s2328 + $0x6] sm:$0x1]
        %v2336 = vld [vmem:[%s2328 + $0x7] sm:$0x1]
        %v2337 = vld [vmem:[%s2328 + $0x8] sm:$0x1]
        %v2338 = vld [vmem:[%s2328 + $0x9] sm:$0x1]
        %v2339 = vld [vmem:[%s2328 + $0xa] sm:$0x1]
        %v2340 = vld [vmem:[%s2328 + $0xb] sm:$0x1]
        %v2341 = vld [vmem:[%s2328 + $0xc] sm:$0x1]
        %v2342 = vld [vmem:[%s2328 + $0xd] sm:$0x1]
        %v2343 = vld [vmem:[%s2328 + $0xe] sm:$0x1]
        %v2344 = vld [vmem:[%s2328 + $0xf] sm:$0x1]
        %v2345 = vadd.f32 %v2329, %v2319
        %v2346 = vadd.f32 %v2330, %v2319
        %v2347 = vadd.f32 %v2331, %v2319
        %v2348 = vadd.f32 %v2332, %v2319
        %v2349 = vadd.f32 %v2333, %v2320
        %v2350 = vadd.f32 %v2334, %v2320
        %v2351 = vadd.f32 %v2335, %v2320
        %v2352 = vadd.f32 %v2336, %v2320
        %v2353 = vadd.f32 %v2337, %v2321
        %v2354 = vadd.f32 %v2338, %v2321
        %v2355 = vadd.f32 %v2339, %v2321
        %v2356 = vadd.f32 %v2340, %v2321
        %v2357 = vadd.f32 %v2341, %v2322
        %v2358 = vadd.f32 %v2342, %v2322
        %v2359 = vadd.f32 %v2343, %v2322
        %v2360 = vadd.f32 %v2344, %v2322
        %v2361 = vmul.f32 %v2345, %v319
        %v2362 = vmul.f32 %v2346, %v319
        %v2363 = vmul.f32 %v2347, %v319
        %v2364 = vmul.f32 %v2348, %v319
        %v2365 = vmul.f32 %v2349, %v319
        %v2366 = vmul.f32 %v2350, %v319
        %v2367 = vmul.f32 %v2351, %v319
        %v2368 = vmul.f32 %v2352, %v319
        %v2369 = vmul.f32 %v2353, %v319
        %v2370 = vmul.f32 %v2354, %v319
        %v2371 = vmul.f32 %v2355, %v319
        %v2372 = vmul.f32 %v2356, %v319
        %v2373 = vmul.f32 %v2357, %v319
        %v2374 = vmul.f32 %v2358, %v319
        %v2375 = vmul.f32 %v2359, %v319
        %v2376 = vmul.f32 %v2360, %v319
        %v2377 = vsel %vm339, %v2361, -inf
        %v2378 = vsel %vm339, %v2365, -inf
        %v2379 = vmax.f32 %v2377, %v2378
        %v2380 = vsel %vm339, %v2369, -inf
        %v2381 = vmax.f32 %v2379, %v2380
        %v2382 = vsel %vm339, %v2373, -inf
        %v2383 = vmax.f32 %v2381, %v2382
        %v2384 = vsel %vm339, %v2362, -inf
        %v2385 = vsel %vm339, %v2366, -inf
        %v2386 = vmax.f32 %v2384, %v2385
        %v2387 = vsel %vm339, %v2370, -inf
        %v2388 = vmax.f32 %v2386, %v2387
        %v2389 = vsel %vm339, %v2374, -inf
        %v2390 = vmax.f32 %v2388, %v2389
        %v2391 = vsel %vm339, %v2363, -inf
        %v2392 = vsel %vm339, %v2367, -inf
        %v2393 = vmax.f32 %v2391, %v2392
        %v2394 = vsel %vm339, %v2371, -inf
        %v2395 = vmax.f32 %v2393, %v2394
        %v2396 = vsel %vm339, %v2375, -inf
        %v2397 = vmax.f32 %v2395, %v2396
        %v2398 = vsel %vm339, %v2364, -inf
        %v2399 = vsel %vm339, %v2368, -inf
        %v2400 = vmax.f32 %v2398, %v2399
        %v2401 = vsel %vm339, %v2372, -inf
        %v2402 = vmax.f32 %v2400, %v2401
        %v2403 = vsel %vm339, %v2376, -inf
        %v2404 = vmax.f32 %v2402, %v2403
        %v2405 = vsub.f32 %v2361, %v2383
        %v2406 = vsub.f32 %v2362, %v2390
        %v2407 = vsub.f32 %v2363, %v2397
        %v2408 = vsub.f32 %v2364, %v2404
        %v2409 = vsub.f32 %v2365, %v2383
        %v2410 = vsub.f32 %v2366, %v2390
        %v2411 = vsub.f32 %v2367, %v2397
        %v2412 = vsub.f32 %v2368, %v2404
        %v2413 = vsub.f32 %v2369, %v2383
        %v2414 = vsub.f32 %v2370, %v2390
        %v2415 = vsub.f32 %v2371, %v2397
        %v2416 = vsub.f32 %v2372, %v2404
        %v2417 = vsub.f32 %v2373, %v2383
        %v2418 = vsub.f32 %v2374, %v2390
        %v2419 = vsub.f32 %v2375, %v2397
        %v2420 = vsub.f32 %v2376, %v2404
        %v2421 = vmul.f32 %v2405, 1.442695
        %v2422 = vpow.pop %v2421
        %v2423 = vmul.f32 %v2406, 1.442695
        %v2424 = vpow.pop %v2423
        %v2425 = vmul.f32 %v2407, 1.442695
        %v2426 = vpow.pop %v2425
        %v2427 = vmul.f32 %v2408, 1.442695
        %v2428 = vpow.pop %v2427
        %v2429 = vmul.f32 %v2409, 1.442695
        %v2430 = vpow.pop %v2429
        %v2431 = vmul.f32 %v2410, 1.442695
        %v2432 = vpow.pop %v2431
        %v2433 = vmul.f32 %v2411, 1.442695
        %v2434 = vpow.pop %v2433
        %v2435 = vmul.f32 %v2412, 1.442695
        %v2436 = vpow.pop %v2435
        %v2437 = vmul.f32 %v2413, 1.442695
        %v2438 = vpow.pop %v2437
        %v2439 = vmul.f32 %v2414, 1.442695
        %v2440 = vpow.pop %v2439
        %v2441 = vmul.f32 %v2415, 1.442695
        %v2442 = vpow.pop %v2441
        %v2443 = vmul.f32 %v2416, 1.442695
        %v2444 = vpow.pop %v2443
        %v2445 = vmul.f32 %v2417, 1.442695
        %v2446 = vpow.pop %v2445
        %v2447 = vmul.f32 %v2418, 1.442695
        %v2448 = vpow.pop %v2447
        %v2449 = vmul.f32 %v2419, 1.442695
        %v2450 = vpow.pop %v2449
        %v2451 = vmul.f32 %v2420, 1.442695
        %v2452 = vpow.pop %v2451
        %v2453 = vsel %vm416, %v2422, 0.0
        %v2454 = vsel %vm416, %v2430, 0.0
        %v2455 = vadd.f32 %v2453, %v2454
        %v2456 = vsel %vm416, %v2438, 0.0
        %v2457 = vadd.f32 %v2455, %v2456
        %v2458 = vsel %vm416, %v2446, 0.0
        %v2459 = vadd.f32 %v2457, %v2458
        %v2460 = vsel %vm416, %v2424, 0.0
        %v2461 = vsel %vm416, %v2432, 0.0
        %v2462 = vadd.f32 %v2460, %v2461
        %v2463 = vsel %vm416, %v2440, 0.0
        %v2464 = vadd.f32 %v2462, %v2463
        %v2465 = vsel %vm416, %v2448, 0.0
        %v2466 = vadd.f32 %v2464, %v2465
        %v2467 = vsel %vm416, %v2426, 0.0
        %v2468 = vsel %vm416, %v2434, 0.0
        %v2469 = vadd.f32 %v2467, %v2468
        %v2470 = vsel %vm416, %v2442, 0.0
        %v2471 = vadd.f32 %v2469, %v2470
        %v2472 = vsel %vm416, %v2450, 0.0
        %v2473 = vadd.f32 %v2471, %v2472
        %v2474 = vsel %vm416, %v2428, 0.0
        %v2475 = vsel %vm416, %v2436, 0.0
        %v2476 = vadd.f32 %v2474, %v2475
        %v2477 = vsel %vm416, %v2444, 0.0
        %v2478 = vadd.f32 %v2476, %v2477
        %v2479 = vsel %vm416, %v2452, 0.0
        %v2480 = vadd.f32 %v2478, %v2479
        %v2481 = vlog2.pop %v2459
        %v2482 = vmul.f32 %v2481, 0.6931472
        %v2483 = vlog2.pop %v2466
        %v2484 = vmul.f32 %v2483, 0.6931472
        %v2485 = vlog2.pop %v2473
        %v2486 = vmul.f32 %v2485, 0.6931472
        %v2487 = vlog2.pop %v2480
        %v2488 = vmul.f32 %v2487, 0.6931472
        %v2489 = vadd.f32 %v2383, %v2482
        %v2490 = vadd.f32 %v2390, %v2484
        %v2491 = vadd.f32 %v2397, %v2486
        %v2492 = vadd.f32 %v2404, %v2488
        %v2493 = vmul.f32 %v457, %v2489
        %v2494 = vmul.f32 %v457, %v2490
        %v2495 = vmul.f32 %v457, %v2491
        %v2496 = vmul.f32 %v457, %v2492
        %s2497 = sadd.s32 %s265, 12
        %s2498 = smul.u32 %s2497, 4
        %s2499 = scalar_lea.vmem %s232, %s2498
        %v2500 = vld [vmem:[%s2499] sm:$0x1]
        %v2501 = vld [vmem:[%s2499 + $0x1] sm:$0x1]
        %v2502 = vld [vmem:[%s2499 + $0x2] sm:$0x1]
        %v2503 = vld [vmem:[%s2499 + $0x3] sm:$0x1]
        %v2504 = vadd.f32 %v2500, %v2493
        %v2505 = vadd.f32 %v2501, %v2494
        %v2506 = vadd.f32 %v2502, %v2495
        %v2507 = vadd.f32 %v2503, %v2496
        %s2508 = scalar_lea.vmem %s256, %s2498
        %2509 = vst.msk [vmem:[%s2508] sm:$0x1] %vm416, %v2504
        %2510 = vst.msk [vmem:[%s2508 + $0x1] sm:$0x1] %vm416, %v2505
        %2511 = vst.msk [vmem:[%s2508 + $0x2] sm:$0x1] %vm416, %v2506
        %2512 = vst.msk [vmem:[%s2508 + $0x3] sm:$0x1] %vm416, %v2507
        %s2513 = scalar_lea.vmem %s246, 192
        %v2514 = vld [vmem:[%s2513] sm:$0x1]
        %v2515 = vld [vmem:[%s2513 + $0x1] sm:$0x1]
        %v2516 = vld [vmem:[%s2513 + $0x2] sm:$0x1]
        %v2517 = vld [vmem:[%s2513 + $0x3] sm:$0x1]
        %v2518 = vld [vmem:[%s2513 + $0x4] sm:$0x1]
        %v2519 = vld [vmem:[%s2513 + $0x5] sm:$0x1]
        %v2520 = vld [vmem:[%s2513 + $0x6] sm:$0x1]
        %v2521 = vld [vmem:[%s2513 + $0x7] sm:$0x1]
        %v2522 = vld [vmem:[%s2513 + $0x8] sm:$0x1]
        %v2523 = vld [vmem:[%s2513 + $0x9] sm:$0x1]
        %v2524 = vld [vmem:[%s2513 + $0xa] sm:$0x1]
        %v2525 = vld [vmem:[%s2513 + $0xb] sm:$0x1]
        %v2526 = vld [vmem:[%s2513 + $0xc] sm:$0x1]
        %v2527 = vld [vmem:[%s2513 + $0xd] sm:$0x1]
        %v2528 = vld [vmem:[%s2513 + $0xe] sm:$0x1]
        %v2529 = vld [vmem:[%s2513 + $0xf] sm:$0x1]
        %v2530 = vadd.f32 %v2514, %v2504
        %v2531 = vadd.f32 %v2515, %v2504
        %v2532 = vadd.f32 %v2516, %v2504
        %v2533 = vadd.f32 %v2517, %v2504
        %v2534 = vadd.f32 %v2518, %v2505
        %v2535 = vadd.f32 %v2519, %v2505
        %v2536 = vadd.f32 %v2520, %v2505
        %v2537 = vadd.f32 %v2521, %v2505
        %v2538 = vadd.f32 %v2522, %v2506
        %v2539 = vadd.f32 %v2523, %v2506
        %v2540 = vadd.f32 %v2524, %v2506
        %v2541 = vadd.f32 %v2525, %v2506
        %v2542 = vadd.f32 %v2526, %v2507
        %v2543 = vadd.f32 %v2527, %v2507
        %v2544 = vadd.f32 %v2528, %v2507
        %v2545 = vadd.f32 %v2529, %v2507
        %v2546 = vmul.f32 %v2530, %v319
        %v2547 = vmul.f32 %v2531, %v319
        %v2548 = vmul.f32 %v2532, %v319
        %v2549 = vmul.f32 %v2533, %v319
        %v2550 = vmul.f32 %v2534, %v319
        %v2551 = vmul.f32 %v2535, %v319
        %v2552 = vmul.f32 %v2536, %v319
        %v2553 = vmul.f32 %v2537, %v319
        %v2554 = vmul.f32 %v2538, %v319
        %v2555 = vmul.f32 %v2539, %v319
        %v2556 = vmul.f32 %v2540, %v319
        %v2557 = vmul.f32 %v2541, %v319
        %v2558 = vmul.f32 %v2542, %v319
        %v2559 = vmul.f32 %v2543, %v319
        %v2560 = vmul.f32 %v2544, %v319
        %v2561 = vmul.f32 %v2545, %v319
        %v2562 = vsel %vm339, %v2546, -inf
        %v2563 = vsel %vm339, %v2550, -inf
        %v2564 = vmax.f32 %v2562, %v2563
        %v2565 = vsel %vm339, %v2554, -inf
        %v2566 = vmax.f32 %v2564, %v2565
        %v2567 = vsel %vm339, %v2558, -inf
        %v2568 = vmax.f32 %v2566, %v2567
        %v2569 = vsel %vm339, %v2547, -inf
        %v2570 = vsel %vm339, %v2551, -inf
        %v2571 = vmax.f32 %v2569, %v2570
        %v2572 = vsel %vm339, %v2555, -inf
        %v2573 = vmax.f32 %v2571, %v2572
        %v2574 = vsel %vm339, %v2559, -inf
        %v2575 = vmax.f32 %v2573, %v2574
        %v2576 = vsel %vm339, %v2548, -inf
        %v2577 = vsel %vm339, %v2552, -inf
        %v2578 = vmax.f32 %v2576, %v2577
        %v2579 = vsel %vm339, %v2556, -inf
        %v2580 = vmax.f32 %v2578, %v2579
        %v2581 = vsel %vm339, %v2560, -inf
        %v2582 = vmax.f32 %v2580, %v2581
        %v2583 = vsel %vm339, %v2549, -inf
        %v2584 = vsel %vm339, %v2553, -inf
        %v2585 = vmax.f32 %v2583, %v2584
        %v2586 = vsel %vm339, %v2557, -inf
        %v2587 = vmax.f32 %v2585, %v2586
        %v2588 = vsel %vm339, %v2561, -inf
        %v2589 = vmax.f32 %v2587, %v2588
        %v2590 = vsub.f32 %v2546, %v2568
        %v2591 = vsub.f32 %v2547, %v2575
        %v2592 = vsub.f32 %v2548, %v2582
        %v2593 = vsub.f32 %v2549, %v2589
        %v2594 = vsub.f32 %v2550, %v2568
        %v2595 = vsub.f32 %v2551, %v2575
        %v2596 = vsub.f32 %v2552, %v2582
        %v2597 = vsub.f32 %v2553, %v2589
        %v2598 = vsub.f32 %v2554, %v2568
        %v2599 = vsub.f32 %v2555, %v2575
        %v2600 = vsub.f32 %v2556, %v2582
        %v2601 = vsub.f32 %v2557, %v2589
        %v2602 = vsub.f32 %v2558, %v2568
        %v2603 = vsub.f32 %v2559, %v2575
        %v2604 = vsub.f32 %v2560, %v2582
        %v2605 = vsub.f32 %v2561, %v2589
        %v2606 = vmul.f32 %v2590, 1.442695
        %v2607 = vpow.pop %v2606
        %v2608 = vmul.f32 %v2591, 1.442695
        %v2609 = vpow.pop %v2608
        %v2610 = vmul.f32 %v2592, 1.442695
        %v2611 = vpow.pop %v2610
        %v2612 = vmul.f32 %v2593, 1.442695
        %v2613 = vpow.pop %v2612
        %v2614 = vmul.f32 %v2594, 1.442695
        %v2615 = vpow.pop %v2614
        %v2616 = vmul.f32 %v2595, 1.442695
        %v2617 = vpow.pop %v2616
        %v2618 = vmul.f32 %v2596, 1.442695
        %v2619 = vpow.pop %v2618
        %v2620 = vmul.f32 %v2597, 1.442695
        %v2621 = vpow.pop %v2620
        %v2622 = vmul.f32 %v2598, 1.442695
        %v2623 = vpow.pop %v2622
        %v2624 = vmul.f32 %v2599, 1.442695
        %v2625 = vpow.pop %v2624
        %v2626 = vmul.f32 %v2600, 1.442695
        %v2627 = vpow.pop %v2626
        %v2628 = vmul.f32 %v2601, 1.442695
        %v2629 = vpow.pop %v2628
        %v2630 = vmul.f32 %v2602, 1.442695
        %v2631 = vpow.pop %v2630
        %v2632 = vmul.f32 %v2603, 1.442695
        %v2633 = vpow.pop %v2632
        %v2634 = vmul.f32 %v2604, 1.442695
        %v2635 = vpow.pop %v2634
        %v2636 = vmul.f32 %v2605, 1.442695
        %v2637 = vpow.pop %v2636
        %v2638 = vsel %vm416, %v2607, 0.0
        %v2639 = vsel %vm416, %v2615, 0.0
        %v2640 = vadd.f32 %v2638, %v2639
        %v2641 = vsel %vm416, %v2623, 0.0
        %v2642 = vadd.f32 %v2640, %v2641
        %v2643 = vsel %vm416, %v2631, 0.0
        %v2644 = vadd.f32 %v2642, %v2643
        %v2645 = vsel %vm416, %v2609, 0.0
        %v2646 = vsel %vm416, %v2617, 0.0
        %v2647 = vadd.f32 %v2645, %v2646
        %v2648 = vsel %vm416, %v2625, 0.0
        %v2649 = vadd.f32 %v2647, %v2648
        %v2650 = vsel %vm416, %v2633, 0.0
        %v2651 = vadd.f32 %v2649, %v2650
        %v2652 = vsel %vm416, %v2611, 0.0
        %v2653 = vsel %vm416, %v2619, 0.0
        %v2654 = vadd.f32 %v2652, %v2653
        %v2655 = vsel %vm416, %v2627, 0.0
        %v2656 = vadd.f32 %v2654, %v2655
        %v2657 = vsel %vm416, %v2635, 0.0
        %v2658 = vadd.f32 %v2656, %v2657
        %v2659 = vsel %vm416, %v2613, 0.0
        %v2660 = vsel %vm416, %v2621, 0.0
        %v2661 = vadd.f32 %v2659, %v2660
        %v2662 = vsel %vm416, %v2629, 0.0
        %v2663 = vadd.f32 %v2661, %v2662
        %v2664 = vsel %vm416, %v2637, 0.0
        %v2665 = vadd.f32 %v2663, %v2664
        %v2666 = vlog2.pop %v2644
        %v2667 = vmul.f32 %v2666, 0.6931472
        %v2668 = vlog2.pop %v2651
        %v2669 = vmul.f32 %v2668, 0.6931472
        %v2670 = vlog2.pop %v2658
        %v2671 = vmul.f32 %v2670, 0.6931472
        %v2672 = vlog2.pop %v2665
        %v2673 = vmul.f32 %v2672, 0.6931472
        %v2674 = vadd.f32 %v2568, %v2667
        %v2675 = vadd.f32 %v2575, %v2669
        %v2676 = vadd.f32 %v2582, %v2671
        %v2677 = vadd.f32 %v2589, %v2673
        %v2678 = vmul.f32 %v457, %v2674
        %v2679 = vmul.f32 %v457, %v2675
        %v2680 = vmul.f32 %v457, %v2676
        %v2681 = vmul.f32 %v457, %v2677
        %s2682 = sadd.s32 %s265, 13
        %s2683 = smul.u32 %s2682, 4
        %s2684 = scalar_lea.vmem %s232, %s2683
        %v2685 = vld [vmem:[%s2684] sm:$0x1]
        %v2686 = vld [vmem:[%s2684 + $0x1] sm:$0x1]
        %v2687 = vld [vmem:[%s2684 + $0x2] sm:$0x1]
        %v2688 = vld [vmem:[%s2684 + $0x3] sm:$0x1]
        %v2689 = vadd.f32 %v2685, %v2678
        %v2690 = vadd.f32 %v2686, %v2679
        %v2691 = vadd.f32 %v2687, %v2680
        %v2692 = vadd.f32 %v2688, %v2681
        %s2693 = scalar_lea.vmem %s256, %s2683
        %2694 = vst.msk [vmem:[%s2693] sm:$0x1] %vm416, %v2689
        %2695 = vst.msk [vmem:[%s2693 + $0x1] sm:$0x1] %vm416, %v2690
        %2696 = vst.msk [vmem:[%s2693 + $0x2] sm:$0x1] %vm416, %v2691
        %2697 = vst.msk [vmem:[%s2693 + $0x3] sm:$0x1] %vm416, %v2692
        %s2698 = scalar_lea.vmem %s246, 208
        %v2699 = vld [vmem:[%s2698] sm:$0x1]
        %v2700 = vld [vmem:[%s2698 + $0x1] sm:$0x1]
        %v2701 = vld [vmem:[%s2698 + $0x2] sm:$0x1]
        %v2702 = vld [vmem:[%s2698 + $0x3] sm:$0x1]
        %v2703 = vld [vmem:[%s2698 + $0x4] sm:$0x1]
        %v2704 = vld [vmem:[%s2698 + $0x5] sm:$0x1]
        %v2705 = vld [vmem:[%s2698 + $0x6] sm:$0x1]
        %v2706 = vld [vmem:[%s2698 + $0x7] sm:$0x1]
        %v2707 = vld [vmem:[%s2698 + $0x8] sm:$0x1]
        %v2708 = vld [vmem:[%s2698 + $0x9] sm:$0x1]
        %v2709 = vld [vmem:[%s2698 + $0xa] sm:$0x1]
        %v2710 = vld [vmem:[%s2698 + $0xb] sm:$0x1]
        %v2711 = vld [vmem:[%s2698 + $0xc] sm:$0x1]
        %v2712 = vld [vmem:[%s2698 + $0xd] sm:$0x1]
        %v2713 = vld [vmem:[%s2698 + $0xe] sm:$0x1]
        %v2714 = vld [vmem:[%s2698 + $0xf] sm:$0x1]
        %v2715 = vadd.f32 %v2699, %v2689
        %v2716 = vadd.f32 %v2700, %v2689
        %v2717 = vadd.f32 %v2701, %v2689
        %v2718 = vadd.f32 %v2702, %v2689
        %v2719 = vadd.f32 %v2703, %v2690
        %v2720 = vadd.f32 %v2704, %v2690
        %v2721 = vadd.f32 %v2705, %v2690
        %v2722 = vadd.f32 %v2706, %v2690
        %v2723 = vadd.f32 %v2707, %v2691
        %v2724 = vadd.f32 %v2708, %v2691
        %v2725 = vadd.f32 %v2709, %v2691
        %v2726 = vadd.f32 %v2710, %v2691
        %v2727 = vadd.f32 %v2711, %v2692
        %v2728 = vadd.f32 %v2712, %v2692
        %v2729 = vadd.f32 %v2713, %v2692
        %v2730 = vadd.f32 %v2714, %v2692
        %v2731 = vmul.f32 %v2715, %v319
        %v2732 = vmul.f32 %v2716, %v319
        %v2733 = vmul.f32 %v2717, %v319
        %v2734 = vmul.f32 %v2718, %v319
        %v2735 = vmul.f32 %v2719, %v319
        %v2736 = vmul.f32 %v2720, %v319
        %v2737 = vmul.f32 %v2721, %v319
        %v2738 = vmul.f32 %v2722, %v319
        %v2739 = vmul.f32 %v2723, %v319
        %v2740 = vmul.f32 %v2724, %v319
        %v2741 = vmul.f32 %v2725, %v319
        %v2742 = vmul.f32 %v2726, %v319
        %v2743 = vmul.f32 %v2727, %v319
        %v2744 = vmul.f32 %v2728, %v319
        %v2745 = vmul.f32 %v2729, %v319
        %v2746 = vmul.f32 %v2730, %v319
        %v2747 = vsel %vm339, %v2731, -inf
        %v2748 = vsel %vm339, %v2735, -inf
        %v2749 = vmax.f32 %v2747, %v2748
        %v2750 = vsel %vm339, %v2739, -inf
        %v2751 = vmax.f32 %v2749, %v2750
        %v2752 = vsel %vm339, %v2743, -inf
        %v2753 = vmax.f32 %v2751, %v2752
        %v2754 = vsel %vm339, %v2732, -inf
        %v2755 = vsel %vm339, %v2736, -inf
        %v2756 = vmax.f32 %v2754, %v2755
        %v2757 = vsel %vm339, %v2740, -inf
        %v2758 = vmax.f32 %v2756, %v2757
        %v2759 = vsel %vm339, %v2744, -inf
        %v2760 = vmax.f32 %v2758, %v2759
        %v2761 = vsel %vm339, %v2733, -inf
        %v2762 = vsel %vm339, %v2737, -inf
        %v2763 = vmax.f32 %v2761, %v2762
        %v2764 = vsel %vm339, %v2741, -inf
        %v2765 = vmax.f32 %v2763, %v2764
        %v2766 = vsel %vm339, %v2745, -inf
        %v2767 = vmax.f32 %v2765, %v2766
        %v2768 = vsel %vm339, %v2734, -inf
        %v2769 = vsel %vm339, %v2738, -inf
        %v2770 = vmax.f32 %v2768, %v2769
        %v2771 = vsel %vm339, %v2742, -inf
        %v2772 = vmax.f32 %v2770, %v2771
        %v2773 = vsel %vm339, %v2746, -inf
        %v2774 = vmax.f32 %v2772, %v2773
        %v2775 = vsub.f32 %v2731, %v2753
        %v2776 = vsub.f32 %v2732, %v2760
        %v2777 = vsub.f32 %v2733, %v2767
        %v2778 = vsub.f32 %v2734, %v2774
        %v2779 = vsub.f32 %v2735, %v2753
        %v2780 = vsub.f32 %v2736, %v2760
        %v2781 = vsub.f32 %v2737, %v2767
        %v2782 = vsub.f32 %v2738, %v2774
        %v2783 = vsub.f32 %v2739, %v2753
        %v2784 = vsub.f32 %v2740, %v2760
        %v2785 = vsub.f32 %v2741, %v2767
        %v2786 = vsub.f32 %v2742, %v2774
        %v2787 = vsub.f32 %v2743, %v2753
        %v2788 = vsub.f32 %v2744, %v2760
        %v2789 = vsub.f32 %v2745, %v2767
        %v2790 = vsub.f32 %v2746, %v2774
        %v2791 = vmul.f32 %v2775, 1.442695
        %v2792 = vpow.pop %v2791
        %v2793 = vmul.f32 %v2776, 1.442695
        %v2794 = vpow.pop %v2793
        %v2795 = vmul.f32 %v2777, 1.442695
        %v2796 = vpow.pop %v2795
        %v2797 = vmul.f32 %v2778, 1.442695
        %v2798 = vpow.pop %v2797
        %v2799 = vmul.f32 %v2779, 1.442695
        %v2800 = vpow.pop %v2799
        %v2801 = vmul.f32 %v2780, 1.442695
        %v2802 = vpow.pop %v2801
        %v2803 = vmul.f32 %v2781, 1.442695
        %v2804 = vpow.pop %v2803
        %v2805 = vmul.f32 %v2782, 1.442695
        %v2806 = vpow.pop %v2805
        %v2807 = vmul.f32 %v2783, 1.442695
        %v2808 = vpow.pop %v2807
        %v2809 = vmul.f32 %v2784, 1.442695
        %v2810 = vpow.pop %v2809
        %v2811 = vmul.f32 %v2785, 1.442695
        %v2812 = vpow.pop %v2811
        %v2813 = vmul.f32 %v2786, 1.442695
        %v2814 = vpow.pop %v2813
        %v2815 = vmul.f32 %v2787, 1.442695
        %v2816 = vpow.pop %v2815
        %v2817 = vmul.f32 %v2788, 1.442695
        %v2818 = vpow.pop %v2817
        %v2819 = vmul.f32 %v2789, 1.442695
        %v2820 = vpow.pop %v2819
        %v2821 = vmul.f32 %v2790, 1.442695
        %v2822 = vpow.pop %v2821
        %v2823 = vsel %vm416, %v2792, 0.0
        %v2824 = vsel %vm416, %v2800, 0.0
        %v2825 = vadd.f32 %v2823, %v2824
        %v2826 = vsel %vm416, %v2808, 0.0
        %v2827 = vadd.f32 %v2825, %v2826
        %v2828 = vsel %vm416, %v2816, 0.0
        %v2829 = vadd.f32 %v2827, %v2828
        %v2830 = vsel %vm416, %v2794, 0.0
        %v2831 = vsel %vm416, %v2802, 0.0
        %v2832 = vadd.f32 %v2830, %v2831
        %v2833 = vsel %vm416, %v2810, 0.0
        %v2834 = vadd.f32 %v2832, %v2833
        %v2835 = vsel %vm416, %v2818, 0.0
        %v2836 = vadd.f32 %v2834, %v2835
        %v2837 = vsel %vm416, %v2796, 0.0
        %v2838 = vsel %vm416, %v2804, 0.0
        %v2839 = vadd.f32 %v2837, %v2838
        %v2840 = vsel %vm416, %v2812, 0.0
        %v2841 = vadd.f32 %v2839, %v2840
        %v2842 = vsel %vm416, %v2820, 0.0
        %v2843 = vadd.f32 %v2841, %v2842
        %v2844 = vsel %vm416, %v2798, 0.0
        %v2845 = vsel %vm416, %v2806, 0.0
        %v2846 = vadd.f32 %v2844, %v2845
        %v2847 = vsel %vm416, %v2814, 0.0
        %v2848 = vadd.f32 %v2846, %v2847
        %v2849 = vsel %vm416, %v2822, 0.0
        %v2850 = vadd.f32 %v2848, %v2849
        %v2851 = vlog2.pop %v2829
        %v2852 = vmul.f32 %v2851, 0.6931472
        %v2853 = vlog2.pop %v2836
        %v2854 = vmul.f32 %v2853, 0.6931472
        %v2855 = vlog2.pop %v2843
        %v2856 = vmul.f32 %v2855, 0.6931472
        %v2857 = vlog2.pop %v2850
        %v2858 = vmul.f32 %v2857, 0.6931472
        %v2859 = vadd.f32 %v2753, %v2852
        %v2860 = vadd.f32 %v2760, %v2854
        %v2861 = vadd.f32 %v2767, %v2856
        %v2862 = vadd.f32 %v2774, %v2858
        %v2863 = vmul.f32 %v457, %v2859
        %v2864 = vmul.f32 %v457, %v2860
        %v2865 = vmul.f32 %v457, %v2861
        %v2866 = vmul.f32 %v457, %v2862
        %s2867 = sadd.s32 %s265, 14
        %s2868 = smul.u32 %s2867, 4
        %s2869 = scalar_lea.vmem %s232, %s2868
        %v2870 = vld [vmem:[%s2869] sm:$0x1]
        %v2871 = vld [vmem:[%s2869 + $0x1] sm:$0x1]
        %v2872 = vld [vmem:[%s2869 + $0x2] sm:$0x1]
        %v2873 = vld [vmem:[%s2869 + $0x3] sm:$0x1]
        %v2874 = vadd.f32 %v2870, %v2863
        %v2875 = vadd.f32 %v2871, %v2864
        %v2876 = vadd.f32 %v2872, %v2865
        %v2877 = vadd.f32 %v2873, %v2866
        %s2878 = scalar_lea.vmem %s256, %s2868
        %2879 = vst.msk [vmem:[%s2878] sm:$0x1] %vm416, %v2874
        %2880 = vst.msk [vmem:[%s2878 + $0x1] sm:$0x1] %vm416, %v2875
        %2881 = vst.msk [vmem:[%s2878 + $0x2] sm:$0x1] %vm416, %v2876
        %2882 = vst.msk [vmem:[%s2878 + $0x3] sm:$0x1] %vm416, %v2877
        %s2883 = scalar_lea.vmem %s246, 224
        %v2884 = vld [vmem:[%s2883] sm:$0x1]
        %v2885 = vld [vmem:[%s2883 + $0x1] sm:$0x1]
        %v2886 = vld [vmem:[%s2883 + $0x2] sm:$0x1]
        %v2887 = vld [vmem:[%s2883 + $0x3] sm:$0x1]
        %v2888 = vld [vmem:[%s2883 + $0x4] sm:$0x1]
        %v2889 = vld [vmem:[%s2883 + $0x5] sm:$0x1]
        %v2890 = vld [vmem:[%s2883 + $0x6] sm:$0x1]
        %v2891 = vld [vmem:[%s2883 + $0x7] sm:$0x1]
        %v2892 = vld [vmem:[%s2883 + $0x8] sm:$0x1]
        %v2893 = vld [vmem:[%s2883 + $0x9] sm:$0x1]
        %v2894 = vld [vmem:[%s2883 + $0xa] sm:$0x1]
        %v2895 = vld [vmem:[%s2883 + $0xb] sm:$0x1]
        %v2896 = vld [vmem:[%s2883 + $0xc] sm:$0x1]
        %v2897 = vld [vmem:[%s2883 + $0xd] sm:$0x1]
        %v2898 = vld [vmem:[%s2883 + $0xe] sm:$0x1]
        %v2899 = vld [vmem:[%s2883 + $0xf] sm:$0x1]
        %v2900 = vadd.f32 %v2884, %v2874
        %v2901 = vadd.f32 %v2885, %v2874
        %v2902 = vadd.f32 %v2886, %v2874
        %v2903 = vadd.f32 %v2887, %v2874
        %v2904 = vadd.f32 %v2888, %v2875
        %v2905 = vadd.f32 %v2889, %v2875
        %v2906 = vadd.f32 %v2890, %v2875
        %v2907 = vadd.f32 %v2891, %v2875
        %v2908 = vadd.f32 %v2892, %v2876
        %v2909 = vadd.f32 %v2893, %v2876
        %v2910 = vadd.f32 %v2894, %v2876
        %v2911 = vadd.f32 %v2895, %v2876
        %v2912 = vadd.f32 %v2896, %v2877
        %v2913 = vadd.f32 %v2897, %v2877
        %v2914 = vadd.f32 %v2898, %v2877
        %v2915 = vadd.f32 %v2899, %v2877
        %v2916 = vmul.f32 %v2900, %v319
        %v2917 = vmul.f32 %v2901, %v319
        %v2918 = vmul.f32 %v2902, %v319
        %v2919 = vmul.f32 %v2903, %v319
        %v2920 = vmul.f32 %v2904, %v319
        %v2921 = vmul.f32 %v2905, %v319
        %v2922 = vmul.f32 %v2906, %v319
        %v2923 = vmul.f32 %v2907, %v319
        %v2924 = vmul.f32 %v2908, %v319
        %v2925 = vmul.f32 %v2909, %v319
        %v2926 = vmul.f32 %v2910, %v319
        %v2927 = vmul.f32 %v2911, %v319
        %v2928 = vmul.f32 %v2912, %v319
        %v2929 = vmul.f32 %v2913, %v319
        %v2930 = vmul.f32 %v2914, %v319
        %v2931 = vmul.f32 %v2915, %v319
        %v2932 = vsel %vm339, %v2916, -inf
        %v2933 = vsel %vm339, %v2920, -inf
        %v2934 = vmax.f32 %v2932, %v2933
        %v2935 = vsel %vm339, %v2924, -inf
        %v2936 = vmax.f32 %v2934, %v2935
        %v2937 = vsel %vm339, %v2928, -inf
        %v2938 = vmax.f32 %v2936, %v2937
        %v2939 = vsel %vm339, %v2917, -inf
        %v2940 = vsel %vm339, %v2921, -inf
        %v2941 = vmax.f32 %v2939, %v2940
        %v2942 = vsel %vm339, %v2925, -inf
        %v2943 = vmax.f32 %v2941, %v2942
        %v2944 = vsel %vm339, %v2929, -inf
        %v2945 = vmax.f32 %v2943, %v2944
        %v2946 = vsel %vm339, %v2918, -inf
        %v2947 = vsel %vm339, %v2922, -inf
        %v2948 = vmax.f32 %v2946, %v2947
        %v2949 = vsel %vm339, %v2926, -inf
        %v2950 = vmax.f32 %v2948, %v2949
        %v2951 = vsel %vm339, %v2930, -inf
        %v2952 = vmax.f32 %v2950, %v2951
        %v2953 = vsel %vm339, %v2919, -inf
        %v2954 = vsel %vm339, %v2923, -inf
        %v2955 = vmax.f32 %v2953, %v2954
        %v2956 = vsel %vm339, %v2927, -inf
        %v2957 = vmax.f32 %v2955, %v2956
        %v2958 = vsel %vm339, %v2931, -inf
        %v2959 = vmax.f32 %v2957, %v2958
        %v2960 = vsub.f32 %v2916, %v2938
        %v2961 = vsub.f32 %v2917, %v2945
        %v2962 = vsub.f32 %v2918, %v2952
        %v2963 = vsub.f32 %v2919, %v2959
        %v2964 = vsub.f32 %v2920, %v2938
        %v2965 = vsub.f32 %v2921, %v2945
        %v2966 = vsub.f32 %v2922, %v2952
        %v2967 = vsub.f32 %v2923, %v2959
        %v2968 = vsub.f32 %v2924, %v2938
        %v2969 = vsub.f32 %v2925, %v2945
        %v2970 = vsub.f32 %v2926, %v2952
        %v2971 = vsub.f32 %v2927, %v2959
        %v2972 = vsub.f32 %v2928, %v2938
        %v2973 = vsub.f32 %v2929, %v2945
        %v2974 = vsub.f32 %v2930, %v2952
        %v2975 = vsub.f32 %v2931, %v2959
        %v2976 = vmul.f32 %v2960, 1.442695
        %v2977 = vpow.pop %v2976
        %v2978 = vmul.f32 %v2961, 1.442695
        %v2979 = vpow.pop %v2978
        %v2980 = vmul.f32 %v2962, 1.442695
        %v2981 = vpow.pop %v2980
        %v2982 = vmul.f32 %v2963, 1.442695
        %v2983 = vpow.pop %v2982
        %v2984 = vmul.f32 %v2964, 1.442695
        %v2985 = vpow.pop %v2984
        %v2986 = vmul.f32 %v2965, 1.442695
        %v2987 = vpow.pop %v2986
        %v2988 = vmul.f32 %v2966, 1.442695
        %v2989 = vpow.pop %v2988
        %v2990 = vmul.f32 %v2967, 1.442695
        %v2991 = vpow.pop %v2990
        %v2992 = vmul.f32 %v2968, 1.442695
        %v2993 = vpow.pop %v2992
        %v2994 = vmul.f32 %v2969, 1.442695
        %v2995 = vpow.pop %v2994
        %v2996 = vmul.f32 %v2970, 1.442695
        %v2997 = vpow.pop %v2996
        %v2998 = vmul.f32 %v2971, 1.442695
        %v2999 = vpow.pop %v2998
        %v3000 = vmul.f32 %v2972, 1.442695
        %v3001 = vpow.pop %v3000
        %v3002 = vmul.f32 %v2973, 1.442695
        %v3003 = vpow.pop %v3002
        %v3004 = vmul.f32 %v2974, 1.442695
        %v3005 = vpow.pop %v3004
        %v3006 = vmul.f32 %v2975, 1.442695
        %v3007 = vpow.pop %v3006
        %v3008 = vsel %vm416, %v2977, 0.0
        %v3009 = vsel %vm416, %v2985, 0.0
        %v3010 = vadd.f32 %v3008, %v3009
        %v3011 = vsel %vm416, %v2993, 0.0
        %v3012 = vadd.f32 %v3010, %v3011
        %v3013 = vsel %vm416, %v3001, 0.0
        %v3014 = vadd.f32 %v3012, %v3013
        %v3015 = vsel %vm416, %v2979, 0.0
        %v3016 = vsel %vm416, %v2987, 0.0
        %v3017 = vadd.f32 %v3015, %v3016
        %v3018 = vsel %vm416, %v2995, 0.0
        %v3019 = vadd.f32 %v3017, %v3018
        %v3020 = vsel %vm416, %v3003, 0.0
        %v3021 = vadd.f32 %v3019, %v3020
        %v3022 = vsel %vm416, %v2981, 0.0
        %v3023 = vsel %vm416, %v2989, 0.0
        %v3024 = vadd.f32 %v3022, %v3023
        %v3025 = vsel %vm416, %v2997, 0.0
        %v3026 = vadd.f32 %v3024, %v3025
        %v3027 = vsel %vm416, %v3005, 0.0
        %v3028 = vadd.f32 %v3026, %v3027
        %v3029 = vsel %vm416, %v2983, 0.0
        %v3030 = vsel %vm416, %v2991, 0.0
        %v3031 = vadd.f32 %v3029, %v3030
        %v3032 = vsel %vm416, %v2999, 0.0
        %v3033 = vadd.f32 %v3031, %v3032
        %v3034 = vsel %vm416, %v3007, 0.0
        %v3035 = vadd.f32 %v3033, %v3034
        %v3036 = vlog2.pop %v3014
        %v3037 = vmul.f32 %v3036, 0.6931472
        %v3038 = vlog2.pop %v3021
        %v3039 = vmul.f32 %v3038, 0.6931472
        %v3040 = vlog2.pop %v3028
        %v3041 = vmul.f32 %v3040, 0.6931472
        %v3042 = vlog2.pop %v3035
        %v3043 = vmul.f32 %v3042, 0.6931472
        %v3044 = vadd.f32 %v2938, %v3037
        %v3045 = vadd.f32 %v2945, %v3039
        %v3046 = vadd.f32 %v2952, %v3041
        %v3047 = vadd.f32 %v2959, %v3043
        %v3048 = vmul.f32 %v457, %v3044
        %v3049 = vmul.f32 %v457, %v3045
        %v3050 = vmul.f32 %v457, %v3046
        %v3051 = vmul.f32 %v457, %v3047
        %s3052 = sadd.s32 %s265, 15
        %s3053 = smul.u32 %s3052, 4
        %s3054 = scalar_lea.vmem %s232, %s3053
        %v3055 = vld [vmem:[%s3054] sm:$0x1]
        %v3056 = vld [vmem:[%s3054 + $0x1] sm:$0x1]
        %v3057 = vld [vmem:[%s3054 + $0x2] sm:$0x1]
        %v3058 = vld [vmem:[%s3054 + $0x3] sm:$0x1]
        %v3059 = vadd.f32 %v3055, %v3048
        %v3060 = vadd.f32 %v3056, %v3049
        %v3061 = vadd.f32 %v3057, %v3050
        %v3062 = vadd.f32 %v3058, %v3051
        %s3063 = scalar_lea.vmem %s256, %s3053
        %3064 = vst.msk [vmem:[%s3063] sm:$0x1] %vm416, %v3059
        %3065 = vst.msk [vmem:[%s3063 + $0x1] sm:$0x1] %vm416, %v3060
        %3066 = vst.msk [vmem:[%s3063 + $0x2] sm:$0x1] %vm416, %v3061
        %3067 = vst.msk [vmem:[%s3063 + $0x3] sm:$0x1] %vm416, %v3062
        %3068 = vst.msk [vmem:[#allocation2] sm:$0x1] %vm416, %v3059
        %3069 = vst.msk [vmem:[#allocation2 + $0x1] sm:$0x1] %vm416, %v3060
        %3070 = vst.msk [vmem:[#allocation2 + $0x2] sm:$0x1] %vm416, %v3061
        %3071 = vst.msk [vmem:[#allocation2 + $0x3] sm:$0x1] %vm416, %v3062
      $region36: #{fixed_point_iteration.1} parent=31 // pred_fallthru
        _
      %p3072 = scmp.eq.s32.totalorder %s21, 1
      // Predicated region
      $region41: #{fixed_point_iteration.1} parent=31 // pred_check
        %p3073 = pneg %p3072
      $region42: #{fixed_point_iteration.1} parent=31 // pred_check_branch
        %3075 = sbr.rel (%p3073) target = $region44
      $region43: #{fixed_point_iteration.1} parent=31 // pred_region
        %s3076 = ssub.s32 0, %s22
        %s3077 = smul.u32 %s3076, 15
        %p3078 = scmp.eq.s32.totalorder %s22, 0
        // Predicated region
        $region45: #{fixed_point_iteration.1} parent=43 // pred_check
          %p3079 = pneg %p3078
        $region46: #{fixed_point_iteration.1} parent=43 // pred_check_branch
          %3081 = sbr.rel (%p3079) target = $region48
        $region47: #{fixed_point_iteration.1} parent=43 // pred_region
          %s3082 = scalar_lea.vmem %s232, 60
          %v3083 = vld [vmem:[%s3082] sm:$0x1]
          %v3084 = vld [vmem:[%s3082 + $0x1] sm:$0x1]
          %v3085 = vld [vmem:[%s3082 + $0x2] sm:$0x1]
          %v3086 = vld [vmem:[%s3082 + $0x3] sm:$0x1]
          %vm3087 = vcmask 253952
          %3088 = vst.msk [vmem:[#allocation2] sm:$0x1] %vm3087, %v3083
          %3089 = vst.msk [vmem:[#allocation2 + $0x1] sm:$0x1] %vm3087, %v3084
          %3090 = vst.msk [vmem:[#allocation2 + $0x2] sm:$0x1] %vm3087, %v3085
          %3091 = vst.msk [vmem:[#allocation2 + $0x3] sm:$0x1] %vm3087, %v3086
        $region48: #{fixed_point_iteration.1} parent=43 // pred_fallthru
          _
        %v3092 = vld [vmem:[#allocation2] sm:$0x1]
        %v3093 = vld [vmem:[#allocation2 + $0x1] sm:$0x1]
        %v3094 = vld [vmem:[#allocation2 + $0x2] sm:$0x1]
        %v3095 = vld [vmem:[#allocation2 + $0x3] sm:$0x1]
        %s3096 = scalar_lea.vmem %s246, 224
        %v3097 = vld [vmem:[%s3096] sm:$0x1]
        %v3098 = vld [vmem:[%s3096 + $0x1] sm:$0x1]
        %v3099 = vld [vmem:[%s3096 + $0x2] sm:$0x1]
        %v3100 = vld [vmem:[%s3096 + $0x3] sm:$0x1]
        %v3101 = vld [vmem:[%s3096 + $0x4] sm:$0x1]
        %v3102 = vld [vmem:[%s3096 + $0x5] sm:$0x1]
        %v3103 = vld [vmem:[%s3096 + $0x6] sm:$0x1]
        %v3104 = vld [vmem:[%s3096 + $0x7] sm:$0x1]
        %v3105 = vld [vmem:[%s3096 + $0x8] sm:$0x1]
        %v3106 = vld [vmem:[%s3096 + $0x9] sm:$0x1]
        %v3107 = vld [vmem:[%s3096 + $0xa] sm:$0x1]
        %v3108 = vld [vmem:[%s3096 + $0xb] sm:$0x1]
        %v3109 = vld [vmem:[%s3096 + $0xc] sm:$0x1]
        %v3110 = vld [vmem:[%s3096 + $0xd] sm:$0x1]
        %v3111 = vld [vmem:[%s3096 + $0xe] sm:$0x1]
        %v3112 = vld [vmem:[%s3096 + $0xf] sm:$0x1]
        %v3113 = vadd.f32 %v3097, %v3092
        %v3114 = vadd.f32 %v3098, %v3093
        %v3115 = vadd.f32 %v3099, %v3094
        %v3116 = vadd.f32 %v3100, %v3095
        %v3117 = vadd.f32 %v3101, %v3092
        %v3118 = vadd.f32 %v3102, %v3093
        %v3119 = vadd.f32 %v3103, %v3094
        %v3120 = vadd.f32 %v3104, %v3095
        %v3121 = vadd.f32 %v3105, %v3092
        %v3122 = vadd.f32 %v3106, %v3093
        %v3123 = vadd.f32 %v3107, %v3094
        %v3124 = vadd.f32 %v3108, %v3095
        %v3125 = vadd.f32 %v3109, %v3092
        %v3126 = vadd.f32 %v3110, %v3093
        %v3127 = vadd.f32 %v3111, %v3094
        %v3128 = vadd.f32 %v3112, %v3095
        %v3129 = vstv %s260
        %v3130 = vmul.f32 %v3113, %v3129
        %v3131 = vmul.f32 %v3114, %v3129
        %v3132 = vmul.f32 %v3115, %v3129
        %v3133 = vmul.f32 %v3116, %v3129
        %v3134 = vmul.f32 %v3117, %v3129
        %v3135 = vmul.f32 %v3118, %v3129
        %v3136 = vmul.f32 %v3119, %v3129
        %v3137 = vmul.f32 %v3120, %v3129
        %v3138 = vmul.f32 %v3121, %v3129
        %v3139 = vmul.f32 %v3122, %v3129
        %v3140 = vmul.f32 %v3123, %v3129
        %v3141 = vmul.f32 %v3124, %v3129
        %v3142 = vmul.f32 %v3125, %v3129
        %v3143 = vmul.f32 %v3126, %v3129
        %v3144 = vmul.f32 %v3127, %v3129
        %v3145 = vmul.f32 %v3128, %v3129
        %v3146 = vlaneseq
        %vm3147 = vcmp.ge.s32.totalorder %v3146, 0
        %vm3148 = vcmp.lt.s32.totalorder %v3146, 32
        %vm3149 = vmand %vm3147, %vm3148
        %v3150 = vsel %vm3149, %v3130, -inf
        %v3151 = vsel %vm3149, %v3131, -inf
        %v3152 = vmax.f32 %v3150, %v3151
        %v3153 = vsel %vm3149, %v3132, -inf
        %v3154 = vmax.f32 %v3152, %v3153
        %v3155 = vsel %vm3149, %v3133, -inf
        %v3156 = vmax.f32 %v3154, %v3155
        %v3157 = vsel %vm3149, %v3134, -inf
        %v3158 = vsel %vm3149, %v3135, -inf
        %v3159 = vmax.f32 %v3157, %v3158
        %v3160 = vsel %vm3149, %v3136, -inf
        %v3161 = vmax.f32 %v3159, %v3160
        %v3162 = vsel %vm3149, %v3137, -inf
        %v3163 = vmax.f32 %v3161, %v3162
        %v3164 = vsel %vm3149, %v3138, -inf
        %v3165 = vsel %vm3149, %v3139, -inf
        %v3166 = vmax.f32 %v3164, %v3165
        %v3167 = vsel %vm3149, %v3140, -inf
        %v3168 = vmax.f32 %v3166, %v3167
        %v3169 = vsel %vm3149, %v3141, -inf
        %v3170 = vmax.f32 %v3168, %v3169
        %v3171 = vsel %vm3149, %v3142, -inf
        %v3172 = vsel %vm3149, %v3143, -inf
        %v3173 = vmax.f32 %v3171, %v3172
        %v3174 = vsel %vm3149, %v3144, -inf
        %v3175 = vmax.f32 %v3173, %v3174
        %v3176 = vsel %vm3149, %v3145, -inf
        %v3177 = vmax.f32 %v3175, %v3176
        %v3178 = vsub.f32 %v3130, %v3156
        %v3179 = vsub.f32 %v3131, %v3156
        %v3180 = vsub.f32 %v3132, %v3156
        %v3181 = vsub.f32 %v3133, %v3156
        %v3182 = vsub.f32 %v3134, %v3163
        %v3183 = vsub.f32 %v3135, %v3163
        %v3184 = vsub.f32 %v3136, %v3163
        %v3185 = vsub.f32 %v3137, %v3163
        %v3186 = vsub.f32 %v3138, %v3170
        %v3187 = vsub.f32 %v3139, %v3170
        %v3188 = vsub.f32 %v3140, %v3170
        %v3189 = vsub.f32 %v3141, %v3170
        %v3190 = vsub.f32 %v3142, %v3177
        %v3191 = vsub.f32 %v3143, %v3177
        %v3192 = vsub.f32 %v3144, %v3177
        %v3193 = vsub.f32 %v3145, %v3177
        %v3194 = vmul.f32 %v3178, 1.442695
        %v3195 = vpow.pop %v3194
        %v3196 = vmul.f32 %v3179, 1.442695
        %v3197 = vpow.pop %v3196
        %v3198 = vmul.f32 %v3180, 1.442695
        %v3199 = vpow.pop %v3198
        %v3200 = vmul.f32 %v3181, 1.442695
        %v3201 = vpow.pop %v3200
        %v3202 = vmul.f32 %v3182, 1.442695
        %v3203 = vpow.pop %v3202
        %v3204 = vmul.f32 %v3183, 1.442695
        %v3205 = vpow.pop %v3204
        %v3206 = vmul.f32 %v3184, 1.442695
        %v3207 = vpow.pop %v3206
        %v3208 = vmul.f32 %v3185, 1.442695
        %v3209 = vpow.pop %v3208
        %v3210 = vmul.f32 %v3186, 1.442695
        %v3211 = vpow.pop %v3210
        %v3212 = vmul.f32 %v3187, 1.442695
        %v3213 = vpow.pop %v3212
        %v3214 = vmul.f32 %v3188, 1.442695
        %v3215 = vpow.pop %v3214
        %v3216 = vmul.f32 %v3189, 1.442695
        %v3217 = vpow.pop %v3216
        %v3218 = vmul.f32 %v3190, 1.442695
        %v3219 = vpow.pop %v3218
        %v3220 = vmul.f32 %v3191, 1.442695
        %v3221 = vpow.pop %v3220
        %v3222 = vmul.f32 %v3192, 1.442695
        %v3223 = vpow.pop %v3222
        %v3224 = vmul.f32 %v3193, 1.442695
        %v3225 = vpow.pop %v3224
        %vm3226 = vcmask 253952
        %v3227 = vsel %vm3226, %v3195, 0.0
        %v3228 = vsel %vm3226, %v3197, 0.0
        %v3229 = vadd.f32 %v3227, %v3228
        %v3230 = vsel %vm3226, %v3199, 0.0
        %v3231 = vadd.f32 %v3229, %v3230
        %v3232 = vsel %vm3226, %v3201, 0.0
        %v3233 = vadd.f32 %v3231, %v3232
        %v3234 = vsel %vm3226, %v3203, 0.0
        %v3235 = vsel %vm3226, %v3205, 0.0
        %v3236 = vadd.f32 %v3234, %v3235
        %v3237 = vsel %vm3226, %v3207, 0.0
        %v3238 = vadd.f32 %v3236, %v3237
        %v3239 = vsel %vm3226, %v3209, 0.0
        %v3240 = vadd.f32 %v3238, %v3239
        %v3241 = vsel %vm3226, %v3211, 0.0
        %v3242 = vsel %vm3226, %v3213, 0.0
        %v3243 = vadd.f32 %v3241, %v3242
        %v3244 = vsel %vm3226, %v3215, 0.0
        %v3245 = vadd.f32 %v3243, %v3244
        %v3246 = vsel %vm3226, %v3217, 0.0
        %v3247 = vadd.f32 %v3245, %v3246
        %v3248 = vsel %vm3226, %v3219, 0.0
        %v3249 = vsel %vm3226, %v3221, 0.0
        %v3250 = vadd.f32 %v3248, %v3249
        %v3251 = vsel %vm3226, %v3223, 0.0
        %v3252 = vadd.f32 %v3250, %v3251
        %v3253 = vsel %vm3226, %v3225, 0.0
        %v3254 = vadd.f32 %v3252, %v3253
        %v3255 = vlog2.pop %v3233
        %v3256 = vmul.f32 %v3255, 0.6931472
        %v3257 = vlog2.pop %v3240
        %v3258 = vmul.f32 %v3257, 0.6931472
        %v3259 = vlog2.pop %v3247
        %v3260 = vmul.f32 %v3259, 0.6931472
        %v3261 = vlog2.pop %v3254
        %v3262 = vmul.f32 %v3261, 0.6931472
        %v3263 = vadd.f32 %v3156, %v3256
        %v3264 = vadd.f32 %v3163, %v3258
        %v3265 = vadd.f32 %v3170, %v3260
        %v3266 = vadd.f32 %v3177, %v3262
        %v3267 = vstv %s257
        %v3268 = vmul.f32 %v3267, %v3263
        %v3269 = vmul.f32 %v3267, %v3264
        %v3270 = vmul.f32 %v3267, %v3265
        %v3271 = vmul.f32 %v3267, %v3266
        %s3272 = sadd.s32 %s3077, 14
        %s3273 = smul.u32 %s3272, 4
        %s3274 = scalar_lea.vmem %s256, %s3273
        %v3275 = vld [vmem:[%s3274] sm:$0x1]
        %v3276 = vld [vmem:[%s3274 + $0x1] sm:$0x1]
        %v3277 = vld [vmem:[%s3274 + $0x2] sm:$0x1]
        %v3278 = vld [vmem:[%s3274 + $0x3] sm:$0x1]
        %v3279 = vadd.f32 %v3275, %v3268
        %v3280 = vadd.f32 %v3276, %v3269
        %v3281 = vadd.f32 %v3277, %v3270
        %v3282 = vadd.f32 %v3278, %v3271
        %3283 = vst.msk [vmem:[%s3274] sm:$0x1] %vm3226, %v3279
        %3284 = vst.msk [vmem:[%s3274 + $0x1] sm:$0x1] %vm3226, %v3280
        %3285 = vst.msk [vmem:[%s3274 + $0x2] sm:$0x1] %vm3226, %v3281
        %3286 = vst.msk [vmem:[%s3274 + $0x3] sm:$0x1] %vm3226, %v3282
        %s3287 = scalar_lea.vmem %s232, %s3273
        %v3288 = vld [vmem:[%s3287] sm:$0x1]
        %v3289 = vld [vmem:[%s3287 + $0x1] sm:$0x1]
        %v3290 = vld [vmem:[%s3287 + $0x2] sm:$0x1]
        %v3291 = vld [vmem:[%s3287 + $0x3] sm:$0x1]
        %v3292 = vadd.f32 %v3288, %v3268
        %v3293 = vadd.f32 %v3289, %v3269
        %v3294 = vadd.f32 %v3290, %v3270
        %v3295 = vadd.f32 %v3291, %v3271
        %s3296 = scalar_lea.vmem %s246, 208
        %v3297 = vld [vmem:[%s3296] sm:$0x1]
        %v3298 = vld [vmem:[%s3296 + $0x1] sm:$0x1]
        %v3299 = vld [vmem:[%s3296 + $0x2] sm:$0x1]
        %v3300 = vld [vmem:[%s3296 + $0x3] sm:$0x1]
        %v3301 = vld [vmem:[%s3296 + $0x4] sm:$0x1]
        %v3302 = vld [vmem:[%s3296 + $0x5] sm:$0x1]
        %v3303 = vld [vmem:[%s3296 + $0x6] sm:$0x1]
        %v3304 = vld [vmem:[%s3296 + $0x7] sm:$0x1]
        %v3305 = vld [vmem:[%s3296 + $0x8] sm:$0x1]
        %v3306 = vld [vmem:[%s3296 + $0x9] sm:$0x1]
        %v3307 = vld [vmem:[%s3296 + $0xa] sm:$0x1]
        %v3308 = vld [vmem:[%s3296 + $0xb] sm:$0x1]
        %v3309 = vld [vmem:[%s3296 + $0xc] sm:$0x1]
        %v3310 = vld [vmem:[%s3296 + $0xd] sm:$0x1]
        %v3311 = vld [vmem:[%s3296 + $0xe] sm:$0x1]
        %v3312 = vld [vmem:[%s3296 + $0xf] sm:$0x1]
        %v3313 = vadd.f32 %v3297, %v3292
        %v3314 = vadd.f32 %v3298, %v3293
        %v3315 = vadd.f32 %v3299, %v3294
        %v3316 = vadd.f32 %v3300, %v3295
        %v3317 = vadd.f32 %v3301, %v3292
        %v3318 = vadd.f32 %v3302, %v3293
        %v3319 = vadd.f32 %v3303, %v3294
        %v3320 = vadd.f32 %v3304, %v3295
        %v3321 = vadd.f32 %v3305, %v3292
        %v3322 = vadd.f32 %v3306, %v3293
        %v3323 = vadd.f32 %v3307, %v3294
        %v3324 = vadd.f32 %v3308, %v3295
        %v3325 = vadd.f32 %v3309, %v3292
        %v3326 = vadd.f32 %v3310, %v3293
        %v3327 = vadd.f32 %v3311, %v3294
        %v3328 = vadd.f32 %v3312, %v3295
        %v3329 = vmul.f32 %v3313, %v3129
        %v3330 = vmul.f32 %v3314, %v3129
        %v3331 = vmul.f32 %v3315, %v3129
        %v3332 = vmul.f32 %v3316, %v3129
        %v3333 = vmul.f32 %v3317, %v3129
        %v3334 = vmul.f32 %v3318, %v3129
        %v3335 = vmul.f32 %v3319, %v3129
        %v3336 = vmul.f32 %v3320, %v3129
        %v3337 = vmul.f32 %v3321, %v3129
        %v3338 = vmul.f32 %v3322, %v3129
        %v3339 = vmul.f32 %v3323, %v3129
        %v3340 = vmul.f32 %v3324, %v3129
        %v3341 = vmul.f32 %v3325, %v3129
        %v3342 = vmul.f32 %v3326, %v3129
        %v3343 = vmul.f32 %v3327, %v3129
        %v3344 = vmul.f32 %v3328, %v3129
        %v3345 = vsel %vm3149, %v3329, -inf
        %v3346 = vsel %vm3149, %v3330, -inf
        %v3347 = vmax.f32 %v3345, %v3346
        %v3348 = vsel %vm3149, %v3331, -inf
        %v3349 = vmax.f32 %v3347, %v3348
        %v3350 = vsel %vm3149, %v3332, -inf
        %v3351 = vmax.f32 %v3349, %v3350
        %v3352 = vsel %vm3149, %v3333, -inf
        %v3353 = vsel %vm3149, %v3334, -inf
        %v3354 = vmax.f32 %v3352, %v3353
        %v3355 = vsel %vm3149, %v3335, -inf
        %v3356 = vmax.f32 %v3354, %v3355
        %v3357 = vsel %vm3149, %v3336, -inf
        %v3358 = vmax.f32 %v3356, %v3357
        %v3359 = vsel %vm3149, %v3337, -inf
        %v3360 = vsel %vm3149, %v3338, -inf
        %v3361 = vmax.f32 %v3359, %v3360
        %v3362 = vsel %vm3149, %v3339, -inf
        %v3363 = vmax.f32 %v3361, %v3362
        %v3364 = vsel %vm3149, %v3340, -inf
        %v3365 = vmax.f32 %v3363, %v3364
        %v3366 = vsel %vm3149, %v3341, -inf
        %v3367 = vsel %vm3149, %v3342, -inf
        %v3368 = vmax.f32 %v3366, %v3367
        %v3369 = vsel %vm3149, %v3343, -inf
        %v3370 = vmax.f32 %v3368, %v3369
        %v3371 = vsel %vm3149, %v3344, -inf
        %v3372 = vmax.f32 %v3370, %v3371
        %v3373 = vsub.f32 %v3329, %v3351
        %v3374 = vsub.f32 %v3330, %v3351
        %v3375 = vsub.f32 %v3331, %v3351
        %v3376 = vsub.f32 %v3332, %v3351
        %v3377 = vsub.f32 %v3333, %v3358
        %v3378 = vsub.f32 %v3334, %v3358
        %v3379 = vsub.f32 %v3335, %v3358
        %v3380 = vsub.f32 %v3336, %v3358
        %v3381 = vsub.f32 %v3337, %v3365
        %v3382 = vsub.f32 %v3338, %v3365
        %v3383 = vsub.f32 %v3339, %v3365
        %v3384 = vsub.f32 %v3340, %v3365
        %v3385 = vsub.f32 %v3341, %v3372
        %v3386 = vsub.f32 %v3342, %v3372
        %v3387 = vsub.f32 %v3343, %v3372
        %v3388 = vsub.f32 %v3344, %v3372
        %v3389 = vmul.f32 %v3373, 1.442695
        %v3390 = vpow.pop %v3389
        %v3391 = vmul.f32 %v3374, 1.442695
        %v3392 = vpow.pop %v3391
        %v3393 = vmul.f32 %v3375, 1.442695
        %v3394 = vpow.pop %v3393
        %v3395 = vmul.f32 %v3376, 1.442695
        %v3396 = vpow.pop %v3395
        %v3397 = vmul.f32 %v3377, 1.442695
        %v3398 = vpow.pop %v3397
        %v3399 = vmul.f32 %v3378, 1.442695
        %v3400 = vpow.pop %v3399
        %v3401 = vmul.f32 %v3379, 1.442695
        %v3402 = vpow.pop %v3401
        %v3403 = vmul.f32 %v3380, 1.442695
        %v3404 = vpow.pop %v3403
        %v3405 = vmul.f32 %v3381, 1.442695
        %v3406 = vpow.pop %v3405
        %v3407 = vmul.f32 %v3382, 1.442695
        %v3408 = vpow.pop %v3407
        %v3409 = vmul.f32 %v3383, 1.442695
        %v3410 = vpow.pop %v3409
        %v3411 = vmul.f32 %v3384, 1.442695
        %v3412 = vpow.pop %v3411
        %v3413 = vmul.f32 %v3385, 1.442695
        %v3414 = vpow.pop %v3413
        %v3415 = vmul.f32 %v3386, 1.442695
        %v3416 = vpow.pop %v3415
        %v3417 = vmul.f32 %v3387, 1.442695
        %v3418 = vpow.pop %v3417
        %v3419 = vmul.f32 %v3388, 1.442695
        %v3420 = vpow.pop %v3419
        %v3421 = vsel %vm3226, %v3390, 0.0
        %v3422 = vsel %vm3226, %v3392, 0.0
        %v3423 = vadd.f32 %v3421, %v3422
        %v3424 = vsel %vm3226, %v3394, 0.0
        %v3425 = vadd.f32 %v3423, %v3424
        %v3426 = vsel %vm3226, %v3396, 0.0
        %v3427 = vadd.f32 %v3425, %v3426
        %v3428 = vsel %vm3226, %v3398, 0.0
        %v3429 = vsel %vm3226, %v3400, 0.0
        %v3430 = vadd.f32 %v3428, %v3429
        %v3431 = vsel %vm3226, %v3402, 0.0
        %v3432 = vadd.f32 %v3430, %v3431
        %v3433 = vsel %vm3226, %v3404, 0.0
        %v3434 = vadd.f32 %v3432, %v3433
        %v3435 = vsel %vm3226, %v3406, 0.0
        %v3436 = vsel %vm3226, %v3408, 0.0
        %v3437 = vadd.f32 %v3435, %v3436
        %v3438 = vsel %vm3226, %v3410, 0.0
        %v3439 = vadd.f32 %v3437, %v3438
        %v3440 = vsel %vm3226, %v3412, 0.0
        %v3441 = vadd.f32 %v3439, %v3440
        %v3442 = vsel %vm3226, %v3414, 0.0
        %v3443 = vsel %vm3226, %v3416, 0.0
        %v3444 = vadd.f32 %v3442, %v3443
        %v3445 = vsel %vm3226, %v3418, 0.0
        %v3446 = vadd.f32 %v3444, %v3445
        %v3447 = vsel %vm3226, %v3420, 0.0
        %v3448 = vadd.f32 %v3446, %v3447
        %v3449 = vlog2.pop %v3427
        %v3450 = vmul.f32 %v3449, 0.6931472
        %v3451 = vlog2.pop %v3434
        %v3452 = vmul.f32 %v3451, 0.6931472
        %v3453 = vlog2.pop %v3441
        %v3454 = vmul.f32 %v3453, 0.6931472
        %v3455 = vlog2.pop %v3448
        %v3456 = vmul.f32 %v3455, 0.6931472
        %v3457 = vadd.f32 %v3351, %v3450
        %v3458 = vadd.f32 %v3358, %v3452
        %v3459 = vadd.f32 %v3365, %v3454
        %v3460 = vadd.f32 %v3372, %v3456
        %v3461 = vmul.f32 %v3267, %v3457
        %v3462 = vmul.f32 %v3267, %v3458
        %v3463 = vmul.f32 %v3267, %v3459
        %v3464 = vmul.f32 %v3267, %v3460
        %s3465 = sadd.s32 %s3077, 13
        %s3466 = smul.u32 %s3465, 4
        %s3467 = scalar_lea.vmem %s256, %s3466
        %v3468 = vld [vmem:[%s3467] sm:$0x1]
        %v3469 = vld [vmem:[%s3467 + $0x1] sm:$0x1]
        %v3470 = vld [vmem:[%s3467 + $0x2] sm:$0x1]
        %v3471 = vld [vmem:[%s3467 + $0x3] sm:$0x1]
        %v3472 = vadd.f32 %v3468, %v3461
        %v3473 = vadd.f32 %v3469, %v3462
        %v3474 = vadd.f32 %v3470, %v3463
        %v3475 = vadd.f32 %v3471, %v3464
        %3476 = vst.msk [vmem:[%s3467] sm:$0x1] %vm3226, %v3472
        %3477 = vst.msk [vmem:[%s3467 + $0x1] sm:$0x1] %vm3226, %v3473
        %3478 = vst.msk [vmem:[%s3467 + $0x2] sm:$0x1] %vm3226, %v3474
        %3479 = vst.msk [vmem:[%s3467 + $0x3] sm:$0x1] %vm3226, %v3475
        %s3480 = scalar_lea.vmem %s232, %s3466
        %v3481 = vld [vmem:[%s3480] sm:$0x1]
        %v3482 = vld [vmem:[%s3480 + $0x1] sm:$0x1]
        %v3483 = vld [vmem:[%s3480 + $0x2] sm:$0x1]
        %v3484 = vld [vmem:[%s3480 + $0x3] sm:$0x1]
        %v3485 = vadd.f32 %v3481, %v3461
        %v3486 = vadd.f32 %v3482, %v3462
        %v3487 = vadd.f32 %v3483, %v3463
        %v3488 = vadd.f32 %v3484, %v3464
        %s3489 = scalar_lea.vmem %s246, 192
        %v3490 = vld [vmem:[%s3489] sm:$0x1]
        %v3491 = vld [vmem:[%s3489 + $0x1] sm:$0x1]
        %v3492 = vld [vmem:[%s3489 + $0x2] sm:$0x1]
        %v3493 = vld [vmem:[%s3489 + $0x3] sm:$0x1]
        %v3494 = vld [vmem:[%s3489 + $0x4] sm:$0x1]
        %v3495 = vld [vmem:[%s3489 + $0x5] sm:$0x1]
        %v3496 = vld [vmem:[%s3489 + $0x6] sm:$0x1]
        %v3497 = vld [vmem:[%s3489 + $0x7] sm:$0x1]
        %v3498 = vld [vmem:[%s3489 + $0x8] sm:$0x1]
        %v3499 = vld [vmem:[%s3489 + $0x9] sm:$0x1]
        %v3500 = vld [vmem:[%s3489 + $0xa] sm:$0x1]
        %v3501 = vld [vmem:[%s3489 + $0xb] sm:$0x1]
        %v3502 = vld [vmem:[%s3489 + $0xc] sm:$0x1]
        %v3503 = vld [vmem:[%s3489 + $0xd] sm:$0x1]
        %v3504 = vld [vmem:[%s3489 + $0xe] sm:$0x1]
        %v3505 = vld [vmem:[%s3489 + $0xf] sm:$0x1]
        %v3506 = vadd.f32 %v3490, %v3485
        %v3507 = vadd.f32 %v3491, %v3486
        %v3508 = vadd.f32 %v3492, %v3487
        %v3509 = vadd.f32 %v3493, %v3488
        %v3510 = vadd.f32 %v3494, %v3485
        %v3511 = vadd.f32 %v3495, %v3486
        %v3512 = vadd.f32 %v3496, %v3487
        %v3513 = vadd.f32 %v3497, %v3488
        %v3514 = vadd.f32 %v3498, %v3485
        %v3515 = vadd.f32 %v3499, %v3486
        %v3516 = vadd.f32 %v3500, %v3487
        %v3517 = vadd.f32 %v3501, %v3488
        %v3518 = vadd.f32 %v3502, %v3485
        %v3519 = vadd.f32 %v3503, %v3486
        %v3520 = vadd.f32 %v3504, %v3487
        %v3521 = vadd.f32 %v3505, %v3488
        %v3522 = vmul.f32 %v3506, %v3129
        %v3523 = vmul.f32 %v3507, %v3129
        %v3524 = vmul.f32 %v3508, %v3129
        %v3525 = vmul.f32 %v3509, %v3129
        %v3526 = vmul.f32 %v3510, %v3129
        %v3527 = vmul.f32 %v3511, %v3129
        %v3528 = vmul.f32 %v3512, %v3129
        %v3529 = vmul.f32 %v3513, %v3129
        %v3530 = vmul.f32 %v3514, %v3129
        %v3531 = vmul.f32 %v3515, %v3129
        %v3532 = vmul.f32 %v3516, %v3129
        %v3533 = vmul.f32 %v3517, %v3129
        %v3534 = vmul.f32 %v3518, %v3129
        %v3535 = vmul.f32 %v3519, %v3129
        %v3536 = vmul.f32 %v3520, %v3129
        %v3537 = vmul.f32 %v3521, %v3129
        %v3538 = vsel %vm3149, %v3522, -inf
        %v3539 = vsel %vm3149, %v3523, -inf
        %v3540 = vmax.f32 %v3538, %v3539
        %v3541 = vsel %vm3149, %v3524, -inf
        %v3542 = vmax.f32 %v3540, %v3541
        %v3543 = vsel %vm3149, %v3525, -inf
        %v3544 = vmax.f32 %v3542, %v3543
        %v3545 = vsel %vm3149, %v3526, -inf
        %v3546 = vsel %vm3149, %v3527, -inf
        %v3547 = vmax.f32 %v3545, %v3546
        %v3548 = vsel %vm3149, %v3528, -inf
        %v3549 = vmax.f32 %v3547, %v3548
        %v3550 = vsel %vm3149, %v3529, -inf
        %v3551 = vmax.f32 %v3549, %v3550
        %v3552 = vsel %vm3149, %v3530, -inf
        %v3553 = vsel %vm3149, %v3531, -inf
        %v3554 = vmax.f32 %v3552, %v3553
        %v3555 = vsel %vm3149, %v3532, -inf
        %v3556 = vmax.f32 %v3554, %v3555
        %v3557 = vsel %vm3149, %v3533, -inf
        %v3558 = vmax.f32 %v3556, %v3557
        %v3559 = vsel %vm3149, %v3534, -inf
        %v3560 = vsel %vm3149, %v3535, -inf
        %v3561 = vmax.f32 %v3559, %v3560
        %v3562 = vsel %vm3149, %v3536, -inf
        %v3563 = vmax.f32 %v3561, %v3562
        %v3564 = vsel %vm3149, %v3537, -inf
        %v3565 = vmax.f32 %v3563, %v3564
        %v3566 = vsub.f32 %v3522, %v3544
        %v3567 = vsub.f32 %v3523, %v3544
        %v3568 = vsub.f32 %v3524, %v3544
        %v3569 = vsub.f32 %v3525, %v3544
        %v3570 = vsub.f32 %v3526, %v3551
        %v3571 = vsub.f32 %v3527, %v3551
        %v3572 = vsub.f32 %v3528, %v3551
        %v3573 = vsub.f32 %v3529, %v3551
        %v3574 = vsub.f32 %v3530, %v3558
        %v3575 = vsub.f32 %v3531, %v3558
        %v3576 = vsub.f32 %v3532, %v3558
        %v3577 = vsub.f32 %v3533, %v3558
        %v3578 = vsub.f32 %v3534, %v3565
        %v3579 = vsub.f32 %v3535, %v3565
        %v3580 = vsub.f32 %v3536, %v3565
        %v3581 = vsub.f32 %v3537, %v3565
        %v3582 = vmul.f32 %v3566, 1.442695
        %v3583 = vpow.pop %v3582
        %v3584 = vmul.f32 %v3567, 1.442695
        %v3585 = vpow.pop %v3584
        %v3586 = vmul.f32 %v3568, 1.442695
        %v3587 = vpow.pop %v3586
        %v3588 = vmul.f32 %v3569, 1.442695
        %v3589 = vpow.pop %v3588
        %v3590 = vmul.f32 %v3570, 1.442695
        %v3591 = vpow.pop %v3590
        %v3592 = vmul.f32 %v3571, 1.442695
        %v3593 = vpow.pop %v3592
        %v3594 = vmul.f32 %v3572, 1.442695
        %v3595 = vpow.pop %v3594
        %v3596 = vmul.f32 %v3573, 1.442695
        %v3597 = vpow.pop %v3596
        %v3598 = vmul.f32 %v3574, 1.442695
        %v3599 = vpow.pop %v3598
        %v3600 = vmul.f32 %v3575, 1.442695
        %v3601 = vpow.pop %v3600
        %v3602 = vmul.f32 %v3576, 1.442695
        %v3603 = vpow.pop %v3602
        %v3604 = vmul.f32 %v3577, 1.442695
        %v3605 = vpow.pop %v3604
        %v3606 = vmul.f32 %v3578, 1.442695
        %v3607 = vpow.pop %v3606
        %v3608 = vmul.f32 %v3579, 1.442695
        %v3609 = vpow.pop %v3608
        %v3610 = vmul.f32 %v3580, 1.442695
        %v3611 = vpow.pop %v3610
        %v3612 = vmul.f32 %v3581, 1.442695
        %v3613 = vpow.pop %v3612
        %v3614 = vsel %vm3226, %v3583, 0.0
        %v3615 = vsel %vm3226, %v3585, 0.0
        %v3616 = vadd.f32 %v3614, %v3615
        %v3617 = vsel %vm3226, %v3587, 0.0
        %v3618 = vadd.f32 %v3616, %v3617
        %v3619 = vsel %vm3226, %v3589, 0.0
        %v3620 = vadd.f32 %v3618, %v3619
        %v3621 = vsel %vm3226, %v3591, 0.0
        %v3622 = vsel %vm3226, %v3593, 0.0
        %v3623 = vadd.f32 %v3621, %v3622
        %v3624 = vsel %vm3226, %v3595, 0.0
        %v3625 = vadd.f32 %v3623, %v3624
        %v3626 = vsel %vm3226, %v3597, 0.0
        %v3627 = vadd.f32 %v3625, %v3626
        %v3628 = vsel %vm3226, %v3599, 0.0
        %v3629 = vsel %vm3226, %v3601, 0.0
        %v3630 = vadd.f32 %v3628, %v3629
        %v3631 = vsel %vm3226, %v3603, 0.0
        %v3632 = vadd.f32 %v3630, %v3631
        %v3633 = vsel %vm3226, %v3605, 0.0
        %v3634 = vadd.f32 %v3632, %v3633
        %v3635 = vsel %vm3226, %v3607, 0.0
        %v3636 = vsel %vm3226, %v3609, 0.0
        %v3637 = vadd.f32 %v3635, %v3636
        %v3638 = vsel %vm3226, %v3611, 0.0
        %v3639 = vadd.f32 %v3637, %v3638
        %v3640 = vsel %vm3226, %v3613, 0.0
        %v3641 = vadd.f32 %v3639, %v3640
        %v3642 = vlog2.pop %v3620
        %v3643 = vmul.f32 %v3642, 0.6931472
        %v3644 = vlog2.pop %v3627
        %v3645 = vmul.f32 %v3644, 0.6931472
        %v3646 = vlog2.pop %v3634
        %v3647 = vmul.f32 %v3646, 0.6931472
        %v3648 = vlog2.pop %v3641
        %v3649 = vmul.f32 %v3648, 0.6931472
        %v3650 = vadd.f32 %v3544, %v3643
        %v3651 = vadd.f32 %v3551, %v3645
        %v3652 = vadd.f32 %v3558, %v3647
        %v3653 = vadd.f32 %v3565, %v3649
        %v3654 = vmul.f32 %v3267, %v3650
        %v3655 = vmul.f32 %v3267, %v3651
        %v3656 = vmul.f32 %v3267, %v3652
        %v3657 = vmul.f32 %v3267, %v3653
        %s3658 = sadd.s32 %s3077, 12
        %s3659 = smul.u32 %s3658, 4
        %s3660 = scalar_lea.vmem %s256, %s3659
        %v3661 = vld [vmem:[%s3660] sm:$0x1]
        %v3662 = vld [vmem:[%s3660 + $0x1] sm:$0x1]
        %v3663 = vld [vmem:[%s3660 + $0x2] sm:$0x1]
        %v3664 = vld [vmem:[%s3660 + $0x3] sm:$0x1]
        %v3665 = vadd.f32 %v3661, %v3654
        %v3666 = vadd.f32 %v3662, %v3655
        %v3667 = vadd.f32 %v3663, %v3656
        %v3668 = vadd.f32 %v3664, %v3657
        %3669 = vst.msk [vmem:[%s3660] sm:$0x1] %vm3226, %v3665
        %3670 = vst.msk [vmem:[%s3660 + $0x1] sm:$0x1] %vm3226, %v3666
        %3671 = vst.msk [vmem:[%s3660 + $0x2] sm:$0x1] %vm3226, %v3667
        %3672 = vst.msk [vmem:[%s3660 + $0x3] sm:$0x1] %vm3226, %v3668
        %s3673 = scalar_lea.vmem %s232, %s3659
        %v3674 = vld [vmem:[%s3673] sm:$0x1]
        %v3675 = vld [vmem:[%s3673 + $0x1] sm:$0x1]
        %v3676 = vld [vmem:[%s3673 + $0x2] sm:$0x1]
        %v3677 = vld [vmem:[%s3673 + $0x3] sm:$0x1]
        %v3678 = vadd.f32 %v3674, %v3654
        %v3679 = vadd.f32 %v3675, %v3655
        %v3680 = vadd.f32 %v3676, %v3656
        %v3681 = vadd.f32 %v3677, %v3657
        %s3682 = scalar_lea.vmem %s246, 176
        %v3683 = vld [vmem:[%s3682] sm:$0x1]
        %v3684 = vld [vmem:[%s3682 + $0x1] sm:$0x1]
        %v3685 = vld [vmem:[%s3682 + $0x2] sm:$0x1]
        %v3686 = vld [vmem:[%s3682 + $0x3] sm:$0x1]
        %v3687 = vld [vmem:[%s3682 + $0x4] sm:$0x1]
        %v3688 = vld [vmem:[%s3682 + $0x5] sm:$0x1]
        %v3689 = vld [vmem:[%s3682 + $0x6] sm:$0x1]
        %v3690 = vld [vmem:[%s3682 + $0x7] sm:$0x1]
        %v3691 = vld [vmem:[%s3682 + $0x8] sm:$0x1]
        %v3692 = vld [vmem:[%s3682 + $0x9] sm:$0x1]
        %v3693 = vld [vmem:[%s3682 + $0xa] sm:$0x1]
        %v3694 = vld [vmem:[%s3682 + $0xb] sm:$0x1]
        %v3695 = vld [vmem:[%s3682 + $0xc] sm:$0x1]
        %v3696 = vld [vmem:[%s3682 + $0xd] sm:$0x1]
        %v3697 = vld [vmem:[%s3682 + $0xe] sm:$0x1]
        %v3698 = vld [vmem:[%s3682 + $0xf] sm:$0x1]
        %v3699 = vadd.f32 %v3683, %v3678
        %v3700 = vadd.f32 %v3684, %v3679
        %v3701 = vadd.f32 %v3685, %v3680
        %v3702 = vadd.f32 %v3686, %v3681
        %v3703 = vadd.f32 %v3687, %v3678
        %v3704 = vadd.f32 %v3688, %v3679
        %v3705 = vadd.f32 %v3689, %v3680
        %v3706 = vadd.f32 %v3690, %v3681
        %v3707 = vadd.f32 %v3691, %v3678
        %v3708 = vadd.f32 %v3692, %v3679
        %v3709 = vadd.f32 %v3693, %v3680
        %v3710 = vadd.f32 %v3694, %v3681
        %v3711 = vadd.f32 %v3695, %v3678
        %v3712 = vadd.f32 %v3696, %v3679
        %v3713 = vadd.f32 %v3697, %v3680
        %v3714 = vadd.f32 %v3698, %v3681
        %v3715 = vmul.f32 %v3699, %v3129
        %v3716 = vmul.f32 %v3700, %v3129
        %v3717 = vmul.f32 %v3701, %v3129
        %v3718 = vmul.f32 %v3702, %v3129
        %v3719 = vmul.f32 %v3703, %v3129
        %v3720 = vmul.f32 %v3704, %v3129
        %v3721 = vmul.f32 %v3705, %v3129
        %v3722 = vmul.f32 %v3706, %v3129
        %v3723 = vmul.f32 %v3707, %v3129
        %v3724 = vmul.f32 %v3708, %v3129
        %v3725 = vmul.f32 %v3709, %v3129
        %v3726 = vmul.f32 %v3710, %v3129
        %v3727 = vmul.f32 %v3711, %v3129
        %v3728 = vmul.f32 %v3712, %v3129
        %v3729 = vmul.f32 %v3713, %v3129
        %v3730 = vmul.f32 %v3714, %v3129
        %v3731 = vsel %vm3149, %v3715, -inf
        %v3732 = vsel %vm3149, %v3716, -inf
        %v3733 = vmax.f32 %v3731, %v3732
        %v3734 = vsel %vm3149, %v3717, -inf
        %v3735 = vmax.f32 %v3733, %v3734
        %v3736 = vsel %vm3149, %v3718, -inf
        %v3737 = vmax.f32 %v3735, %v3736
        %v3738 = vsel %vm3149, %v3719, -inf
        %v3739 = vsel %vm3149, %v3720, -inf
        %v3740 = vmax.f32 %v3738, %v3739
        %v3741 = vsel %vm3149, %v3721, -inf
        %v3742 = vmax.f32 %v3740, %v3741
        %v3743 = vsel %vm3149, %v3722, -inf
        %v3744 = vmax.f32 %v3742, %v3743
        %v3745 = vsel %vm3149, %v3723, -inf
        %v3746 = vsel %vm3149, %v3724, -inf
        %v3747 = vmax.f32 %v3745, %v3746
        %v3748 = vsel %vm3149, %v3725, -inf
        %v3749 = vmax.f32 %v3747, %v3748
        %v3750 = vsel %vm3149, %v3726, -inf
        %v3751 = vmax.f32 %v3749, %v3750
        %v3752 = vsel %vm3149, %v3727, -inf
        %v3753 = vsel %vm3149, %v3728, -inf
        %v3754 = vmax.f32 %v3752, %v3753
        %v3755 = vsel %vm3149, %v3729, -inf
        %v3756 = vmax.f32 %v3754, %v3755
        %v3757 = vsel %vm3149, %v3730, -inf
        %v3758 = vmax.f32 %v3756, %v3757
        %v3759 = vsub.f32 %v3715, %v3737
        %v3760 = vsub.f32 %v3716, %v3737
        %v3761 = vsub.f32 %v3717, %v3737
        %v3762 = vsub.f32 %v3718, %v3737
        %v3763 = vsub.f32 %v3719, %v3744
        %v3764 = vsub.f32 %v3720, %v3744
        %v3765 = vsub.f32 %v3721, %v3744
        %v3766 = vsub.f32 %v3722, %v3744
        %v3767 = vsub.f32 %v3723, %v3751
        %v3768 = vsub.f32 %v3724, %v3751
        %v3769 = vsub.f32 %v3725, %v3751
        %v3770 = vsub.f32 %v3726, %v3751
        %v3771 = vsub.f32 %v3727, %v3758
        %v3772 = vsub.f32 %v3728, %v3758
        %v3773 = vsub.f32 %v3729, %v3758
        %v3774 = vsub.f32 %v3730, %v3758
        %v3775 = vmul.f32 %v3759, 1.442695
        %v3776 = vpow.pop %v3775
        %v3777 = vmul.f32 %v3760, 1.442695
        %v3778 = vpow.pop %v3777
        %v3779 = vmul.f32 %v3761, 1.442695
        %v3780 = vpow.pop %v3779
        %v3781 = vmul.f32 %v3762, 1.442695
        %v3782 = vpow.pop %v3781
        %v3783 = vmul.f32 %v3763, 1.442695
        %v3784 = vpow.pop %v3783
        %v3785 = vmul.f32 %v3764, 1.442695
        %v3786 = vpow.pop %v3785
        %v3787 = vmul.f32 %v3765, 1.442695
        %v3788 = vpow.pop %v3787
        %v3789 = vmul.f32 %v3766, 1.442695
        %v3790 = vpow.pop %v3789
        %v3791 = vmul.f32 %v3767, 1.442695
        %v3792 = vpow.pop %v3791
        %v3793 = vmul.f32 %v3768, 1.442695
        %v3794 = vpow.pop %v3793
        %v3795 = vmul.f32 %v3769, 1.442695
        %v3796 = vpow.pop %v3795
        %v3797 = vmul.f32 %v3770, 1.442695
        %v3798 = vpow.pop %v3797
        %v3799 = vmul.f32 %v3771, 1.442695
        %v3800 = vpow.pop %v3799
        %v3801 = vmul.f32 %v3772, 1.442695
        %v3802 = vpow.pop %v3801
        %v3803 = vmul.f32 %v3773, 1.442695
        %v3804 = vpow.pop %v3803
        %v3805 = vmul.f32 %v3774, 1.442695
        %v3806 = vpow.pop %v3805
        %v3807 = vsel %vm3226, %v3776, 0.0
        %v3808 = vsel %vm3226, %v3778, 0.0
        %v3809 = vadd.f32 %v3807, %v3808
        %v3810 = vsel %vm3226, %v3780, 0.0
        %v3811 = vadd.f32 %v3809, %v3810
        %v3812 = vsel %vm3226, %v3782, 0.0
        %v3813 = vadd.f32 %v3811, %v3812
        %v3814 = vsel %vm3226, %v3784, 0.0
        %v3815 = vsel %vm3226, %v3786, 0.0
        %v3816 = vadd.f32 %v3814, %v3815
        %v3817 = vsel %vm3226, %v3788, 0.0
        %v3818 = vadd.f32 %v3816, %v3817
        %v3819 = vsel %vm3226, %v3790, 0.0
        %v3820 = vadd.f32 %v3818, %v3819
        %v3821 = vsel %vm3226, %v3792, 0.0
        %v3822 = vsel %vm3226, %v3794, 0.0
        %v3823 = vadd.f32 %v3821, %v3822
        %v3824 = vsel %vm3226, %v3796, 0.0
        %v3825 = vadd.f32 %v3823, %v3824
        %v3826 = vsel %vm3226, %v3798, 0.0
        %v3827 = vadd.f32 %v3825, %v3826
        %v3828 = vsel %vm3226, %v3800, 0.0
        %v3829 = vsel %vm3226, %v3802, 0.0
        %v3830 = vadd.f32 %v3828, %v3829
        %v3831 = vsel %vm3226, %v3804, 0.0
        %v3832 = vadd.f32 %v3830, %v3831
        %v3833 = vsel %vm3226, %v3806, 0.0
        %v3834 = vadd.f32 %v3832, %v3833
        %v3835 = vlog2.pop %v3813
        %v3836 = vmul.f32 %v3835, 0.6931472
        %v3837 = vlog2.pop %v3820
        %v3838 = vmul.f32 %v3837, 0.6931472
        %v3839 = vlog2.pop %v3827
        %v3840 = vmul.f32 %v3839, 0.6931472
        %v3841 = vlog2.pop %v3834
        %v3842 = vmul.f32 %v3841, 0.6931472
        %v3843 = vadd.f32 %v3737, %v3836
        %v3844 = vadd.f32 %v3744, %v3838
        %v3845 = vadd.f32 %v3751, %v3840
        %v3846 = vadd.f32 %v3758, %v3842
        %v3847 = vmul.f32 %v3267, %v3843
        %v3848 = vmul.f32 %v3267, %v3844
        %v3849 = vmul.f32 %v3267, %v3845
        %v3850 = vmul.f32 %v3267, %v3846
        %s3851 = sadd.s32 %s3077, 11
        %s3852 = smul.u32 %s3851, 4
        %s3853 = scalar_lea.vmem %s256, %s3852
        %v3854 = vld [vmem:[%s3853] sm:$0x1]
        %v3855 = vld [vmem:[%s3853 + $0x1] sm:$0x1]
        %v3856 = vld [vmem:[%s3853 + $0x2] sm:$0x1]
        %v3857 = vld [vmem:[%s3853 + $0x3] sm:$0x1]
        %v3858 = vadd.f32 %v3854, %v3847
        %v3859 = vadd.f32 %v3855, %v3848
        %v3860 = vadd.f32 %v3856, %v3849
        %v3861 = vadd.f32 %v3857, %v3850
        %3862 = vst.msk [vmem:[%s3853] sm:$0x1] %vm3226, %v3858
        %3863 = vst.msk [vmem:[%s3853 + $0x1] sm:$0x1] %vm3226, %v3859
        %3864 = vst.msk [vmem:[%s3853 + $0x2] sm:$0x1] %vm3226, %v3860
        %3865 = vst.msk [vmem:[%s3853 + $0x3] sm:$0x1] %vm3226, %v3861
        %s3866 = scalar_lea.vmem %s232, %s3852
        %v3867 = vld [vmem:[%s3866] sm:$0x1]
        %v3868 = vld [vmem:[%s3866 + $0x1] sm:$0x1]
        %v3869 = vld [vmem:[%s3866 + $0x2] sm:$0x1]
        %v3870 = vld [vmem:[%s3866 + $0x3] sm:$0x1]
        %v3871 = vadd.f32 %v3867, %v3847
        %v3872 = vadd.f32 %v3868, %v3848
        %v3873 = vadd.f32 %v3869, %v3849
        %v3874 = vadd.f32 %v3870, %v3850
        %s3875 = scalar_lea.vmem %s246, 160
        %v3876 = vld [vmem:[%s3875] sm:$0x1]
        %v3877 = vld [vmem:[%s3875 + $0x1] sm:$0x1]
        %v3878 = vld [vmem:[%s3875 + $0x2] sm:$0x1]
        %v3879 = vld [vmem:[%s3875 + $0x3] sm:$0x1]
        %v3880 = vld [vmem:[%s3875 + $0x4] sm:$0x1]
        %v3881 = vld [vmem:[%s3875 + $0x5] sm:$0x1]
        %v3882 = vld [vmem:[%s3875 + $0x6] sm:$0x1]
        %v3883 = vld [vmem:[%s3875 + $0x7] sm:$0x1]
        %v3884 = vld [vmem:[%s3875 + $0x8] sm:$0x1]
        %v3885 = vld [vmem:[%s3875 + $0x9] sm:$0x1]
        %v3886 = vld [vmem:[%s3875 + $0xa] sm:$0x1]
        %v3887 = vld [vmem:[%s3875 + $0xb] sm:$0x1]
        %v3888 = vld [vmem:[%s3875 + $0xc] sm:$0x1]
        %v3889 = vld [vmem:[%s3875 + $0xd] sm:$0x1]
        %v3890 = vld [vmem:[%s3875 + $0xe] sm:$0x1]
        %v3891 = vld [vmem:[%s3875 + $0xf] sm:$0x1]
        %v3892 = vadd.f32 %v3876, %v3871
        %v3893 = vadd.f32 %v3877, %v3872
        %v3894 = vadd.f32 %v3878, %v3873
        %v3895 = vadd.f32 %v3879, %v3874
        %v3896 = vadd.f32 %v3880, %v3871
        %v3897 = vadd.f32 %v3881, %v3872
        %v3898 = vadd.f32 %v3882, %v3873
        %v3899 = vadd.f32 %v3883, %v3874
        %v3900 = vadd.f32 %v3884, %v3871
        %v3901 = vadd.f32 %v3885, %v3872
        %v3902 = vadd.f32 %v3886, %v3873
        %v3903 = vadd.f32 %v3887, %v3874
        %v3904 = vadd.f32 %v3888, %v3871
        %v3905 = vadd.f32 %v3889, %v3872
        %v3906 = vadd.f32 %v3890, %v3873
        %v3907 = vadd.f32 %v3891, %v3874
        %v3908 = vmul.f32 %v3892, %v3129
        %v3909 = vmul.f32 %v3893, %v3129
        %v3910 = vmul.f32 %v3894, %v3129
        %v3911 = vmul.f32 %v3895, %v3129
        %v3912 = vmul.f32 %v3896, %v3129
        %v3913 = vmul.f32 %v3897, %v3129
        %v3914 = vmul.f32 %v3898, %v3129
        %v3915 = vmul.f32 %v3899, %v3129
        %v3916 = vmul.f32 %v3900, %v3129
        %v3917 = vmul.f32 %v3901, %v3129
        %v3918 = vmul.f32 %v3902, %v3129
        %v3919 = vmul.f32 %v3903, %v3129
        %v3920 = vmul.f32 %v3904, %v3129
        %v3921 = vmul.f32 %v3905, %v3129
        %v3922 = vmul.f32 %v3906, %v3129
        %v3923 = vmul.f32 %v3907, %v3129
        %v3924 = vsel %vm3149, %v3908, -inf
        %v3925 = vsel %vm3149, %v3909, -inf
        %v3926 = vmax.f32 %v3924, %v3925
        %v3927 = vsel %vm3149, %v3910, -inf
        %v3928 = vmax.f32 %v3926, %v3927
        %v3929 = vsel %vm3149, %v3911, -inf
        %v3930 = vmax.f32 %v3928, %v3929
        %v3931 = vsel %vm3149, %v3912, -inf
        %v3932 = vsel %vm3149, %v3913, -inf
        %v3933 = vmax.f32 %v3931, %v3932
        %v3934 = vsel %vm3149, %v3914, -inf
        %v3935 = vmax.f32 %v3933, %v3934
        %v3936 = vsel %vm3149, %v3915, -inf
        %v3937 = vmax.f32 %v3935, %v3936
        %v3938 = vsel %vm3149, %v3916, -inf
        %v3939 = vsel %vm3149, %v3917, -inf
        %v3940 = vmax.f32 %v3938, %v3939
        %v3941 = vsel %vm3149, %v3918, -inf
        %v3942 = vmax.f32 %v3940, %v3941
        %v3943 = vsel %vm3149, %v3919, -inf
        %v3944 = vmax.f32 %v3942, %v3943
        %v3945 = vsel %vm3149, %v3920, -inf
        %v3946 = vsel %vm3149, %v3921, -inf
        %v3947 = vmax.f32 %v3945, %v3946
        %v3948 = vsel %vm3149, %v3922, -inf
        %v3949 = vmax.f32 %v3947, %v3948
        %v3950 = vsel %vm3149, %v3923, -inf
        %v3951 = vmax.f32 %v3949, %v3950
        %v3952 = vsub.f32 %v3908, %v3930
        %v3953 = vsub.f32 %v3909, %v3930
        %v3954 = vsub.f32 %v3910, %v3930
        %v3955 = vsub.f32 %v3911, %v3930
        %v3956 = vsub.f32 %v3912, %v3937
        %v3957 = vsub.f32 %v3913, %v3937
        %v3958 = vsub.f32 %v3914, %v3937
        %v3959 = vsub.f32 %v3915, %v3937
        %v3960 = vsub.f32 %v3916, %v3944
        %v3961 = vsub.f32 %v3917, %v3944
        %v3962 = vsub.f32 %v3918, %v3944
        %v3963 = vsub.f32 %v3919, %v3944
        %v3964 = vsub.f32 %v3920, %v3951
        %v3965 = vsub.f32 %v3921, %v3951
        %v3966 = vsub.f32 %v3922, %v3951
        %v3967 = vsub.f32 %v3923, %v3951
        %v3968 = vmul.f32 %v3952, 1.442695
        %v3969 = vpow.pop %v3968
        %v3970 = vmul.f32 %v3953, 1.442695
        %v3971 = vpow.pop %v3970
        %v3972 = vmul.f32 %v3954, 1.442695
        %v3973 = vpow.pop %v3972
        %v3974 = vmul.f32 %v3955, 1.442695
        %v3975 = vpow.pop %v3974
        %v3976 = vmul.f32 %v3956, 1.442695
        %v3977 = vpow.pop %v3976
        %v3978 = vmul.f32 %v3957, 1.442695
        %v3979 = vpow.pop %v3978
        %v3980 = vmul.f32 %v3958, 1.442695
        %v3981 = vpow.pop %v3980
        %v3982 = vmul.f32 %v3959, 1.442695
        %v3983 = vpow.pop %v3982
        %v3984 = vmul.f32 %v3960, 1.442695
        %v3985 = vpow.pop %v3984
        %v3986 = vmul.f32 %v3961, 1.442695
        %v3987 = vpow.pop %v3986
        %v3988 = vmul.f32 %v3962, 1.442695
        %v3989 = vpow.pop %v3988
        %v3990 = vmul.f32 %v3963, 1.442695
        %v3991 = vpow.pop %v3990
        %v3992 = vmul.f32 %v3964, 1.442695
        %v3993 = vpow.pop %v3992
        %v3994 = vmul.f32 %v3965, 1.442695
        %v3995 = vpow.pop %v3994
        %v3996 = vmul.f32 %v3966, 1.442695
        %v3997 = vpow.pop %v3996
        %v3998 = vmul.f32 %v3967, 1.442695
        %v3999 = vpow.pop %v3998
        %v4000 = vsel %vm3226, %v3969, 0.0
        %v4001 = vsel %vm3226, %v3971, 0.0
        %v4002 = vadd.f32 %v4000, %v4001
        %v4003 = vsel %vm3226, %v3973, 0.0
        %v4004 = vadd.f32 %v4002, %v4003
        %v4005 = vsel %vm3226, %v3975, 0.0
        %v4006 = vadd.f32 %v4004, %v4005
        %v4007 = vsel %vm3226, %v3977, 0.0
        %v4008 = vsel %vm3226, %v3979, 0.0
        %v4009 = vadd.f32 %v4007, %v4008
        %v4010 = vsel %vm3226, %v3981, 0.0
        %v4011 = vadd.f32 %v4009, %v4010
        %v4012 = vsel %vm3226, %v3983, 0.0
        %v4013 = vadd.f32 %v4011, %v4012
        %v4014 = vsel %vm3226, %v3985, 0.0
        %v4015 = vsel %vm3226, %v3987, 0.0
        %v4016 = vadd.f32 %v4014, %v4015
        %v4017 = vsel %vm3226, %v3989, 0.0
        %v4018 = vadd.f32 %v4016, %v4017
        %v4019 = vsel %vm3226, %v3991, 0.0
        %v4020 = vadd.f32 %v4018, %v4019
        %v4021 = vsel %vm3226, %v3993, 0.0
        %v4022 = vsel %vm3226, %v3995, 0.0
        %v4023 = vadd.f32 %v4021, %v4022
        %v4024 = vsel %vm3226, %v3997, 0.0
        %v4025 = vadd.f32 %v4023, %v4024
        %v4026 = vsel %vm3226, %v3999, 0.0
        %v4027 = vadd.f32 %v4025, %v4026
        %v4028 = vlog2.pop %v4006
        %v4029 = vmul.f32 %v4028, 0.6931472
        %v4030 = vlog2.pop %v4013
        %v4031 = vmul.f32 %v4030, 0.6931472
        %v4032 = vlog2.pop %v4020
        %v4033 = vmul.f32 %v4032, 0.6931472
        %v4034 = vlog2.pop %v4027
        %v4035 = vmul.f32 %v4034, 0.6931472
        %v4036 = vadd.f32 %v3930, %v4029
        %v4037 = vadd.f32 %v3937, %v4031
        %v4038 = vadd.f32 %v3944, %v4033
        %v4039 = vadd.f32 %v3951, %v4035
        %v4040 = vmul.f32 %v3267, %v4036
        %v4041 = vmul.f32 %v3267, %v4037
        %v4042 = vmul.f32 %v3267, %v4038
        %v4043 = vmul.f32 %v3267, %v4039
        %s4044 = sadd.s32 %s3077, 10
        %s4045 = smul.u32 %s4044, 4
        %s4046 = scalar_lea.vmem %s256, %s4045
        %v4047 = vld [vmem:[%s4046] sm:$0x1]
        %v4048 = vld [vmem:[%s4046 + $0x1] sm:$0x1]
        %v4049 = vld [vmem:[%s4046 + $0x2] sm:$0x1]
        %v4050 = vld [vmem:[%s4046 + $0x3] sm:$0x1]
        %v4051 = vadd.f32 %v4047, %v4040
        %v4052 = vadd.f32 %v4048, %v4041
        %v4053 = vadd.f32 %v4049, %v4042
        %v4054 = vadd.f32 %v4050, %v4043
        %4055 = vst.msk [vmem:[%s4046] sm:$0x1] %vm3226, %v4051
        %4056 = vst.msk [vmem:[%s4046 + $0x1] sm:$0x1] %vm3226, %v4052
        %4057 = vst.msk [vmem:[%s4046 + $0x2] sm:$0x1] %vm3226, %v4053
        %4058 = vst.msk [vmem:[%s4046 + $0x3] sm:$0x1] %vm3226, %v4054
        %s4059 = scalar_lea.vmem %s232, %s4045
        %v4060 = vld [vmem:[%s4059] sm:$0x1]
        %v4061 = vld [vmem:[%s4059 + $0x1] sm:$0x1]
        %v4062 = vld [vmem:[%s4059 + $0x2] sm:$0x1]
        %v4063 = vld [vmem:[%s4059 + $0x3] sm:$0x1]
        %v4064 = vadd.f32 %v4060, %v4040
        %v4065 = vadd.f32 %v4061, %v4041
        %v4066 = vadd.f32 %v4062, %v4042
        %v4067 = vadd.f32 %v4063, %v4043
        %s4068 = scalar_lea.vmem %s246, 144
        %v4069 = vld [vmem:[%s4068] sm:$0x1]
        %v4070 = vld [vmem:[%s4068 + $0x1] sm:$0x1]
        %v4071 = vld [vmem:[%s4068 + $0x2] sm:$0x1]
        %v4072 = vld [vmem:[%s4068 + $0x3] sm:$0x1]
        %v4073 = vld [vmem:[%s4068 + $0x4] sm:$0x1]
        %v4074 = vld [vmem:[%s4068 + $0x5] sm:$0x1]
        %v4075 = vld [vmem:[%s4068 + $0x6] sm:$0x1]
        %v4076 = vld [vmem:[%s4068 + $0x7] sm:$0x1]
        %v4077 = vld [vmem:[%s4068 + $0x8] sm:$0x1]
        %v4078 = vld [vmem:[%s4068 + $0x9] sm:$0x1]
        %v4079 = vld [vmem:[%s4068 + $0xa] sm:$0x1]
        %v4080 = vld [vmem:[%s4068 + $0xb] sm:$0x1]
        %v4081 = vld [vmem:[%s4068 + $0xc] sm:$0x1]
        %v4082 = vld [vmem:[%s4068 + $0xd] sm:$0x1]
        %v4083 = vld [vmem:[%s4068 + $0xe] sm:$0x1]
        %v4084 = vld [vmem:[%s4068 + $0xf] sm:$0x1]
        %v4085 = vadd.f32 %v4069, %v4064
        %v4086 = vadd.f32 %v4070, %v4065
        %v4087 = vadd.f32 %v4071, %v4066
        %v4088 = vadd.f32 %v4072, %v4067
        %v4089 = vadd.f32 %v4073, %v4064
        %v4090 = vadd.f32 %v4074, %v4065
        %v4091 = vadd.f32 %v4075, %v4066
        %v4092 = vadd.f32 %v4076, %v4067
        %v4093 = vadd.f32 %v4077, %v4064
        %v4094 = vadd.f32 %v4078, %v4065
        %v4095 = vadd.f32 %v4079, %v4066
        %v4096 = vadd.f32 %v4080, %v4067
        %v4097 = vadd.f32 %v4081, %v4064
        %v4098 = vadd.f32 %v4082, %v4065
        %v4099 = vadd.f32 %v4083, %v4066
        %v4100 = vadd.f32 %v4084, %v4067
        %v4101 = vmul.f32 %v4085, %v3129
        %v4102 = vmul.f32 %v4086, %v3129
        %v4103 = vmul.f32 %v4087, %v3129
        %v4104 = vmul.f32 %v4088, %v3129
        %v4105 = vmul.f32 %v4089, %v3129
        %v4106 = vmul.f32 %v4090, %v3129
        %v4107 = vmul.f32 %v4091, %v3129
        %v4108 = vmul.f32 %v4092, %v3129
        %v4109 = vmul.f32 %v4093, %v3129
        %v4110 = vmul.f32 %v4094, %v3129
        %v4111 = vmul.f32 %v4095, %v3129
        %v4112 = vmul.f32 %v4096, %v3129
        %v4113 = vmul.f32 %v4097, %v3129
        %v4114 = vmul.f32 %v4098, %v3129
        %v4115 = vmul.f32 %v4099, %v3129
        %v4116 = vmul.f32 %v4100, %v3129
        %v4117 = vsel %vm3149, %v4101, -inf
        %v4118 = vsel %vm3149, %v4102, -inf
        %v4119 = vmax.f32 %v4117, %v4118
        %v4120 = vsel %vm3149, %v4103, -inf
        %v4121 = vmax.f32 %v4119, %v4120
        %v4122 = vsel %vm3149, %v4104, -inf
        %v4123 = vmax.f32 %v4121, %v4122
        %v4124 = vsel %vm3149, %v4105, -inf
        %v4125 = vsel %vm3149, %v4106, -inf
        %v4126 = vmax.f32 %v4124, %v4125
        %v4127 = vsel %vm3149, %v4107, -inf
        %v4128 = vmax.f32 %v4126, %v4127
        %v4129 = vsel %vm3149, %v4108, -inf
        %v4130 = vmax.f32 %v4128, %v4129
        %v4131 = vsel %vm3149, %v4109, -inf
        %v4132 = vsel %vm3149, %v4110, -inf
        %v4133 = vmax.f32 %v4131, %v4132
        %v4134 = vsel %vm3149, %v4111, -inf
        %v4135 = vmax.f32 %v4133, %v4134
        %v4136 = vsel %vm3149, %v4112, -inf
        %v4137 = vmax.f32 %v4135, %v4136
        %v4138 = vsel %vm3149, %v4113, -inf
        %v4139 = vsel %vm3149, %v4114, -inf
        %v4140 = vmax.f32 %v4138, %v4139
        %v4141 = vsel %vm3149, %v4115, -inf
        %v4142 = vmax.f32 %v4140, %v4141
        %v4143 = vsel %vm3149, %v4116, -inf
        %v4144 = vmax.f32 %v4142, %v4143
        %v4145 = vsub.f32 %v4101, %v4123
        %v4146 = vsub.f32 %v4102, %v4123
        %v4147 = vsub.f32 %v4103, %v4123
        %v4148 = vsub.f32 %v4104, %v4123
        %v4149 = vsub.f32 %v4105, %v4130
        %v4150 = vsub.f32 %v4106, %v4130
        %v4151 = vsub.f32 %v4107, %v4130
        %v4152 = vsub.f32 %v4108, %v4130
        %v4153 = vsub.f32 %v4109, %v4137
        %v4154 = vsub.f32 %v4110, %v4137
        %v4155 = vsub.f32 %v4111, %v4137
        %v4156 = vsub.f32 %v4112, %v4137
        %v4157 = vsub.f32 %v4113, %v4144
        %v4158 = vsub.f32 %v4114, %v4144
        %v4159 = vsub.f32 %v4115, %v4144
        %v4160 = vsub.f32 %v4116, %v4144
        %v4161 = vmul.f32 %v4145, 1.442695
        %v4162 = vpow.pop %v4161
        %v4163 = vmul.f32 %v4146, 1.442695
        %v4164 = vpow.pop %v4163
        %v4165 = vmul.f32 %v4147, 1.442695
        %v4166 = vpow.pop %v4165
        %v4167 = vmul.f32 %v4148, 1.442695
        %v4168 = vpow.pop %v4167
        %v4169 = vmul.f32 %v4149, 1.442695
        %v4170 = vpow.pop %v4169
        %v4171 = vmul.f32 %v4150, 1.442695
        %v4172 = vpow.pop %v4171
        %v4173 = vmul.f32 %v4151, 1.442695
        %v4174 = vpow.pop %v4173
        %v4175 = vmul.f32 %v4152, 1.442695
        %v4176 = vpow.pop %v4175
        %v4177 = vmul.f32 %v4153, 1.442695
        %v4178 = vpow.pop %v4177
        %v4179 = vmul.f32 %v4154, 1.442695
        %v4180 = vpow.pop %v4179
        %v4181 = vmul.f32 %v4155, 1.442695
        %v4182 = vpow.pop %v4181
        %v4183 = vmul.f32 %v4156, 1.442695
        %v4184 = vpow.pop %v4183
        %v4185 = vmul.f32 %v4157, 1.442695
        %v4186 = vpow.pop %v4185
        %v4187 = vmul.f32 %v4158, 1.442695
        %v4188 = vpow.pop %v4187
        %v4189 = vmul.f32 %v4159, 1.442695
        %v4190 = vpow.pop %v4189
        %v4191 = vmul.f32 %v4160, 1.442695
        %v4192 = vpow.pop %v4191
        %v4193 = vsel %vm3226, %v4162, 0.0
        %v4194 = vsel %vm3226, %v4164, 0.0
        %v4195 = vadd.f32 %v4193, %v4194
        %v4196 = vsel %vm3226, %v4166, 0.0
        %v4197 = vadd.f32 %v4195, %v4196
        %v4198 = vsel %vm3226, %v4168, 0.0
        %v4199 = vadd.f32 %v4197, %v4198
        %v4200 = vsel %vm3226, %v4170, 0.0
        %v4201 = vsel %vm3226, %v4172, 0.0
        %v4202 = vadd.f32 %v4200, %v4201
        %v4203 = vsel %vm3226, %v4174, 0.0
        %v4204 = vadd.f32 %v4202, %v4203
        %v4205 = vsel %vm3226, %v4176, 0.0
        %v4206 = vadd.f32 %v4204, %v4205
        %v4207 = vsel %vm3226, %v4178, 0.0
        %v4208 = vsel %vm3226, %v4180, 0.0
        %v4209 = vadd.f32 %v4207, %v4208
        %v4210 = vsel %vm3226, %v4182, 0.0
        %v4211 = vadd.f32 %v4209, %v4210
        %v4212 = vsel %vm3226, %v4184, 0.0
        %v4213 = vadd.f32 %v4211, %v4212
        %v4214 = vsel %vm3226, %v4186, 0.0
        %v4215 = vsel %vm3226, %v4188, 0.0
        %v4216 = vadd.f32 %v4214, %v4215
        %v4217 = vsel %vm3226, %v4190, 0.0
        %v4218 = vadd.f32 %v4216, %v4217
        %v4219 = vsel %vm3226, %v4192, 0.0
        %v4220 = vadd.f32 %v4218, %v4219
        %v4221 = vlog2.pop %v4199
        %v4222 = vmul.f32 %v4221, 0.6931472
        %v4223 = vlog2.pop %v4206
        %v4224 = vmul.f32 %v4223, 0.6931472
        %v4225 = vlog2.pop %v4213
        %v4226 = vmul.f32 %v4225, 0.6931472
        %v4227 = vlog2.pop %v4220
        %v4228 = vmul.f32 %v4227, 0.6931472
        %v4229 = vadd.f32 %v4123, %v4222
        %v4230 = vadd.f32 %v4130, %v4224
        %v4231 = vadd.f32 %v4137, %v4226
        %v4232 = vadd.f32 %v4144, %v4228
        %v4233 = vmul.f32 %v3267, %v4229
        %v4234 = vmul.f32 %v3267, %v4230
        %v4235 = vmul.f32 %v3267, %v4231
        %v4236 = vmul.f32 %v3267, %v4232
        %s4237 = sadd.s32 %s3077, 9
        %s4238 = smul.u32 %s4237, 4
        %s4239 = scalar_lea.vmem %s256, %s4238
        %v4240 = vld [vmem:[%s4239] sm:$0x1]
        %v4241 = vld [vmem:[%s4239 + $0x1] sm:$0x1]
        %v4242 = vld [vmem:[%s4239 + $0x2] sm:$0x1]
        %v4243 = vld [vmem:[%s4239 + $0x3] sm:$0x1]
        %v4244 = vadd.f32 %v4240, %v4233
        %v4245 = vadd.f32 %v4241, %v4234
        %v4246 = vadd.f32 %v4242, %v4235
        %v4247 = vadd.f32 %v4243, %v4236
        %4248 = vst.msk [vmem:[%s4239] sm:$0x1] %vm3226, %v4244
        %4249 = vst.msk [vmem:[%s4239 + $0x1] sm:$0x1] %vm3226, %v4245
        %4250 = vst.msk [vmem:[%s4239 + $0x2] sm:$0x1] %vm3226, %v4246
        %4251 = vst.msk [vmem:[%s4239 + $0x3] sm:$0x1] %vm3226, %v4247
        %s4252 = scalar_lea.vmem %s232, %s4238
        %v4253 = vld [vmem:[%s4252] sm:$0x1]
        %v4254 = vld [vmem:[%s4252 + $0x1] sm:$0x1]
        %v4255 = vld [vmem:[%s4252 + $0x2] sm:$0x1]
        %v4256 = vld [vmem:[%s4252 + $0x3] sm:$0x1]
        %v4257 = vadd.f32 %v4253, %v4233
        %v4258 = vadd.f32 %v4254, %v4234
        %v4259 = vadd.f32 %v4255, %v4235
        %v4260 = vadd.f32 %v4256, %v4236
        %s4261 = scalar_lea.vmem %s246, 128
        %v4262 = vld [vmem:[%s4261] sm:$0x1]
        %v4263 = vld [vmem:[%s4261 + $0x1] sm:$0x1]
        %v4264 = vld [vmem:[%s4261 + $0x2] sm:$0x1]
        %v4265 = vld [vmem:[%s4261 + $0x3] sm:$0x1]
        %v4266 = vld [vmem:[%s4261 + $0x4] sm:$0x1]
        %v4267 = vld [vmem:[%s4261 + $0x5] sm:$0x1]
        %v4268 = vld [vmem:[%s4261 + $0x6] sm:$0x1]
        %v4269 = vld [vmem:[%s4261 + $0x7] sm:$0x1]
        %v4270 = vld [vmem:[%s4261 + $0x8] sm:$0x1]
        %v4271 = vld [vmem:[%s4261 + $0x9] sm:$0x1]
        %v4272 = vld [vmem:[%s4261 + $0xa] sm:$0x1]
        %v4273 = vld [vmem:[%s4261 + $0xb] sm:$0x1]
        %v4274 = vld [vmem:[%s4261 + $0xc] sm:$0x1]
        %v4275 = vld [vmem:[%s4261 + $0xd] sm:$0x1]
        %v4276 = vld [vmem:[%s4261 + $0xe] sm:$0x1]
        %v4277 = vld [vmem:[%s4261 + $0xf] sm:$0x1]
        %v4278 = vadd.f32 %v4262, %v4257
        %v4279 = vadd.f32 %v4263, %v4258
        %v4280 = vadd.f32 %v4264, %v4259
        %v4281 = vadd.f32 %v4265, %v4260
        %v4282 = vadd.f32 %v4266, %v4257
        %v4283 = vadd.f32 %v4267, %v4258
        %v4284 = vadd.f32 %v4268, %v4259
        %v4285 = vadd.f32 %v4269, %v4260
        %v4286 = vadd.f32 %v4270, %v4257
        %v4287 = vadd.f32 %v4271, %v4258
        %v4288 = vadd.f32 %v4272, %v4259
        %v4289 = vadd.f32 %v4273, %v4260
        %v4290 = vadd.f32 %v4274, %v4257
        %v4291 = vadd.f32 %v4275, %v4258
        %v4292 = vadd.f32 %v4276, %v4259
        %v4293 = vadd.f32 %v4277, %v4260
        %v4294 = vmul.f32 %v4278, %v3129
        %v4295 = vmul.f32 %v4279, %v3129
        %v4296 = vmul.f32 %v4280, %v3129
        %v4297 = vmul.f32 %v4281, %v3129
        %v4298 = vmul.f32 %v4282, %v3129
        %v4299 = vmul.f32 %v4283, %v3129
        %v4300 = vmul.f32 %v4284, %v3129
        %v4301 = vmul.f32 %v4285, %v3129
        %v4302 = vmul.f32 %v4286, %v3129
        %v4303 = vmul.f32 %v4287, %v3129
        %v4304 = vmul.f32 %v4288, %v3129
        %v4305 = vmul.f32 %v4289, %v3129
        %v4306 = vmul.f32 %v4290, %v3129
        %v4307 = vmul.f32 %v4291, %v3129
        %v4308 = vmul.f32 %v4292, %v3129
        %v4309 = vmul.f32 %v4293, %v3129
        %v4310 = vsel %vm3149, %v4294, -inf
        %v4311 = vsel %vm3149, %v4295, -inf
        %v4312 = vmax.f32 %v4310, %v4311
        %v4313 = vsel %vm3149, %v4296, -inf
        %v4314 = vmax.f32 %v4312, %v4313
        %v4315 = vsel %vm3149, %v4297, -inf
        %v4316 = vmax.f32 %v4314, %v4315
        %v4317 = vsel %vm3149, %v4298, -inf
        %v4318 = vsel %vm3149, %v4299, -inf
        %v4319 = vmax.f32 %v4317, %v4318
        %v4320 = vsel %vm3149, %v4300, -inf
        %v4321 = vmax.f32 %v4319, %v4320
        %v4322 = vsel %vm3149, %v4301, -inf
        %v4323 = vmax.f32 %v4321, %v4322
        %v4324 = vsel %vm3149, %v4302, -inf
        %v4325 = vsel %vm3149, %v4303, -inf
        %v4326 = vmax.f32 %v4324, %v4325
        %v4327 = vsel %vm3149, %v4304, -inf
        %v4328 = vmax.f32 %v4326, %v4327
        %v4329 = vsel %vm3149, %v4305, -inf
        %v4330 = vmax.f32 %v4328, %v4329
        %v4331 = vsel %vm3149, %v4306, -inf
        %v4332 = vsel %vm3149, %v4307, -inf
        %v4333 = vmax.f32 %v4331, %v4332
        %v4334 = vsel %vm3149, %v4308, -inf
        %v4335 = vmax.f32 %v4333, %v4334
        %v4336 = vsel %vm3149, %v4309, -inf
        %v4337 = vmax.f32 %v4335, %v4336
        %v4338 = vsub.f32 %v4294, %v4316
        %v4339 = vsub.f32 %v4295, %v4316
        %v4340 = vsub.f32 %v4296, %v4316
        %v4341 = vsub.f32 %v4297, %v4316
        %v4342 = vsub.f32 %v4298, %v4323
        %v4343 = vsub.f32 %v4299, %v4323
        %v4344 = vsub.f32 %v4300, %v4323
        %v4345 = vsub.f32 %v4301, %v4323
        %v4346 = vsub.f32 %v4302, %v4330
        %v4347 = vsub.f32 %v4303, %v4330
        %v4348 = vsub.f32 %v4304, %v4330
        %v4349 = vsub.f32 %v4305, %v4330
        %v4350 = vsub.f32 %v4306, %v4337
        %v4351 = vsub.f32 %v4307, %v4337
        %v4352 = vsub.f32 %v4308, %v4337
        %v4353 = vsub.f32 %v4309, %v4337
        %v4354 = vmul.f32 %v4338, 1.442695
        %v4355 = vpow.pop %v4354
        %v4356 = vmul.f32 %v4339, 1.442695
        %v4357 = vpow.pop %v4356
        %v4358 = vmul.f32 %v4340, 1.442695
        %v4359 = vpow.pop %v4358
        %v4360 = vmul.f32 %v4341, 1.442695
        %v4361 = vpow.pop %v4360
        %v4362 = vmul.f32 %v4342, 1.442695
        %v4363 = vpow.pop %v4362
        %v4364 = vmul.f32 %v4343, 1.442695
        %v4365 = vpow.pop %v4364
        %v4366 = vmul.f32 %v4344, 1.442695
        %v4367 = vpow.pop %v4366
        %v4368 = vmul.f32 %v4345, 1.442695
        %v4369 = vpow.pop %v4368
        %v4370 = vmul.f32 %v4346, 1.442695
        %v4371 = vpow.pop %v4370
        %v4372 = vmul.f32 %v4347, 1.442695
        %v4373 = vpow.pop %v4372
        %v4374 = vmul.f32 %v4348, 1.442695
        %v4375 = vpow.pop %v4374
        %v4376 = vmul.f32 %v4349, 1.442695
        %v4377 = vpow.pop %v4376
        %v4378 = vmul.f32 %v4350, 1.442695
        %v4379 = vpow.pop %v4378
        %v4380 = vmul.f32 %v4351, 1.442695
        %v4381 = vpow.pop %v4380
        %v4382 = vmul.f32 %v4352, 1.442695
        %v4383 = vpow.pop %v4382
        %v4384 = vmul.f32 %v4353, 1.442695
        %v4385 = vpow.pop %v4384
        %v4386 = vsel %vm3226, %v4355, 0.0
        %v4387 = vsel %vm3226, %v4357, 0.0
        %v4388 = vadd.f32 %v4386, %v4387
        %v4389 = vsel %vm3226, %v4359, 0.0
        %v4390 = vadd.f32 %v4388, %v4389
        %v4391 = vsel %vm3226, %v4361, 0.0
        %v4392 = vadd.f32 %v4390, %v4391
        %v4393 = vsel %vm3226, %v4363, 0.0
        %v4394 = vsel %vm3226, %v4365, 0.0
        %v4395 = vadd.f32 %v4393, %v4394
        %v4396 = vsel %vm3226, %v4367, 0.0
        %v4397 = vadd.f32 %v4395, %v4396
        %v4398 = vsel %vm3226, %v4369, 0.0
        %v4399 = vadd.f32 %v4397, %v4398
        %v4400 = vsel %vm3226, %v4371, 0.0
        %v4401 = vsel %vm3226, %v4373, 0.0
        %v4402 = vadd.f32 %v4400, %v4401
        %v4403 = vsel %vm3226, %v4375, 0.0
        %v4404 = vadd.f32 %v4402, %v4403
        %v4405 = vsel %vm3226, %v4377, 0.0
        %v4406 = vadd.f32 %v4404, %v4405
        %v4407 = vsel %vm3226, %v4379, 0.0
        %v4408 = vsel %vm3226, %v4381, 0.0
        %v4409 = vadd.f32 %v4407, %v4408
        %v4410 = vsel %vm3226, %v4383, 0.0
        %v4411 = vadd.f32 %v4409, %v4410
        %v4412 = vsel %vm3226, %v4385, 0.0
        %v4413 = vadd.f32 %v4411, %v4412
        %v4414 = vlog2.pop %v4392
        %v4415 = vmul.f32 %v4414, 0.6931472
        %v4416 = vlog2.pop %v4399
        %v4417 = vmul.f32 %v4416, 0.6931472
        %v4418 = vlog2.pop %v4406
        %v4419 = vmul.f32 %v4418, 0.6931472
        %v4420 = vlog2.pop %v4413
        %v4421 = vmul.f32 %v4420, 0.6931472
        %v4422 = vadd.f32 %v4316, %v4415
        %v4423 = vadd.f32 %v4323, %v4417
        %v4424 = vadd.f32 %v4330, %v4419
        %v4425 = vadd.f32 %v4337, %v4421
        %v4426 = vmul.f32 %v3267, %v4422
        %v4427 = vmul.f32 %v3267, %v4423
        %v4428 = vmul.f32 %v3267, %v4424
        %v4429 = vmul.f32 %v3267, %v4425
        %s4430 = sadd.s32 %s3077, 8
        %s4431 = smul.u32 %s4430, 4
        %s4432 = scalar_lea.vmem %s256, %s4431
        %v4433 = vld [vmem:[%s4432] sm:$0x1]
        %v4434 = vld [vmem:[%s4432 + $0x1] sm:$0x1]
        %v4435 = vld [vmem:[%s4432 + $0x2] sm:$0x1]
        %v4436 = vld [vmem:[%s4432 + $0x3] sm:$0x1]
        %v4437 = vadd.f32 %v4433, %v4426
        %v4438 = vadd.f32 %v4434, %v4427
        %v4439 = vadd.f32 %v4435, %v4428
        %v4440 = vadd.f32 %v4436, %v4429
        %4441 = vst.msk [vmem:[%s4432] sm:$0x1] %vm3226, %v4437
        %4442 = vst.msk [vmem:[%s4432 + $0x1] sm:$0x1] %vm3226, %v4438
        %4443 = vst.msk [vmem:[%s4432 + $0x2] sm:$0x1] %vm3226, %v4439
        %4444 = vst.msk [vmem:[%s4432 + $0x3] sm:$0x1] %vm3226, %v4440
        %s4445 = scalar_lea.vmem %s232, %s4431
        %v4446 = vld [vmem:[%s4445] sm:$0x1]
        %v4447 = vld [vmem:[%s4445 + $0x1] sm:$0x1]
        %v4448 = vld [vmem:[%s4445 + $0x2] sm:$0x1]
        %v4449 = vld [vmem:[%s4445 + $0x3] sm:$0x1]
        %v4450 = vadd.f32 %v4446, %v4426
        %v4451 = vadd.f32 %v4447, %v4427
        %v4452 = vadd.f32 %v4448, %v4428
        %v4453 = vadd.f32 %v4449, %v4429
        %s4454 = scalar_lea.vmem %s246, 112
        %v4455 = vld [vmem:[%s4454] sm:$0x1]
        %v4456 = vld [vmem:[%s4454 + $0x1] sm:$0x1]
        %v4457 = vld [vmem:[%s4454 + $0x2] sm:$0x1]
        %v4458 = vld [vmem:[%s4454 + $0x3] sm:$0x1]
        %v4459 = vld [vmem:[%s4454 + $0x4] sm:$0x1]
        %v4460 = vld [vmem:[%s4454 + $0x5] sm:$0x1]
        %v4461 = vld [vmem:[%s4454 + $0x6] sm:$0x1]
        %v4462 = vld [vmem:[%s4454 + $0x7] sm:$0x1]
        %v4463 = vld [vmem:[%s4454 + $0x8] sm:$0x1]
        %v4464 = vld [vmem:[%s4454 + $0x9] sm:$0x1]
        %v4465 = vld [vmem:[%s4454 + $0xa] sm:$0x1]
        %v4466 = vld [vmem:[%s4454 + $0xb] sm:$0x1]
        %v4467 = vld [vmem:[%s4454 + $0xc] sm:$0x1]
        %v4468 = vld [vmem:[%s4454 + $0xd] sm:$0x1]
        %v4469 = vld [vmem:[%s4454 + $0xe] sm:$0x1]
        %v4470 = vld [vmem:[%s4454 + $0xf] sm:$0x1]
        %v4471 = vadd.f32 %v4455, %v4450
        %v4472 = vadd.f32 %v4456, %v4451
        %v4473 = vadd.f32 %v4457, %v4452
        %v4474 = vadd.f32 %v4458, %v4453
        %v4475 = vadd.f32 %v4459, %v4450
        %v4476 = vadd.f32 %v4460, %v4451
        %v4477 = vadd.f32 %v4461, %v4452
        %v4478 = vadd.f32 %v4462, %v4453
        %v4479 = vadd.f32 %v4463, %v4450
        %v4480 = vadd.f32 %v4464, %v4451
        %v4481 = vadd.f32 %v4465, %v4452
        %v4482 = vadd.f32 %v4466, %v4453
        %v4483 = vadd.f32 %v4467, %v4450
        %v4484 = vadd.f32 %v4468, %v4451
        %v4485 = vadd.f32 %v4469, %v4452
        %v4486 = vadd.f32 %v4470, %v4453
        %v4487 = vmul.f32 %v4471, %v3129
        %v4488 = vmul.f32 %v4472, %v3129
        %v4489 = vmul.f32 %v4473, %v3129
        %v4490 = vmul.f32 %v4474, %v3129
        %v4491 = vmul.f32 %v4475, %v3129
        %v4492 = vmul.f32 %v4476, %v3129
        %v4493 = vmul.f32 %v4477, %v3129
        %v4494 = vmul.f32 %v4478, %v3129
        %v4495 = vmul.f32 %v4479, %v3129
        %v4496 = vmul.f32 %v4480, %v3129
        %v4497 = vmul.f32 %v4481, %v3129
        %v4498 = vmul.f32 %v4482, %v3129
        %v4499 = vmul.f32 %v4483, %v3129
        %v4500 = vmul.f32 %v4484, %v3129
        %v4501 = vmul.f32 %v4485, %v3129
        %v4502 = vmul.f32 %v4486, %v3129
        %v4503 = vsel %vm3149, %v4487, -inf
        %v4504 = vsel %vm3149, %v4488, -inf
        %v4505 = vmax.f32 %v4503, %v4504
        %v4506 = vsel %vm3149, %v4489, -inf
        %v4507 = vmax.f32 %v4505, %v4506
        %v4508 = vsel %vm3149, %v4490, -inf
        %v4509 = vmax.f32 %v4507, %v4508
        %v4510 = vsel %vm3149, %v4491, -inf
        %v4511 = vsel %vm3149, %v4492, -inf
        %v4512 = vmax.f32 %v4510, %v4511
        %v4513 = vsel %vm3149, %v4493, -inf
        %v4514 = vmax.f32 %v4512, %v4513
        %v4515 = vsel %vm3149, %v4494, -inf
        %v4516 = vmax.f32 %v4514, %v4515
        %v4517 = vsel %vm3149, %v4495, -inf
        %v4518 = vsel %vm3149, %v4496, -inf
        %v4519 = vmax.f32 %v4517, %v4518
        %v4520 = vsel %vm3149, %v4497, -inf
        %v4521 = vmax.f32 %v4519, %v4520
        %v4522 = vsel %vm3149, %v4498, -inf
        %v4523 = vmax.f32 %v4521, %v4522
        %v4524 = vsel %vm3149, %v4499, -inf
        %v4525 = vsel %vm3149, %v4500, -inf
        %v4526 = vmax.f32 %v4524, %v4525
        %v4527 = vsel %vm3149, %v4501, -inf
        %v4528 = vmax.f32 %v4526, %v4527
        %v4529 = vsel %vm3149, %v4502, -inf
        %v4530 = vmax.f32 %v4528, %v4529
        %v4531 = vsub.f32 %v4487, %v4509
        %v4532 = vsub.f32 %v4488, %v4509
        %v4533 = vsub.f32 %v4489, %v4509
        %v4534 = vsub.f32 %v4490, %v4509
        %v4535 = vsub.f32 %v4491, %v4516
        %v4536 = vsub.f32 %v4492, %v4516
        %v4537 = vsub.f32 %v4493, %v4516
        %v4538 = vsub.f32 %v4494, %v4516
        %v4539 = vsub.f32 %v4495, %v4523
        %v4540 = vsub.f32 %v4496, %v4523
        %v4541 = vsub.f32 %v4497, %v4523
        %v4542 = vsub.f32 %v4498, %v4523
        %v4543 = vsub.f32 %v4499, %v4530
        %v4544 = vsub.f32 %v4500, %v4530
        %v4545 = vsub.f32 %v4501, %v4530
        %v4546 = vsub.f32 %v4502, %v4530
        %v4547 = vmul.f32 %v4531, 1.442695
        %v4548 = vpow.pop %v4547
        %v4549 = vmul.f32 %v4532, 1.442695
        %v4550 = vpow.pop %v4549
        %v4551 = vmul.f32 %v4533, 1.442695
        %v4552 = vpow.pop %v4551
        %v4553 = vmul.f32 %v4534, 1.442695
        %v4554 = vpow.pop %v4553
        %v4555 = vmul.f32 %v4535, 1.442695
        %v4556 = vpow.pop %v4555
        %v4557 = vmul.f32 %v4536, 1.442695
        %v4558 = vpow.pop %v4557
        %v4559 = vmul.f32 %v4537, 1.442695
        %v4560 = vpow.pop %v4559
        %v4561 = vmul.f32 %v4538, 1.442695
        %v4562 = vpow.pop %v4561
        %v4563 = vmul.f32 %v4539, 1.442695
        %v4564 = vpow.pop %v4563
        %v4565 = vmul.f32 %v4540, 1.442695
        %v4566 = vpow.pop %v4565
        %v4567 = vmul.f32 %v4541, 1.442695
        %v4568 = vpow.pop %v4567
        %v4569 = vmul.f32 %v4542, 1.442695
        %v4570 = vpow.pop %v4569
        %v4571 = vmul.f32 %v4543, 1.442695
        %v4572 = vpow.pop %v4571
        %v4573 = vmul.f32 %v4544, 1.442695
        %v4574 = vpow.pop %v4573
        %v4575 = vmul.f32 %v4545, 1.442695
        %v4576 = vpow.pop %v4575
        %v4577 = vmul.f32 %v4546, 1.442695
        %v4578 = vpow.pop %v4577
        %v4579 = vsel %vm3226, %v4548, 0.0
        %v4580 = vsel %vm3226, %v4550, 0.0
        %v4581 = vadd.f32 %v4579, %v4580
        %v4582 = vsel %vm3226, %v4552, 0.0
        %v4583 = vadd.f32 %v4581, %v4582
        %v4584 = vsel %vm3226, %v4554, 0.0
        %v4585 = vadd.f32 %v4583, %v4584
        %v4586 = vsel %vm3226, %v4556, 0.0
        %v4587 = vsel %vm3226, %v4558, 0.0
        %v4588 = vadd.f32 %v4586, %v4587
        %v4589 = vsel %vm3226, %v4560, 0.0
        %v4590 = vadd.f32 %v4588, %v4589
        %v4591 = vsel %vm3226, %v4562, 0.0
        %v4592 = vadd.f32 %v4590, %v4591
        %v4593 = vsel %vm3226, %v4564, 0.0
        %v4594 = vsel %vm3226, %v4566, 0.0
        %v4595 = vadd.f32 %v4593, %v4594
        %v4596 = vsel %vm3226, %v4568, 0.0
        %v4597 = vadd.f32 %v4595, %v4596
        %v4598 = vsel %vm3226, %v4570, 0.0
        %v4599 = vadd.f32 %v4597, %v4598
        %v4600 = vsel %vm3226, %v4572, 0.0
        %v4601 = vsel %vm3226, %v4574, 0.0
        %v4602 = vadd.f32 %v4600, %v4601
        %v4603 = vsel %vm3226, %v4576, 0.0
        %v4604 = vadd.f32 %v4602, %v4603
        %v4605 = vsel %vm3226, %v4578, 0.0
        %v4606 = vadd.f32 %v4604, %v4605
        %v4607 = vlog2.pop %v4585
        %v4608 = vmul.f32 %v4607, 0.6931472
        %v4609 = vlog2.pop %v4592
        %v4610 = vmul.f32 %v4609, 0.6931472
        %v4611 = vlog2.pop %v4599
        %v4612 = vmul.f32 %v4611, 0.6931472
        %v4613 = vlog2.pop %v4606
        %v4614 = vmul.f32 %v4613, 0.6931472
        %v4615 = vadd.f32 %v4509, %v4608
        %v4616 = vadd.f32 %v4516, %v4610
        %v4617 = vadd.f32 %v4523, %v4612
        %v4618 = vadd.f32 %v4530, %v4614
        %v4619 = vmul.f32 %v3267, %v4615
        %v4620 = vmul.f32 %v3267, %v4616
        %v4621 = vmul.f32 %v3267, %v4617
        %v4622 = vmul.f32 %v3267, %v4618
        %s4623 = sadd.s32 %s3077, 7
        %s4624 = smul.u32 %s4623, 4
        %s4625 = scalar_lea.vmem %s256, %s4624
        %v4626 = vld [vmem:[%s4625] sm:$0x1]
        %v4627 = vld [vmem:[%s4625 + $0x1] sm:$0x1]
        %v4628 = vld [vmem:[%s4625 + $0x2] sm:$0x1]
        %v4629 = vld [vmem:[%s4625 + $0x3] sm:$0x1]
        %v4630 = vadd.f32 %v4626, %v4619
        %v4631 = vadd.f32 %v4627, %v4620
        %v4632 = vadd.f32 %v4628, %v4621
        %v4633 = vadd.f32 %v4629, %v4622
        %4634 = vst.msk [vmem:[%s4625] sm:$0x1] %vm3226, %v4630
        %4635 = vst.msk [vmem:[%s4625 + $0x1] sm:$0x1] %vm3226, %v4631
        %4636 = vst.msk [vmem:[%s4625 + $0x2] sm:$0x1] %vm3226, %v4632
        %4637 = vst.msk [vmem:[%s4625 + $0x3] sm:$0x1] %vm3226, %v4633
        %s4638 = scalar_lea.vmem %s232, %s4624
        %v4639 = vld [vmem:[%s4638] sm:$0x1]
        %v4640 = vld [vmem:[%s4638 + $0x1] sm:$0x1]
        %v4641 = vld [vmem:[%s4638 + $0x2] sm:$0x1]
        %v4642 = vld [vmem:[%s4638 + $0x3] sm:$0x1]
        %v4643 = vadd.f32 %v4639, %v4619
        %v4644 = vadd.f32 %v4640, %v4620
        %v4645 = vadd.f32 %v4641, %v4621
        %v4646 = vadd.f32 %v4642, %v4622
        %s4647 = scalar_lea.vmem %s246, 96
        %v4648 = vld [vmem:[%s4647] sm:$0x1]
        %v4649 = vld [vmem:[%s4647 + $0x1] sm:$0x1]
        %v4650 = vld [vmem:[%s4647 + $0x2] sm:$0x1]
        %v4651 = vld [vmem:[%s4647 + $0x3] sm:$0x1]
        %v4652 = vld [vmem:[%s4647 + $0x4] sm:$0x1]
        %v4653 = vld [vmem:[%s4647 + $0x5] sm:$0x1]
        %v4654 = vld [vmem:[%s4647 + $0x6] sm:$0x1]
        %v4655 = vld [vmem:[%s4647 + $0x7] sm:$0x1]
        %v4656 = vld [vmem:[%s4647 + $0x8] sm:$0x1]
        %v4657 = vld [vmem:[%s4647 + $0x9] sm:$0x1]
        %v4658 = vld [vmem:[%s4647 + $0xa] sm:$0x1]
        %v4659 = vld [vmem:[%s4647 + $0xb] sm:$0x1]
        %v4660 = vld [vmem:[%s4647 + $0xc] sm:$0x1]
        %v4661 = vld [vmem:[%s4647 + $0xd] sm:$0x1]
        %v4662 = vld [vmem:[%s4647 + $0xe] sm:$0x1]
        %v4663 = vld [vmem:[%s4647 + $0xf] sm:$0x1]
        %v4664 = vadd.f32 %v4648, %v4643
        %v4665 = vadd.f32 %v4649, %v4644
        %v4666 = vadd.f32 %v4650, %v4645
        %v4667 = vadd.f32 %v4651, %v4646
        %v4668 = vadd.f32 %v4652, %v4643
        %v4669 = vadd.f32 %v4653, %v4644
        %v4670 = vadd.f32 %v4654, %v4645
        %v4671 = vadd.f32 %v4655, %v4646
        %v4672 = vadd.f32 %v4656, %v4643
        %v4673 = vadd.f32 %v4657, %v4644
        %v4674 = vadd.f32 %v4658, %v4645
        %v4675 = vadd.f32 %v4659, %v4646
        %v4676 = vadd.f32 %v4660, %v4643
        %v4677 = vadd.f32 %v4661, %v4644
        %v4678 = vadd.f32 %v4662, %v4645
        %v4679 = vadd.f32 %v4663, %v4646
        %v4680 = vmul.f32 %v4664, %v3129
        %v4681 = vmul.f32 %v4665, %v3129
        %v4682 = vmul.f32 %v4666, %v3129
        %v4683 = vmul.f32 %v4667, %v3129
        %v4684 = vmul.f32 %v4668, %v3129
        %v4685 = vmul.f32 %v4669, %v3129
        %v4686 = vmul.f32 %v4670, %v3129
        %v4687 = vmul.f32 %v4671, %v3129
        %v4688 = vmul.f32 %v4672, %v3129
        %v4689 = vmul.f32 %v4673, %v3129
        %v4690 = vmul.f32 %v4674, %v3129
        %v4691 = vmul.f32 %v4675, %v3129
        %v4692 = vmul.f32 %v4676, %v3129
        %v4693 = vmul.f32 %v4677, %v3129
        %v4694 = vmul.f32 %v4678, %v3129
        %v4695 = vmul.f32 %v4679, %v3129
        %v4696 = vsel %vm3149, %v4680, -inf
        %v4697 = vsel %vm3149, %v4681, -inf
        %v4698 = vmax.f32 %v4696, %v4697
        %v4699 = vsel %vm3149, %v4682, -inf
        %v4700 = vmax.f32 %v4698, %v4699
        %v4701 = vsel %vm3149, %v4683, -inf
        %v4702 = vmax.f32 %v4700, %v4701
        %v4703 = vsel %vm3149, %v4684, -inf
        %v4704 = vsel %vm3149, %v4685, -inf
        %v4705 = vmax.f32 %v4703, %v4704
        %v4706 = vsel %vm3149, %v4686, -inf
        %v4707 = vmax.f32 %v4705, %v4706
        %v4708 = vsel %vm3149, %v4687, -inf
        %v4709 = vmax.f32 %v4707, %v4708
        %v4710 = vsel %vm3149, %v4688, -inf
        %v4711 = vsel %vm3149, %v4689, -inf
        %v4712 = vmax.f32 %v4710, %v4711
        %v4713 = vsel %vm3149, %v4690, -inf
        %v4714 = vmax.f32 %v4712, %v4713
        %v4715 = vsel %vm3149, %v4691, -inf
        %v4716 = vmax.f32 %v4714, %v4715
        %v4717 = vsel %vm3149, %v4692, -inf
        %v4718 = vsel %vm3149, %v4693, -inf
        %v4719 = vmax.f32 %v4717, %v4718
        %v4720 = vsel %vm3149, %v4694, -inf
        %v4721 = vmax.f32 %v4719, %v4720
        %v4722 = vsel %vm3149, %v4695, -inf
        %v4723 = vmax.f32 %v4721, %v4722
        %v4724 = vsub.f32 %v4680, %v4702
        %v4725 = vsub.f32 %v4681, %v4702
        %v4726 = vsub.f32 %v4682, %v4702
        %v4727 = vsub.f32 %v4683, %v4702
        %v4728 = vsub.f32 %v4684, %v4709
        %v4729 = vsub.f32 %v4685, %v4709
        %v4730 = vsub.f32 %v4686, %v4709
        %v4731 = vsub.f32 %v4687, %v4709
        %v4732 = vsub.f32 %v4688, %v4716
        %v4733 = vsub.f32 %v4689, %v4716
        %v4734 = vsub.f32 %v4690, %v4716
        %v4735 = vsub.f32 %v4691, %v4716
        %v4736 = vsub.f32 %v4692, %v4723
        %v4737 = vsub.f32 %v4693, %v4723
        %v4738 = vsub.f32 %v4694, %v4723
        %v4739 = vsub.f32 %v4695, %v4723
        %v4740 = vmul.f32 %v4724, 1.442695
        %v4741 = vpow.pop %v4740
        %v4742 = vmul.f32 %v4725, 1.442695
        %v4743 = vpow.pop %v4742
        %v4744 = vmul.f32 %v4726, 1.442695
        %v4745 = vpow.pop %v4744
        %v4746 = vmul.f32 %v4727, 1.442695
        %v4747 = vpow.pop %v4746
        %v4748 = vmul.f32 %v4728, 1.442695
        %v4749 = vpow.pop %v4748
        %v4750 = vmul.f32 %v4729, 1.442695
        %v4751 = vpow.pop %v4750
        %v4752 = vmul.f32 %v4730, 1.442695
        %v4753 = vpow.pop %v4752
        %v4754 = vmul.f32 %v4731, 1.442695
        %v4755 = vpow.pop %v4754
        %v4756 = vmul.f32 %v4732, 1.442695
        %v4757 = vpow.pop %v4756
        %v4758 = vmul.f32 %v4733, 1.442695
        %v4759 = vpow.pop %v4758
        %v4760 = vmul.f32 %v4734, 1.442695
        %v4761 = vpow.pop %v4760
        %v4762 = vmul.f32 %v4735, 1.442695
        %v4763 = vpow.pop %v4762
        %v4764 = vmul.f32 %v4736, 1.442695
        %v4765 = vpow.pop %v4764
        %v4766 = vmul.f32 %v4737, 1.442695
        %v4767 = vpow.pop %v4766
        %v4768 = vmul.f32 %v4738, 1.442695
        %v4769 = vpow.pop %v4768
        %v4770 = vmul.f32 %v4739, 1.442695
        %v4771 = vpow.pop %v4770
        %v4772 = vsel %vm3226, %v4741, 0.0
        %v4773 = vsel %vm3226, %v4743, 0.0
        %v4774 = vadd.f32 %v4772, %v4773
        %v4775 = vsel %vm3226, %v4745, 0.0
        %v4776 = vadd.f32 %v4774, %v4775
        %v4777 = vsel %vm3226, %v4747, 0.0
        %v4778 = vadd.f32 %v4776, %v4777
        %v4779 = vsel %vm3226, %v4749, 0.0
        %v4780 = vsel %vm3226, %v4751, 0.0
        %v4781 = vadd.f32 %v4779, %v4780
        %v4782 = vsel %vm3226, %v4753, 0.0
        %v4783 = vadd.f32 %v4781, %v4782
        %v4784 = vsel %vm3226, %v4755, 0.0
        %v4785 = vadd.f32 %v4783, %v4784
        %v4786 = vsel %vm3226, %v4757, 0.0
        %v4787 = vsel %vm3226, %v4759, 0.0
        %v4788 = vadd.f32 %v4786, %v4787
        %v4789 = vsel %vm3226, %v4761, 0.0
        %v4790 = vadd.f32 %v4788, %v4789
        %v4791 = vsel %vm3226, %v4763, 0.0
        %v4792 = vadd.f32 %v4790, %v4791
        %v4793 = vsel %vm3226, %v4765, 0.0
        %v4794 = vsel %vm3226, %v4767, 0.0
        %v4795 = vadd.f32 %v4793, %v4794
        %v4796 = vsel %vm3226, %v4769, 0.0
        %v4797 = vadd.f32 %v4795, %v4796
        %v4798 = vsel %vm3226, %v4771, 0.0
        %v4799 = vadd.f32 %v4797, %v4798
        %v4800 = vlog2.pop %v4778
        %v4801 = vmul.f32 %v4800, 0.6931472
        %v4802 = vlog2.pop %v4785
        %v4803 = vmul.f32 %v4802, 0.6931472
        %v4804 = vlog2.pop %v4792
        %v4805 = vmul.f32 %v4804, 0.6931472
        %v4806 = vlog2.pop %v4799
        %v4807 = vmul.f32 %v4806, 0.6931472
        %v4808 = vadd.f32 %v4702, %v4801
        %v4809 = vadd.f32 %v4709, %v4803
        %v4810 = vadd.f32 %v4716, %v4805
        %v4811 = vadd.f32 %v4723, %v4807
        %v4812 = vmul.f32 %v3267, %v4808
        %v4813 = vmul.f32 %v3267, %v4809
        %v4814 = vmul.f32 %v3267, %v4810
        %v4815 = vmul.f32 %v3267, %v4811
        %s4816 = sadd.s32 %s3077, 6
        %s4817 = smul.u32 %s4816, 4
        %s4818 = scalar_lea.vmem %s256, %s4817
        %v4819 = vld [vmem:[%s4818] sm:$0x1]
        %v4820 = vld [vmem:[%s4818 + $0x1] sm:$0x1]
        %v4821 = vld [vmem:[%s4818 + $0x2] sm:$0x1]
        %v4822 = vld [vmem:[%s4818 + $0x3] sm:$0x1]
        %v4823 = vadd.f32 %v4819, %v4812
        %v4824 = vadd.f32 %v4820, %v4813
        %v4825 = vadd.f32 %v4821, %v4814
        %v4826 = vadd.f32 %v4822, %v4815
        %4827 = vst.msk [vmem:[%s4818] sm:$0x1] %vm3226, %v4823
        %4828 = vst.msk [vmem:[%s4818 + $0x1] sm:$0x1] %vm3226, %v4824
        %4829 = vst.msk [vmem:[%s4818 + $0x2] sm:$0x1] %vm3226, %v4825
        %4830 = vst.msk [vmem:[%s4818 + $0x3] sm:$0x1] %vm3226, %v4826
        %s4831 = scalar_lea.vmem %s232, %s4817
        %v4832 = vld [vmem:[%s4831] sm:$0x1]
        %v4833 = vld [vmem:[%s4831 + $0x1] sm:$0x1]
        %v4834 = vld [vmem:[%s4831 + $0x2] sm:$0x1]
        %v4835 = vld [vmem:[%s4831 + $0x3] sm:$0x1]
        %v4836 = vadd.f32 %v4832, %v4812
        %v4837 = vadd.f32 %v4833, %v4813
        %v4838 = vadd.f32 %v4834, %v4814
        %v4839 = vadd.f32 %v4835, %v4815
        %s4840 = scalar_lea.vmem %s246, 80
        %v4841 = vld [vmem:[%s4840] sm:$0x1]
        %v4842 = vld [vmem:[%s4840 + $0x1] sm:$0x1]
        %v4843 = vld [vmem:[%s4840 + $0x2] sm:$0x1]
        %v4844 = vld [vmem:[%s4840 + $0x3] sm:$0x1]
        %v4845 = vld [vmem:[%s4840 + $0x4] sm:$0x1]
        %v4846 = vld [vmem:[%s4840 + $0x5] sm:$0x1]
        %v4847 = vld [vmem:[%s4840 + $0x6] sm:$0x1]
        %v4848 = vld [vmem:[%s4840 + $0x7] sm:$0x1]
        %v4849 = vld [vmem:[%s4840 + $0x8] sm:$0x1]
        %v4850 = vld [vmem:[%s4840 + $0x9] sm:$0x1]
        %v4851 = vld [vmem:[%s4840 + $0xa] sm:$0x1]
        %v4852 = vld [vmem:[%s4840 + $0xb] sm:$0x1]
        %v4853 = vld [vmem:[%s4840 + $0xc] sm:$0x1]
        %v4854 = vld [vmem:[%s4840 + $0xd] sm:$0x1]
        %v4855 = vld [vmem:[%s4840 + $0xe] sm:$0x1]
        %v4856 = vld [vmem:[%s4840 + $0xf] sm:$0x1]
        %v4857 = vadd.f32 %v4841, %v4836
        %v4858 = vadd.f32 %v4842, %v4837
        %v4859 = vadd.f32 %v4843, %v4838
        %v4860 = vadd.f32 %v4844, %v4839
        %v4861 = vadd.f32 %v4845, %v4836
        %v4862 = vadd.f32 %v4846, %v4837
        %v4863 = vadd.f32 %v4847, %v4838
        %v4864 = vadd.f32 %v4848, %v4839
        %v4865 = vadd.f32 %v4849, %v4836
        %v4866 = vadd.f32 %v4850, %v4837
        %v4867 = vadd.f32 %v4851, %v4838
        %v4868 = vadd.f32 %v4852, %v4839
        %v4869 = vadd.f32 %v4853, %v4836
        %v4870 = vadd.f32 %v4854, %v4837
        %v4871 = vadd.f32 %v4855, %v4838
        %v4872 = vadd.f32 %v4856, %v4839
        %v4873 = vmul.f32 %v4857, %v3129
        %v4874 = vmul.f32 %v4858, %v3129
        %v4875 = vmul.f32 %v4859, %v3129
        %v4876 = vmul.f32 %v4860, %v3129
        %v4877 = vmul.f32 %v4861, %v3129
        %v4878 = vmul.f32 %v4862, %v3129
        %v4879 = vmul.f32 %v4863, %v3129
        %v4880 = vmul.f32 %v4864, %v3129
        %v4881 = vmul.f32 %v4865, %v3129
        %v4882 = vmul.f32 %v4866, %v3129
        %v4883 = vmul.f32 %v4867, %v3129
        %v4884 = vmul.f32 %v4868, %v3129
        %v4885 = vmul.f32 %v4869, %v3129
        %v4886 = vmul.f32 %v4870, %v3129
        %v4887 = vmul.f32 %v4871, %v3129
        %v4888 = vmul.f32 %v4872, %v3129
        %v4889 = vsel %vm3149, %v4873, -inf
        %v4890 = vsel %vm3149, %v4874, -inf
        %v4891 = vmax.f32 %v4889, %v4890
        %v4892 = vsel %vm3149, %v4875, -inf
        %v4893 = vmax.f32 %v4891, %v4892
        %v4894 = vsel %vm3149, %v4876, -inf
        %v4895 = vmax.f32 %v4893, %v4894
        %v4896 = vsel %vm3149, %v4877, -inf
        %v4897 = vsel %vm3149, %v4878, -inf
        %v4898 = vmax.f32 %v4896, %v4897
        %v4899 = vsel %vm3149, %v4879, -inf
        %v4900 = vmax.f32 %v4898, %v4899
        %v4901 = vsel %vm3149, %v4880, -inf
        %v4902 = vmax.f32 %v4900, %v4901
        %v4903 = vsel %vm3149, %v4881, -inf
        %v4904 = vsel %vm3149, %v4882, -inf
        %v4905 = vmax.f32 %v4903, %v4904
        %v4906 = vsel %vm3149, %v4883, -inf
        %v4907 = vmax.f32 %v4905, %v4906
        %v4908 = vsel %vm3149, %v4884, -inf
        %v4909 = vmax.f32 %v4907, %v4908
        %v4910 = vsel %vm3149, %v4885, -inf
        %v4911 = vsel %vm3149, %v4886, -inf
        %v4912 = vmax.f32 %v4910, %v4911
        %v4913 = vsel %vm3149, %v4887, -inf
        %v4914 = vmax.f32 %v4912, %v4913
        %v4915 = vsel %vm3149, %v4888, -inf
        %v4916 = vmax.f32 %v4914, %v4915
        %v4917 = vsub.f32 %v4873, %v4895
        %v4918 = vsub.f32 %v4874, %v4895
        %v4919 = vsub.f32 %v4875, %v4895
        %v4920 = vsub.f32 %v4876, %v4895
        %v4921 = vsub.f32 %v4877, %v4902
        %v4922 = vsub.f32 %v4878, %v4902
        %v4923 = vsub.f32 %v4879, %v4902
        %v4924 = vsub.f32 %v4880, %v4902
        %v4925 = vsub.f32 %v4881, %v4909
        %v4926 = vsub.f32 %v4882, %v4909
        %v4927 = vsub.f32 %v4883, %v4909
        %v4928 = vsub.f32 %v4884, %v4909
        %v4929 = vsub.f32 %v4885, %v4916
        %v4930 = vsub.f32 %v4886, %v4916
        %v4931 = vsub.f32 %v4887, %v4916
        %v4932 = vsub.f32 %v4888, %v4916
        %v4933 = vmul.f32 %v4917, 1.442695
        %v4934 = vpow.pop %v4933
        %v4935 = vmul.f32 %v4918, 1.442695
        %v4936 = vpow.pop %v4935
        %v4937 = vmul.f32 %v4919, 1.442695
        %v4938 = vpow.pop %v4937
        %v4939 = vmul.f32 %v4920, 1.442695
        %v4940 = vpow.pop %v4939
        %v4941 = vmul.f32 %v4921, 1.442695
        %v4942 = vpow.pop %v4941
        %v4943 = vmul.f32 %v4922, 1.442695
        %v4944 = vpow.pop %v4943
        %v4945 = vmul.f32 %v4923, 1.442695
        %v4946 = vpow.pop %v4945
        %v4947 = vmul.f32 %v4924, 1.442695
        %v4948 = vpow.pop %v4947
        %v4949 = vmul.f32 %v4925, 1.442695
        %v4950 = vpow.pop %v4949
        %v4951 = vmul.f32 %v4926, 1.442695
        %v4952 = vpow.pop %v4951
        %v4953 = vmul.f32 %v4927, 1.442695
        %v4954 = vpow.pop %v4953
        %v4955 = vmul.f32 %v4928, 1.442695
        %v4956 = vpow.pop %v4955
        %v4957 = vmul.f32 %v4929, 1.442695
        %v4958 = vpow.pop %v4957
        %v4959 = vmul.f32 %v4930, 1.442695
        %v4960 = vpow.pop %v4959
        %v4961 = vmul.f32 %v4931, 1.442695
        %v4962 = vpow.pop %v4961
        %v4963 = vmul.f32 %v4932, 1.442695
        %v4964 = vpow.pop %v4963
        %v4965 = vsel %vm3226, %v4934, 0.0
        %v4966 = vsel %vm3226, %v4936, 0.0
        %v4967 = vadd.f32 %v4965, %v4966
        %v4968 = vsel %vm3226, %v4938, 0.0
        %v4969 = vadd.f32 %v4967, %v4968
        %v4970 = vsel %vm3226, %v4940, 0.0
        %v4971 = vadd.f32 %v4969, %v4970
        %v4972 = vsel %vm3226, %v4942, 0.0
        %v4973 = vsel %vm3226, %v4944, 0.0
        %v4974 = vadd.f32 %v4972, %v4973
        %v4975 = vsel %vm3226, %v4946, 0.0
        %v4976 = vadd.f32 %v4974, %v4975
        %v4977 = vsel %vm3226, %v4948, 0.0
        %v4978 = vadd.f32 %v4976, %v4977
        %v4979 = vsel %vm3226, %v4950, 0.0
        %v4980 = vsel %vm3226, %v4952, 0.0
        %v4981 = vadd.f32 %v4979, %v4980
        %v4982 = vsel %vm3226, %v4954, 0.0
        %v4983 = vadd.f32 %v4981, %v4982
        %v4984 = vsel %vm3226, %v4956, 0.0
        %v4985 = vadd.f32 %v4983, %v4984
        %v4986 = vsel %vm3226, %v4958, 0.0
        %v4987 = vsel %vm3226, %v4960, 0.0
        %v4988 = vadd.f32 %v4986, %v4987
        %v4989 = vsel %vm3226, %v4962, 0.0
        %v4990 = vadd.f32 %v4988, %v4989
        %v4991 = vsel %vm3226, %v4964, 0.0
        %v4992 = vadd.f32 %v4990, %v4991
        %v4993 = vlog2.pop %v4971
        %v4994 = vmul.f32 %v4993, 0.6931472
        %v4995 = vlog2.pop %v4978
        %v4996 = vmul.f32 %v4995, 0.6931472
        %v4997 = vlog2.pop %v4985
        %v4998 = vmul.f32 %v4997, 0.6931472
        %v4999 = vlog2.pop %v4992
        %v5000 = vmul.f32 %v4999, 0.6931472
        %v5001 = vadd.f32 %v4895, %v4994
        %v5002 = vadd.f32 %v4902, %v4996
        %v5003 = vadd.f32 %v4909, %v4998
        %v5004 = vadd.f32 %v4916, %v5000
        %v5005 = vmul.f32 %v3267, %v5001
        %v5006 = vmul.f32 %v3267, %v5002
        %v5007 = vmul.f32 %v3267, %v5003
        %v5008 = vmul.f32 %v3267, %v5004
        %s5009 = sadd.s32 %s3077, 5
        %s5010 = smul.u32 %s5009, 4
        %s5011 = scalar_lea.vmem %s256, %s5010
        %v5012 = vld [vmem:[%s5011] sm:$0x1]
        %v5013 = vld [vmem:[%s5011 + $0x1] sm:$0x1]
        %v5014 = vld [vmem:[%s5011 + $0x2] sm:$0x1]
        %v5015 = vld [vmem:[%s5011 + $0x3] sm:$0x1]
        %v5016 = vadd.f32 %v5012, %v5005
        %v5017 = vadd.f32 %v5013, %v5006
        %v5018 = vadd.f32 %v5014, %v5007
        %v5019 = vadd.f32 %v5015, %v5008
        %5020 = vst.msk [vmem:[%s5011] sm:$0x1] %vm3226, %v5016
        %5021 = vst.msk [vmem:[%s5011 + $0x1] sm:$0x1] %vm3226, %v5017
        %5022 = vst.msk [vmem:[%s5011 + $0x2] sm:$0x1] %vm3226, %v5018
        %5023 = vst.msk [vmem:[%s5011 + $0x3] sm:$0x1] %vm3226, %v5019
        %s5024 = scalar_lea.vmem %s232, %s5010
        %v5025 = vld [vmem:[%s5024] sm:$0x1]
        %v5026 = vld [vmem:[%s5024 + $0x1] sm:$0x1]
        %v5027 = vld [vmem:[%s5024 + $0x2] sm:$0x1]
        %v5028 = vld [vmem:[%s5024 + $0x3] sm:$0x1]
        %v5029 = vadd.f32 %v5025, %v5005
        %v5030 = vadd.f32 %v5026, %v5006
        %v5031 = vadd.f32 %v5027, %v5007
        %v5032 = vadd.f32 %v5028, %v5008
        %s5033 = scalar_lea.vmem %s246, 64
        %v5034 = vld [vmem:[%s5033] sm:$0x1]
        %v5035 = vld [vmem:[%s5033 + $0x1] sm:$0x1]
        %v5036 = vld [vmem:[%s5033 + $0x2] sm:$0x1]
        %v5037 = vld [vmem:[%s5033 + $0x3] sm:$0x1]
        %v5038 = vld [vmem:[%s5033 + $0x4] sm:$0x1]
        %v5039 = vld [vmem:[%s5033 + $0x5] sm:$0x1]
        %v5040 = vld [vmem:[%s5033 + $0x6] sm:$0x1]
        %v5041 = vld [vmem:[%s5033 + $0x7] sm:$0x1]
        %v5042 = vld [vmem:[%s5033 + $0x8] sm:$0x1]
        %v5043 = vld [vmem:[%s5033 + $0x9] sm:$0x1]
        %v5044 = vld [vmem:[%s5033 + $0xa] sm:$0x1]
        %v5045 = vld [vmem:[%s5033 + $0xb] sm:$0x1]
        %v5046 = vld [vmem:[%s5033 + $0xc] sm:$0x1]
        %v5047 = vld [vmem:[%s5033 + $0xd] sm:$0x1]
        %v5048 = vld [vmem:[%s5033 + $0xe] sm:$0x1]
        %v5049 = vld [vmem:[%s5033 + $0xf] sm:$0x1]
        %v5050 = vadd.f32 %v5034, %v5029
        %v5051 = vadd.f32 %v5035, %v5030
        %v5052 = vadd.f32 %v5036, %v5031
        %v5053 = vadd.f32 %v5037, %v5032
        %v5054 = vadd.f32 %v5038, %v5029
        %v5055 = vadd.f32 %v5039, %v5030
        %v5056 = vadd.f32 %v5040, %v5031
        %v5057 = vadd.f32 %v5041, %v5032
        %v5058 = vadd.f32 %v5042, %v5029
        %v5059 = vadd.f32 %v5043, %v5030
        %v5060 = vadd.f32 %v5044, %v5031
        %v5061 = vadd.f32 %v5045, %v5032
        %v5062 = vadd.f32 %v5046, %v5029
        %v5063 = vadd.f32 %v5047, %v5030
        %v5064 = vadd.f32 %v5048, %v5031
        %v5065 = vadd.f32 %v5049, %v5032
        %v5066 = vmul.f32 %v5050, %v3129
        %v5067 = vmul.f32 %v5051, %v3129
        %v5068 = vmul.f32 %v5052, %v3129
        %v5069 = vmul.f32 %v5053, %v3129
        %v5070 = vmul.f32 %v5054, %v3129
        %v5071 = vmul.f32 %v5055, %v3129
        %v5072 = vmul.f32 %v5056, %v3129
        %v5073 = vmul.f32 %v5057, %v3129
        %v5074 = vmul.f32 %v5058, %v3129
        %v5075 = vmul.f32 %v5059, %v3129
        %v5076 = vmul.f32 %v5060, %v3129
        %v5077 = vmul.f32 %v5061, %v3129
        %v5078 = vmul.f32 %v5062, %v3129
        %v5079 = vmul.f32 %v5063, %v3129
        %v5080 = vmul.f32 %v5064, %v3129
        %v5081 = vmul.f32 %v5065, %v3129
        %v5082 = vsel %vm3149, %v5066, -inf
        %v5083 = vsel %vm3149, %v5067, -inf
        %v5084 = vmax.f32 %v5082, %v5083
        %v5085 = vsel %vm3149, %v5068, -inf
        %v5086 = vmax.f32 %v5084, %v5085
        %v5087 = vsel %vm3149, %v5069, -inf
        %v5088 = vmax.f32 %v5086, %v5087
        %v5089 = vsel %vm3149, %v5070, -inf
        %v5090 = vsel %vm3149, %v5071, -inf
        %v5091 = vmax.f32 %v5089, %v5090
        %v5092 = vsel %vm3149, %v5072, -inf
        %v5093 = vmax.f32 %v5091, %v5092
        %v5094 = vsel %vm3149, %v5073, -inf
        %v5095 = vmax.f32 %v5093, %v5094
        %v5096 = vsel %vm3149, %v5074, -inf
        %v5097 = vsel %vm3149, %v5075, -inf
        %v5098 = vmax.f32 %v5096, %v5097
        %v5099 = vsel %vm3149, %v5076, -inf
        %v5100 = vmax.f32 %v5098, %v5099
        %v5101 = vsel %vm3149, %v5077, -inf
        %v5102 = vmax.f32 %v5100, %v5101
        %v5103 = vsel %vm3149, %v5078, -inf
        %v5104 = vsel %vm3149, %v5079, -inf
        %v5105 = vmax.f32 %v5103, %v5104
        %v5106 = vsel %vm3149, %v5080, -inf
        %v5107 = vmax.f32 %v5105, %v5106
        %v5108 = vsel %vm3149, %v5081, -inf
        %v5109 = vmax.f32 %v5107, %v5108
        %v5110 = vsub.f32 %v5066, %v5088
        %v5111 = vsub.f32 %v5067, %v5088
        %v5112 = vsub.f32 %v5068, %v5088
        %v5113 = vsub.f32 %v5069, %v5088
        %v5114 = vsub.f32 %v5070, %v5095
        %v5115 = vsub.f32 %v5071, %v5095
        %v5116 = vsub.f32 %v5072, %v5095
        %v5117 = vsub.f32 %v5073, %v5095
        %v5118 = vsub.f32 %v5074, %v5102
        %v5119 = vsub.f32 %v5075, %v5102
        %v5120 = vsub.f32 %v5076, %v5102
        %v5121 = vsub.f32 %v5077, %v5102
        %v5122 = vsub.f32 %v5078, %v5109
        %v5123 = vsub.f32 %v5079, %v5109
        %v5124 = vsub.f32 %v5080, %v5109
        %v5125 = vsub.f32 %v5081, %v5109
        %v5126 = vmul.f32 %v5110, 1.442695
        %v5127 = vpow.pop %v5126
        %v5128 = vmul.f32 %v5111, 1.442695
        %v5129 = vpow.pop %v5128
        %v5130 = vmul.f32 %v5112, 1.442695
        %v5131 = vpow.pop %v5130
        %v5132 = vmul.f32 %v5113, 1.442695
        %v5133 = vpow.pop %v5132
        %v5134 = vmul.f32 %v5114, 1.442695
        %v5135 = vpow.pop %v5134
        %v5136 = vmul.f32 %v5115, 1.442695
        %v5137 = vpow.pop %v5136
        %v5138 = vmul.f32 %v5116, 1.442695
        %v5139 = vpow.pop %v5138
        %v5140 = vmul.f32 %v5117, 1.442695
        %v5141 = vpow.pop %v5140
        %v5142 = vmul.f32 %v5118, 1.442695
        %v5143 = vpow.pop %v5142
        %v5144 = vmul.f32 %v5119, 1.442695
        %v5145 = vpow.pop %v5144
        %v5146 = vmul.f32 %v5120, 1.442695
        %v5147 = vpow.pop %v5146
        %v5148 = vmul.f32 %v5121, 1.442695
        %v5149 = vpow.pop %v5148
        %v5150 = vmul.f32 %v5122, 1.442695
        %v5151 = vpow.pop %v5150
        %v5152 = vmul.f32 %v5123, 1.442695
        %v5153 = vpow.pop %v5152
        %v5154 = vmul.f32 %v5124, 1.442695
        %v5155 = vpow.pop %v5154
        %v5156 = vmul.f32 %v5125, 1.442695
        %v5157 = vpow.pop %v5156
        %v5158 = vsel %vm3226, %v5127, 0.0
        %v5159 = vsel %vm3226, %v5129, 0.0
        %v5160 = vadd.f32 %v5158, %v5159
        %v5161 = vsel %vm3226, %v5131, 0.0
        %v5162 = vadd.f32 %v5160, %v5161
        %v5163 = vsel %vm3226, %v5133, 0.0
        %v5164 = vadd.f32 %v5162, %v5163
        %v5165 = vsel %vm3226, %v5135, 0.0
        %v5166 = vsel %vm3226, %v5137, 0.0
        %v5167 = vadd.f32 %v5165, %v5166
        %v5168 = vsel %vm3226, %v5139, 0.0
        %v5169 = vadd.f32 %v5167, %v5168
        %v5170 = vsel %vm3226, %v5141, 0.0
        %v5171 = vadd.f32 %v5169, %v5170
        %v5172 = vsel %vm3226, %v5143, 0.0
        %v5173 = vsel %vm3226, %v5145, 0.0
        %v5174 = vadd.f32 %v5172, %v5173
        %v5175 = vsel %vm3226, %v5147, 0.0
        %v5176 = vadd.f32 %v5174, %v5175
        %v5177 = vsel %vm3226, %v5149, 0.0
        %v5178 = vadd.f32 %v5176, %v5177
        %v5179 = vsel %vm3226, %v5151, 0.0
        %v5180 = vsel %vm3226, %v5153, 0.0
        %v5181 = vadd.f32 %v5179, %v5180
        %v5182 = vsel %vm3226, %v5155, 0.0
        %v5183 = vadd.f32 %v5181, %v5182
        %v5184 = vsel %vm3226, %v5157, 0.0
        %v5185 = vadd.f32 %v5183, %v5184
        %v5186 = vlog2.pop %v5164
        %v5187 = vmul.f32 %v5186, 0.6931472
        %v5188 = vlog2.pop %v5171
        %v5189 = vmul.f32 %v5188, 0.6931472
        %v5190 = vlog2.pop %v5178
        %v5191 = vmul.f32 %v5190, 0.6931472
        %v5192 = vlog2.pop %v5185
        %v5193 = vmul.f32 %v5192, 0.6931472
        %v5194 = vadd.f32 %v5088, %v5187
        %v5195 = vadd.f32 %v5095, %v5189
        %v5196 = vadd.f32 %v5102, %v5191
        %v5197 = vadd.f32 %v5109, %v5193
        %v5198 = vmul.f32 %v3267, %v5194
        %v5199 = vmul.f32 %v3267, %v5195
        %v5200 = vmul.f32 %v3267, %v5196
        %v5201 = vmul.f32 %v3267, %v5197
        %s5202 = sadd.s32 %s3077, 4
        %s5203 = smul.u32 %s5202, 4
        %s5204 = scalar_lea.vmem %s256, %s5203
        %v5205 = vld [vmem:[%s5204] sm:$0x1]
        %v5206 = vld [vmem:[%s5204 + $0x1] sm:$0x1]
        %v5207 = vld [vmem:[%s5204 + $0x2] sm:$0x1]
        %v5208 = vld [vmem:[%s5204 + $0x3] sm:$0x1]
        %v5209 = vadd.f32 %v5205, %v5198
        %v5210 = vadd.f32 %v5206, %v5199
        %v5211 = vadd.f32 %v5207, %v5200
        %v5212 = vadd.f32 %v5208, %v5201
        %5213 = vst.msk [vmem:[%s5204] sm:$0x1] %vm3226, %v5209
        %5214 = vst.msk [vmem:[%s5204 + $0x1] sm:$0x1] %vm3226, %v5210
        %5215 = vst.msk [vmem:[%s5204 + $0x2] sm:$0x1] %vm3226, %v5211
        %5216 = vst.msk [vmem:[%s5204 + $0x3] sm:$0x1] %vm3226, %v5212
        %s5217 = scalar_lea.vmem %s232, %s5203
        %v5218 = vld [vmem:[%s5217] sm:$0x1]
        %v5219 = vld [vmem:[%s5217 + $0x1] sm:$0x1]
        %v5220 = vld [vmem:[%s5217 + $0x2] sm:$0x1]
        %v5221 = vld [vmem:[%s5217 + $0x3] sm:$0x1]
        %v5222 = vadd.f32 %v5218, %v5198
        %v5223 = vadd.f32 %v5219, %v5199
        %v5224 = vadd.f32 %v5220, %v5200
        %v5225 = vadd.f32 %v5221, %v5201
        %s5226 = scalar_lea.vmem %s246, 48
        %v5227 = vld [vmem:[%s5226] sm:$0x1]
        %v5228 = vld [vmem:[%s5226 + $0x1] sm:$0x1]
        %v5229 = vld [vmem:[%s5226 + $0x2] sm:$0x1]
        %v5230 = vld [vmem:[%s5226 + $0x3] sm:$0x1]
        %v5231 = vld [vmem:[%s5226 + $0x4] sm:$0x1]
        %v5232 = vld [vmem:[%s5226 + $0x5] sm:$0x1]
        %v5233 = vld [vmem:[%s5226 + $0x6] sm:$0x1]
        %v5234 = vld [vmem:[%s5226 + $0x7] sm:$0x1]
        %v5235 = vld [vmem:[%s5226 + $0x8] sm:$0x1]
        %v5236 = vld [vmem:[%s5226 + $0x9] sm:$0x1]
        %v5237 = vld [vmem:[%s5226 + $0xa] sm:$0x1]
        %v5238 = vld [vmem:[%s5226 + $0xb] sm:$0x1]
        %v5239 = vld [vmem:[%s5226 + $0xc] sm:$0x1]
        %v5240 = vld [vmem:[%s5226 + $0xd] sm:$0x1]
        %v5241 = vld [vmem:[%s5226 + $0xe] sm:$0x1]
        %v5242 = vld [vmem:[%s5226 + $0xf] sm:$0x1]
        %v5243 = vadd.f32 %v5227, %v5222
        %v5244 = vadd.f32 %v5228, %v5223
        %v5245 = vadd.f32 %v5229, %v5224
        %v5246 = vadd.f32 %v5230, %v5225
        %v5247 = vadd.f32 %v5231, %v5222
        %v5248 = vadd.f32 %v5232, %v5223
        %v5249 = vadd.f32 %v5233, %v5224
        %v5250 = vadd.f32 %v5234, %v5225
        %v5251 = vadd.f32 %v5235, %v5222
        %v5252 = vadd.f32 %v5236, %v5223
        %v5253 = vadd.f32 %v5237, %v5224
        %v5254 = vadd.f32 %v5238, %v5225
        %v5255 = vadd.f32 %v5239, %v5222
        %v5256 = vadd.f32 %v5240, %v5223
        %v5257 = vadd.f32 %v5241, %v5224
        %v5258 = vadd.f32 %v5242, %v5225
        %v5259 = vmul.f32 %v5243, %v3129
        %v5260 = vmul.f32 %v5244, %v3129
        %v5261 = vmul.f32 %v5245, %v3129
        %v5262 = vmul.f32 %v5246, %v3129
        %v5263 = vmul.f32 %v5247, %v3129
        %v5264 = vmul.f32 %v5248, %v3129
        %v5265 = vmul.f32 %v5249, %v3129
        %v5266 = vmul.f32 %v5250, %v3129
        %v5267 = vmul.f32 %v5251, %v3129
        %v5268 = vmul.f32 %v5252, %v3129
        %v5269 = vmul.f32 %v5253, %v3129
        %v5270 = vmul.f32 %v5254, %v3129
        %v5271 = vmul.f32 %v5255, %v3129
        %v5272 = vmul.f32 %v5256, %v3129
        %v5273 = vmul.f32 %v5257, %v3129
        %v5274 = vmul.f32 %v5258, %v3129
        %v5275 = vsel %vm3149, %v5259, -inf
        %v5276 = vsel %vm3149, %v5260, -inf
        %v5277 = vmax.f32 %v5275, %v5276
        %v5278 = vsel %vm3149, %v5261, -inf
        %v5279 = vmax.f32 %v5277, %v5278
        %v5280 = vsel %vm3149, %v5262, -inf
        %v5281 = vmax.f32 %v5279, %v5280
        %v5282 = vsel %vm3149, %v5263, -inf
        %v5283 = vsel %vm3149, %v5264, -inf
        %v5284 = vmax.f32 %v5282, %v5283
        %v5285 = vsel %vm3149, %v5265, -inf
        %v5286 = vmax.f32 %v5284, %v5285
        %v5287 = vsel %vm3149, %v5266, -inf
        %v5288 = vmax.f32 %v5286, %v5287
        %v5289 = vsel %vm3149, %v5267, -inf
        %v5290 = vsel %vm3149, %v5268, -inf
        %v5291 = vmax.f32 %v5289, %v5290
        %v5292 = vsel %vm3149, %v5269, -inf
        %v5293 = vmax.f32 %v5291, %v5292
        %v5294 = vsel %vm3149, %v5270, -inf
        %v5295 = vmax.f32 %v5293, %v5294
        %v5296 = vsel %vm3149, %v5271, -inf
        %v5297 = vsel %vm3149, %v5272, -inf
        %v5298 = vmax.f32 %v5296, %v5297
        %v5299 = vsel %vm3149, %v5273, -inf
        %v5300 = vmax.f32 %v5298, %v5299
        %v5301 = vsel %vm3149, %v5274, -inf
        %v5302 = vmax.f32 %v5300, %v5301
        %v5303 = vsub.f32 %v5259, %v5281
        %v5304 = vsub.f32 %v5260, %v5281
        %v5305 = vsub.f32 %v5261, %v5281
        %v5306 = vsub.f32 %v5262, %v5281
        %v5307 = vsub.f32 %v5263, %v5288
        %v5308 = vsub.f32 %v5264, %v5288
        %v5309 = vsub.f32 %v5265, %v5288
        %v5310 = vsub.f32 %v5266, %v5288
        %v5311 = vsub.f32 %v5267, %v5295
        %v5312 = vsub.f32 %v5268, %v5295
        %v5313 = vsub.f32 %v5269, %v5295
        %v5314 = vsub.f32 %v5270, %v5295
        %v5315 = vsub.f32 %v5271, %v5302
        %v5316 = vsub.f32 %v5272, %v5302
        %v5317 = vsub.f32 %v5273, %v5302
        %v5318 = vsub.f32 %v5274, %v5302
        %v5319 = vmul.f32 %v5303, 1.442695
        %v5320 = vpow.pop %v5319
        %v5321 = vmul.f32 %v5304, 1.442695
        %v5322 = vpow.pop %v5321
        %v5323 = vmul.f32 %v5305, 1.442695
        %v5324 = vpow.pop %v5323
        %v5325 = vmul.f32 %v5306, 1.442695
        %v5326 = vpow.pop %v5325
        %v5327 = vmul.f32 %v5307, 1.442695
        %v5328 = vpow.pop %v5327
        %v5329 = vmul.f32 %v5308, 1.442695
        %v5330 = vpow.pop %v5329
        %v5331 = vmul.f32 %v5309, 1.442695
        %v5332 = vpow.pop %v5331
        %v5333 = vmul.f32 %v5310, 1.442695
        %v5334 = vpow.pop %v5333
        %v5335 = vmul.f32 %v5311, 1.442695
        %v5336 = vpow.pop %v5335
        %v5337 = vmul.f32 %v5312, 1.442695
        %v5338 = vpow.pop %v5337
        %v5339 = vmul.f32 %v5313, 1.442695
        %v5340 = vpow.pop %v5339
        %v5341 = vmul.f32 %v5314, 1.442695
        %v5342 = vpow.pop %v5341
        %v5343 = vmul.f32 %v5315, 1.442695
        %v5344 = vpow.pop %v5343
        %v5345 = vmul.f32 %v5316, 1.442695
        %v5346 = vpow.pop %v5345
        %v5347 = vmul.f32 %v5317, 1.442695
        %v5348 = vpow.pop %v5347
        %v5349 = vmul.f32 %v5318, 1.442695
        %v5350 = vpow.pop %v5349
        %v5351 = vsel %vm3226, %v5320, 0.0
        %v5352 = vsel %vm3226, %v5322, 0.0
        %v5353 = vadd.f32 %v5351, %v5352
        %v5354 = vsel %vm3226, %v5324, 0.0
        %v5355 = vadd.f32 %v5353, %v5354
        %v5356 = vsel %vm3226, %v5326, 0.0
        %v5357 = vadd.f32 %v5355, %v5356
        %v5358 = vsel %vm3226, %v5328, 0.0
        %v5359 = vsel %vm3226, %v5330, 0.0
        %v5360 = vadd.f32 %v5358, %v5359
        %v5361 = vsel %vm3226, %v5332, 0.0
        %v5362 = vadd.f32 %v5360, %v5361
        %v5363 = vsel %vm3226, %v5334, 0.0
        %v5364 = vadd.f32 %v5362, %v5363
        %v5365 = vsel %vm3226, %v5336, 0.0
        %v5366 = vsel %vm3226, %v5338, 0.0
        %v5367 = vadd.f32 %v5365, %v5366
        %v5368 = vsel %vm3226, %v5340, 0.0
        %v5369 = vadd.f32 %v5367, %v5368
        %v5370 = vsel %vm3226, %v5342, 0.0
        %v5371 = vadd.f32 %v5369, %v5370
        %v5372 = vsel %vm3226, %v5344, 0.0
        %v5373 = vsel %vm3226, %v5346, 0.0
        %v5374 = vadd.f32 %v5372, %v5373
        %v5375 = vsel %vm3226, %v5348, 0.0
        %v5376 = vadd.f32 %v5374, %v5375
        %v5377 = vsel %vm3226, %v5350, 0.0
        %v5378 = vadd.f32 %v5376, %v5377
        %v5379 = vlog2.pop %v5357
        %v5380 = vmul.f32 %v5379, 0.6931472
        %v5381 = vlog2.pop %v5364
        %v5382 = vmul.f32 %v5381, 0.6931472
        %v5383 = vlog2.pop %v5371
        %v5384 = vmul.f32 %v5383, 0.6931472
        %v5385 = vlog2.pop %v5378
        %v5386 = vmul.f32 %v5385, 0.6931472
        %v5387 = vadd.f32 %v5281, %v5380
        %v5388 = vadd.f32 %v5288, %v5382
        %v5389 = vadd.f32 %v5295, %v5384
        %v5390 = vadd.f32 %v5302, %v5386
        %v5391 = vmul.f32 %v3267, %v5387
        %v5392 = vmul.f32 %v3267, %v5388
        %v5393 = vmul.f32 %v3267, %v5389
        %v5394 = vmul.f32 %v3267, %v5390
        %s5395 = sadd.s32 %s3077, 3
        %s5396 = smul.u32 %s5395, 4
        %s5397 = scalar_lea.vmem %s256, %s5396
        %v5398 = vld [vmem:[%s5397] sm:$0x1]
        %v5399 = vld [vmem:[%s5397 + $0x1] sm:$0x1]
        %v5400 = vld [vmem:[%s5397 + $0x2] sm:$0x1]
        %v5401 = vld [vmem:[%s5397 + $0x3] sm:$0x1]
        %v5402 = vadd.f32 %v5398, %v5391
        %v5403 = vadd.f32 %v5399, %v5392
        %v5404 = vadd.f32 %v5400, %v5393
        %v5405 = vadd.f32 %v5401, %v5394
        %5406 = vst.msk [vmem:[%s5397] sm:$0x1] %vm3226, %v5402
        %5407 = vst.msk [vmem:[%s5397 + $0x1] sm:$0x1] %vm3226, %v5403
        %5408 = vst.msk [vmem:[%s5397 + $0x2] sm:$0x1] %vm3226, %v5404
        %5409 = vst.msk [vmem:[%s5397 + $0x3] sm:$0x1] %vm3226, %v5405
        %s5410 = scalar_lea.vmem %s232, %s5396
        %v5411 = vld [vmem:[%s5410] sm:$0x1]
        %v5412 = vld [vmem:[%s5410 + $0x1] sm:$0x1]
        %v5413 = vld [vmem:[%s5410 + $0x2] sm:$0x1]
        %v5414 = vld [vmem:[%s5410 + $0x3] sm:$0x1]
        %v5415 = vadd.f32 %v5411, %v5391
        %v5416 = vadd.f32 %v5412, %v5392
        %v5417 = vadd.f32 %v5413, %v5393
        %v5418 = vadd.f32 %v5414, %v5394
        %s5419 = scalar_lea.vmem %s246, 32
        %v5420 = vld [vmem:[%s5419] sm:$0x1]
        %v5421 = vld [vmem:[%s5419 + $0x1] sm:$0x1]
        %v5422 = vld [vmem:[%s5419 + $0x2] sm:$0x1]
        %v5423 = vld [vmem:[%s5419 + $0x3] sm:$0x1]
        %v5424 = vld [vmem:[%s5419 + $0x4] sm:$0x1]
        %v5425 = vld [vmem:[%s5419 + $0x5] sm:$0x1]
        %v5426 = vld [vmem:[%s5419 + $0x6] sm:$0x1]
        %v5427 = vld [vmem:[%s5419 + $0x7] sm:$0x1]
        %v5428 = vld [vmem:[%s5419 + $0x8] sm:$0x1]
        %v5429 = vld [vmem:[%s5419 + $0x9] sm:$0x1]
        %v5430 = vld [vmem:[%s5419 + $0xa] sm:$0x1]
        %v5431 = vld [vmem:[%s5419 + $0xb] sm:$0x1]
        %v5432 = vld [vmem:[%s5419 + $0xc] sm:$0x1]
        %v5433 = vld [vmem:[%s5419 + $0xd] sm:$0x1]
        %v5434 = vld [vmem:[%s5419 + $0xe] sm:$0x1]
        %v5435 = vld [vmem:[%s5419 + $0xf] sm:$0x1]
        %v5436 = vadd.f32 %v5420, %v5415
        %v5437 = vadd.f32 %v5421, %v5416
        %v5438 = vadd.f32 %v5422, %v5417
        %v5439 = vadd.f32 %v5423, %v5418
        %v5440 = vadd.f32 %v5424, %v5415
        %v5441 = vadd.f32 %v5425, %v5416
        %v5442 = vadd.f32 %v5426, %v5417
        %v5443 = vadd.f32 %v5427, %v5418
        %v5444 = vadd.f32 %v5428, %v5415
        %v5445 = vadd.f32 %v5429, %v5416
        %v5446 = vadd.f32 %v5430, %v5417
        %v5447 = vadd.f32 %v5431, %v5418
        %v5448 = vadd.f32 %v5432, %v5415
        %v5449 = vadd.f32 %v5433, %v5416
        %v5450 = vadd.f32 %v5434, %v5417
        %v5451 = vadd.f32 %v5435, %v5418
        %v5452 = vmul.f32 %v5436, %v3129
        %v5453 = vmul.f32 %v5437, %v3129
        %v5454 = vmul.f32 %v5438, %v3129
        %v5455 = vmul.f32 %v5439, %v3129
        %v5456 = vmul.f32 %v5440, %v3129
        %v5457 = vmul.f32 %v5441, %v3129
        %v5458 = vmul.f32 %v5442, %v3129
        %v5459 = vmul.f32 %v5443, %v3129
        %v5460 = vmul.f32 %v5444, %v3129
        %v5461 = vmul.f32 %v5445, %v3129
        %v5462 = vmul.f32 %v5446, %v3129
        %v5463 = vmul.f32 %v5447, %v3129
        %v5464 = vmul.f32 %v5448, %v3129
        %v5465 = vmul.f32 %v5449, %v3129
        %v5466 = vmul.f32 %v5450, %v3129
        %v5467 = vmul.f32 %v5451, %v3129
        %v5468 = vsel %vm3149, %v5452, -inf
        %v5469 = vsel %vm3149, %v5453, -inf
        %v5470 = vmax.f32 %v5468, %v5469
        %v5471 = vsel %vm3149, %v5454, -inf
        %v5472 = vmax.f32 %v5470, %v5471
        %v5473 = vsel %vm3149, %v5455, -inf
        %v5474 = vmax.f32 %v5472, %v5473
        %v5475 = vsel %vm3149, %v5456, -inf
        %v5476 = vsel %vm3149, %v5457, -inf
        %v5477 = vmax.f32 %v5475, %v5476
        %v5478 = vsel %vm3149, %v5458, -inf
        %v5479 = vmax.f32 %v5477, %v5478
        %v5480 = vsel %vm3149, %v5459, -inf
        %v5481 = vmax.f32 %v5479, %v5480
        %v5482 = vsel %vm3149, %v5460, -inf
        %v5483 = vsel %vm3149, %v5461, -inf
        %v5484 = vmax.f32 %v5482, %v5483
        %v5485 = vsel %vm3149, %v5462, -inf
        %v5486 = vmax.f32 %v5484, %v5485
        %v5487 = vsel %vm3149, %v5463, -inf
        %v5488 = vmax.f32 %v5486, %v5487
        %v5489 = vsel %vm3149, %v5464, -inf
        %v5490 = vsel %vm3149, %v5465, -inf
        %v5491 = vmax.f32 %v5489, %v5490
        %v5492 = vsel %vm3149, %v5466, -inf
        %v5493 = vmax.f32 %v5491, %v5492
        %v5494 = vsel %vm3149, %v5467, -inf
        %v5495 = vmax.f32 %v5493, %v5494
        %v5496 = vsub.f32 %v5452, %v5474
        %v5497 = vsub.f32 %v5453, %v5474
        %v5498 = vsub.f32 %v5454, %v5474
        %v5499 = vsub.f32 %v5455, %v5474
        %v5500 = vsub.f32 %v5456, %v5481
        %v5501 = vsub.f32 %v5457, %v5481
        %v5502 = vsub.f32 %v5458, %v5481
        %v5503 = vsub.f32 %v5459, %v5481
        %v5504 = vsub.f32 %v5460, %v5488
        %v5505 = vsub.f32 %v5461, %v5488
        %v5506 = vsub.f32 %v5462, %v5488
        %v5507 = vsub.f32 %v5463, %v5488
        %v5508 = vsub.f32 %v5464, %v5495
        %v5509 = vsub.f32 %v5465, %v5495
        %v5510 = vsub.f32 %v5466, %v5495
        %v5511 = vsub.f32 %v5467, %v5495
        %v5512 = vmul.f32 %v5496, 1.442695
        %v5513 = vpow.pop %v5512
        %v5514 = vmul.f32 %v5497, 1.442695
        %v5515 = vpow.pop %v5514
        %v5516 = vmul.f32 %v5498, 1.442695
        %v5517 = vpow.pop %v5516
        %v5518 = vmul.f32 %v5499, 1.442695
        %v5519 = vpow.pop %v5518
        %v5520 = vmul.f32 %v5500, 1.442695
        %v5521 = vpow.pop %v5520
        %v5522 = vmul.f32 %v5501, 1.442695
        %v5523 = vpow.pop %v5522
        %v5524 = vmul.f32 %v5502, 1.442695
        %v5525 = vpow.pop %v5524
        %v5526 = vmul.f32 %v5503, 1.442695
        %v5527 = vpow.pop %v5526
        %v5528 = vmul.f32 %v5504, 1.442695
        %v5529 = vpow.pop %v5528
        %v5530 = vmul.f32 %v5505, 1.442695
        %v5531 = vpow.pop %v5530
        %v5532 = vmul.f32 %v5506, 1.442695
        %v5533 = vpow.pop %v5532
        %v5534 = vmul.f32 %v5507, 1.442695
        %v5535 = vpow.pop %v5534
        %v5536 = vmul.f32 %v5508, 1.442695
        %v5537 = vpow.pop %v5536
        %v5538 = vmul.f32 %v5509, 1.442695
        %v5539 = vpow.pop %v5538
        %v5540 = vmul.f32 %v5510, 1.442695
        %v5541 = vpow.pop %v5540
        %v5542 = vmul.f32 %v5511, 1.442695
        %v5543 = vpow.pop %v5542
        %v5544 = vsel %vm3226, %v5513, 0.0
        %v5545 = vsel %vm3226, %v5515, 0.0
        %v5546 = vadd.f32 %v5544, %v5545
        %v5547 = vsel %vm3226, %v5517, 0.0
        %v5548 = vadd.f32 %v5546, %v5547
        %v5549 = vsel %vm3226, %v5519, 0.0
        %v5550 = vadd.f32 %v5548, %v5549
        %v5551 = vsel %vm3226, %v5521, 0.0
        %v5552 = vsel %vm3226, %v5523, 0.0
        %v5553 = vadd.f32 %v5551, %v5552
        %v5554 = vsel %vm3226, %v5525, 0.0
        %v5555 = vadd.f32 %v5553, %v5554
        %v5556 = vsel %vm3226, %v5527, 0.0
        %v5557 = vadd.f32 %v5555, %v5556
        %v5558 = vsel %vm3226, %v5529, 0.0
        %v5559 = vsel %vm3226, %v5531, 0.0
        %v5560 = vadd.f32 %v5558, %v5559
        %v5561 = vsel %vm3226, %v5533, 0.0
        %v5562 = vadd.f32 %v5560, %v5561
        %v5563 = vsel %vm3226, %v5535, 0.0
        %v5564 = vadd.f32 %v5562, %v5563
        %v5565 = vsel %vm3226, %v5537, 0.0
        %v5566 = vsel %vm3226, %v5539, 0.0
        %v5567 = vadd.f32 %v5565, %v5566
        %v5568 = vsel %vm3226, %v5541, 0.0
        %v5569 = vadd.f32 %v5567, %v5568
        %v5570 = vsel %vm3226, %v5543, 0.0
        %v5571 = vadd.f32 %v5569, %v5570
        %v5572 = vlog2.pop %v5550
        %v5573 = vmul.f32 %v5572, 0.6931472
        %v5574 = vlog2.pop %v5557
        %v5575 = vmul.f32 %v5574, 0.6931472
        %v5576 = vlog2.pop %v5564
        %v5577 = vmul.f32 %v5576, 0.6931472
        %v5578 = vlog2.pop %v5571
        %v5579 = vmul.f32 %v5578, 0.6931472
        %v5580 = vadd.f32 %v5474, %v5573
        %v5581 = vadd.f32 %v5481, %v5575
        %v5582 = vadd.f32 %v5488, %v5577
        %v5583 = vadd.f32 %v5495, %v5579
        %v5584 = vmul.f32 %v3267, %v5580
        %v5585 = vmul.f32 %v3267, %v5581
        %v5586 = vmul.f32 %v3267, %v5582
        %v5587 = vmul.f32 %v3267, %v5583
        %s5588 = sadd.s32 %s3077, 2
        %s5589 = smul.u32 %s5588, 4
        %s5590 = scalar_lea.vmem %s256, %s5589
        %v5591 = vld [vmem:[%s5590] sm:$0x1]
        %v5592 = vld [vmem:[%s5590 + $0x1] sm:$0x1]
        %v5593 = vld [vmem:[%s5590 + $0x2] sm:$0x1]
        %v5594 = vld [vmem:[%s5590 + $0x3] sm:$0x1]
        %v5595 = vadd.f32 %v5591, %v5584
        %v5596 = vadd.f32 %v5592, %v5585
        %v5597 = vadd.f32 %v5593, %v5586
        %v5598 = vadd.f32 %v5594, %v5587
        %5599 = vst.msk [vmem:[%s5590] sm:$0x1] %vm3226, %v5595
        %5600 = vst.msk [vmem:[%s5590 + $0x1] sm:$0x1] %vm3226, %v5596
        %5601 = vst.msk [vmem:[%s5590 + $0x2] sm:$0x1] %vm3226, %v5597
        %5602 = vst.msk [vmem:[%s5590 + $0x3] sm:$0x1] %vm3226, %v5598
        %s5603 = scalar_lea.vmem %s232, %s5589
        %v5604 = vld [vmem:[%s5603] sm:$0x1]
        %v5605 = vld [vmem:[%s5603 + $0x1] sm:$0x1]
        %v5606 = vld [vmem:[%s5603 + $0x2] sm:$0x1]
        %v5607 = vld [vmem:[%s5603 + $0x3] sm:$0x1]
        %v5608 = vadd.f32 %v5604, %v5584
        %v5609 = vadd.f32 %v5605, %v5585
        %v5610 = vadd.f32 %v5606, %v5586
        %v5611 = vadd.f32 %v5607, %v5587
        %s5612 = scalar_lea.vmem %s246, 16
        %v5613 = vld [vmem:[%s5612] sm:$0x1]
        %v5614 = vld [vmem:[%s5612 + $0x1] sm:$0x1]
        %v5615 = vld [vmem:[%s5612 + $0x2] sm:$0x1]
        %v5616 = vld [vmem:[%s5612 + $0x3] sm:$0x1]
        %v5617 = vld [vmem:[%s5612 + $0x4] sm:$0x1]
        %v5618 = vld [vmem:[%s5612 + $0x5] sm:$0x1]
        %v5619 = vld [vmem:[%s5612 + $0x6] sm:$0x1]
        %v5620 = vld [vmem:[%s5612 + $0x7] sm:$0x1]
        %v5621 = vld [vmem:[%s5612 + $0x8] sm:$0x1]
        %v5622 = vld [vmem:[%s5612 + $0x9] sm:$0x1]
        %v5623 = vld [vmem:[%s5612 + $0xa] sm:$0x1]
        %v5624 = vld [vmem:[%s5612 + $0xb] sm:$0x1]
        %v5625 = vld [vmem:[%s5612 + $0xc] sm:$0x1]
        %v5626 = vld [vmem:[%s5612 + $0xd] sm:$0x1]
        %v5627 = vld [vmem:[%s5612 + $0xe] sm:$0x1]
        %v5628 = vld [vmem:[%s5612 + $0xf] sm:$0x1]
        %v5629 = vadd.f32 %v5613, %v5608
        %v5630 = vadd.f32 %v5614, %v5609
        %v5631 = vadd.f32 %v5615, %v5610
        %v5632 = vadd.f32 %v5616, %v5611
        %v5633 = vadd.f32 %v5617, %v5608
        %v5634 = vadd.f32 %v5618, %v5609
        %v5635 = vadd.f32 %v5619, %v5610
        %v5636 = vadd.f32 %v5620, %v5611
        %v5637 = vadd.f32 %v5621, %v5608
        %v5638 = vadd.f32 %v5622, %v5609
        %v5639 = vadd.f32 %v5623, %v5610
        %v5640 = vadd.f32 %v5624, %v5611
        %v5641 = vadd.f32 %v5625, %v5608
        %v5642 = vadd.f32 %v5626, %v5609
        %v5643 = vadd.f32 %v5627, %v5610
        %v5644 = vadd.f32 %v5628, %v5611
        %v5645 = vmul.f32 %v5629, %v3129
        %v5646 = vmul.f32 %v5630, %v3129
        %v5647 = vmul.f32 %v5631, %v3129
        %v5648 = vmul.f32 %v5632, %v3129
        %v5649 = vmul.f32 %v5633, %v3129
        %v5650 = vmul.f32 %v5634, %v3129
        %v5651 = vmul.f32 %v5635, %v3129
        %v5652 = vmul.f32 %v5636, %v3129
        %v5653 = vmul.f32 %v5637, %v3129
        %v5654 = vmul.f32 %v5638, %v3129
        %v5655 = vmul.f32 %v5639, %v3129
        %v5656 = vmul.f32 %v5640, %v3129
        %v5657 = vmul.f32 %v5641, %v3129
        %v5658 = vmul.f32 %v5642, %v3129
        %v5659 = vmul.f32 %v5643, %v3129
        %v5660 = vmul.f32 %v5644, %v3129
        %v5661 = vsel %vm3149, %v5645, -inf
        %v5662 = vsel %vm3149, %v5646, -inf
        %v5663 = vmax.f32 %v5661, %v5662
        %v5664 = vsel %vm3149, %v5647, -inf
        %v5665 = vmax.f32 %v5663, %v5664
        %v5666 = vsel %vm3149, %v5648, -inf
        %v5667 = vmax.f32 %v5665, %v5666
        %v5668 = vsel %vm3149, %v5649, -inf
        %v5669 = vsel %vm3149, %v5650, -inf
        %v5670 = vmax.f32 %v5668, %v5669
        %v5671 = vsel %vm3149, %v5651, -inf
        %v5672 = vmax.f32 %v5670, %v5671
        %v5673 = vsel %vm3149, %v5652, -inf
        %v5674 = vmax.f32 %v5672, %v5673
        %v5675 = vsel %vm3149, %v5653, -inf
        %v5676 = vsel %vm3149, %v5654, -inf
        %v5677 = vmax.f32 %v5675, %v5676
        %v5678 = vsel %vm3149, %v5655, -inf
        %v5679 = vmax.f32 %v5677, %v5678
        %v5680 = vsel %vm3149, %v5656, -inf
        %v5681 = vmax.f32 %v5679, %v5680
        %v5682 = vsel %vm3149, %v5657, -inf
        %v5683 = vsel %vm3149, %v5658, -inf
        %v5684 = vmax.f32 %v5682, %v5683
        %v5685 = vsel %vm3149, %v5659, -inf
        %v5686 = vmax.f32 %v5684, %v5685
        %v5687 = vsel %vm3149, %v5660, -inf
        %v5688 = vmax.f32 %v5686, %v5687
        %v5689 = vsub.f32 %v5645, %v5667
        %v5690 = vsub.f32 %v5646, %v5667
        %v5691 = vsub.f32 %v5647, %v5667
        %v5692 = vsub.f32 %v5648, %v5667
        %v5693 = vsub.f32 %v5649, %v5674
        %v5694 = vsub.f32 %v5650, %v5674
        %v5695 = vsub.f32 %v5651, %v5674
        %v5696 = vsub.f32 %v5652, %v5674
        %v5697 = vsub.f32 %v5653, %v5681
        %v5698 = vsub.f32 %v5654, %v5681
        %v5699 = vsub.f32 %v5655, %v5681
        %v5700 = vsub.f32 %v5656, %v5681
        %v5701 = vsub.f32 %v5657, %v5688
        %v5702 = vsub.f32 %v5658, %v5688
        %v5703 = vsub.f32 %v5659, %v5688
        %v5704 = vsub.f32 %v5660, %v5688
        %v5705 = vmul.f32 %v5689, 1.442695
        %v5706 = vpow.pop %v5705
        %v5707 = vmul.f32 %v5690, 1.442695
        %v5708 = vpow.pop %v5707
        %v5709 = vmul.f32 %v5691, 1.442695
        %v5710 = vpow.pop %v5709
        %v5711 = vmul.f32 %v5692, 1.442695
        %v5712 = vpow.pop %v5711
        %v5713 = vmul.f32 %v5693, 1.442695
        %v5714 = vpow.pop %v5713
        %v5715 = vmul.f32 %v5694, 1.442695
        %v5716 = vpow.pop %v5715
        %v5717 = vmul.f32 %v5695, 1.442695
        %v5718 = vpow.pop %v5717
        %v5719 = vmul.f32 %v5696, 1.442695
        %v5720 = vpow.pop %v5719
        %v5721 = vmul.f32 %v5697, 1.442695
        %v5722 = vpow.pop %v5721
        %v5723 = vmul.f32 %v5698, 1.442695
        %v5724 = vpow.pop %v5723
        %v5725 = vmul.f32 %v5699, 1.442695
        %v5726 = vpow.pop %v5725
        %v5727 = vmul.f32 %v5700, 1.442695
        %v5728 = vpow.pop %v5727
        %v5729 = vmul.f32 %v5701, 1.442695
        %v5730 = vpow.pop %v5729
        %v5731 = vmul.f32 %v5702, 1.442695
        %v5732 = vpow.pop %v5731
        %v5733 = vmul.f32 %v5703, 1.442695
        %v5734 = vpow.pop %v5733
        %v5735 = vmul.f32 %v5704, 1.442695
        %v5736 = vpow.pop %v5735
        %v5737 = vsel %vm3226, %v5706, 0.0
        %v5738 = vsel %vm3226, %v5708, 0.0
        %v5739 = vadd.f32 %v5737, %v5738
        %v5740 = vsel %vm3226, %v5710, 0.0
        %v5741 = vadd.f32 %v5739, %v5740
        %v5742 = vsel %vm3226, %v5712, 0.0
        %v5743 = vadd.f32 %v5741, %v5742
        %v5744 = vsel %vm3226, %v5714, 0.0
        %v5745 = vsel %vm3226, %v5716, 0.0
        %v5746 = vadd.f32 %v5744, %v5745
        %v5747 = vsel %vm3226, %v5718, 0.0
        %v5748 = vadd.f32 %v5746, %v5747
        %v5749 = vsel %vm3226, %v5720, 0.0
        %v5750 = vadd.f32 %v5748, %v5749
        %v5751 = vsel %vm3226, %v5722, 0.0
        %v5752 = vsel %vm3226, %v5724, 0.0
        %v5753 = vadd.f32 %v5751, %v5752
        %v5754 = vsel %vm3226, %v5726, 0.0
        %v5755 = vadd.f32 %v5753, %v5754
        %v5756 = vsel %vm3226, %v5728, 0.0
        %v5757 = vadd.f32 %v5755, %v5756
        %v5758 = vsel %vm3226, %v5730, 0.0
        %v5759 = vsel %vm3226, %v5732, 0.0
        %v5760 = vadd.f32 %v5758, %v5759
        %v5761 = vsel %vm3226, %v5734, 0.0
        %v5762 = vadd.f32 %v5760, %v5761
        %v5763 = vsel %vm3226, %v5736, 0.0
        %v5764 = vadd.f32 %v5762, %v5763
        %v5765 = vlog2.pop %v5743
        %v5766 = vmul.f32 %v5765, 0.6931472
        %v5767 = vlog2.pop %v5750
        %v5768 = vmul.f32 %v5767, 0.6931472
        %v5769 = vlog2.pop %v5757
        %v5770 = vmul.f32 %v5769, 0.6931472
        %v5771 = vlog2.pop %v5764
        %v5772 = vmul.f32 %v5771, 0.6931472
        %v5773 = vadd.f32 %v5667, %v5766
        %v5774 = vadd.f32 %v5674, %v5768
        %v5775 = vadd.f32 %v5681, %v5770
        %v5776 = vadd.f32 %v5688, %v5772
        %v5777 = vmul.f32 %v3267, %v5773
        %v5778 = vmul.f32 %v3267, %v5774
        %v5779 = vmul.f32 %v3267, %v5775
        %v5780 = vmul.f32 %v3267, %v5776
        %s5781 = sadd.s32 %s3077, 1
        %s5782 = smul.u32 %s5781, 4
        %s5783 = scalar_lea.vmem %s256, %s5782
        %v5784 = vld [vmem:[%s5783] sm:$0x1]
        %v5785 = vld [vmem:[%s5783 + $0x1] sm:$0x1]
        %v5786 = vld [vmem:[%s5783 + $0x2] sm:$0x1]
        %v5787 = vld [vmem:[%s5783 + $0x3] sm:$0x1]
        %v5788 = vadd.f32 %v5784, %v5777
        %v5789 = vadd.f32 %v5785, %v5778
        %v5790 = vadd.f32 %v5786, %v5779
        %v5791 = vadd.f32 %v5787, %v5780
        %5792 = vst.msk [vmem:[%s5783] sm:$0x1] %vm3226, %v5788
        %5793 = vst.msk [vmem:[%s5783 + $0x1] sm:$0x1] %vm3226, %v5789
        %5794 = vst.msk [vmem:[%s5783 + $0x2] sm:$0x1] %vm3226, %v5790
        %5795 = vst.msk [vmem:[%s5783 + $0x3] sm:$0x1] %vm3226, %v5791
        %s5796 = scalar_lea.vmem %s232, %s5782
        %v5797 = vld [vmem:[%s5796] sm:$0x1]
        %v5798 = vld [vmem:[%s5796 + $0x1] sm:$0x1]
        %v5799 = vld [vmem:[%s5796 + $0x2] sm:$0x1]
        %v5800 = vld [vmem:[%s5796 + $0x3] sm:$0x1]
        %v5801 = vadd.f32 %v5797, %v5777
        %v5802 = vadd.f32 %v5798, %v5778
        %v5803 = vadd.f32 %v5799, %v5779
        %v5804 = vadd.f32 %v5800, %v5780
        %v5805 = vld [vmem:[%s246] sm:$0x1]
        %v5806 = vld [vmem:[%s246 + $0x1] sm:$0x1]
        %v5807 = vld [vmem:[%s246 + $0x2] sm:$0x1]
        %v5808 = vld [vmem:[%s246 + $0x3] sm:$0x1]
        %v5809 = vld [vmem:[%s246 + $0x4] sm:$0x1]
        %v5810 = vld [vmem:[%s246 + $0x5] sm:$0x1]
        %v5811 = vld [vmem:[%s246 + $0x6] sm:$0x1]
        %v5812 = vld [vmem:[%s246 + $0x7] sm:$0x1]
        %v5813 = vld [vmem:[%s246 + $0x8] sm:$0x1]
        %v5814 = vld [vmem:[%s246 + $0x9] sm:$0x1]
        %v5815 = vld [vmem:[%s246 + $0xa] sm:$0x1]
        %v5816 = vld [vmem:[%s246 + $0xb] sm:$0x1]
        %v5817 = vld [vmem:[%s246 + $0xc] sm:$0x1]
        %v5818 = vld [vmem:[%s246 + $0xd] sm:$0x1]
        %v5819 = vld [vmem:[%s246 + $0xe] sm:$0x1]
        %v5820 = vld [vmem:[%s246 + $0xf] sm:$0x1]
        %v5821 = vadd.f32 %v5805, %v5801
        %v5822 = vadd.f32 %v5806, %v5802
        %v5823 = vadd.f32 %v5807, %v5803
        %v5824 = vadd.f32 %v5808, %v5804
        %v5825 = vadd.f32 %v5809, %v5801
        %v5826 = vadd.f32 %v5810, %v5802
        %v5827 = vadd.f32 %v5811, %v5803
        %v5828 = vadd.f32 %v5812, %v5804
        %v5829 = vadd.f32 %v5813, %v5801
        %v5830 = vadd.f32 %v5814, %v5802
        %v5831 = vadd.f32 %v5815, %v5803
        %v5832 = vadd.f32 %v5816, %v5804
        %v5833 = vadd.f32 %v5817, %v5801
        %v5834 = vadd.f32 %v5818, %v5802
        %v5835 = vadd.f32 %v5819, %v5803
        %v5836 = vadd.f32 %v5820, %v5804
        %v5837 = vmul.f32 %v5821, %v3129
        %v5838 = vmul.f32 %v5822, %v3129
        %v5839 = vmul.f32 %v5823, %v3129
        %v5840 = vmul.f32 %v5824, %v3129
        %v5841 = vmul.f32 %v5825, %v3129
        %v5842 = vmul.f32 %v5826, %v3129
        %v5843 = vmul.f32 %v5827, %v3129
        %v5844 = vmul.f32 %v5828, %v3129
        %v5845 = vmul.f32 %v5829, %v3129
        %v5846 = vmul.f32 %v5830, %v3129
        %v5847 = vmul.f32 %v5831, %v3129
        %v5848 = vmul.f32 %v5832, %v3129
        %v5849 = vmul.f32 %v5833, %v3129
        %v5850 = vmul.f32 %v5834, %v3129
        %v5851 = vmul.f32 %v5835, %v3129
        %v5852 = vmul.f32 %v5836, %v3129
        %v5853 = vsel %vm3149, %v5837, -inf
        %v5854 = vsel %vm3149, %v5838, -inf
        %v5855 = vmax.f32 %v5853, %v5854
        %v5856 = vsel %vm3149, %v5839, -inf
        %v5857 = vmax.f32 %v5855, %v5856
        %v5858 = vsel %vm3149, %v5840, -inf
        %v5859 = vmax.f32 %v5857, %v5858
        %v5860 = vsel %vm3149, %v5841, -inf
        %v5861 = vsel %vm3149, %v5842, -inf
        %v5862 = vmax.f32 %v5860, %v5861
        %v5863 = vsel %vm3149, %v5843, -inf
        %v5864 = vmax.f32 %v5862, %v5863
        %v5865 = vsel %vm3149, %v5844, -inf
        %v5866 = vmax.f32 %v5864, %v5865
        %v5867 = vsel %vm3149, %v5845, -inf
        %v5868 = vsel %vm3149, %v5846, -inf
        %v5869 = vmax.f32 %v5867, %v5868
        %v5870 = vsel %vm3149, %v5847, -inf
        %v5871 = vmax.f32 %v5869, %v5870
        %v5872 = vsel %vm3149, %v5848, -inf
        %v5873 = vmax.f32 %v5871, %v5872
        %v5874 = vsel %vm3149, %v5849, -inf
        %v5875 = vsel %vm3149, %v5850, -inf
        %v5876 = vmax.f32 %v5874, %v5875
        %v5877 = vsel %vm3149, %v5851, -inf
        %v5878 = vmax.f32 %v5876, %v5877
        %v5879 = vsel %vm3149, %v5852, -inf
        %v5880 = vmax.f32 %v5878, %v5879
        %v5881 = vsub.f32 %v5837, %v5859
        %v5882 = vsub.f32 %v5838, %v5859
        %v5883 = vsub.f32 %v5839, %v5859
        %v5884 = vsub.f32 %v5840, %v5859
        %v5885 = vsub.f32 %v5841, %v5866
        %v5886 = vsub.f32 %v5842, %v5866
        %v5887 = vsub.f32 %v5843, %v5866
        %v5888 = vsub.f32 %v5844, %v5866
        %v5889 = vsub.f32 %v5845, %v5873
        %v5890 = vsub.f32 %v5846, %v5873
        %v5891 = vsub.f32 %v5847, %v5873
        %v5892 = vsub.f32 %v5848, %v5873
        %v5893 = vsub.f32 %v5849, %v5880
        %v5894 = vsub.f32 %v5850, %v5880
        %v5895 = vsub.f32 %v5851, %v5880
        %v5896 = vsub.f32 %v5852, %v5880
        %v5897 = vmul.f32 %v5881, 1.442695
        %v5898 = vpow.pop %v5897
        %v5899 = vmul.f32 %v5882, 1.442695
        %v5900 = vpow.pop %v5899
        %v5901 = vmul.f32 %v5883, 1.442695
        %v5902 = vpow.pop %v5901
        %v5903 = vmul.f32 %v5884, 1.442695
        %v5904 = vpow.pop %v5903
        %v5905 = vmul.f32 %v5885, 1.442695
        %v5906 = vpow.pop %v5905
        %v5907 = vmul.f32 %v5886, 1.442695
        %v5908 = vpow.pop %v5907
        %v5909 = vmul.f32 %v5887, 1.442695
        %v5910 = vpow.pop %v5909
        %v5911 = vmul.f32 %v5888, 1.442695
        %v5912 = vpow.pop %v5911
        %v5913 = vmul.f32 %v5889, 1.442695
        %v5914 = vpow.pop %v5913
        %v5915 = vmul.f32 %v5890, 1.442695
        %v5916 = vpow.pop %v5915
        %v5917 = vmul.f32 %v5891, 1.442695
        %v5918 = vpow.pop %v5917
        %v5919 = vmul.f32 %v5892, 1.442695
        %v5920 = vpow.pop %v5919
        %v5921 = vmul.f32 %v5893, 1.442695
        %v5922 = vpow.pop %v5921
        %v5923 = vmul.f32 %v5894, 1.442695
        %v5924 = vpow.pop %v5923
        %v5925 = vmul.f32 %v5895, 1.442695
        %v5926 = vpow.pop %v5925
        %v5927 = vmul.f32 %v5896, 1.442695
        %v5928 = vpow.pop %v5927
        %v5929 = vsel %vm3226, %v5898, 0.0
        %v5930 = vsel %vm3226, %v5900, 0.0
        %v5931 = vadd.f32 %v5929, %v5930
        %v5932 = vsel %vm3226, %v5902, 0.0
        %v5933 = vadd.f32 %v5931, %v5932
        %v5934 = vsel %vm3226, %v5904, 0.0
        %v5935 = vadd.f32 %v5933, %v5934
        %v5936 = vsel %vm3226, %v5906, 0.0
        %v5937 = vsel %vm3226, %v5908, 0.0
        %v5938 = vadd.f32 %v5936, %v5937
        %v5939 = vsel %vm3226, %v5910, 0.0
        %v5940 = vadd.f32 %v5938, %v5939
        %v5941 = vsel %vm3226, %v5912, 0.0
        %v5942 = vadd.f32 %v5940, %v5941
        %v5943 = vsel %vm3226, %v5914, 0.0
        %v5944 = vsel %vm3226, %v5916, 0.0
        %v5945 = vadd.f32 %v5943, %v5944
        %v5946 = vsel %vm3226, %v5918, 0.0
        %v5947 = vadd.f32 %v5945, %v5946
        %v5948 = vsel %vm3226, %v5920, 0.0
        %v5949 = vadd.f32 %v5947, %v5948
        %v5950 = vsel %vm3226, %v5922, 0.0
        %v5951 = vsel %vm3226, %v5924, 0.0
        %v5952 = vadd.f32 %v5950, %v5951
        %v5953 = vsel %vm3226, %v5926, 0.0
        %v5954 = vadd.f32 %v5952, %v5953
        %v5955 = vsel %vm3226, %v5928, 0.0
        %v5956 = vadd.f32 %v5954, %v5955
        %v5957 = vlog2.pop %v5935
        %v5958 = vmul.f32 %v5957, 0.6931472
        %v5959 = vlog2.pop %v5942
        %v5960 = vmul.f32 %v5959, 0.6931472
        %v5961 = vlog2.pop %v5949
        %v5962 = vmul.f32 %v5961, 0.6931472
        %v5963 = vlog2.pop %v5956
        %v5964 = vmul.f32 %v5963, 0.6931472
        %v5965 = vadd.f32 %v5859, %v5958
        %v5966 = vadd.f32 %v5866, %v5960
        %v5967 = vadd.f32 %v5873, %v5962
        %v5968 = vadd.f32 %v5880, %v5964
        %v5969 = vmul.f32 %v3267, %v5965
        %v5970 = vmul.f32 %v3267, %v5966
        %v5971 = vmul.f32 %v3267, %v5967
        %v5972 = vmul.f32 %v3267, %v5968
        %s5973 = smul.u32 %s3077, 4
        %s5974 = scalar_lea.vmem %s256, %s5973
        %v5975 = vld [vmem:[%s5974] sm:$0x1]
        %v5976 = vld [vmem:[%s5974 + $0x1] sm:$0x1]
        %v5977 = vld [vmem:[%s5974 + $0x2] sm:$0x1]
        %v5978 = vld [vmem:[%s5974 + $0x3] sm:$0x1]
        %v5979 = vadd.f32 %v5975, %v5969
        %v5980 = vadd.f32 %v5976, %v5970
        %v5981 = vadd.f32 %v5977, %v5971
        %v5982 = vadd.f32 %v5978, %v5972
        %5983 = vst.msk [vmem:[%s5974] sm:$0x1] %vm3226, %v5979
        %5984 = vst.msk [vmem:[%s5974 + $0x1] sm:$0x1] %vm3226, %v5980
        %5985 = vst.msk [vmem:[%s5974 + $0x2] sm:$0x1] %vm3226, %v5981
        %5986 = vst.msk [vmem:[%s5974 + $0x3] sm:$0x1] %vm3226, %v5982
        %s5987 = scalar_lea.vmem %s232, %s5973
        %v5988 = vld [vmem:[%s5987] sm:$0x1]
        %v5989 = vld [vmem:[%s5987 + $0x1] sm:$0x1]
        %v5990 = vld [vmem:[%s5987 + $0x2] sm:$0x1]
        %v5991 = vld [vmem:[%s5987 + $0x3] sm:$0x1]
        %v5992 = vadd.f32 %v5988, %v5969
        %v5993 = vadd.f32 %v5989, %v5970
        %v5994 = vadd.f32 %v5990, %v5971
        %v5995 = vadd.f32 %v5991, %v5972
        %5996 = vst.msk [vmem:[#allocation2] sm:$0x1] %vm3226, %v5992
        %5997 = vst.msk [vmem:[#allocation2 + $0x1] sm:$0x1] %vm3226, %v5993
        %5998 = vst.msk [vmem:[#allocation2 + $0x2] sm:$0x1] %vm3226, %v5994
        %5999 = vst.msk [vmem:[#allocation2 + $0x3] sm:$0x1] %vm3226, %v5995
      $region44: #{fixed_point_iteration.1} parent=31 // pred_fallthru
        _
      %p6000 = scmp.lt.s32.totalorder %s20, 1
      %s6001 = scalar_select %p6000, %s20, 1
      %s6002 = smul.addr %s6001, 64
      %s6003 = scalar_lea.vmem %s3, %s6002
      // Predicated region
      $region49: #{fixed_point_iteration.1} parent=31 // pred_check
        %p6004 = pneg %p137
      $region50: #{fixed_point_iteration.1} parent=31 // pred_check_branch
        %6006 = sbr.rel (%p6004) target = $region52
      $region51: #{fixed_point_iteration.1} parent=31 // pred_region
        _
      $region52: #{fixed_point_iteration.1} parent=31 // pred_fallthru
        _
    $region32: #{fixed_point_iteration.1} parent=5 // pred_fallthru
      _
    %p6007 = scmp.le.s32.totalorder 2, %s10
    // Predicated region
    $region53: #{fixed_point_iteration.1} parent=5 // pred_check
      %p6008 = pneg %p6007
    $region54: #{fixed_point_iteration.1} parent=5 // pred_check_branch
      %6010 = sbr.rel (%p6008) target = $region56
    $region55: #{fixed_point_iteration.1} parent=5 // pred_region
      %s6011 = ssub.s32 %s10, 2
      // Predicated region
      $region57: #{fixed_point_iteration.1} parent=55 // pred_check
        %p6012 = pneg %p143
      $region58: #{fixed_point_iteration.1} parent=55 // pred_check_branch
        %6014 = sbr.rel (%p6012) target = $region60
      $region59: #{fixed_point_iteration.1} parent=55 // pred_region
        %p6015 = scmp.lt.s32.totalorder %s23, 1
        %s6016 = scalar_select %p6015, %s23, 1
        %s6017 = smul.addr %s6016, 64
        %s6018 = scalar_lea.vmem %s3, %s6017
      $region60: #{fixed_point_iteration.1} parent=55 // pred_fallthru
        _
    $region56: #{fixed_point_iteration.1} parent=5 // pred_fallthru
      _
  $region6: #{fixed_point_iteration.1} parent=0 // loop_footer
    %s14 = sadd.s32 1, %s10
  $region7: #{fixed_point_iteration.1} parent=0 // loop_footer_branch
    %9 = sbr.rel target = $region3
  $region8: #{fixed_point_iteration.1} parent=0 // loop_exit
    _

</llo_original>
